<compile_context>
chip_gen: v7x
topology: tpu7x:2x2x1
jax: 0.10.0
libtpu: 0.0.40
codegen_flags: <defaults>
</compile_context>

<pallas_src>
import functools
import math

import jax
import jax.numpy as jnp
from jax import lax
from jax.experimental import pallas as pl
from jax.experimental.pallas import tpu as pltpu

COMPUTE_DTYPE = jnp.bfloat16   # matmul-input / intermediate-activation dtype
TM_MAX = 1024                  # max rows of the flattened N*H*W axis per tile


# ---------------------------------------------------------------------------
# small helpers
# ---------------------------------------------------------------------------
def _round_up(x, m):
    return ((x + m - 1) // m) * m


def _row_tile(m, tm_max=TM_MAX):
    """Largest multiple-of-8 row tile <= tm_max, preferring >= 2 grid blocks
    (v7x has 2 TensorCores; one extra grid step costs ~0.35 us on 1-TC parts)."""
    m8 = _round_up(m, 8)
    half = _round_up(max(m8 // 2, 8), 8)
    return max(8, min(tm_max, half, m8))


@functools.lru_cache(maxsize=None)
def _vmem_cap_bytes():
    cap = 64 * 2**20                       # conservative default: v7x physical VMEM
    try:
        info = pltpu.get_tpu_info()
        cap = int(getattr(info, "vmem_capacity_bytes", cap)) or cap
    except Exception:
        pass
    return (cap * 3) // 4                  # headroom for Mosaic-internal scratch


def _vmem_limit_bytes(pipelined, resident=()):
    """2x (double-buffer) for pipelined blocks, 1x for scratch / in-kernel temps."""
    need = sum(2 * math.prod(s) * jnp.dtype(d).itemsize for s, d in pipelined)
    need += sum(math.prod(s) * jnp.dtype(d).itemsize for s, d in resident)
    return int(min(_vmem_cap_bytes(), max(32 * 2**20, 2 * need)))


def _silu_f32(y):
    # exp and the approximate reciprocal both run on the EUP slot, keeping the
    # VPU free for the bias / residual epilogue.  y is f32.
    return y * pl.reciprocal(1.0 + jnp.exp(-y), approx=True)


# ---------------------------------------------------------------------------
# Pallas kernels
# ---------------------------------------------------------------------------
def _pw_kernel(x_ref, w_ref, b_ref, o_ref):
    """1x1 conv (+folded BN) + SiLU: silu(x @ w + b).  Per-tile bf16 cast."""
    x = x_ref[...].astype(COMPUTE_DTYPE)
    y = jnp.dot(x, w_ref[...], preferred_element_type=jnp.float32)
    o_ref[...] = _silu_f32(y + b_ref[...]).astype(o_ref.dtype)


def _pw_concat_kernel(y1_ref, y2_ref, wa_ref, wb_ref, b_ref, o_ref):
    """channel-concat + 1x1 conv fused: silu(y1 @ Wa + y2 @ Wb + b)."""
    acc = jnp.dot(y1_ref[...].astype(COMPUTE_DTYPE), wa_ref[...],
                  preferred_element_type=jnp.float32)
    acc = acc + jnp.dot(y2_ref[...].astype(COMPUTE_DTYPE), wb_ref[...],
                        preferred_element_type=jnp.float32)
    o_ref[...] = _silu_f32(acc + b_ref[...]).astype(o_ref.dtype)


def _bottleneck_kernel(x_ref, w1_ref, b1_ref, w9_ref, b2_ref, o_ref,
                       hp_ref, slab_ref, *, H, W, c, add):
    """Fused Bottleneck: 1x1 conv+SiLU -> zero-halo 3x3 conv+SiLU -> residual.

    x_ref    : (H*W, cin_blk)  y1 rows (or the full [y1|y2] slab; the y2 half is
                               masked out of the cv1 matmul via zero weight rows)
    w1_ref   : (cin_blk, c)    cv1 weights (BN folded)
    w9_ref   : (9*c, c)        cv2 3x3 taps stacked along K in (dy, dx, cin) order
    hp_ref   : (H+2, W+2, c)   VMEM scratch: zero-padded cv1 output plane
    slab_ref : (H*W, 9*c)      VMEM scratch: the 9 shifted taps stacked on K
    """
    HW = H * W
    x = x_ref[...]
    # --- bottleneck cv1 (1x1): h never touches HBM ---------------------------
    h = jnp.dot(x.astype(COMPUTE_DTYPE), w1_ref[...],
                preferred_element_type=jnp.float32)
    h = _silu_f32(h + b1_ref[...])                              # (HW, c) f32
    # --- zero-halo plane, built entirely in VMEM ------------------------------
    hp_ref[...] = jnp.zeros(hp_ref.shape, hp_ref.dtype)
    hp_ref[1:H + 1, 1:W + 1, :] = h.reshape(H, W, c).astype(hp_ref.dtype)
    # --- stack the 9 shifted taps along K -> ONE MXU matmul with K = 9*c ------
    for dy in range(3):
        for dx in range(3):
            t = dy * 3 + dx
            slab_ref[:, t * c:(t + 1) * c] = (
                hp_ref[dy:dy + H, dx:dx + W, :].reshape(HW, c))
    z = jnp.dot(slab_ref[...], w9_ref[...], preferred_element_type=jnp.float32)
    z = _silu_f32(z + b2_ref[...])
    if add:
        z = z + x[:, :c].astype(jnp.float32)                    # residual, post-SiLU
    o_ref[...] = z.astype(o_ref.dtype)


# ---------------------------------------------------------------------------
# pallas_call wrappers
# ---------------------------------------------------------------------------
def pw_conv_silu(x, w, b, out_dtype=COMPUTE_DTYPE):
    """Fused 1x1 conv: silu(x @ w + b).  x: (M, K) in its native dtype."""
    M, K = x.shape
    C = w.shape[1]
    tm = _row_tile(M)
    limit = _vmem_limit_bytes(
        pipelined=[((tm, K), x.dtype), ((K, C), COMPUTE_DTYPE),
                   ((1, C), jnp.float32), ((tm, C), out_dtype)],
        resident=[((tm, C), jnp.float32)])
    return pl.pallas_call(
        _pw_kernel,
        out_shape=jax.ShapeDtypeStruct((M, C), out_dtype),
        grid=(pl.cdiv(M, tm),),
        in_specs=[pl.BlockSpec((tm, K), lambda i: (i, 0)),
                  pl.BlockSpec((K, C), lambda i: (0, 0)),
                  pl.BlockSpec((1, C), lambda i: (0, 0))],
        out_specs=pl.BlockSpec((tm, C), lambda i: (i, 0)),
        compiler_params=pltpu.CompilerParams(
            dimension_semantics=("parallel",), vmem_limit_bytes=limit),
    )(x, w.astype(COMPUTE_DTYPE), b.reshape(1, C).astype(jnp.float32))


def pw_concat_silu(y1, y12, cb, cb_idx, wa, wb, b, out_dtype=jnp.float32):
    """Fused channel-concat + 1x1 conv: silu([y1 | y2] @ [Wa; Wb] + b).

    y2 is channel block `cb_idx` of width `cb` inside the combined y12 slab
    (when c_ is 128-aligned only the y2 half is DMA'd; otherwise the full slab
    is read -- same 128-lane tile anyway -- and Wb is zero-extended)."""
    M, ca = y1.shape
    C = wa.shape[1]
    tm = _row_tile(M)
    limit = _vmem_limit_bytes(
        pipelined=[((tm, ca), y1.dtype), ((tm, cb), y12.dtype),
                   ((ca, C), COMPUTE_DTYPE), ((cb, C), COMPUTE_DTYPE),
                   ((1, C), jnp.float32), ((tm, C), out_dtype)],
        resident=[((tm, C), jnp.float32)])
    return pl.pallas_call(
        _pw_concat_kernel,
        out_shape=jax.ShapeDtypeStruct((M, C), out_dtype),
        grid=(pl.cdiv(M, tm),),
        in_specs=[pl.BlockSpec((tm, ca), lambda i: (i, 0)),
                  pl.BlockSpec((tm, cb), lambda i: (i, cb_idx)),
                  pl.BlockSpec((ca, C), lambda i: (0, 0)),
                  pl.BlockSpec((cb, C), lambda i: (0, 0)),
                  pl.BlockSpec((1, C), lambda i: (0, 0))],
        out_specs=pl.BlockSpec((tm, C), lambda i: (i, 0)),
        compiler_params=pltpu.CompilerParams(
            dimension_semantics=("parallel",), vmem_limit_bytes=limit),
    )(y1, y12, wa.astype(COMPUTE_DTYPE), wb.astype(COMPUTE_DTYPE),
      b.reshape(1, C).astype(jnp.float32))


def bottleneck_fused(src, cin_blk, cblk_idx, w1, b1, w_taps, b2,
                     N, H, W, c_, add, out_dtype=COMPUTE_DTYPE):
    """One fused Bottleneck(c_, c_, k=((1,1),(3,3)), e=1.0) over (N, H, W, c_)."""
    HW = H * W
    M = N * HW
    if N > 1 and HW % 8 != 0:
        # TODO(synk): row padding for H*W not a multiple of 8 (not needed here).
        raise NotImplementedError("H*W must be a multiple of 8 when N > 1")
    cout = w_taps.shape[-1]
    w9 = w_taps.reshape(9 * c_, cout)
    limit = _vmem_limit_bytes(
        pipelined=[((HW, cin_blk), src.dtype), ((cin_blk, c_), COMPUTE_DTYPE),
                   ((1, c_), jnp.float32), ((9 * c_, cout), COMPUTE_DTYPE),
                   ((1, cout), jnp.float32), ((HW, cout), out_dtype)],
        resident=[((H + 2, W + 2, c_), COMPUTE_DTYPE),
                  ((HW, 9 * c_), COMPUTE_DTYPE),
                  ((HW, c_), jnp.float32), ((HW, cout), jnp.float32)])
    # TODO(synk): for batch-1 / large-plane inference, add halo row-tiling
    #             (overlapping (TH+2, W+2) windows via manual async_copy) so the
    #             grid has >=2 blocks for v7x's 2 TensorCores and the plane +
    #             tap slab stay inside its 64 MiB VMEM.
    return pl.pallas_call(
        functools.partial(_bottleneck_kernel, H=H, W=W, c=c_, add=add),
        out_shape=jax.ShapeDtypeStruct((M, cout), out_dtype),
        grid=(N,),
        in_specs=[pl.BlockSpec((HW, cin_blk), lambda b: (b, cblk_idx)),
                  pl.BlockSpec((cin_blk, c_), lambda b: (0, 0)),
                  pl.BlockSpec((1, c_), lambda b: (0, 0)),
                  pl.BlockSpec((9 * c_, cout), lambda b: (0, 0)),
                  pl.BlockSpec((1, cout), lambda b: (0, 0))],
        out_specs=pl.BlockSpec((HW, cout), lambda b: (b, 0)),
        scratch_shapes=[pltpu.VMEM((H + 2, W + 2, c_), COMPUTE_DTYPE),
                        pltpu.VMEM((HW, 9 * c_), COMPUTE_DTYPE)],
        compiler_params=pltpu.CompilerParams(
            dimension_semantics=("parallel",), vmem_limit_bytes=limit),
    )(src, w1.astype(COMPUTE_DTYPE), b1.reshape(1, c_).astype(jnp.float32),
      w9.astype(COMPUTE_DTYPE), b2.reshape(1, cout).astype(jnp.float32))


# ---------------------------------------------------------------------------
# Parameter construction (Conv = Conv2d + BatchNorm2d + SiLU; BN folded in f32)
# ---------------------------------------------------------------------------
def init_conv_params(key, cin, cout, k):
    kw, kg, kb, km, kv = jax.random.split(key, 5)
    w = 0.1 * jax.random.normal(kw, (cout, cin, k, k), jnp.float32)       # OIHW
    gamma = 1.0 + 0.1 * jax.random.normal(kg, (cout,), jnp.float32)
    beta = 0.1 * jax.random.normal(kb, (cout,), jnp.float32)
    mean = 0.1 * jax.random.normal(km, (cout,), jnp.float32)
    var = 1.0 + 0.1 * jnp.abs(jax.random.normal(kv, (cout,), jnp.float32))
    eps = 1e-5
    scale = gamma / jnp.sqrt(var + eps)
    w_eff = w * scale[:, None, None, None]          # BN folded, still f32
    b_eff = beta - mean * scale
    p = {"w_oihw": w_eff, "b": b_eff}
    if k == 1:
        p["w_mat"] = w_eff[:, :, 0, 0].T                        # (cin, cout)
    else:
        p["w_taps"] = jnp.transpose(w_eff, (2, 3, 1, 0))        # (kh, kw, cin, cout)
    return p


def init_c3_params(key, c1, c2, n=1, e=0.5):
    c_ = int(c2 * e)
    keys = jax.random.split(key, 3 + 2 * n)
    params = {
        "cv1": init_conv_params(keys[0], c1, c_, 1),
        "cv2": init_conv_params(keys[1], c1, c_, 1),
        "cv3": init_conv_params(keys[2], 2 * c_, c2, 1),
        "m": [],
    }
    for i in range(n):
        # Bottleneck(c_, c_, shortcut, g, k=((1,1),(3,3)), e=1.0)
        params["m"].append({
            "cv1": init_conv_params(keys[3 + 2 * i], c_, c_, 1),
            "cv2": init_conv_params(keys[4 + 2 * i], c_, c_, 3),
        })
    return params


# ---------------------------------------------------------------------------
# C3 forward (Pallas path)
# ---------------------------------------------------------------------------
def c3_forward(x_nchw, params, n=1, shortcut=True):
    N, C, H, W = x_nchw.shape
    M = N * H * W
    c_ = params["cv1"]["w_mat"].shape[1]

    # NCHW -> NHWC -> (M, C): the transpose is the single unavoidable HBM pass.
    xf = jnp.transpose(x_nchw, (0, 2, 3, 1)).reshape(M, C)

    # --- Stage A: cv1 + cv2 fused; combined [y1 | y2] slab written once -------
    w12 = jnp.concatenate([params["cv1"]["w_mat"], params["cv2"]["w_mat"]], axis=1)
    b12 = jnp.concatenate([params["cv1"]["b"], params["cv2"]["b"]], axis=0)
    y12 = pw_conv_silu(xf, w12, b12, out_dtype=COMPUTE_DTYPE)          # (M, 2c_)

    aligned = (c_ % 128 == 0)      # can a half of the slab be DMA'd on its own?

    # --- Stage B: n fused Bottlenecks ------------------------------------------
    y1 = None
    for i in range(n):
        p = params["m"][i]
        w1 = p["cv1"]["w_mat"]
        if i == 0:
            src = y12
            if aligned:
                cin_blk, cblk_idx = c_, 0
            else:
                cin_blk, cblk_idx = 2 * c_, 0
                w1 = jnp.concatenate(
                    [w1, jnp.zeros((c_, c_), w1.dtype)], axis=0)   # mask y2 half
        else:
            src, cin_blk, cblk_idx = y1, c_, 0
        y1 = bottleneck_fused(src, cin_blk, cblk_idx, w1, p["cv1"]["b"],
                              p["cv2"]["w_taps"], p["cv2"]["b"],
                              N, H, W, c_, add=shortcut)

    # --- Stage C: channel-concat + cv3 fused -----------------------------------
    w3, b3 = params["cv3"]["w_mat"], params["cv3"]["b"]
    if n == 0:
        out = pw_conv_silu(y12, w3, b3, out_dtype=jnp.float32)
    else:
        if aligned:
            wa, wb, cb, cb_idx = w3[:c_], w3[c_:], c_, 1
        else:
            wa, cb, cb_idx = w3[:c_], 2 * c_, 0
            wb = jnp.concatenate(
                [jnp.zeros((c_, w3.shape[1]), w3.dtype), w3[c_:]], axis=0)
        out = pw_concat_silu(y1, y12, cb, cb_idx, wa, wb, b3,
                             out_dtype=jnp.float32)

    out = out.reshape(N, H, W, -1)
    return jnp.transpose(out, (0, 3, 1, 2))                            # back to NCHW


# ---------------------------------------------------------------------------
# Pure-JAX reference (NCHW, lax.conv, f32) for correctness checking
# ---------------------------------------------------------------------------
def _conv_silu_ref(x, p, pad):
    y = lax.conv_general_dilated(
        x, p["w_oihw"], window_strides=(1, 1),
        padding=((pad, pad), (pad, pad)),
        dimension_numbers=("NCHW", "OIHW", "NCHW"))
    y = y + p["b"][None, :, None, None]
    return y * jax.nn.sigmoid(y)


def c3_forward_ref(x, params, n=1, shortcut=True):
    y1 = _conv_silu_ref(x, params["cv1"], 0)
    y2 = _conv_silu_ref(x, params["cv2"], 0)
    for i in range(n):
        p = params["m"][i]
        h = _conv_silu_ref(y1, p["cv1"], 0)
        h = _conv_silu_ref(h, p["cv2"], 1)
        y1 = y1 + h if shortcut else h
    cat = jnp.concatenate([y1, y2], axis=1)
    return _conv_silu_ref(cat, params["cv3"], 0)


# ---------------------------------------------------------------------------
if __name__ == "__main__":
    key = jax.random.PRNGKey(0)
    kx, kp = jax.random.split(key)

    c1, c2, n, shortcut = 4, 4, 1, True
    x = jax.random.normal(kx, (2, c1, 16, 16), jnp.float32)   # NCHW, like PyTorch
    params = init_c3_params(kp, c1, c2, n=n, e=0.5)

    fwd = jax.jit(functools.partial(c3_forward, n=n, shortcut=shortcut))
    out = jax.block_until_ready(fwd(x, params))

    ref = jax.block_until_ready(c3_forward_ref(x, params, n=n, shortcut=shortcut))
    assert out.shape == (2, c2, 16, 16) and out.dtype == jnp.float32
    # bf16 matmul inputs + f32 accumulate: compare with a bf16-appropriate tolerance
    err = float(jnp.max(jnp.abs(out - ref)))
    assert err < 2e-2, f"Pallas C3 mismatch, max|err|={err}"

    print("KERNEL_OK")
</pallas_src>

<mosaic_0001>
module attributes {stable_mosaic.version = 11 : i64} {
  func.func @_pw_kernel(%arg0: i32, %arg1: memref<256x4xf32, #tpu.memory_space<vmem>>, %arg2: memref<4x4xbf16, #tpu.memory_space<vmem>>, %arg3: memref<1x4xf32, #tpu.memory_space<vmem>>, %arg4: memref<256x4xbf16, #tpu.memory_space<vmem>>) attributes {dimension_semantics = [#tpu.dimension_semantics<parallel>], iteration_bounds = array<i64: 2>, scalar_prefetch = 0 : i64, scratch_operands = 0 : i64, tpu.core_type = #tpu.core_type<tc>, window_params = [{transform_indices = @transform_0, window_bounds = array<i64: 256, 4>}, {pipeline_mode = #tpu.pipeline_mode<synchronous>, transform_indices = @transform_1, window_bounds = array<i64: 4, 4>}, {pipeline_mode = #tpu.pipeline_mode<synchronous>, transform_indices = @transform_2, window_bounds = array<i64: 1, 4>}, {transform_indices = @transform_3, window_bounds = array<i64: 256, 4>}]} {
    %c0 = arith.constant 0 : index
    %c0_0 = arith.constant 0 : index
    %0 = vector.load %arg1[%c0, %c0_0] : memref<256x4xf32, #tpu.memory_space<vmem>>, vector<256x4xf32>
    %1 = arith.truncf %0 : vector<256x4xf32> to vector<256x4xbf16>
    %c0_1 = arith.constant 0 : index
    %c0_2 = arith.constant 0 : index
    %2 = vector.load %arg2[%c0_1, %c0_2] : memref<4x4xbf16, #tpu.memory_space<vmem>>, vector<4x4xbf16>
    %cst = arith.constant dense<0.000000e+00> : vector<256x4xf32>
    %3 = tpu.matmul %1, %2, %cst {dimension_numbers = #tpu.dot_dimension_numbers<[1], [0], [0], [1], [0, 0, 1, 1], [], []>} : vector<256x4xbf16>, vector<4x4xbf16>, vector<256x4xf32> -> vector<256x4xf32>
    %c0_3 = arith.constant 0 : index
    %c0_4 = arith.constant 0 : index
    %4 = vector.load %arg3[%c0_3, %c0_4] : memref<1x4xf32, #tpu.memory_space<vmem>>, vector<1x4xf32>
    %5 = vector.broadcast %4 : vector<1x4xf32> to vector<256x4xf32>
    %6 = arith.addf %3, %5 : vector<256x4xf32>
    %cst_5 = arith.constant 0.000000e+00 : f32
    %7 = vector.broadcast %cst_5 : f32 to vector<256x4xf32>
    %8 = arith.subf %7, %6 : vector<256x4xf32>
    %9 = math.exp %8 : vector<256x4xf32>
    %cst_6 = arith.constant 1.000000e+00 : f32
    %10 = vector.broadcast %cst_6 : f32 to vector<256x4xf32>
    %11 = arith.addf %10, %9 : vector<256x4xf32>
    %12 = tpu.reciprocal %11 {approx = true} : vector<256x4xf32> -> vector<256x4xf32>
    %13 = arith.mulf %6, %12 : vector<256x4xf32>
    %14 = arith.truncf %13 : vector<256x4xf32> to vector<256x4xbf16>
    %c0_7 = arith.constant 0 : index
    %c0_8 = arith.constant 0 : index
    %15 = vector.load %arg4[%c0_7, %c0_8] : memref<256x4xbf16, #tpu.memory_space<vmem>>, vector<256x4xbf16>
    tpu.vector_store %arg4[%c0_7, %c0_8], %14 {strides = array<i32>} : memref<256x4xbf16, #tpu.memory_space<vmem>>, vector<256x4xbf16>,
    return
  }
  func.func @transform_0(%arg0: i32) -> (i32, i32) {
    %c0_i32 = arith.constant 0 : i32
    %c0_i32_0 = arith.constant 0 : i32
    return %arg0, %c0_i32 : i32, i32
  }
  func.func @transform_1(%arg0: i32) -> (i32, i32) {
    %c0_i32 = arith.constant 0 : i32
    %c0_i32_0 = arith.constant 0 : i32
    %c0_i32_1 = arith.constant 0 : i32
    return %c0_i32, %c0_i32_0 : i32, i32
  }
  func.func @transform_2(%arg0: i32) -> (i32, i32) {
    %c0_i32 = arith.constant 0 : i32
    %c0_i32_0 = arith.constant 0 : i32
    %c0_i32_1 = arith.constant 0 : i32
    return %c0_i32, %c0_i32_0 : i32, i32
  }
  func.func @transform_3(%arg0: i32) -> (i32, i32) {
    %c0_i32 = arith.constant 0 : i32
    %c0_i32_0 = arith.constant 0 : i32
    return %arg0, %c0_i32 : i32, i32
  }
}

module attributes {stable_mosaic.version = 11 : i64} {
  func.func @_pw_concat_kernel(%arg0: i32, %arg1: memref<256x2xbf16, #tpu.memory_space<vmem>>, %arg2: memref<256x4xbf16, #tpu.memory_space<vmem>>, %arg3: memref<2x4xbf16, #tpu.memory_space<vmem>>, %arg4: memref<4x4xbf16, #tpu.memory_space<vmem>>, %arg5: memref<1x4xf32, #tpu.memory_space<vmem>>, %arg6: memref<256x4xf32, #tpu.memory_space<vmem>>) attributes {dimension_semantics = [#tpu.dimension_semantics<parallel>], iteration_bounds = array<i64: 2>, scalar_prefetch = 0 : i64, scratch_operands = 0 : i64, tpu.core_type = #tpu.core_type<tc>, window_params = [{transform_indices = @transform_0, window_bounds = array<i64: 256, 2>}, {transform_indices = @transform_1, window_bounds = array<i64: 256, 4>}, {pipeline_mode = #tpu.pipeline_mode<synchronous>, transform_indices = @transform_2, window_bounds = array<i64: 2, 4>}, {pipeline_mode = #tpu.pipeline_mode<synchronous>, transform_indices = @transform_3, window_bounds = array<i64: 4, 4>}, {pipeline_mode = #tpu.pipeline_mode<synchronous>, transform_indices = @transform_4, window_bounds = array<i64: 1, 4>}, {transform_indices = @transform_5, window_bounds = array<i64: 256, 4>}]} {
    %c0 = arith.constant 0 : index
    %c0_0 = arith.constant 0 : index
    %0 = vector.load %arg1[%c0, %c0_0] : memref<256x2xbf16, #tpu.memory_space<vmem>>, vector<256x2xbf16>
    %c0_1 = arith.constant 0 : index
    %c0_2 = arith.constant 0 : index
    %1 = vector.load %arg3[%c0_1, %c0_2] : memref<2x4xbf16, #tpu.memory_space<vmem>>, vector<2x4xbf16>
    %cst = arith.constant dense<0.000000e+00> : vector<256x4xf32>
    %2 = tpu.matmul %0, %1, %cst {dimension_numbers = #tpu.dot_dimension_numbers<[1], [0], [0], [1], [0, 0, 1, 1], [], []>} : vector<256x2xbf16>, vector<2x4xbf16>, vector<256x4xf32> -> vector<256x4xf32>
    %c0_3 = arith.constant 0 : index
    %c0_4 = arith.constant 0 : index
    %3 = vector.load %arg2[%c0_3, %c0_4] : memref<256x4xbf16, #tpu.memory_space<vmem>>, vector<256x4xbf16>
    %c0_5 = arith.constant 0 : index
    %c0_6 = arith.constant 0 : index
    %4 = vector.load %arg4[%c0_5, %c0_6] : memref<4x4xbf16, #tpu.memory_space<vmem>>, vector<4x4xbf16>
    %cst_7 = arith.constant dense<0.000000e+00> : vector<256x4xf32>
    %5 = tpu.matmul %3, %4, %cst_7 {dimension_numbers = #tpu.dot_dimension_numbers<[1], [0], [0], [1], [0, 0, 1, 1], [], []>} : vector<256x4xbf16>, vector<4x4xbf16>, vector<256x4xf32> -> vector<256x4xf32>
    %6 = arith.addf %2, %5 : vector<256x4xf32>
    %c0_8 = arith.constant 0 : index
    %c0_9 = arith.constant 0 : index
    %7 = vector.load %arg5[%c0_8, %c0_9] : memref<1x4xf32, #tpu.memory_space<vmem>>, vector<1x4xf32>
    %8 = vector.broadcast %7 : vector<1x4xf32> to vector<256x4xf32>
    %9 = arith.addf %6, %8 : vector<256x4xf32>
    %cst_10 = arith.constant 0.000000e+00 : f32
    %10 = vector.broadcast %cst_10 : f32 to vector<256x4xf32>
    %11 = arith.subf %10, %9 : vector<256x4xf32>
    %12 = math.exp %11 : vector<256x4xf32>
    %cst_11 = arith.constant 1.000000e+00 : f32
    %13 = vector.broadcast %cst_11 : f32 to vector<256x4xf32>
    %14 = arith.addf %13, %12 : vector<256x4xf32>
    %15 = tpu.reciprocal %14 {approx = true} : vector<256x4xf32> -> vector<256x4xf32>
    %16 = arith.mulf %9, %15 : vector<256x4xf32>
    %c0_12 = arith.constant 0 : index
    %c0_13 = arith.constant 0 : index
    %17 = vector.load %arg6[%c0_12, %c0_13] : memref<256x4xf32, #tpu.memory_space<vmem>>, vector<256x4xf32>
    tpu.vector_store %arg6[%c0_12, %c0_13], %16 {strides = array<i32>} : memref<256x4xf32, #tpu.memory_space<vmem>>, vector<256x4xf32>,
    return
  }
  func.func @transform_0(%arg0: i32) -> (i32, i32) {
    %c0_i32 = arith.constant 0 : i32
    %c0_i32_0 = arith.constant 0 : i32
    return %arg0, %c0_i32 : i32, i32
  }
  func.func @transform_1(%arg0: i32) -> (i32, i32) {
    %c0_i32 = arith.constant 0 : i32
    %c0_i32_0 = arith.constant 0 : i32
    return %arg0, %c0_i32 : i32, i32
  }
  func.func @transform_2(%arg0: i32) -> (i32, i32) {
    %c0_i32 = arith.constant 0 : i32
    %c0_i32_0 = arith.constant 0 : i32
    %c0_i32_1 = arith.constant 0 : i32
    return %c0_i32, %c0_i32_0 : i32, i32
  }
  func.func @transform_3(%arg0: i32) -> (i32, i32) {
    %c0_i32 = arith.constant 0 : i32
    %c0_i32_0 = arith.constant 0 : i32
    %c0_i32_1 = arith.constant 0 : i32
    return %c0_i32, %c0_i32_0 : i32, i32
  }
  func.func @transform_4(%arg0: i32) -> (i32, i32) {
    %c0_i32 = arith.constant 0 : i32
    %c0_i32_0 = arith.constant 0 : i32
    %c0_i32_1 = arith.constant 0 : i32
    return %c0_i32, %c0_i32_0 : i32, i32
  }
  func.func @transform_5(%arg0: i32) -> (i32, i32) {
    %c0_i32 = arith.constant 0 : i32
    %c0_i32_0 = arith.constant 0 : i32
    return %arg0, %c0_i32 : i32, i32
  }
}

module attributes {stable_mosaic.version = 11 : i64} {
  func.func @_bottleneck_kernel(%arg0: i32, %arg1: memref<256x4xbf16, #tpu.memory_space<vmem>>, %arg2: memref<4x2xbf16, #tpu.memory_space<vmem>>, %arg3: memref<1x2xf32, #tpu.memory_space<vmem>>, %arg4: memref<18x2xbf16, #tpu.memory_space<vmem>>, %arg5: memref<1x2xf32, #tpu.memory_space<vmem>>, %arg6: memref<256x2xbf16, #tpu.memory_space<vmem>>, %arg7: memref<18x18x2xbf16, #tpu.memory_space<vmem>>, %arg8: memref<256x18xbf16, #tpu.memory_space<vmem>>) attributes {dimension_semantics = [#tpu.dimension_semantics<parallel>], iteration_bounds = array<i64: 2>, scalar_prefetch = 0 : i64, scratch_operands = 2 : i64, tpu.core_type = #tpu.core_type<tc>, window_params = [{transform_indices = @transform_0, window_bounds = array<i64: 256, 4>}, {pipeline_mode = #tpu.pipeline_mode<synchronous>, transform_indices = @transform_1, window_bounds = array<i64: 4, 2>}, {pipeline_mode = #tpu.pipeline_mode<synchronous>, transform_indices = @transform_2, window_bounds = array<i64: 1, 2>}, {pipeline_mode = #tpu.pipeline_mode<synchronous>, transform_indices = @transform_3, window_bounds = array<i64: 18, 2>}, {pipeline_mode = #tpu.pipeline_mode<synchronous>, transform_indices = @transform_4, window_bounds = array<i64: 1, 2>}, {transform_indices = @transform_5, window_bounds = array<i64: 256, 2>}]} {
    %c0 = arith.constant 0 : index
    %c0_0 = arith.constant 0 : index
    %0 = vector.load %arg1[%c0, %c0_0] : memref<256x4xbf16, #tpu.memory_space<vmem>>, vector<256x4xbf16>
    %c0_1 = arith.constant 0 : index
    %c0_2 = arith.constant 0 : index
    %1 = vector.load %arg2[%c0_1, %c0_2] : memref<4x2xbf16, #tpu.memory_space<vmem>>, vector<4x2xbf16>
    %cst = arith.constant dense<0.000000e+00> : vector<256x2xf32>
    %2 = tpu.matmul %0, %1, %cst {dimension_numbers = #tpu.dot_dimension_numbers<[1], [0], [0], [1], [0, 0, 1, 1], [], []>} : vector<256x4xbf16>, vector<4x2xbf16>, vector<256x2xf32> -> vector<256x2xf32>
    %c0_3 = arith.constant 0 : index
    %c0_4 = arith.constant 0 : index
    %3 = vector.load %arg3[%c0_3, %c0_4] : memref<1x2xf32, #tpu.memory_space<vmem>>, vector<1x2xf32>
    %4 = vector.broadcast %3 : vector<1x2xf32> to vector<256x2xf32>
    %5 = arith.addf %2, %4 : vector<256x2xf32>
    %cst_5 = arith.constant 0.000000e+00 : f32
    %6 = vector.broadcast %cst_5 : f32 to vector<256x2xf32>
    %7 = arith.subf %6, %5 : vector<256x2xf32>
    %8 = math.exp %7 : vector<256x2xf32>
    %cst_6 = arith.constant 1.000000e+00 : f32
    %9 = vector.broadcast %cst_6 : f32 to vector<256x2xf32>
    %10 = arith.addf %9, %8 : vector<256x2xf32>
    %11 = tpu.reciprocal %10 {approx = true} : vector<256x2xf32> -> vector<256x2xf32>
    %12 = arith.mulf %5, %11 : vector<256x2xf32>
    %cst_7 = arith.constant 0.000000e+00 : bf16
    %13 = vector.broadcast %cst_7 : bf16 to vector<18x18x2xbf16>
    %c0_8 = arith.constant 0 : index
    %c0_9 = arith.constant 0 : index
    %c0_10 = arith.constant 0 : index
    %14 = vector.load %arg7[%c0_8, %c0_9, %c0_10] : memref<18x18x2xbf16, #tpu.memory_space<vmem>>, vector<18x18x2xbf16>
    tpu.vector_store %arg7[%c0_8, %c0_9, %c0_10], %13 {strides = array<i32>} : memref<18x18x2xbf16, #tpu.memory_space<vmem>>, vector<18x18x2xbf16>,
    %15 = vector.shape_cast %12 : vector<256x2xf32> to vector<16x16x2xf32>
    %16 = arith.truncf %15 : vector<16x16x2xf32> to vector<16x16x2xbf16>
    %c1 = arith.constant 1 : index
    %c1_11 = arith.constant 1 : index
    %c0_12 = arith.constant 0 : index
    %17 = vector.load %arg7[%c1, %c1_11, %c0_12] : memref<18x18x2xbf16, #tpu.memory_space<vmem>>, vector<16x16x2xbf16>
    tpu.vector_store %arg7[%c1, %c1_11, %c0_12], %16 {strides = array<i32>} : memref<18x18x2xbf16, #tpu.memory_space<vmem>>, vector<16x16x2xbf16>,
    %c0_13 = arith.constant 0 : index
    %c0_14 = arith.constant 0 : index
    %c0_15 = arith.constant 0 : index
    %18 = vector.load %arg7[%c0_13, %c0_14, %c0_15] : memref<18x18x2xbf16, #tpu.memory_space<vmem>>, vector<16x16x2xbf16>
    %19 = vector.shape_cast %18 : vector<16x16x2xbf16> to vector<256x2xbf16>
    %c0_16 = arith.constant 0 : index
    %c0_17 = arith.constant 0 : index
    %20 = vector.load %arg8[%c0_16, %c0_17] : memref<256x18xbf16, #tpu.memory_space<vmem>>, vector<256x2xbf16>
    tpu.vector_store %arg8[%c0_16, %c0_17], %19 {strides = array<i32>} : memref<256x18xbf16, #tpu.memory_space<vmem>>, vector<256x2xbf16>,
    %c0_18 = arith.constant 0 : index
    %c1_19 = arith.constant 1 : index
    %c0_20 = arith.constant 0 : index
    %21 = vector.load %arg7[%c0_18, %c1_19, %c0_20] : memref<18x18x2xbf16, #tpu.memory_space<vmem>>, vector<16x16x2xbf16>
    %22 = vector.shape_cast %21 : vector<16x16x2xbf16> to vector<256x2xbf16>
    %c0_21 = arith.constant 0 : index
    %c2 = arith.constant 2 : index
    %23 = vector.load %arg8[%c0_21, %c2] : memref<256x18xbf16, #tpu.memory_space<vmem>>, vector<256x2xbf16>
    tpu.vector_store %arg8[%c0_21, %c2], %22 {strides = array<i32>} : memref<256x18xbf16, #tpu.memory_space<vmem>>, vector<256x2xbf16>,
    %c0_22 = arith.constant 0 : index
    %c2_23 = arith.constant 2 : index
    %c0_24 = arith.constant 0 : index
    %24 = vector.load %arg7[%c0_22, %c2_23, %c0_24] : memref<18x18x2xbf16, #tpu.memory_space<vmem>>, vector<16x16x2xbf16>
    %25 = vector.shape_cast %24 : vector<16x16x2xbf16> to vector<256x2xbf16>
    %c0_25 = arith.constant 0 : index
    %c4 = arith.constant 4 : index
    %26 = vector.load %arg8[%c0_25, %c4] : memref<256x18xbf16, #tpu.memory_space<vmem>>, vector<256x2xbf16>
    tpu.vector_store %arg8[%c0_25, %c4], %25 {strides = array<i32>} : memref<256x18xbf16, #tpu.memory_space<vmem>>, vector<256x2xbf16>,
    %c1_26 = arith.constant 1 : index
    %c0_27 = arith.constant 0 : index
    %c0_28 = arith.constant 0 : index
    %27 = vector.load %arg7[%c1_26, %c0_27, %c0_28] : memref<18x18x2xbf16, #tpu.memory_space<vmem>>, vector<16x16x2xbf16>
    %28 = vector.shape_cast %27 : vector<16x16x2xbf16> to vector<256x2xbf16>
    %c0_29 = arith.constant 0 : index
    %c6 = arith.constant 6 : index
    %29 = vector.load %arg8[%c0_29, %c6] : memref<256x18xbf16, #tpu.memory_space<vmem>>, vector<256x2xbf16>
    tpu.vector_store %arg8[%c0_29, %c6], %28 {strides = array<i32>} : memref<256x18xbf16, #tpu.memory_space<vmem>>, vector<256x2xbf16>,
    %c1_30 = arith.constant 1 : index
    %c1_31 = arith.constant 1 : index
    %c0_32 = arith.constant 0 : index
    %30 = vector.load %arg7[%c1_30, %c1_31, %c0_32] : memref<18x18x2xbf16, #tpu.memory_space<vmem>>, vector<16x16x2xbf16>
    %31 = vector.shape_cast %30 : vector<16x16x2xbf16> to vector<256x2xbf16>
    %c0_33 = arith.constant 0 : index
    %c8 = arith.constant 8 : index
    %32 = vector.load %arg8[%c0_33, %c8] : memref<256x18xbf16, #tpu.memory_space<vmem>>, vector<256x2xbf16>
    tpu.vector_store %arg8[%c0_33, %c8], %31 {strides = array<i32>} : memref<256x18xbf16, #tpu.memory_space<vmem>>, vector<256x2xbf16>,
    %c1_34 = arith.constant 1 : index
    %c2_35 = arith.constant 2 : index
    %c0_36 = arith.constant 0 : index
    %33 = vector.load %arg7[%c1_34, %c2_35, %c0_36] : memref<18x18x2xbf16, #tpu.memory_space<vmem>>, vector<16x16x2xbf16>
    %34 = vector.shape_cast %33 : vector<16x16x2xbf16> to vector<256x2xbf16>
    %c0_37 = arith.constant 0 : index
    %c10 = arith.constant 10 : index
    %35 = vector.load %arg8[%c0_37, %c10] : memref<256x18xbf16, #tpu.memory_space<vmem>>, vector<256x2xbf16>
    tpu.vector_store %arg8[%c0_37, %c10], %34 {strides = array<i32>} : memref<256x18xbf16, #tpu.memory_space<vmem>>, vector<256x2xbf16>,
    %c2_38 = arith.constant 2 : index
    %c0_39 = arith.constant 0 : index
    %c0_40 = arith.constant 0 : index
    %36 = vector.load %arg7[%c2_38, %c0_39, %c0_40] : memref<18x18x2xbf16, #tpu.memory_space<vmem>>, vector<16x16x2xbf16>
    %37 = vector.shape_cast %36 : vector<16x16x2xbf16> to vector<256x2xbf16>
    %c0_41 = arith.constant 0 : index
    %c12 = arith.constant 12 : index
    %38 = vector.load %arg8[%c0_41, %c12] : memref<256x18xbf16, #tpu.memory_space<vmem>>, vector<256x2xbf16>
    tpu.vector_store %arg8[%c0_41, %c12], %37 {strides = array<i32>} : memref<256x18xbf16, #tpu.memory_space<vmem>>, vector<256x2xbf16>,
    %c2_42 = arith.constant 2 : index
    %c1_43 = arith.constant 1 : index
    %c0_44 = arith.constant 0 : index
    %39 = vector.load %arg7[%c2_42, %c1_43, %c0_44] : memref<18x18x2xbf16, #tpu.memory_space<vmem>>, vector<16x16x2xbf16>
    %40 = vector.shape_cast %39 : vector<16x16x2xbf16> to vector<256x2xbf16>
    %c0_45 = arith.constant 0 : index
    %c14 = arith.constant 14 : index
    %41 = vector.load %arg8[%c0_45, %c14] : memref<256x18xbf16, #tpu.memory_space<vmem>>, vector<256x2xbf16>
    tpu.vector_store %arg8[%c0_45, %c14], %40 {strides = array<i32>} : memref<256x18xbf16, #tpu.memory_space<vmem>>, vector<256x2xbf16>,
    %c2_46 = arith.constant 2 : index
    %c2_47 = arith.constant 2 : index
    %c0_48 = arith.constant 0 : index
    %42 = vector.load %arg7[%c2_46, %c2_47, %c0_48] : memref<18x18x2xbf16, #tpu.memory_space<vmem>>, vector<16x16x2xbf16>
    %43 = vector.shape_cast %42 : vector<16x16x2xbf16> to vector<256x2xbf16>
    %c0_49 = arith.constant 0 : index
    %c16 = arith.constant 16 : index
    %44 = vector.load %arg8[%c0_49, %c16] : memref<256x18xbf16, #tpu.memory_space<vmem>>, vector<256x2xbf16>
    tpu.vector_store %arg8[%c0_49, %c16], %43 {strides = array<i32>} : memref<256x18xbf16, #tpu.memory_space<vmem>>, vector<256x2xbf16>,
    %c0_50 = arith.constant 0 : index
    %c0_51 = arith.constant 0 : index
    %45 = vector.load %arg8[%c0_50, %c0_51] : memref<256x18xbf16, #tpu.memory_space<vmem>>, vector<256x18xbf16>
    %c0_52 = arith.constant 0 : index
    %c0_53 = arith.constant 0 : index
    %46 = vector.load %arg4[%c0_52, %c0_53] : memref<18x2xbf16, #tpu.memory_space<vmem>>, vector<18x2xbf16>
    %cst_54 = arith.constant dense<0.000000e+00> : vector<256x2xf32>
    %47 = tpu.matmul %45, %46, %cst_54 {dimension_numbers = #tpu.dot_dimension_numbers<[1], [0], [0], [1], [0, 0, 1, 1], [], []>} : vector<256x18xbf16>, vector<18x2xbf16>, vector<256x2xf32> -> vector<256x2xf32>
    %c0_55 = arith.constant 0 : index
    %c0_56 = arith.constant 0 : index
    %48 = vector.load %arg5[%c0_55, %c0_56] : memref<1x2xf32, #tpu.memory_space<vmem>>, vector<1x2xf32>
    %49 = vector.broadcast %48 : vector<1x2xf32> to vector<256x2xf32>
    %50 = arith.addf %47, %49 : vector<256x2xf32>
    %cst_57 = arith.constant 0.000000e+00 : f32
    %51 = vector.broadcast %cst_57 : f32 to vector<256x2xf32>
    %52 = arith.subf %51, %50 : vector<256x2xf32>
    %53 = math.exp %52 : vector<256x2xf32>
    %cst_58 = arith.constant 1.000000e+00 : f32
    %54 = vector.broadcast %cst_58 : f32 to vector<256x2xf32>
    %55 = arith.addf %54, %53 : vector<256x2xf32>
    %56 = tpu.reciprocal %55 {approx = true} : vector<256x2xf32> -> vector<256x2xf32>
    %57 = arith.mulf %50, %56 : vector<256x2xf32>
    %58 = vector.extract_strided_slice %0 {offsets = [0, 0], sizes = [256, 2], strides = [1, 1]} : vector<256x4xbf16> to vector<256x2xbf16>
    %59 = arith.extf %58 : vector<256x2xbf16> to vector<256x2xf32>
    %60 = arith.addf %57, %59 : vector<256x2xf32>
    %61 = arith.truncf %60 : vector<256x2xf32> to vector<256x2xbf16>
    %c0_59 = arith.constant 0 : index
    %c0_60 = arith.constant 0 : index
    %62 = vector.load %arg6[%c0_59, %c0_60] : memref<256x2xbf16, #tpu.memory_space<vmem>>, vector<256x2xbf16>
    tpu.vector_store %arg6[%c0_59, %c0_60], %61 {strides = array<i32>} : memref<256x2xbf16, #tpu.memory_space<vmem>>, vector<256x2xbf16>,
    return
  }
  func.func @transform_0(%arg0: i32) -> (i32, i32) {
    %c0_i32 = arith.constant 0 : i32
    %c0_i32_0 = arith.constant 0 : i32
    return %arg0, %c0_i32 : i32, i32
  }
  func.func @transform_1(%arg0: i32) -> (i32, i32) {
    %c0_i32 = arith.constant 0 : i32
    %c0_i32_0 = arith.constant 0 : i32
    %c0_i32_1 = arith.constant 0 : i32
    return %c0_i32, %c0_i32_0 : i32, i32
  }
  func.func @transform_2(%arg0: i32) -> (i32, i32) {
    %c0_i32 = arith.constant 0 : i32
    %c0_i32_0 = arith.constant 0 : i32
    %c0_i32_1 = arith.constant 0 : i32
    return %c0_i32, %c0_i32_0 : i32, i32
  }
  func.func @transform_3(%arg0: i32) -> (i32, i32) {
    %c0_i32 = arith.constant 0 : i32
    %c0_i32_0 = arith.constant 0 : i32
    %c0_i32_1 = arith.constant 0 : i32
    return %c0_i32, %c0_i32_0 : i32, i32
  }
  func.func @transform_4(%arg0: i32) -> (i32, i32) {
    %c0_i32 = arith.constant 0 : i32
    %c0_i32_0 = arith.constant 0 : i32
    %c0_i32_1 = arith.constant 0 : i32
    return %c0_i32, %c0_i32_0 : i32, i32
  }
  func.func @transform_5(%arg0: i32) -> (i32, i32) {
    %c0_i32 = arith.constant 0 : i32
    %c0_i32_0 = arith.constant 0 : i32
    return %arg0, %c0_i32 : i32, i32
  }
}

</mosaic_0001>

<llo_original>
// kernel: c3_forward.5
$region0: #{c3_forward.5}
  #allocation0 [shape = 'u32[]', space=smem, size = 0x4, offset = 0x4, fixed_abs, tag = 'smem constant byte address 0x4 - core index']
  #allocation1 [shape = 'u32[144,128]{1,0:T(1,128)}', space=vmem, size = 0x12000, scoped, tag = 'internal scratch']
  %s0 = inlined_call_operand.vmem [shape: bf16[512,2], index: 0, kind: input, shape index: {}]
  %s1 = inlined_call_operand.vmem [shape: bf16[512,4], index: 1, kind: input, shape index: {}]
  %s2 = inlined_call_operand.vmem [shape: bf16[2,4], index: 2, kind: input, shape index: {}]
  %s3 = inlined_call_operand.vmem [shape: bf16[4,4], index: 3, kind: input, shape index: {}]
  %s4 = inlined_call_operand.vmem [shape: f32[1,4], index: 4, kind: input, shape index: {}]
  %s5 = inlined_call_operand.vmem [shape: f32[512,4], index: 5, kind: output, shape index: {}]
  %s6 = sld [smem:[#allocation0]]
  $region53: #{c3_forward.5} parent=0
    _
  %s8 = ssub.s32 1, %s6
  %s9 = scalar_select 0, %s8, %s6
  loop: start=0, step=1, limit=4
  $region2: #{c3_forward.5} parent=0 // loop_pre_header
    _
  $region3: #{c3_forward.5} parent=0 // loop_header
    %s11 = sphi 0, %s15
    %p12 = scmp.ge.s32.totalorder %s11, 4
    %s21 = sphi 0, %s23
    %s24 = sphi 0, %s21
    %s25 = sphi 0, %s24
    %s41 = sphi 0, %s25
    %s47 = sphi 0, %s49
    %s50 = sphi 0, %s47
    %s51 = sphi 0, %s50
    %s67 = sphi 0, %s51
    %s71 = sphi 0, %s71
    %s73 = sphi 0, %s71
    %s74 = sphi 0, %s73
    %s88 = sphi 0, %s74
    %s92 = sphi 0, %s92
    %s94 = sphi 0, %s92
    %s95 = sphi 0, %s94
    %s109 = sphi 0, %s95
    %s113 = sphi 0, %s113
    %s115 = sphi 0, %s113
    %s116 = sphi 0, %s115
    %s130 = sphi 0, %s116
    %s136 = sphi 0, %s138
    %s139 = sphi 0, %s136
    %s140 = sphi 0, %s139
    %s156 = sphi 0, %s140
  $region4: #{c3_forward.5} parent=0 // loop_header_branch
    %14 = sbr.rel (%p12) target = $region8
  $region5: #{c3_forward.5} parent=0 // loop_body
    %s16 = ssub.s32 %s11, 1
    %s17 = ssub.s32 %s11, 2
    %s18 = sadd.s32 %s11, 1
    %s19 = ssub.s32 %s11, %s18
    %p20 = scmp.eq.s32.totalorder %s19, 0
    %s22 = sadd.s32 %s21, 1
    %s23 = scalar_select %p20, %s21, %s22
    %p26 = pneg %p20
    %p27 = scmp.eq.s32.totalorder %s11, 1
    %p28 = por %p26, %p27
    %p29 = scmp.ne.s32.totalorder %s21, %s24
    %p30 = scmp.eq.s32.totalorder %s11, 0
    %p31 = por %p29, %p30
    %p32 = scmp.ne.s32.totalorder %s21, %s24
    %p33 = scmp.eq.s32.totalorder %s16, 1
    %p34 = por %p32, %p33
    %p35 = scmp.ne.s32.totalorder %s24, %s25
    %p36 = scmp.eq.s32.totalorder %s16, 0
    %p37 = por %p35, %p36
    %p38 = scmp.ne.s32.totalorder %s24, %s25
    %p39 = scmp.eq.s32.totalorder %s17, 1
    %p40 = por %p38, %p39
    %p42 = scmp.ne.s32.totalorder %s25, %s41
    %p43 = scmp.eq.s32.totalorder %s17, 0
    %p44 = por %p42, %p43
    %s45 = ssub.s32 %s11, %s18
    %p46 = scmp.eq.s32.totalorder %s45, 0
    %s48 = sadd.s32 %s47, 1
    %s49 = scalar_select %p46, %s47, %s48
    %p52 = pneg %p46
    %p53 = scmp.eq.s32.totalorder %s11, 1
    %p54 = por %p52, %p53
    %p55 = scmp.ne.s32.totalorder %s47, %s50
    %p56 = scmp.eq.s32.totalorder %s11, 0
    %p57 = por %p55, %p56
    %p58 = scmp.ne.s32.totalorder %s47, %s50
    %p59 = scmp.eq.s32.totalorder %s16, 1
    %p60 = por %p58, %p59
    %p61 = scmp.ne.s32.totalorder %s50, %s51
    %p62 = scmp.eq.s32.totalorder %s16, 0
    %p63 = por %p61, %p62
    %p64 = scmp.ne.s32.totalorder %s50, %s51
    %p65 = scmp.eq.s32.totalorder %s17, 1
    %p66 = por %p64, %p65
    %p68 = scmp.ne.s32.totalorder %s51, %s67
    %p69 = scmp.eq.s32.totalorder %s17, 0
    %p70 = por %p68, %p69
    %s72 = sadd.s32 %s71, 1
    %p75 = scmp.eq.s32.totalorder %s11, 1
    %p76 = scmp.ne.s32.totalorder %s71, %s73
    %p77 = scmp.eq.s32.totalorder %s11, 0
    %p78 = por %p76, %p77
    %p79 = scmp.ne.s32.totalorder %s71, %s73
    %p80 = scmp.eq.s32.totalorder %s16, 1
    %p81 = por %p79, %p80
    %p82 = scmp.ne.s32.totalorder %s73, %s74
    %p83 = scmp.eq.s32.totalorder %s16, 0
    %p84 = por %p82, %p83
    %p85 = scmp.ne.s32.totalorder %s73, %s74
    %p86 = scmp.eq.s32.totalorder %s17, 1
    %p87 = por %p85, %p86
    %p89 = scmp.ne.s32.totalorder %s74, %s88
    %p90 = scmp.eq.s32.totalorder %s17, 0
    %p91 = por %p89, %p90
    %s93 = sadd.s32 %s92, 1
    %p96 = scmp.eq.s32.totalorder %s11, 1
    %p97 = scmp.ne.s32.totalorder %s92, %s94
    %p98 = scmp.eq.s32.totalorder %s11, 0
    %p99 = por %p97, %p98
    %p100 = scmp.ne.s32.totalorder %s92, %s94
    %p101 = scmp.eq.s32.totalorder %s16, 1
    %p102 = por %p100, %p101
    %p103 = scmp.ne.s32.totalorder %s94, %s95
    %p104 = scmp.eq.s32.totalorder %s16, 0
    %p105 = por %p103, %p104
    %p106 = scmp.ne.s32.totalorder %s94, %s95
    %p107 = scmp.eq.s32.totalorder %s17, 1
    %p108 = por %p106, %p107
    %p110 = scmp.ne.s32.totalorder %s95, %s109
    %p111 = scmp.eq.s32.totalorder %s17, 0
    %p112 = por %p110, %p111
    %s114 = sadd.s32 %s113, 1
    %p117 = scmp.eq.s32.totalorder %s11, 1
    %p118 = scmp.ne.s32.totalorder %s113, %s115
    %p119 = scmp.eq.s32.totalorder %s11, 0
    %p120 = por %p118, %p119
    %p121 = scmp.ne.s32.totalorder %s113, %s115
    %p122 = scmp.eq.s32.totalorder %s16, 1
    %p123 = por %p121, %p122
    %p124 = scmp.ne.s32.totalorder %s115, %s116
    %p125 = scmp.eq.s32.totalorder %s16, 0
    %p126 = por %p124, %p125
    %p127 = scmp.ne.s32.totalorder %s115, %s116
    %p128 = scmp.eq.s32.totalorder %s17, 1
    %p129 = por %p127, %p128
    %p131 = scmp.ne.s32.totalorder %s116, %s130
    %p132 = scmp.eq.s32.totalorder %s17, 0
    %p133 = por %p131, %p132
    %s134 = ssub.s32 %s11, %s18
    %p135 = scmp.eq.s32.totalorder %s134, 0
    %s137 = sadd.s32 %s136, 1
    %s138 = scalar_select %p135, %s136, %s137
    %p141 = pneg %p135
    %p142 = scmp.eq.s32.totalorder %s11, 1
    %p143 = por %p141, %p142
    %p144 = scmp.ne.s32.totalorder %s136, %s139
    %p145 = scmp.eq.s32.totalorder %s11, 0
    %p146 = por %p144, %p145
    %p147 = scmp.ne.s32.totalorder %s136, %s139
    %p148 = scmp.eq.s32.totalorder %s16, 1
    %p149 = por %p147, %p148
    %p150 = scmp.ne.s32.totalorder %s139, %s140
    %p151 = scmp.eq.s32.totalorder %s16, 0
    %p152 = por %p150, %p151
    %p153 = scmp.ne.s32.totalorder %s139, %s140
    %p154 = scmp.eq.s32.totalorder %s17, 1
    %p155 = por %p153, %p154
    %p157 = scmp.ne.s32.totalorder %s140, %s156
    %p158 = scmp.eq.s32.totalorder %s17, 0
    %p159 = por %p157, %p158
    %p160 = scmp.le.s32.totalorder 1, %s11
    %p161 = scmp.lt.s32.totalorder %s11, 3
    %p162 = pnand %p160, %p161
    %p163 = pneg %p162
    // Predicated region
    $region9: #{c3_forward.5} parent=5 // pred_check
      _
    $region10: #{c3_forward.5} parent=5 // pred_check_branch
      %165 = sbr.rel (%p162) target = $region12
    $region11: #{c3_forward.5} parent=5 // pred_region
      %s166 = ssub.s32 %s11, 1
      // Predicated region
      $region13: #{c3_forward.5} parent=11 // pred_check
        %p167 = pneg %p84
      $region14: #{c3_forward.5} parent=11 // pred_check_branch
        %169 = sbr.rel (%p167) target = $region16
      $region15: #{c3_forward.5} parent=11 // pred_region
        _
      $region16: #{c3_forward.5} parent=11 // pred_fallthru
        _
      // Predicated region
      $region17: #{c3_forward.5} parent=11 // pred_check
        %p170 = pneg %p105
      $region18: #{c3_forward.5} parent=11 // pred_check_branch
        %172 = sbr.rel (%p170) target = $region20
      $region19: #{c3_forward.5} parent=11 // pred_region
        _
      $region20: #{c3_forward.5} parent=11 // pred_fallthru
        _
      // Predicated region
      $region21: #{c3_forward.5} parent=11 // pred_check
        %p173 = pneg %p126
      $region22: #{c3_forward.5} parent=11 // pred_check_branch
        %175 = sbr.rel (%p173) target = $region24
      $region23: #{c3_forward.5} parent=11 // pred_region
        _
      $region24: #{c3_forward.5} parent=11 // pred_fallthru
        _
    $region12: #{c3_forward.5} parent=5 // pred_fallthru
      _
    %p176 = scmp.lt.s32.totalorder %s11, 2
    // Predicated region
    $region25: #{c3_forward.5} parent=5 // pred_check
      %p177 = pneg %p176
    $region26: #{c3_forward.5} parent=5 // pred_check_branch
      %179 = sbr.rel (%p177) target = $region28
    $region27: #{c3_forward.5} parent=5 // pred_region
      // Predicated region
      $region29: #{c3_forward.5} parent=27 // pred_check
        %p180 = pneg %p31
      $region30: #{c3_forward.5} parent=27 // pred_check_branch
        %182 = sbr.rel (%p180) target = $region32
      $region31: #{c3_forward.5} parent=27 // pred_region
        %s183 = smul.u32 32, %s11
        %p184 = scmp.lt.s32.totalorder %s183, 63
        %s185 = scalar_select %p184, %s183, 63
        %s186 = smul.addr %s185, 4
        %s187 = scalar_lea.vmem %s0, %s186
        %s188 = smul.u32 32, %s11
      $region32: #{c3_forward.5} parent=27 // pred_fallthru
        _
      // Predicated region
      $region33: #{c3_forward.5} parent=27 // pred_check
        %p189 = pneg %p57
      $region34: #{c3_forward.5} parent=27 // pred_check_branch
        %191 = sbr.rel (%p189) target = $region36
      $region35: #{c3_forward.5} parent=27 // pred_region
        %s192 = smul.u32 32, %s11
        %p193 = scmp.lt.s32.totalorder %s192, 63
        %s194 = scalar_select %p193, %s192, 63
        %s195 = smul.addr %s194, 4
        %s196 = scalar_lea.vmem %s1, %s195
        %s197 = smul.u32 32, %s11
      $region36: #{c3_forward.5} parent=27 // pred_fallthru
        _
    $region28: #{c3_forward.5} parent=5 // pred_fallthru
      _
    %p198 = scmp.le.s32.totalorder 1, %s11
    %p199 = scmp.lt.s32.totalorder %s11, 3
    %p200 = pnand %p198, %p199
    %p201 = pneg %p200
    // Predicated region
    $region37: #{c3_forward.5} parent=5 // pred_check
      _
    $region38: #{c3_forward.5} parent=5 // pred_check_branch
      %203 = sbr.rel (%p200) target = $region40
    $region39: #{c3_forward.5} parent=5 // pred_region
      %s204 = ssub.s32 %s11, 1
      %s205 = smul.u32 32, %s16
      %p206 = scmp.lt.s32.totalorder %s205, 63
      %s207 = scalar_select %p206, %s205, 63
      %s208 = smul.addr %s207, 4
      %s209 = scalar_lea.vmem %s0, %s208
      %p210 = pneg %p37
      %p211 = pneg %p34
      %s212 = smul.u32 32, %s16
      %p213 = scmp.lt.s32.totalorder %s212, 63
      %s214 = scalar_select %p213, %s212, 63
      %s215 = smul.addr %s214, 4
      %s216 = scalar_lea.vmem %s1, %s215
      %p217 = pneg %p63
      %p218 = pneg %p60
      %p219 = pneg %p84
      %p220 = pneg %p81
      %p221 = pneg %p105
      %p222 = pneg %p102
      %p223 = pneg %p126
      %p224 = pneg %p123
      %p225 = pneg %p152
      %p226 = pneg %p149
      %s227 = smul.u32 32, %s16
      %p228 = scmp.lt.s32.totalorder %s227, 63
      %s229 = scalar_select %p228, %s227, 63
      %s230 = smul.addr %s229, 8
      %s231 = scalar_lea.vmem %s5, %s230
      %s232 = smul.u32 32, %s16
      %p233 = scmp.lt.s32.totalorder %s232, 63
      %s234 = scalar_select %p233, %s232, 63
      %s235 = smul.addr %s234, 4
      %s236 = scalar_lea.vmem %s0, %s235
      %s237 = smul.u32 32, %s16
      %s238 = smul.u32 32, %s16
      %p239 = scmp.lt.s32.totalorder %s238, 63
      %s240 = scalar_select %p239, %s238, 63
      %s241 = smul.addr %s240, 4
      %s242 = scalar_lea.vmem %s1, %s241
      %s243 = smul.u32 32, %s16
      %s244 = smul.u32 32, %s16
      %p245 = scmp.lt.s32.totalorder %s244, 63
      %s246 = scalar_select %p245, %s244, 63
      %s247 = smul.addr %s246, 8
      %s248 = scalar_lea.vmem %s5, %s247
      %s249 = smul.u32 32, %s16
      %v251 = vld [vmem:[%s236] sm:$0xf]
      %v252 = vld [vmem:[%s236 + $0x4] sm:$0xf]
      %v253 = vld [vmem:[%s236 + $0x8] sm:$0xf]
      %v254 = vld [vmem:[%s236 + $0xc] sm:$0xf]
      %v255 = vld [vmem:[%s236 + $0x10] sm:$0xf]
      %v256 = vld [vmem:[%s236 + $0x14] sm:$0xf]
      %v257 = vld [vmem:[%s236 + $0x18] sm:$0xf]
      %v258 = vld [vmem:[%s236 + $0x1c] sm:$0xf]
      %v259 = vld [vmem:[%s236 + $0x20] sm:$0xf]
      %v260 = vld [vmem:[%s236 + $0x24] sm:$0xf]
      %v261 = vld [vmem:[%s236 + $0x28] sm:$0xf]
      %v262 = vld [vmem:[%s236 + $0x2c] sm:$0xf]
      %v263 = vld [vmem:[%s236 + $0x30] sm:$0xf]
      %v264 = vld [vmem:[%s236 + $0x34] sm:$0xf]
      %v265 = vld [vmem:[%s236 + $0x38] sm:$0xf]
      %v266 = vld [vmem:[%s236 + $0x3c] sm:$0xf]
      %v267 = vld [vmem:[%s236 + $0x40] sm:$0xf]
      %v268 = vld [vmem:[%s236 + $0x44] sm:$0xf]
      %v269 = vld [vmem:[%s236 + $0x48] sm:$0xf]
      %v270 = vld [vmem:[%s236 + $0x4c] sm:$0xf]
      %v271 = vld [vmem:[%s236 + $0x50] sm:$0xf]
      %v272 = vld [vmem:[%s236 + $0x54] sm:$0xf]
      %v273 = vld [vmem:[%s236 + $0x58] sm:$0xf]
      %v274 = vld [vmem:[%s236 + $0x5c] sm:$0xf]
      %v275 = vld [vmem:[%s236 + $0x60] sm:$0xf]
      %v276 = vld [vmem:[%s236 + $0x64] sm:$0xf]
      %v277 = vld [vmem:[%s236 + $0x68] sm:$0xf]
      %v278 = vld [vmem:[%s236 + $0x6c] sm:$0xf]
      %v279 = vld [vmem:[%s236 + $0x70] sm:$0xf]
      %v280 = vld [vmem:[%s236 + $0x74] sm:$0xf]
      %v281 = vld [vmem:[%s236 + $0x78] sm:$0xf]
      %v282 = vld [vmem:[%s236 + $0x7c] sm:$0xf]
      %v283 = vld [vmem:[%s2] sm:$0x1]
      %v284 = vld [vmem:[%s242] sm:$0xf]
      %v285 = vld [vmem:[%s242 + $0x4] sm:$0xf]
      %v286 = vld [vmem:[%s242 + $0x8] sm:$0xf]
      %v287 = vld [vmem:[%s242 + $0xc] sm:$0xf]
      %v288 = vld [vmem:[%s242 + $0x10] sm:$0xf]
      %v289 = vld [vmem:[%s242 + $0x14] sm:$0xf]
      %v290 = vld [vmem:[%s242 + $0x18] sm:$0xf]
      %v291 = vld [vmem:[%s242 + $0x1c] sm:$0xf]
      %v292 = vld [vmem:[%s242 + $0x20] sm:$0xf]
      %v293 = vld [vmem:[%s242 + $0x24] sm:$0xf]
      %v294 = vld [vmem:[%s242 + $0x28] sm:$0xf]
      %v295 = vld [vmem:[%s242 + $0x2c] sm:$0xf]
      %v296 = vld [vmem:[%s242 + $0x30] sm:$0xf]
      %v297 = vld [vmem:[%s242 + $0x34] sm:$0xf]
      %v298 = vld [vmem:[%s242 + $0x38] sm:$0xf]
      %v299 = vld [vmem:[%s242 + $0x3c] sm:$0xf]
      %v300 = vld [vmem:[%s242 + $0x40] sm:$0xf]
      %v301 = vld [vmem:[%s242 + $0x44] sm:$0xf]
      %v302 = vld [vmem:[%s242 + $0x48] sm:$0xf]
      %v303 = vld [vmem:[%s242 + $0x4c] sm:$0xf]
      %v304 = vld [vmem:[%s242 + $0x50] sm:$0xf]
      %v305 = vld [vmem:[%s242 + $0x54] sm:$0xf]
      %v306 = vld [vmem:[%s242 + $0x58] sm:$0xf]
      %v307 = vld [vmem:[%s242 + $0x5c] sm:$0xf]
      %v308 = vld [vmem:[%s242 + $0x60] sm:$0xf]
      %v309 = vld [vmem:[%s242 + $0x64] sm:$0xf]
      %v310 = vld [vmem:[%s242 + $0x68] sm:$0xf]
      %v311 = vld [vmem:[%s242 + $0x6c] sm:$0xf]
      %v312 = vld [vmem:[%s242 + $0x70] sm:$0xf]
      %v313 = vld [vmem:[%s242 + $0x74] sm:$0xf]
      %v314 = vld [vmem:[%s242 + $0x78] sm:$0xf]
      %v315 = vld [vmem:[%s242 + $0x7c] sm:$0xf]
      %v316 = vld [vmem:[%s3] sm:$0x3]
      %v349 = vunpack.c.l.b16 %v284
      %v350 = vunpack.c.l.b16 %v285
      %v351 = vunpack.c.l.b16 %v286
      %v352 = vunpack.c.l.b16 %v287
      %v353 = vunpack.c.l.b16 %v288
      %v354 = vunpack.c.l.b16 %v289
      %v355 = vunpack.c.l.b16 %v290
      %v356 = vunpack.c.l.b16 %v291
      %v357 = vunpack.c.l.b16 %v292
      %v358 = vunpack.c.l.b16 %v293
      %v359 = vunpack.c.l.b16 %v294
      %v360 = vunpack.c.l.b16 %v295
      %v361 = vunpack.c.l.b16 %v296
      %v362 = vunpack.c.l.b16 %v297
      %v363 = vunpack.c.l.b16 %v298
      %v364 = vunpack.c.l.b16 %v299
      %v365 = vunpack.c.l.b16 %v300
      %v366 = vunpack.c.l.b16 %v301
      %v367 = vunpack.c.l.b16 %v302
      %v368 = vunpack.c.l.b16 %v303
      %v369 = vunpack.c.l.b16 %v304
      %v370 = vunpack.c.l.b16 %v305
      %v371 = vunpack.c.l.b16 %v306
      %v372 = vunpack.c.l.b16 %v307
      %v373 = vunpack.c.l.b16 %v308
      %v374 = vunpack.c.l.b16 %v309
      %v375 = vunpack.c.l.b16 %v310
      %v376 = vunpack.c.l.b16 %v311
      %v377 = vunpack.c.l.b16 %v312
      %v378 = vunpack.c.l.b16 %v313
      %v379 = vunpack.c.l.b16 %v314
      %v380 = vunpack.c.l.b16 %v315
      %v381 = vpack.c.b16 %v350, %v349
      %v382 = vpack.c.b16 %v352, %v351
      %v383 = vpack.c.b16 %v354, %v353
      %v384 = vpack.c.b16 %v356, %v355
      %v385 = vpack.c.b16 %v358, %v357
      %v386 = vpack.c.b16 %v360, %v359
      %v387 = vpack.c.b16 %v362, %v361
      %v388 = vpack.c.b16 %v364, %v363
      %v389 = vpack.c.b16 %v366, %v365
      %v390 = vpack.c.b16 %v368, %v367
      %v391 = vpack.c.b16 %v370, %v369
      %v392 = vpack.c.b16 %v372, %v371
      %v393 = vpack.c.b16 %v374, %v373
      %v394 = vpack.c.b16 %v376, %v375
      %v395 = vpack.c.b16 %v378, %v377
      %v396 = vpack.c.b16 %v380, %v379
      %vm397 = vcmask 31744
      %v399 = vsel %vm397, %v381, 0
      %v402 = vsel %vm397, %v382, 0
      %v405 = vsel %vm397, %v383, 0
      %v408 = vsel %vm397, %v384, 0
      %v411 = vsel %vm397, %v385, 0
      %v414 = vsel %vm397, %v386, 0
      %v417 = vsel %vm397, %v387, 0
      %v420 = vsel %vm397, %v388, 0
      %v423 = vsel %vm397, %v389, 0
      %v426 = vsel %vm397, %v390, 0
      %v429 = vsel %vm397, %v391, 0
      %v432 = vsel %vm397, %v392, 0
      %v435 = vsel %vm397, %v393, 0
      %v438 = vsel %vm397, %v394, 0
      %v441 = vsel %vm397, %v395, 0
      %v444 = vsel %vm397, %v396, 0
      %vm446 = vcmask 1041408
      %v448 = vsel %vm446, %v316, 0
      %450 = vmatprep.subr.bf16.mxu0 0
      %451 = vmatpush1.bf16.msra.mxu0 %v448
      %452 = vmatprep.subr.bf16.mxu0 0
      %453 = vmatpush1.bf16.msra.mxu0 0
      %454 = vmatprep.subr.bf16.mxu0 0
      %455 = vmatpush1.bf16.msra.mxu0 0
      %456 = vmatprep.subr.bf16.mxu0 0
      %457 = vmatpush1.bf16.msra.mxu0 0
      %458 = vmatprep.subr.bf16.mxu0 0
      %459 = vmatpush1.bf16.msra.mxu0 0
      %460 = vmatprep.subr.bf16.mxu0 0
      %461 = vmatpush1.bf16.msra.mxu0 0
      %462 = vmatprep.subr.bf16.mxu0 0
      %463 = vmatpush1.bf16.msra.mxu0 0
      %464 = vmatprep.subr.bf16.mxu0 0
      %465 = vmatpush1.bf16.msra.mxu0 0
      %466 = vmatprep.subr.bf16.mxu0 0
      %467 = vmatpush1.bf16.msra.mxu0 0
      %468 = vmatprep.subr.bf16.mxu0 0
      %469 = vmatpush1.bf16.msra.mxu0 0
      %470 = vmatprep.subr.bf16.mxu0 0
      %471 = vmatpush1.bf16.msra.mxu0 0
      %472 = vmatprep.subr.bf16.mxu0 0
      %473 = vmatpush1.bf16.msra.mxu0 0
      %474 = vmatprep.subr.bf16.mxu0 0
      %475 = vmatpush1.bf16.msra.mxu0 0
      %476 = vmatprep.subr.bf16.mxu0 0
      %477 = vmatpush1.bf16.msra.mxu0 0
      %478 = vmatprep.subr.bf16.mxu0 0
      %479 = vmatpush1.bf16.msra.mxu0 0
      %480 = vmatprep.subr.bf16.mxu0 0
      %481 = vmatpush1.bf16.msra.mxu0 0
      %482 = vmatprep.mubr.bf16.mxu0 0
      %483 = vmatmul.mubr.bf16.gmra.mrb[0].mxu0 %v399
      %v484 = vpop.f32.mrb[0].mxu0
      %v485 = vadd.f32 0.0, %v484
      %v486 = vpop.f32.mrb[0].mxu0
      %v487 = vpop.f32.mrb[0].mxu0
      %v488 = vadd.f32 0.0, %v487
      %v489 = vpop.f32.mrb[0].mxu0
      %490 = vmatprep.mubr.bf16.mxu0 0
      %491 = vmatmul.mubr.bf16.gmra.mrb[0].mxu0 %v402
      %v492 = vpop.f32.mrb[0].mxu0
      %v493 = vadd.f32 0.0, %v492
      %v494 = vpop.f32.mrb[0].mxu0
      %v495 = vpop.f32.mrb[0].mxu0
      %v496 = vadd.f32 0.0, %v495
      %v497 = vpop.f32.mrb[0].mxu0
      %498 = vmatprep.mubr.bf16.mxu0 0
      %499 = vmatmul.mubr.bf16.gmra.mrb[0].mxu0 %v405
      %v500 = vpop.f32.mrb[0].mxu0
      %v501 = vadd.f32 0.0, %v500
      %v502 = vpop.f32.mrb[0].mxu0
      %v503 = vpop.f32.mrb[0].mxu0
      %v504 = vadd.f32 0.0, %v503
      %v505 = vpop.f32.mrb[0].mxu0
      %506 = vmatprep.mubr.bf16.mxu0 0
      %507 = vmatmul.mubr.bf16.gmra.mrb[0].mxu0 %v408
      %v508 = vpop.f32.mrb[0].mxu0
      %v509 = vadd.f32 0.0, %v508
      %v510 = vpop.f32.mrb[0].mxu0
      %v511 = vpop.f32.mrb[0].mxu0
      %v512 = vadd.f32 0.0, %v511
      %v513 = vpop.f32.mrb[0].mxu0
      %514 = vmatprep.mubr.bf16.mxu0 0
      %515 = vmatmul.mubr.bf16.gmra.mrb[0].mxu0 %v411
      %v516 = vpop.f32.mrb[0].mxu0
      %v517 = vadd.f32 0.0, %v516
      %v518 = vpop.f32.mrb[0].mxu0
      %v519 = vpop.f32.mrb[0].mxu0
      %v520 = vadd.f32 0.0, %v519
      %v521 = vpop.f32.mrb[0].mxu0
      %522 = vmatprep.mubr.bf16.mxu0 0
      %523 = vmatmul.mubr.bf16.gmra.mrb[0].mxu0 %v414
      %v524 = vpop.f32.mrb[0].mxu0
      %v525 = vadd.f32 0.0, %v524
      %v526 = vpop.f32.mrb[0].mxu0
      %v527 = vpop.f32.mrb[0].mxu0
      %v528 = vadd.f32 0.0, %v527
      %v529 = vpop.f32.mrb[0].mxu0
      %530 = vmatprep.mubr.bf16.mxu0 0
      %531 = vmatmul.mubr.bf16.gmra.mrb[0].mxu0 %v417
      %v532 = vpop.f32.mrb[0].mxu0
      %v533 = vadd.f32 0.0, %v532
      %v534 = vpop.f32.mrb[0].mxu0
      %v535 = vpop.f32.mrb[0].mxu0
      %v536 = vadd.f32 0.0, %v535
      %v537 = vpop.f32.mrb[0].mxu0
      %538 = vmatprep.mubr.bf16.mxu0 0
      %539 = vmatmul.mubr.bf16.gmra.mrb[0].mxu0 %v420
      %v540 = vpop.f32.mrb[0].mxu0
      %v541 = vadd.f32 0.0, %v540
      %v542 = vpop.f32.mrb[0].mxu0
      %v543 = vpop.f32.mrb[0].mxu0
      %v544 = vadd.f32 0.0, %v543
      %v545 = vpop.f32.mrb[0].mxu0
      %546 = vmatprep.mubr.bf16.mxu0 0
      %547 = vmatmul.mubr.bf16.gmra.mrb[0].mxu0 %v423
      %v548 = vpop.f32.mrb[0].mxu0
      %v549 = vadd.f32 0.0, %v548
      %v550 = vpop.f32.mrb[0].mxu0
      %v551 = vpop.f32.mrb[0].mxu0
      %v552 = vadd.f32 0.0, %v551
      %v553 = vpop.f32.mrb[0].mxu0
      %554 = vmatprep.mubr.bf16.mxu0 0
      %555 = vmatmul.mubr.bf16.gmra.mrb[0].mxu0 %v426
      %v556 = vpop.f32.mrb[0].mxu0
      %v557 = vadd.f32 0.0, %v556
      %v558 = vpop.f32.mrb[0].mxu0
      %v559 = vpop.f32.mrb[0].mxu0
      %v560 = vadd.f32 0.0, %v559
      %v561 = vpop.f32.mrb[0].mxu0
      %562 = vmatprep.mubr.bf16.mxu0 0
      %563 = vmatmul.mubr.bf16.gmra.mrb[0].mxu0 %v429
      %v564 = vpop.f32.mrb[0].mxu0
      %v565 = vadd.f32 0.0, %v564
      %v566 = vpop.f32.mrb[0].mxu0
      %v567 = vpop.f32.mrb[0].mxu0
      %v568 = vadd.f32 0.0, %v567
      %v569 = vpop.f32.mrb[0].mxu0
      %570 = vmatprep.mubr.bf16.mxu0 0
      %571 = vmatmul.mubr.bf16.gmra.mrb[0].mxu0 %v432
      %v572 = vpop.f32.mrb[0].mxu0
      %v573 = vadd.f32 0.0, %v572
      %v574 = vpop.f32.mrb[0].mxu0
      %v575 = vpop.f32.mrb[0].mxu0
      %v576 = vadd.f32 0.0, %v575
      %v577 = vpop.f32.mrb[0].mxu0
      %578 = vmatprep.mubr.bf16.mxu0 0
      %579 = vmatmul.mubr.bf16.gmra.mrb[0].mxu0 %v435
      %v580 = vpop.f32.mrb[0].mxu0
      %v581 = vadd.f32 0.0, %v580
      %v582 = vpop.f32.mrb[0].mxu0
      %v583 = vpop.f32.mrb[0].mxu0
      %v584 = vadd.f32 0.0, %v583
      %v585 = vpop.f32.mrb[0].mxu0
      %586 = vmatprep.mubr.bf16.mxu0 0
      %587 = vmatmul.mubr.bf16.gmra.mrb[0].mxu0 %v438
      %v588 = vpop.f32.mrb[0].mxu0
      %v589 = vadd.f32 0.0, %v588
      %v590 = vpop.f32.mrb[0].mxu0
      %v591 = vpop.f32.mrb[0].mxu0
      %v592 = vadd.f32 0.0, %v591
      %v593 = vpop.f32.mrb[0].mxu0
      %594 = vmatprep.mubr.bf16.mxu0 0
      %595 = vmatmul.mubr.bf16.gmra.mrb[0].mxu0 %v441
      %v596 = vpop.f32.mrb[0].mxu0
      %v597 = vadd.f32 0.0, %v596
      %v598 = vpop.f32.mrb[0].mxu0
      %v599 = vpop.f32.mrb[0].mxu0
      %v600 = vadd.f32 0.0, %v599
      %v601 = vpop.f32.mrb[0].mxu0
      %602 = vmatprep.mubr.bf16.mxu0 0
      %603 = vmatmul.mubr.bf16.gmra.mrb[0].mxu0 %v444
      %v604 = vpop.f32.mrb[0].mxu0
      %v605 = vadd.f32 0.0, %v604
      %v606 = vpop.f32.mrb[0].mxu0
      %v607 = vpop.f32.mrb[0].mxu0
      %v608 = vadd.f32 0.0, %v607
      %v609 = vpop.f32.mrb[0].mxu0
      %610 = vdwg.mxu0
      %v643 = vunpack.c.l.b16 %v251
      %v644 = vunpack.c.l.b16 %v252
      %v645 = vunpack.c.l.b16 %v253
      %v646 = vunpack.c.l.b16 %v254
      %v647 = vunpack.c.l.b16 %v255
      %v648 = vunpack.c.l.b16 %v256
      %v649 = vunpack.c.l.b16 %v257
      %v650 = vunpack.c.l.b16 %v258
      %v651 = vunpack.c.l.b16 %v259
      %v652 = vunpack.c.l.b16 %v260
      %v653 = vunpack.c.l.b16 %v261
      %v654 = vunpack.c.l.b16 %v262
      %v655 = vunpack.c.l.b16 %v263
      %v656 = vunpack.c.l.b16 %v264
      %v657 = vunpack.c.l.b16 %v265
      %v658 = vunpack.c.l.b16 %v266
      %v659 = vunpack.c.l.b16 %v267
      %v660 = vunpack.c.l.b16 %v268
      %v661 = vunpack.c.l.b16 %v269
      %v662 = vunpack.c.l.b16 %v270
      %v663 = vunpack.c.l.b16 %v271
      %v664 = vunpack.c.l.b16 %v272
      %v665 = vunpack.c.l.b16 %v273
      %v666 = vunpack.c.l.b16 %v274
      %v667 = vunpack.c.l.b16 %v275
      %v668 = vunpack.c.l.b16 %v276
      %v669 = vunpack.c.l.b16 %v277
      %v670 = vunpack.c.l.b16 %v278
      %v671 = vunpack.c.l.b16 %v279
      %v672 = vunpack.c.l.b16 %v280
      %v673 = vunpack.c.l.b16 %v281
      %v674 = vunpack.c.l.b16 %v282
      %v675 = vpack.c.b16 %v644, %v643
      %v676 = vpack.c.b16 %v646, %v645
      %v677 = vpack.c.b16 %v648, %v647
      %v678 = vpack.c.b16 %v650, %v649
      %v679 = vpack.c.b16 %v652, %v651
      %v680 = vpack.c.b16 %v654, %v653
      %v681 = vpack.c.b16 %v656, %v655
      %v682 = vpack.c.b16 %v658, %v657
      %v683 = vpack.c.b16 %v660, %v659
      %v684 = vpack.c.b16 %v662, %v661
      %v685 = vpack.c.b16 %v664, %v663
      %v686 = vpack.c.b16 %v666, %v665
      %v687 = vpack.c.b16 %v668, %v667
      %v688 = vpack.c.b16 %v670, %v669
      %v689 = vpack.c.b16 %v672, %v671
      %v690 = vpack.c.b16 %v674, %v673
      %vm691 = vcmask 15360
      %v693 = vsel %vm691, %v675, 0
      %v696 = vsel %vm691, %v676, 0
      %v699 = vsel %vm691, %v677, 0
      %v702 = vsel %vm691, %v678, 0
      %v705 = vsel %vm691, %v679, 0
      %v708 = vsel %vm691, %v680, 0
      %v711 = vsel %vm691, %v681, 0
      %v714 = vsel %vm691, %v682, 0
      %v717 = vsel %vm691, %v683, 0
      %v720 = vsel %vm691, %v684, 0
      %v723 = vsel %vm691, %v685, 0
      %v726 = vsel %vm691, %v686, 0
      %v729 = vsel %vm691, %v687, 0
      %v732 = vsel %vm691, %v688, 0
      %v735 = vsel %vm691, %v689, 0
      %v738 = vsel %vm691, %v690, 0
      %vm740 = vcmask 1040384
      %v742 = vsel %vm740, %v283, 0
      %744 = vmatprep.subr.bf16.mxu0 0
      %745 = vmatpush1.bf16.msra.mxu0 %v742
      %746 = vmatprep.subr.bf16.mxu0 0
      %747 = vmatpush1.bf16.msra.mxu0 0
      %748 = vmatprep.subr.bf16.mxu0 0
      %749 = vmatpush1.bf16.msra.mxu0 0
      %750 = vmatprep.subr.bf16.mxu0 0
      %751 = vmatpush1.bf16.msra.mxu0 0
      %752 = vmatprep.subr.bf16.mxu0 0
      %753 = vmatpush1.bf16.msra.mxu0 0
      %754 = vmatprep.subr.bf16.mxu0 0
      %755 = vmatpush1.bf16.msra.mxu0 0
      %756 = vmatprep.subr.bf16.mxu0 0
      %757 = vmatpush1.bf16.msra.mxu0 0
      %758 = vmatprep.subr.bf16.mxu0 0
      %759 = vmatpush1.bf16.msra.mxu0 0
      %760 = vmatprep.subr.bf16.mxu0 0
      %761 = vmatpush1.bf16.msra.mxu0 0
      %762 = vmatprep.subr.bf16.mxu0 0
      %763 = vmatpush1.bf16.msra.mxu0 0
      %764 = vmatprep.subr.bf16.mxu0 0
      %765 = vmatpush1.bf16.msra.mxu0 0
      %766 = vmatprep.subr.bf16.mxu0 0
      %767 = vmatpush1.bf16.msra.mxu0 0
      %768 = vmatprep.subr.bf16.mxu0 0
      %769 = vmatpush1.bf16.msra.mxu0 0
      %770 = vmatprep.subr.bf16.mxu0 0
      %771 = vmatpush1.bf16.msra.mxu0 0
      %772 = vmatprep.subr.bf16.mxu0 0
      %773 = vmatpush1.bf16.msra.mxu0 0
      %774 = vmatprep.subr.bf16.mxu0 0
      %775 = vmatpush1.bf16.msra.mxu0 0
      %776 = vmatprep.mubr.bf16.mxu0 0
      %777 = vmatmul.mubr.bf16.gmra.mrb[0].mxu0 %v693
      %v778 = vpop.f32.mrb[0].mxu0
      %v779 = vadd.f32 %v485, %v778
      %v780 = vpop.f32.mrb[0].mxu0
      %v781 = vpop.f32.mrb[0].mxu0
      %v782 = vadd.f32 %v488, %v781
      %v783 = vpop.f32.mrb[0].mxu0
      %784 = vmatprep.mubr.bf16.mxu0 0
      %785 = vmatmul.mubr.bf16.gmra.mrb[0].mxu0 %v696
      %v786 = vpop.f32.mrb[0].mxu0
      %v787 = vadd.f32 %v493, %v786
      %v788 = vpop.f32.mrb[0].mxu0
      %v789 = vpop.f32.mrb[0].mxu0
      %v790 = vadd.f32 %v496, %v789
      %v791 = vpop.f32.mrb[0].mxu0
      %792 = vmatprep.mubr.bf16.mxu0 0
      %793 = vmatmul.mubr.bf16.gmra.mrb[0].mxu0 %v699
      %v794 = vpop.f32.mrb[0].mxu0
      %v795 = vadd.f32 %v501, %v794
      %v796 = vpop.f32.mrb[0].mxu0
      %v797 = vpop.f32.mrb[0].mxu0
      %v798 = vadd.f32 %v504, %v797
      %v799 = vpop.f32.mrb[0].mxu0
      %800 = vmatprep.mubr.bf16.mxu0 0
      %801 = vmatmul.mubr.bf16.gmra.mrb[0].mxu0 %v702
      %v802 = vpop.f32.mrb[0].mxu0
      %v803 = vadd.f32 %v509, %v802
      %v804 = vpop.f32.mrb[0].mxu0
      %v805 = vpop.f32.mrb[0].mxu0
      %v806 = vadd.f32 %v512, %v805
      %v807 = vpop.f32.mrb[0].mxu0
      %808 = vmatprep.mubr.bf16.mxu0 0
      %809 = vmatmul.mubr.bf16.gmra.mrb[0].mxu0 %v705
      %v810 = vpop.f32.mrb[0].mxu0
      %v811 = vadd.f32 %v517, %v810
      %v812 = vpop.f32.mrb[0].mxu0
      %v813 = vpop.f32.mrb[0].mxu0
      %v814 = vadd.f32 %v520, %v813
      %v815 = vpop.f32.mrb[0].mxu0
      %816 = vmatprep.mubr.bf16.mxu0 0
      %817 = vmatmul.mubr.bf16.gmra.mrb[0].mxu0 %v708
      %v818 = vpop.f32.mrb[0].mxu0
      %v819 = vadd.f32 %v525, %v818
      %v820 = vpop.f32.mrb[0].mxu0
      %v821 = vpop.f32.mrb[0].mxu0
      %v822 = vadd.f32 %v528, %v821
      %v823 = vpop.f32.mrb[0].mxu0
      %824 = vmatprep.mubr.bf16.mxu0 0
      %825 = vmatmul.mubr.bf16.gmra.mrb[0].mxu0 %v711
      %v826 = vpop.f32.mrb[0].mxu0
      %v827 = vadd.f32 %v533, %v826
      %v828 = vpop.f32.mrb[0].mxu0
      %v829 = vpop.f32.mrb[0].mxu0
      %v830 = vadd.f32 %v536, %v829
      %v831 = vpop.f32.mrb[0].mxu0
      %832 = vmatprep.mubr.bf16.mxu0 0
      %833 = vmatmul.mubr.bf16.gmra.mrb[0].mxu0 %v714
      %v834 = vpop.f32.mrb[0].mxu0
      %v835 = vadd.f32 %v541, %v834
      %v836 = vpop.f32.mrb[0].mxu0
      %v837 = vpop.f32.mrb[0].mxu0
      %v838 = vadd.f32 %v544, %v837
      %v839 = vpop.f32.mrb[0].mxu0
      %840 = vmatprep.mubr.bf16.mxu0 0
      %841 = vmatmul.mubr.bf16.gmra.mrb[0].mxu0 %v717
      %v842 = vpop.f32.mrb[0].mxu0
      %v843 = vadd.f32 %v549, %v842
      %v844 = vpop.f32.mrb[0].mxu0
      %v845 = vpop.f32.mrb[0].mxu0
      %v846 = vadd.f32 %v552, %v845
      %v847 = vpop.f32.mrb[0].mxu0
      %848 = vmatprep.mubr.bf16.mxu0 0
      %849 = vmatmul.mubr.bf16.gmra.mrb[0].mxu0 %v720
      %v850 = vpop.f32.mrb[0].mxu0
      %v851 = vadd.f32 %v557, %v850
      %v852 = vpop.f32.mrb[0].mxu0
      %v853 = vpop.f32.mrb[0].mxu0
      %v854 = vadd.f32 %v560, %v853
      %v855 = vpop.f32.mrb[0].mxu0
      %856 = vmatprep.mubr.bf16.mxu0 0
      %857 = vmatmul.mubr.bf16.gmra.mrb[0].mxu0 %v723
      %v858 = vpop.f32.mrb[0].mxu0
      %v859 = vadd.f32 %v565, %v858
      %v860 = vpop.f32.mrb[0].mxu0
      %v861 = vpop.f32.mrb[0].mxu0
      %v862 = vadd.f32 %v568, %v861
      %v863 = vpop.f32.mrb[0].mxu0
      %864 = vmatprep.mubr.bf16.mxu0 0
      %865 = vmatmul.mubr.bf16.gmra.mrb[0].mxu0 %v726
      %v866 = vpop.f32.mrb[0].mxu0
      %v867 = vadd.f32 %v573, %v866
      %v868 = vpop.f32.mrb[0].mxu0
      %v869 = vpop.f32.mrb[0].mxu0
      %v870 = vadd.f32 %v576, %v869
      %v871 = vpop.f32.mrb[0].mxu0
      %872 = vmatprep.mubr.bf16.mxu0 0
      %873 = vmatmul.mubr.bf16.gmra.mrb[0].mxu0 %v729
      %v874 = vpop.f32.mrb[0].mxu0
      %v875 = vadd.f32 %v581, %v874
      %v876 = vpop.f32.mrb[0].mxu0
      %v877 = vpop.f32.mrb[0].mxu0
      %v878 = vadd.f32 %v584, %v877
      %v879 = vpop.f32.mrb[0].mxu0
      %880 = vmatprep.mubr.bf16.mxu0 0
      %881 = vmatmul.mubr.bf16.gmra.mrb[0].mxu0 %v732
      %v882 = vpop.f32.mrb[0].mxu0
      %v883 = vadd.f32 %v589, %v882
      %v884 = vpop.f32.mrb[0].mxu0
      %v885 = vpop.f32.mrb[0].mxu0
      %v886 = vadd.f32 %v592, %v885
      %v887 = vpop.f32.mrb[0].mxu0
      %888 = vmatprep.mubr.bf16.mxu0 0
      %889 = vmatmul.mubr.bf16.gmra.mrb[0].mxu0 %v735
      %v890 = vpop.f32.mrb[0].mxu0
      %v891 = vadd.f32 %v597, %v890
      %v892 = vpop.f32.mrb[0].mxu0
      %v893 = vpop.f32.mrb[0].mxu0
      %v894 = vadd.f32 %v600, %v893
      %v895 = vpop.f32.mrb[0].mxu0
      %896 = vmatprep.mubr.bf16.mxu0 0
      %897 = vmatmul.mubr.bf16.gmra.mrb[0].mxu0 %v738
      %v898 = vpop.f32.mrb[0].mxu0
      %v899 = vadd.f32 %v605, %v898
      %v900 = vpop.f32.mrb[0].mxu0
      %v901 = vpop.f32.mrb[0].mxu0
      %v902 = vadd.f32 %v608, %v901
      %v903 = vpop.f32.mrb[0].mxu0
      %904 = vdwg.mxu0
      %v905 = vld [vmem:[%s4] sm:$0x1]
      %v907 = vlaneseq
      %v908 = vshrl.u32 %v907, 7
      %v909 = vsub.s32 0, %v908
      %v910 = vrot.slane %v905, %v909
      %v912 = vadd.f32 %v779, %v910
      %v913 = vadd.f32 %v782, %v910
      %v914 = vadd.f32 %v787, %v910
      %v915 = vadd.f32 %v790, %v910
      %v916 = vadd.f32 %v795, %v910
      %v917 = vadd.f32 %v798, %v910
      %v918 = vadd.f32 %v803, %v910
      %v919 = vadd.f32 %v806, %v910
      %v920 = vadd.f32 %v811, %v910
      %v921 = vadd.f32 %v814, %v910
      %v922 = vadd.f32 %v819, %v910
      %v923 = vadd.f32 %v822, %v910
      %v924 = vadd.f32 %v827, %v910
      %v925 = vadd.f32 %v830, %v910
      %v926 = vadd.f32 %v835, %v910
      %v927 = vadd.f32 %v838, %v910
      %v928 = vadd.f32 %v843, %v910
      %v929 = vadd.f32 %v846, %v910
      %v930 = vadd.f32 %v851, %v910
      %v931 = vadd.f32 %v854, %v910
      %v932 = vadd.f32 %v859, %v910
      %v933 = vadd.f32 %v862, %v910
      %v934 = vadd.f32 %v867, %v910
      %v935 = vadd.f32 %v870, %v910
      %v936 = vadd.f32 %v875, %v910
      %v937 = vadd.f32 %v878, %v910
      %v938 = vadd.f32 %v883, %v910
      %v939 = vadd.f32 %v886, %v910
      %v940 = vadd.f32 %v891, %v910
      %v941 = vadd.f32 %v894, %v910
      %v942 = vadd.f32 %v899, %v910
      %v943 = vadd.f32 %v902, %v910
      %v944 = vsub.f32 0.0, %v912
      %v945 = vsub.f32 0.0, %v913
      %v946 = vsub.f32 0.0, %v914
      %v947 = vsub.f32 0.0, %v915
      %v948 = vsub.f32 0.0, %v916
      %v949 = vsub.f32 0.0, %v917
      %v950 = vsub.f32 0.0, %v918
      %v951 = vsub.f32 0.0, %v919
      %v952 = vsub.f32 0.0, %v920
      %v953 = vsub.f32 0.0, %v921
      %v954 = vsub.f32 0.0, %v922
      %v955 = vsub.f32 0.0, %v923
      %v956 = vsub.f32 0.0, %v924
      %v957 = vsub.f32 0.0, %v925
      %v958 = vsub.f32 0.0, %v926
      %v959 = vsub.f32 0.0, %v927
      %v960 = vsub.f32 0.0, %v928
      %v961 = vsub.f32 0.0, %v929
      %v962 = vsub.f32 0.0, %v930
      %v963 = vsub.f32 0.0, %v931
      %v964 = vsub.f32 0.0, %v932
      %v965 = vsub.f32 0.0, %v933
      %v966 = vsub.f32 0.0, %v934
      %v967 = vsub.f32 0.0, %v935
      %v968 = vsub.f32 0.0, %v936
      %v969 = vsub.f32 0.0, %v937
      %v970 = vsub.f32 0.0, %v938
      %v971 = vsub.f32 0.0, %v939
      %v972 = vsub.f32 0.0, %v940
      %v973 = vsub.f32 0.0, %v941
      %v974 = vsub.f32 0.0, %v942
      %v975 = vsub.f32 0.0, %v943
      %v976 = vmul.f32 %v944, 1.442695
      %v977 = vpow.pop %v976
      %v978 = vmul.f32 %v945, 1.442695
      %v979 = vpow.pop %v978
      %v980 = vmul.f32 %v946, 1.442695
      %v981 = vpow.pop %v980
      %v982 = vmul.f32 %v947, 1.442695
      %v983 = vpow.pop %v982
      %v984 = vmul.f32 %v948, 1.442695
      %v985 = vpow.pop %v984
      %v986 = vmul.f32 %v949, 1.442695
      %v987 = vpow.pop %v986
      %v988 = vmul.f32 %v950, 1.442695
      %v989 = vpow.pop %v988
      %v990 = vmul.f32 %v951, 1.442695
      %v991 = vpow.pop %v990
      %v992 = vmul.f32 %v952, 1.442695
      %v993 = vpow.pop %v992
      %v994 = vmul.f32 %v953, 1.442695
      %v995 = vpow.pop %v994
      %v996 = vmul.f32 %v954, 1.442695
      %v997 = vpow.pop %v996
      %v998 = vmul.f32 %v955, 1.442695
      %v999 = vpow.pop %v998
      %v1000 = vmul.f32 %v956, 1.442695
      %v1001 = vpow.pop %v1000
      %v1002 = vmul.f32 %v957, 1.442695
      %v1003 = vpow.pop %v1002
      %v1004 = vmul.f32 %v958, 1.442695
      %v1005 = vpow.pop %v1004
      %v1006 = vmul.f32 %v959, 1.442695
      %v1007 = vpow.pop %v1006
      %v1008 = vmul.f32 %v960, 1.442695
      %v1009 = vpow.pop %v1008
      %v1010 = vmul.f32 %v961, 1.442695
      %v1011 = vpow.pop %v1010
      %v1012 = vmul.f32 %v962, 1.442695
      %v1013 = vpow.pop %v1012
      %v1014 = vmul.f32 %v963, 1.442695
      %v1015 = vpow.pop %v1014
      %v1016 = vmul.f32 %v964, 1.442695
      %v1017 = vpow.pop %v1016
      %v1018 = vmul.f32 %v965, 1.442695
      %v1019 = vpow.pop %v1018
      %v1020 = vmul.f32 %v966, 1.442695
      %v1021 = vpow.pop %v1020
      %v1022 = vmul.f32 %v967, 1.442695
      %v1023 = vpow.pop %v1022
      %v1024 = vmul.f32 %v968, 1.442695
      %v1025 = vpow.pop %v1024
      %v1026 = vmul.f32 %v969, 1.442695
      %v1027 = vpow.pop %v1026
      %v1028 = vmul.f32 %v970, 1.442695
      %v1029 = vpow.pop %v1028
      %v1030 = vmul.f32 %v971, 1.442695
      %v1031 = vpow.pop %v1030
      %v1032 = vmul.f32 %v972, 1.442695
      %v1033 = vpow.pop %v1032
      %v1034 = vmul.f32 %v973, 1.442695
      %v1035 = vpow.pop %v1034
      %v1036 = vmul.f32 %v974, 1.442695
      %v1037 = vpow.pop %v1036
      %v1038 = vmul.f32 %v975, 1.442695
      %v1039 = vpow.pop %v1038
      %v1040 = vadd.f32 %v977, 1.0
      %v1041 = vadd.f32 %v979, 1.0
      %v1042 = vadd.f32 %v981, 1.0
      %v1043 = vadd.f32 %v983, 1.0
      %v1044 = vadd.f32 %v985, 1.0
      %v1045 = vadd.f32 %v987, 1.0
      %v1046 = vadd.f32 %v989, 1.0
      %v1047 = vadd.f32 %v991, 1.0
      %v1048 = vadd.f32 %v993, 1.0
      %v1049 = vadd.f32 %v995, 1.0
      %v1050 = vadd.f32 %v997, 1.0
      %v1051 = vadd.f32 %v999, 1.0
      %v1052 = vadd.f32 %v1001, 1.0
      %v1053 = vadd.f32 %v1003, 1.0
      %v1054 = vadd.f32 %v1005, 1.0
      %v1055 = vadd.f32 %v1007, 1.0
      %v1056 = vadd.f32 %v1009, 1.0
      %v1057 = vadd.f32 %v1011, 1.0
      %v1058 = vadd.f32 %v1013, 1.0
      %v1059 = vadd.f32 %v1015, 1.0
      %v1060 = vadd.f32 %v1017, 1.0
      %v1061 = vadd.f32 %v1019, 1.0
      %v1062 = vadd.f32 %v1021, 1.0
      %v1063 = vadd.f32 %v1023, 1.0
      %v1064 = vadd.f32 %v1025, 1.0
      %v1065 = vadd.f32 %v1027, 1.0
      %v1066 = vadd.f32 %v1029, 1.0
      %v1067 = vadd.f32 %v1031, 1.0
      %v1068 = vadd.f32 %v1033, 1.0
      %v1069 = vadd.f32 %v1035, 1.0
      %v1070 = vadd.f32 %v1037, 1.0
      %v1071 = vadd.f32 %v1039, 1.0
      %v1072 = vrcp.pop %v1040
      %v1073 = vrcp.pop %v1041
      %v1074 = vrcp.pop %v1042
      %v1075 = vrcp.pop %v1043
      %v1076 = vrcp.pop %v1044
      %v1077 = vrcp.pop %v1045
      %v1078 = vrcp.pop %v1046
      %v1079 = vrcp.pop %v1047
      %v1080 = vrcp.pop %v1048
      %v1081 = vrcp.pop %v1049
      %v1082 = vrcp.pop %v1050
      %v1083 = vrcp.pop %v1051
      %v1084 = vrcp.pop %v1052
      %v1085 = vrcp.pop %v1053
      %v1086 = vrcp.pop %v1054
      %v1087 = vrcp.pop %v1055
      %v1088 = vrcp.pop %v1056
      %v1089 = vrcp.pop %v1057
      %v1090 = vrcp.pop %v1058
      %v1091 = vrcp.pop %v1059
      %v1092 = vrcp.pop %v1060
      %v1093 = vrcp.pop %v1061
      %v1094 = vrcp.pop %v1062
      %v1095 = vrcp.pop %v1063
      %v1096 = vrcp.pop %v1064
      %v1097 = vrcp.pop %v1065
      %v1098 = vrcp.pop %v1066
      %v1099 = vrcp.pop %v1067
      %v1100 = vrcp.pop %v1068
      %v1101 = vrcp.pop %v1069
      %v1102 = vrcp.pop %v1070
      %v1103 = vrcp.pop %v1071
      %v1104 = vmul.f32 %v912, %v1072
      %v1105 = vmul.f32 %v913, %v1073
      %v1106 = vmul.f32 %v914, %v1074
      %v1107 = vmul.f32 %v915, %v1075
      %v1108 = vmul.f32 %v916, %v1076
      %v1109 = vmul.f32 %v917, %v1077
      %v1110 = vmul.f32 %v918, %v1078
      %v1111 = vmul.f32 %v919, %v1079
      %v1112 = vmul.f32 %v920, %v1080
      %v1113 = vmul.f32 %v921, %v1081
      %v1114 = vmul.f32 %v922, %v1082
      %v1115 = vmul.f32 %v923, %v1083
      %v1116 = vmul.f32 %v924, %v1084
      %v1117 = vmul.f32 %v925, %v1085
      %v1118 = vmul.f32 %v926, %v1086
      %v1119 = vmul.f32 %v927, %v1087
      %v1120 = vmul.f32 %v928, %v1088
      %v1121 = vmul.f32 %v929, %v1089
      %v1122 = vmul.f32 %v930, %v1090
      %v1123 = vmul.f32 %v931, %v1091
      %v1124 = vmul.f32 %v932, %v1092
      %v1125 = vmul.f32 %v933, %v1093
      %v1126 = vmul.f32 %v934, %v1094
      %v1127 = vmul.f32 %v935, %v1095
      %v1128 = vmul.f32 %v936, %v1096
      %v1129 = vmul.f32 %v937, %v1097
      %v1130 = vmul.f32 %v938, %v1098
      %v1131 = vmul.f32 %v939, %v1099
      %v1132 = vmul.f32 %v940, %v1100
      %v1133 = vmul.f32 %v941, %v1101
      %v1134 = vmul.f32 %v942, %v1102
      %v1135 = vmul.f32 %v943, %v1103
      %1136 = vst.msk [vmem:[%s248] sm:$0xff] %vm397, %v1104
      %1137 = vst.msk [vmem:[%s248 + $0x8] sm:$0xff] %vm397, %v1105
      %1138 = vst.msk [vmem:[%s248 + $0x10] sm:$0xff] %vm397, %v1106
      %1139 = vst.msk [vmem:[%s248 + $0x18] sm:$0xff] %vm397, %v1107
      %1140 = vst.msk [vmem:[%s248 + $0x20] sm:$0xff] %vm397, %v1108
      %1141 = vst.msk [vmem:[%s248 + $0x28] sm:$0xff] %vm397, %v1109
      %1142 = vst.msk [vmem:[%s248 + $0x30] sm:$0xff] %vm397, %v1110
      %1143 = vst.msk [vmem:[%s248 + $0x38] sm:$0xff] %vm397, %v1111
      %1144 = vst.msk [vmem:[%s248 + $0x40] sm:$0xff] %vm397, %v1112
      %1145 = vst.msk [vmem:[%s248 + $0x48] sm:$0xff] %vm397, %v1113
      %1146 = vst.msk [vmem:[%s248 + $0x50] sm:$0xff] %vm397, %v1114
      %1147 = vst.msk [vmem:[%s248 + $0x58] sm:$0xff] %vm397, %v1115
      %1148 = vst.msk [vmem:[%s248 + $0x60] sm:$0xff] %vm397, %v1116
      %1149 = vst.msk [vmem:[%s248 + $0x68] sm:$0xff] %vm397, %v1117
      %1150 = vst.msk [vmem:[%s248 + $0x70] sm:$0xff] %vm397, %v1118
      %1151 = vst.msk [vmem:[%s248 + $0x78] sm:$0xff] %vm397, %v1119
      %1152 = vst.msk [vmem:[%s248 + $0x80] sm:$0xff] %vm397, %v1120
      %1153 = vst.msk [vmem:[%s248 + $0x88] sm:$0xff] %vm397, %v1121
      %1154 = vst.msk [vmem:[%s248 + $0x90] sm:$0xff] %vm397, %v1122
      %1155 = vst.msk [vmem:[%s248 + $0x98] sm:$0xff] %vm397, %v1123
      %1156 = vst.msk [vmem:[%s248 + $0xa0] sm:$0xff] %vm397, %v1124
      %1157 = vst.msk [vmem:[%s248 + $0xa8] sm:$0xff] %vm397, %v1125
      %1158 = vst.msk [vmem:[%s248 + $0xb0] sm:$0xff] %vm397, %v1126
      %1159 = vst.msk [vmem:[%s248 + $0xb8] sm:$0xff] %vm397, %v1127
      %1160 = vst.msk [vmem:[%s248 + $0xc0] sm:$0xff] %vm397, %v1128
      %1161 = vst.msk [vmem:[%s248 + $0xc8] sm:$0xff] %vm397, %v1129
      %1162 = vst.msk [vmem:[%s248 + $0xd0] sm:$0xff] %vm397, %v1130
      %1163 = vst.msk [vmem:[%s248 + $0xd8] sm:$0xff] %vm397, %v1131
      %1164 = vst.msk [vmem:[%s248 + $0xe0] sm:$0xff] %vm397, %v1132
      %1165 = vst.msk [vmem:[%s248 + $0xe8] sm:$0xff] %vm397, %v1133
      %1166 = vst.msk [vmem:[%s248 + $0xf0] sm:$0xff] %vm397, %v1134
      %1167 = vst.msk [vmem:[%s248 + $0xf8] sm:$0xff] %vm397, %v1135
      %s1168 = smul.u32 32, %s16
      %p1169 = scmp.lt.s32.totalorder %s1168, 63
      %s1170 = scalar_select %p1169, %s1168, 63
      %s1171 = smul.addr %s1170, 8
      %s1172 = scalar_lea.vmem %s5, %s1171
      // Predicated region
      $region41: #{c3_forward.5} parent=39 // pred_check
        %p1173 = pneg %p149
      $region42: #{c3_forward.5} parent=39 // pred_check_branch
        %1175 = sbr.rel (%p1173) target = $region44
      $region43: #{c3_forward.5} parent=39 // pred_region
        %s1176 = smul.u32 32, %s16
      $region44: #{c3_forward.5} parent=39 // pred_fallthru
        _
    $region40: #{c3_forward.5} parent=5 // pred_fallthru
      _
    %p1177 = scmp.le.s32.totalorder 2, %s11
    // Predicated region
    $region45: #{c3_forward.5} parent=5 // pred_check
      %p1178 = pneg %p1177
    $region46: #{c3_forward.5} parent=5 // pred_check_branch
      %1180 = sbr.rel (%p1178) target = $region48
    $region47: #{c3_forward.5} parent=5 // pred_region
      %s1181 = ssub.s32 %s11, 2
      // Predicated region
      $region49: #{c3_forward.5} parent=47 // pred_check
        %p1182 = pneg %p155
      $region50: #{c3_forward.5} parent=47 // pred_check_branch
        %1184 = sbr.rel (%p1182) target = $region52
      $region51: #{c3_forward.5} parent=47 // pred_region
        %s1185 = smul.u32 32, %s17
        %p1186 = scmp.lt.s32.totalorder %s1185, 63
        %s1187 = scalar_select %p1186, %s1185, 63
        %s1188 = smul.addr %s1187, 8
        %s1189 = scalar_lea.vmem %s5, %s1188
      $region52: #{c3_forward.5} parent=47 // pred_fallthru
        _
    $region48: #{c3_forward.5} parent=5 // pred_fallthru
      _
  $region6: #{c3_forward.5} parent=0 // loop_footer
    %s15 = sadd.s32 1, %s11
  $region7: #{c3_forward.5} parent=0 // loop_footer_branch
    %10 = sbr.rel target = $region3
  $region8: #{c3_forward.5} parent=0 // loop_exit
    _

// kernel: c3_forward.3
$region0: #{c3_forward.3}
  #allocation0 [shape = 'u32[]', space=smem, size = 0x4, offset = 0x4, fixed_abs, tag = 'smem constant byte address 0x4 - core index']
  #allocation1 [shape = 'u32[144,128]{1,0:T(1,128)}', space=vmem, size = 0x12000, scoped, tag = 'internal scratch']
  %s0 = inlined_call_operand.vmem [shape: f32[512,4], index: 0, kind: input, shape index: {}]
  %s1 = inlined_call_operand.vmem [shape: bf16[4,4], index: 1, kind: input, shape index: {}]
  %s2 = inlined_call_operand.vmem [shape: f32[1,4], index: 2, kind: input, shape index: {}]
  %s3 = inlined_call_operand.vmem [shape: bf16[512,4], index: 3, kind: output, shape index: {}]
  %s4 = sld [smem:[#allocation0]]
  $region45: #{c3_forward.3} parent=0
    _
  %s6 = ssub.s32 1, %s4
  %s7 = scalar_select 0, %s6, %s4
  loop: start=0, step=1, limit=4
  $region2: #{c3_forward.3} parent=0 // loop_pre_header
    _
  $region3: #{c3_forward.3} parent=0 // loop_header
    %s9 = sphi 0, %s13
    %p10 = scmp.ge.s32.totalorder %s9, 4
    %s19 = sphi 0, %s21
    %s22 = sphi 0, %s19
    %s23 = sphi 0, %s22
    %s39 = sphi 0, %s23
    %s43 = sphi 0, %s43
    %s45 = sphi 0, %s43
    %s46 = sphi 0, %s45
    %s60 = sphi 0, %s46
    %s64 = sphi 0, %s64
    %s66 = sphi 0, %s64
    %s67 = sphi 0, %s66
    %s81 = sphi 0, %s67
    %s87 = sphi 0, %s89
    %s90 = sphi 0, %s87
    %s91 = sphi 0, %s90
    %s107 = sphi 0, %s91
  $region4: #{c3_forward.3} parent=0 // loop_header_branch
    %12 = sbr.rel (%p10) target = $region8
  $region5: #{c3_forward.3} parent=0 // loop_body
    %s14 = ssub.s32 %s9, 1
    %s15 = ssub.s32 %s9, 2
    %s16 = sadd.s32 %s9, 1
    %s17 = ssub.s32 %s9, %s16
    %p18 = scmp.eq.s32.totalorder %s17, 0
    %s20 = sadd.s32 %s19, 1
    %s21 = scalar_select %p18, %s19, %s20
    %p24 = pneg %p18
    %p25 = scmp.eq.s32.totalorder %s9, 1
    %p26 = por %p24, %p25
    %p27 = scmp.ne.s32.totalorder %s19, %s22
    %p28 = scmp.eq.s32.totalorder %s9, 0
    %p29 = por %p27, %p28
    %p30 = scmp.ne.s32.totalorder %s19, %s22
    %p31 = scmp.eq.s32.totalorder %s14, 1
    %p32 = por %p30, %p31
    %p33 = scmp.ne.s32.totalorder %s22, %s23
    %p34 = scmp.eq.s32.totalorder %s14, 0
    %p35 = por %p33, %p34
    %p36 = scmp.ne.s32.totalorder %s22, %s23
    %p37 = scmp.eq.s32.totalorder %s15, 1
    %p38 = por %p36, %p37
    %p40 = scmp.ne.s32.totalorder %s23, %s39
    %p41 = scmp.eq.s32.totalorder %s15, 0
    %p42 = por %p40, %p41
    %s44 = sadd.s32 %s43, 1
    %p47 = scmp.eq.s32.totalorder %s9, 1
    %p48 = scmp.ne.s32.totalorder %s43, %s45
    %p49 = scmp.eq.s32.totalorder %s9, 0
    %p50 = por %p48, %p49
    %p51 = scmp.ne.s32.totalorder %s43, %s45
    %p52 = scmp.eq.s32.totalorder %s14, 1
    %p53 = por %p51, %p52
    %p54 = scmp.ne.s32.totalorder %s45, %s46
    %p55 = scmp.eq.s32.totalorder %s14, 0
    %p56 = por %p54, %p55
    %p57 = scmp.ne.s32.totalorder %s45, %s46
    %p58 = scmp.eq.s32.totalorder %s15, 1
    %p59 = por %p57, %p58
    %p61 = scmp.ne.s32.totalorder %s46, %s60
    %p62 = scmp.eq.s32.totalorder %s15, 0
    %p63 = por %p61, %p62
    %s65 = sadd.s32 %s64, 1
    %p68 = scmp.eq.s32.totalorder %s9, 1
    %p69 = scmp.ne.s32.totalorder %s64, %s66
    %p70 = scmp.eq.s32.totalorder %s9, 0
    %p71 = por %p69, %p70
    %p72 = scmp.ne.s32.totalorder %s64, %s66
    %p73 = scmp.eq.s32.totalorder %s14, 1
    %p74 = por %p72, %p73
    %p75 = scmp.ne.s32.totalorder %s66, %s67
    %p76 = scmp.eq.s32.totalorder %s14, 0
    %p77 = por %p75, %p76
    %p78 = scmp.ne.s32.totalorder %s66, %s67
    %p79 = scmp.eq.s32.totalorder %s15, 1
    %p80 = por %p78, %p79
    %p82 = scmp.ne.s32.totalorder %s67, %s81
    %p83 = scmp.eq.s32.totalorder %s15, 0
    %p84 = por %p82, %p83
    %s85 = ssub.s32 %s9, %s16
    %p86 = scmp.eq.s32.totalorder %s85, 0
    %s88 = sadd.s32 %s87, 1
    %s89 = scalar_select %p86, %s87, %s88
    %p92 = pneg %p86
    %p93 = scmp.eq.s32.totalorder %s9, 1
    %p94 = por %p92, %p93
    %p95 = scmp.ne.s32.totalorder %s87, %s90
    %p96 = scmp.eq.s32.totalorder %s9, 0
    %p97 = por %p95, %p96
    %p98 = scmp.ne.s32.totalorder %s87, %s90
    %p99 = scmp.eq.s32.totalorder %s14, 1
    %p100 = por %p98, %p99
    %p101 = scmp.ne.s32.totalorder %s90, %s91
    %p102 = scmp.eq.s32.totalorder %s14, 0
    %p103 = por %p101, %p102
    %p104 = scmp.ne.s32.totalorder %s90, %s91
    %p105 = scmp.eq.s32.totalorder %s15, 1
    %p106 = por %p104, %p105
    %p108 = scmp.ne.s32.totalorder %s91, %s107
    %p109 = scmp.eq.s32.totalorder %s15, 0
    %p110 = por %p108, %p109
    %p111 = scmp.le.s32.totalorder 1, %s9
    %p112 = scmp.lt.s32.totalorder %s9, 3
    %p113 = pnand %p111, %p112
    %p114 = pneg %p113
    // Predicated region
    $region9: #{c3_forward.3} parent=5 // pred_check
      _
    $region10: #{c3_forward.3} parent=5 // pred_check_branch
      %116 = sbr.rel (%p113) target = $region12
    $region11: #{c3_forward.3} parent=5 // pred_region
      %s117 = ssub.s32 %s9, 1
      // Predicated region
      $region13: #{c3_forward.3} parent=11 // pred_check
        %p118 = pneg %p56
      $region14: #{c3_forward.3} parent=11 // pred_check_branch
        %120 = sbr.rel (%p118) target = $region16
      $region15: #{c3_forward.3} parent=11 // pred_region
        _
      $region16: #{c3_forward.3} parent=11 // pred_fallthru
        _
      // Predicated region
      $region17: #{c3_forward.3} parent=11 // pred_check
        %p121 = pneg %p77
      $region18: #{c3_forward.3} parent=11 // pred_check_branch
        %123 = sbr.rel (%p121) target = $region20
      $region19: #{c3_forward.3} parent=11 // pred_region
        _
      $region20: #{c3_forward.3} parent=11 // pred_fallthru
        _
    $region12: #{c3_forward.3} parent=5 // pred_fallthru
      _
    %p124 = scmp.lt.s32.totalorder %s9, 2
    // Predicated region
    $region21: #{c3_forward.3} parent=5 // pred_check
      %p125 = pneg %p124
    $region22: #{c3_forward.3} parent=5 // pred_check_branch
      %127 = sbr.rel (%p125) target = $region24
    $region23: #{c3_forward.3} parent=5 // pred_region
      // Predicated region
      $region25: #{c3_forward.3} parent=23 // pred_check
        %p128 = pneg %p29
      $region26: #{c3_forward.3} parent=23 // pred_check_branch
        %130 = sbr.rel (%p128) target = $region28
      $region27: #{c3_forward.3} parent=23 // pred_region
        %s131 = smul.u32 32, %s9
        %p132 = scmp.lt.s32.totalorder %s131, 63
        %s133 = scalar_select %p132, %s131, 63
        %s134 = smul.addr %s133, 8
        %s135 = scalar_lea.vmem %s0, %s134
        %s136 = smul.u32 32, %s9
      $region28: #{c3_forward.3} parent=23 // pred_fallthru
        _
    $region24: #{c3_forward.3} parent=5 // pred_fallthru
      _
    %p137 = scmp.le.s32.totalorder 1, %s9
    %p138 = scmp.lt.s32.totalorder %s9, 3
    %p139 = pnand %p137, %p138
    %p140 = pneg %p139
    // Predicated region
    $region29: #{c3_forward.3} parent=5 // pred_check
      _
    $region30: #{c3_forward.3} parent=5 // pred_check_branch
      %142 = sbr.rel (%p139) target = $region32
    $region31: #{c3_forward.3} parent=5 // pred_region
      %s143 = ssub.s32 %s9, 1
      %s144 = smul.u32 32, %s14
      %p145 = scmp.lt.s32.totalorder %s144, 63
      %s146 = scalar_select %p145, %s144, 63
      %s147 = smul.addr %s146, 8
      %s148 = scalar_lea.vmem %s0, %s147
      %p149 = pneg %p35
      %p150 = pneg %p32
      %p151 = pneg %p56
      %p152 = pneg %p53
      %p153 = pneg %p77
      %p154 = pneg %p74
      %p155 = pneg %p103
      %p156 = pneg %p100
      %s157 = smul.u32 32, %s14
      %p158 = scmp.lt.s32.totalorder %s157, 63
      %s159 = scalar_select %p158, %s157, 63
      %s160 = smul.addr %s159, 4
      %s161 = scalar_lea.vmem %s3, %s160
      %s162 = smul.u32 32, %s14
      %p163 = scmp.lt.s32.totalorder %s162, 63
      %s164 = scalar_select %p163, %s162, 63
      %s165 = smul.addr %s164, 8
      %s166 = scalar_lea.vmem %s0, %s165
      %s167 = smul.u32 32, %s14
      %s168 = smul.u32 32, %s14
      %p169 = scmp.lt.s32.totalorder %s168, 63
      %s170 = scalar_select %p169, %s168, 63
      %s171 = smul.addr %s170, 4
      %s172 = scalar_lea.vmem %s3, %s171
      %s173 = smul.u32 32, %s14
      %v175 = vld [vmem:[%s166] sm:$0xff]
      %v176 = vld [vmem:[%s166 + $0x8] sm:$0xff]
      %v177 = vld [vmem:[%s166 + $0x10] sm:$0xff]
      %v178 = vld [vmem:[%s166 + $0x18] sm:$0xff]
      %v179 = vld [vmem:[%s166 + $0x20] sm:$0xff]
      %v180 = vld [vmem:[%s166 + $0x28] sm:$0xff]
      %v181 = vld [vmem:[%s166 + $0x30] sm:$0xff]
      %v182 = vld [vmem:[%s166 + $0x38] sm:$0xff]
      %v183 = vld [vmem:[%s166 + $0x40] sm:$0xff]
      %v184 = vld [vmem:[%s166 + $0x48] sm:$0xff]
      %v185 = vld [vmem:[%s166 + $0x50] sm:$0xff]
      %v186 = vld [vmem:[%s166 + $0x58] sm:$0xff]
      %v187 = vld [vmem:[%s166 + $0x60] sm:$0xff]
      %v188 = vld [vmem:[%s166 + $0x68] sm:$0xff]
      %v189 = vld [vmem:[%s166 + $0x70] sm:$0xff]
      %v190 = vld [vmem:[%s166 + $0x78] sm:$0xff]
      %v191 = vld [vmem:[%s166 + $0x80] sm:$0xff]
      %v192 = vld [vmem:[%s166 + $0x88] sm:$0xff]
      %v193 = vld [vmem:[%s166 + $0x90] sm:$0xff]
      %v194 = vld [vmem:[%s166 + $0x98] sm:$0xff]
      %v195 = vld [vmem:[%s166 + $0xa0] sm:$0xff]
      %v196 = vld [vmem:[%s166 + $0xa8] sm:$0xff]
      %v197 = vld [vmem:[%s166 + $0xb0] sm:$0xff]
      %v198 = vld [vmem:[%s166 + $0xb8] sm:$0xff]
      %v199 = vld [vmem:[%s166 + $0xc0] sm:$0xff]
      %v200 = vld [vmem:[%s166 + $0xc8] sm:$0xff]
      %v201 = vld [vmem:[%s166 + $0xd0] sm:$0xff]
      %v202 = vld [vmem:[%s166 + $0xd8] sm:$0xff]
      %v203 = vld [vmem:[%s166 + $0xe0] sm:$0xff]
      %v204 = vld [vmem:[%s166 + $0xe8] sm:$0xff]
      %v205 = vld [vmem:[%s166 + $0xf0] sm:$0xff]
      %v206 = vld [vmem:[%s166 + $0xf8] sm:$0xff]
      %v207 = vpack.c.bf16 %v176, %v175
      %v208 = vpack.c.bf16 %v178, %v177
      %v209 = vpack.c.bf16 %v180, %v179
      %v210 = vpack.c.bf16 %v182, %v181
      %v211 = vpack.c.bf16 %v184, %v183
      %v212 = vpack.c.bf16 %v186, %v185
      %v213 = vpack.c.bf16 %v188, %v187
      %v214 = vpack.c.bf16 %v190, %v189
      %v215 = vpack.c.bf16 %v192, %v191
      %v216 = vpack.c.bf16 %v194, %v193
      %v217 = vpack.c.bf16 %v196, %v195
      %v218 = vpack.c.bf16 %v198, %v197
      %v219 = vpack.c.bf16 %v200, %v199
      %v220 = vpack.c.bf16 %v202, %v201
      %v221 = vpack.c.bf16 %v204, %v203
      %v222 = vpack.c.bf16 %v206, %v205
      %v223 = vld [vmem:[%s1] sm:$0x3]
      %v224 = vld [vmem:[%s2] sm:$0x1]
      %v226 = vlaneseq
      %v227 = vshrl.u32 %v226, 7
      %v228 = vsub.s32 0, %v227
      %v229 = vrot.slane %v224, %v228
      %vm231 = vcmask 31744
      %v233 = vsel %vm231, %v207, 0
      %v236 = vsel %vm231, %v208, 0
      %v239 = vsel %vm231, %v209, 0
      %v242 = vsel %vm231, %v210, 0
      %v245 = vsel %vm231, %v211, 0
      %v248 = vsel %vm231, %v212, 0
      %v251 = vsel %vm231, %v213, 0
      %v254 = vsel %vm231, %v214, 0
      %v257 = vsel %vm231, %v215, 0
      %v260 = vsel %vm231, %v216, 0
      %v263 = vsel %vm231, %v217, 0
      %v266 = vsel %vm231, %v218, 0
      %v269 = vsel %vm231, %v219, 0
      %v272 = vsel %vm231, %v220, 0
      %v275 = vsel %vm231, %v221, 0
      %v278 = vsel %vm231, %v222, 0
      %vm280 = vcmask 1041408
      %v282 = vsel %vm280, %v223, 0
      %284 = vmatprep.subr.bf16.mxu0 0
      %285 = vmatpush1.bf16.msra.mxu0 %v282
      %286 = vmatprep.subr.bf16.mxu0 0
      %287 = vmatpush1.bf16.msra.mxu0 0
      %288 = vmatprep.subr.bf16.mxu0 0
      %289 = vmatpush1.bf16.msra.mxu0 0
      %290 = vmatprep.subr.bf16.mxu0 0
      %291 = vmatpush1.bf16.msra.mxu0 0
      %292 = vmatprep.subr.bf16.mxu0 0
      %293 = vmatpush1.bf16.msra.mxu0 0
      %294 = vmatprep.subr.bf16.mxu0 0
      %295 = vmatpush1.bf16.msra.mxu0 0
      %296 = vmatprep.subr.bf16.mxu0 0
      %297 = vmatpush1.bf16.msra.mxu0 0
      %298 = vmatprep.subr.bf16.mxu0 0
      %299 = vmatpush1.bf16.msra.mxu0 0
      %300 = vmatprep.subr.bf16.mxu0 0
      %301 = vmatpush1.bf16.msra.mxu0 0
      %302 = vmatprep.subr.bf16.mxu0 0
      %303 = vmatpush1.bf16.msra.mxu0 0
      %304 = vmatprep.subr.bf16.mxu0 0
      %305 = vmatpush1.bf16.msra.mxu0 0
      %306 = vmatprep.subr.bf16.mxu0 0
      %307 = vmatpush1.bf16.msra.mxu0 0
      %308 = vmatprep.subr.bf16.mxu0 0
      %309 = vmatpush1.bf16.msra.mxu0 0
      %310 = vmatprep.subr.bf16.mxu0 0
      %311 = vmatpush1.bf16.msra.mxu0 0
      %312 = vmatprep.subr.bf16.mxu0 0
      %313 = vmatpush1.bf16.msra.mxu0 0
      %314 = vmatprep.subr.bf16.mxu0 0
      %315 = vmatpush1.bf16.msra.mxu0 0
      %316 = vmatprep.mubr.bf16.mxu0 0
      %317 = vmatmul.mubr.bf16.gmra.mrb[0].mxu0 %v233
      %v318 = vpop.f32.mrb[0].mxu0
      %v319 = vadd.f32 %v229, %v318
      %v320 = vpop.f32.mrb[0].mxu0
      %v321 = vpop.f32.mrb[0].mxu0
      %v322 = vadd.f32 %v229, %v321
      %v323 = vpop.f32.mrb[0].mxu0
      %324 = vmatprep.mubr.bf16.mxu0 0
      %325 = vmatmul.mubr.bf16.gmra.mrb[0].mxu0 %v236
      %v326 = vpop.f32.mrb[0].mxu0
      %v327 = vadd.f32 %v229, %v326
      %v328 = vpop.f32.mrb[0].mxu0
      %v329 = vpop.f32.mrb[0].mxu0
      %v330 = vadd.f32 %v229, %v329
      %v331 = vpop.f32.mrb[0].mxu0
      %332 = vmatprep.mubr.bf16.mxu0 0
      %333 = vmatmul.mubr.bf16.gmra.mrb[0].mxu0 %v239
      %v334 = vpop.f32.mrb[0].mxu0
      %v335 = vadd.f32 %v229, %v334
      %v336 = vpop.f32.mrb[0].mxu0
      %v337 = vpop.f32.mrb[0].mxu0
      %v338 = vadd.f32 %v229, %v337
      %v339 = vpop.f32.mrb[0].mxu0
      %340 = vmatprep.mubr.bf16.mxu0 0
      %341 = vmatmul.mubr.bf16.gmra.mrb[0].mxu0 %v242
      %v342 = vpop.f32.mrb[0].mxu0
      %v343 = vadd.f32 %v229, %v342
      %v344 = vpop.f32.mrb[0].mxu0
      %v345 = vpop.f32.mrb[0].mxu0
      %v346 = vadd.f32 %v229, %v345
      %v347 = vpop.f32.mrb[0].mxu0
      %348 = vmatprep.mubr.bf16.mxu0 0
      %349 = vmatmul.mubr.bf16.gmra.mrb[0].mxu0 %v245
      %v350 = vpop.f32.mrb[0].mxu0
      %v351 = vadd.f32 %v229, %v350
      %v352 = vpop.f32.mrb[0].mxu0
      %v353 = vpop.f32.mrb[0].mxu0
      %v354 = vadd.f32 %v229, %v353
      %v355 = vpop.f32.mrb[0].mxu0
      %356 = vmatprep.mubr.bf16.mxu0 0
      %357 = vmatmul.mubr.bf16.gmra.mrb[0].mxu0 %v248
      %v358 = vpop.f32.mrb[0].mxu0
      %v359 = vadd.f32 %v229, %v358
      %v360 = vpop.f32.mrb[0].mxu0
      %v361 = vpop.f32.mrb[0].mxu0
      %v362 = vadd.f32 %v229, %v361
      %v363 = vpop.f32.mrb[0].mxu0
      %364 = vmatprep.mubr.bf16.mxu0 0
      %365 = vmatmul.mubr.bf16.gmra.mrb[0].mxu0 %v251
      %v366 = vpop.f32.mrb[0].mxu0
      %v367 = vadd.f32 %v229, %v366
      %v368 = vpop.f32.mrb[0].mxu0
      %v369 = vpop.f32.mrb[0].mxu0
      %v370 = vadd.f32 %v229, %v369
      %v371 = vpop.f32.mrb[0].mxu0
      %372 = vmatprep.mubr.bf16.mxu0 0
      %373 = vmatmul.mubr.bf16.gmra.mrb[0].mxu0 %v254
      %v374 = vpop.f32.mrb[0].mxu0
      %v375 = vadd.f32 %v229, %v374
      %v376 = vpop.f32.mrb[0].mxu0
      %v377 = vpop.f32.mrb[0].mxu0
      %v378 = vadd.f32 %v229, %v377
      %v379 = vpop.f32.mrb[0].mxu0
      %380 = vmatprep.mubr.bf16.mxu0 0
      %381 = vmatmul.mubr.bf16.gmra.mrb[0].mxu0 %v257
      %v382 = vpop.f32.mrb[0].mxu0
      %v383 = vadd.f32 %v229, %v382
      %v384 = vpop.f32.mrb[0].mxu0
      %v385 = vpop.f32.mrb[0].mxu0
      %v386 = vadd.f32 %v229, %v385
      %v387 = vpop.f32.mrb[0].mxu0
      %388 = vmatprep.mubr.bf16.mxu0 0
      %389 = vmatmul.mubr.bf16.gmra.mrb[0].mxu0 %v260
      %v390 = vpop.f32.mrb[0].mxu0
      %v391 = vadd.f32 %v229, %v390
      %v392 = vpop.f32.mrb[0].mxu0
      %v393 = vpop.f32.mrb[0].mxu0
      %v394 = vadd.f32 %v229, %v393
      %v395 = vpop.f32.mrb[0].mxu0
      %396 = vmatprep.mubr.bf16.mxu0 0
      %397 = vmatmul.mubr.bf16.gmra.mrb[0].mxu0 %v263
      %v398 = vpop.f32.mrb[0].mxu0
      %v399 = vadd.f32 %v229, %v398
      %v400 = vpop.f32.mrb[0].mxu0
      %v401 = vpop.f32.mrb[0].mxu0
      %v402 = vadd.f32 %v229, %v401
      %v403 = vpop.f32.mrb[0].mxu0
      %404 = vmatprep.mubr.bf16.mxu0 0
      %405 = vmatmul.mubr.bf16.gmra.mrb[0].mxu0 %v266
      %v406 = vpop.f32.mrb[0].mxu0
      %v407 = vadd.f32 %v229, %v406
      %v408 = vpop.f32.mrb[0].mxu0
      %v409 = vpop.f32.mrb[0].mxu0
      %v410 = vadd.f32 %v229, %v409
      %v411 = vpop.f32.mrb[0].mxu0
      %412 = vmatprep.mubr.bf16.mxu0 0
      %413 = vmatmul.mubr.bf16.gmra.mrb[0].mxu0 %v269
      %v414 = vpop.f32.mrb[0].mxu0
      %v415 = vadd.f32 %v229, %v414
      %v416 = vpop.f32.mrb[0].mxu0
      %v417 = vpop.f32.mrb[0].mxu0
      %v418 = vadd.f32 %v229, %v417
      %v419 = vpop.f32.mrb[0].mxu0
      %420 = vmatprep.mubr.bf16.mxu0 0
      %421 = vmatmul.mubr.bf16.gmra.mrb[0].mxu0 %v272
      %v422 = vpop.f32.mrb[0].mxu0
      %v423 = vadd.f32 %v229, %v422
      %v424 = vpop.f32.mrb[0].mxu0
      %v425 = vpop.f32.mrb[0].mxu0
      %v426 = vadd.f32 %v229, %v425
      %v427 = vpop.f32.mrb[0].mxu0
      %428 = vmatprep.mubr.bf16.mxu0 0
      %429 = vmatmul.mubr.bf16.gmra.mrb[0].mxu0 %v275
      %v430 = vpop.f32.mrb[0].mxu0
      %v431 = vadd.f32 %v229, %v430
      %v432 = vpop.f32.mrb[0].mxu0
      %v433 = vpop.f32.mrb[0].mxu0
      %v434 = vadd.f32 %v229, %v433
      %v435 = vpop.f32.mrb[0].mxu0
      %436 = vmatprep.mubr.bf16.mxu0 0
      %437 = vmatmul.mubr.bf16.gmra.mrb[0].mxu0 %v278
      %v438 = vpop.f32.mrb[0].mxu0
      %v439 = vadd.f32 %v229, %v438
      %v440 = vpop.f32.mrb[0].mxu0
      %v441 = vpop.f32.mrb[0].mxu0
      %v442 = vadd.f32 %v229, %v441
      %v443 = vpop.f32.mrb[0].mxu0
      %444 = vdwg.mxu0
      %v445 = vsub.f32 0.0, %v319
      %v446 = vsub.f32 0.0, %v322
      %v447 = vsub.f32 0.0, %v327
      %v448 = vsub.f32 0.0, %v330
      %v449 = vsub.f32 0.0, %v335
      %v450 = vsub.f32 0.0, %v338
      %v451 = vsub.f32 0.0, %v343
      %v452 = vsub.f32 0.0, %v346
      %v453 = vsub.f32 0.0, %v351
      %v454 = vsub.f32 0.0, %v354
      %v455 = vsub.f32 0.0, %v359
      %v456 = vsub.f32 0.0, %v362
      %v457 = vsub.f32 0.0, %v367
      %v458 = vsub.f32 0.0, %v370
      %v459 = vsub.f32 0.0, %v375
      %v460 = vsub.f32 0.0, %v378
      %v461 = vsub.f32 0.0, %v383
      %v462 = vsub.f32 0.0, %v386
      %v463 = vsub.f32 0.0, %v391
      %v464 = vsub.f32 0.0, %v394
      %v465 = vsub.f32 0.0, %v399
      %v466 = vsub.f32 0.0, %v402
      %v467 = vsub.f32 0.0, %v407
      %v468 = vsub.f32 0.0, %v410
      %v469 = vsub.f32 0.0, %v415
      %v470 = vsub.f32 0.0, %v418
      %v471 = vsub.f32 0.0, %v423
      %v472 = vsub.f32 0.0, %v426
      %v473 = vsub.f32 0.0, %v431
      %v474 = vsub.f32 0.0, %v434
      %v475 = vsub.f32 0.0, %v439
      %v476 = vsub.f32 0.0, %v442
      %v477 = vmul.f32 %v445, 1.442695
      %v478 = vpow.pop %v477
      %v479 = vmul.f32 %v446, 1.442695
      %v480 = vpow.pop %v479
      %v481 = vmul.f32 %v447, 1.442695
      %v482 = vpow.pop %v481
      %v483 = vmul.f32 %v448, 1.442695
      %v484 = vpow.pop %v483
      %v485 = vmul.f32 %v449, 1.442695
      %v486 = vpow.pop %v485
      %v487 = vmul.f32 %v450, 1.442695
      %v488 = vpow.pop %v487
      %v489 = vmul.f32 %v451, 1.442695
      %v490 = vpow.pop %v489
      %v491 = vmul.f32 %v452, 1.442695
      %v492 = vpow.pop %v491
      %v493 = vmul.f32 %v453, 1.442695
      %v494 = vpow.pop %v493
      %v495 = vmul.f32 %v454, 1.442695
      %v496 = vpow.pop %v495
      %v497 = vmul.f32 %v455, 1.442695
      %v498 = vpow.pop %v497
      %v499 = vmul.f32 %v456, 1.442695
      %v500 = vpow.pop %v499
      %v501 = vmul.f32 %v457, 1.442695
      %v502 = vpow.pop %v501
      %v503 = vmul.f32 %v458, 1.442695
      %v504 = vpow.pop %v503
      %v505 = vmul.f32 %v459, 1.442695
      %v506 = vpow.pop %v505
      %v507 = vmul.f32 %v460, 1.442695
      %v508 = vpow.pop %v507
      %v509 = vmul.f32 %v461, 1.442695
      %v510 = vpow.pop %v509
      %v511 = vmul.f32 %v462, 1.442695
      %v512 = vpow.pop %v511
      %v513 = vmul.f32 %v463, 1.442695
      %v514 = vpow.pop %v513
      %v515 = vmul.f32 %v464, 1.442695
      %v516 = vpow.pop %v515
      %v517 = vmul.f32 %v465, 1.442695
      %v518 = vpow.pop %v517
      %v519 = vmul.f32 %v466, 1.442695
      %v520 = vpow.pop %v519
      %v521 = vmul.f32 %v467, 1.442695
      %v522 = vpow.pop %v521
      %v523 = vmul.f32 %v468, 1.442695
      %v524 = vpow.pop %v523
      %v525 = vmul.f32 %v469, 1.442695
      %v526 = vpow.pop %v525
      %v527 = vmul.f32 %v470, 1.442695
      %v528 = vpow.pop %v527
      %v529 = vmul.f32 %v471, 1.442695
      %v530 = vpow.pop %v529
      %v531 = vmul.f32 %v472, 1.442695
      %v532 = vpow.pop %v531
      %v533 = vmul.f32 %v473, 1.442695
      %v534 = vpow.pop %v533
      %v535 = vmul.f32 %v474, 1.442695
      %v536 = vpow.pop %v535
      %v537 = vmul.f32 %v475, 1.442695
      %v538 = vpow.pop %v537
      %v539 = vmul.f32 %v476, 1.442695
      %v540 = vpow.pop %v539
      %v541 = vadd.f32 %v478, 1.0
      %v542 = vadd.f32 %v480, 1.0
      %v543 = vadd.f32 %v482, 1.0
      %v544 = vadd.f32 %v484, 1.0
      %v545 = vadd.f32 %v486, 1.0
      %v546 = vadd.f32 %v488, 1.0
      %v547 = vadd.f32 %v490, 1.0
      %v548 = vadd.f32 %v492, 1.0
      %v549 = vadd.f32 %v494, 1.0
      %v550 = vadd.f32 %v496, 1.0
      %v551 = vadd.f32 %v498, 1.0
      %v552 = vadd.f32 %v500, 1.0
      %v553 = vadd.f32 %v502, 1.0
      %v554 = vadd.f32 %v504, 1.0
      %v555 = vadd.f32 %v506, 1.0
      %v556 = vadd.f32 %v508, 1.0
      %v557 = vadd.f32 %v510, 1.0
      %v558 = vadd.f32 %v512, 1.0
      %v559 = vadd.f32 %v514, 1.0
      %v560 = vadd.f32 %v516, 1.0
      %v561 = vadd.f32 %v518, 1.0
      %v562 = vadd.f32 %v520, 1.0
      %v563 = vadd.f32 %v522, 1.0
      %v564 = vadd.f32 %v524, 1.0
      %v565 = vadd.f32 %v526, 1.0
      %v566 = vadd.f32 %v528, 1.0
      %v567 = vadd.f32 %v530, 1.0
      %v568 = vadd.f32 %v532, 1.0
      %v569 = vadd.f32 %v534, 1.0
      %v570 = vadd.f32 %v536, 1.0
      %v571 = vadd.f32 %v538, 1.0
      %v572 = vadd.f32 %v540, 1.0
      %v573 = vrcp.pop %v541
      %v574 = vrcp.pop %v542
      %v575 = vrcp.pop %v543
      %v576 = vrcp.pop %v544
      %v577 = vrcp.pop %v545
      %v578 = vrcp.pop %v546
      %v579 = vrcp.pop %v547
      %v580 = vrcp.pop %v548
      %v581 = vrcp.pop %v549
      %v582 = vrcp.pop %v550
      %v583 = vrcp.pop %v551
      %v584 = vrcp.pop %v552
      %v585 = vrcp.pop %v553
      %v586 = vrcp.pop %v554
      %v587 = vrcp.pop %v555
      %v588 = vrcp.pop %v556
      %v589 = vrcp.pop %v557
      %v590 = vrcp.pop %v558
      %v591 = vrcp.pop %v559
      %v592 = vrcp.pop %v560
      %v593 = vrcp.pop %v561
      %v594 = vrcp.pop %v562
      %v595 = vrcp.pop %v563
      %v596 = vrcp.pop %v564
      %v597 = vrcp.pop %v565
      %v598 = vrcp.pop %v566
      %v599 = vrcp.pop %v567
      %v600 = vrcp.pop %v568
      %v601 = vrcp.pop %v569
      %v602 = vrcp.pop %v570
      %v603 = vrcp.pop %v571
      %v604 = vrcp.pop %v572
      %v605 = vmul.f32 %v319, %v573
      %v606 = vmul.f32 %v322, %v574
      %v607 = vmul.f32 %v327, %v575
      %v608 = vmul.f32 %v330, %v576
      %v609 = vmul.f32 %v335, %v577
      %v610 = vmul.f32 %v338, %v578
      %v611 = vmul.f32 %v343, %v579
      %v612 = vmul.f32 %v346, %v580
      %v613 = vmul.f32 %v351, %v581
      %v614 = vmul.f32 %v354, %v582
      %v615 = vmul.f32 %v359, %v583
      %v616 = vmul.f32 %v362, %v584
      %v617 = vmul.f32 %v367, %v585
      %v618 = vmul.f32 %v370, %v586
      %v619 = vmul.f32 %v375, %v587
      %v620 = vmul.f32 %v378, %v588
      %v621 = vmul.f32 %v383, %v589
      %v622 = vmul.f32 %v386, %v590
      %v623 = vmul.f32 %v391, %v591
      %v624 = vmul.f32 %v394, %v592
      %v625 = vmul.f32 %v399, %v593
      %v626 = vmul.f32 %v402, %v594
      %v627 = vmul.f32 %v407, %v595
      %v628 = vmul.f32 %v410, %v596
      %v629 = vmul.f32 %v415, %v597
      %v630 = vmul.f32 %v418, %v598
      %v631 = vmul.f32 %v423, %v599
      %v632 = vmul.f32 %v426, %v600
      %v633 = vmul.f32 %v431, %v601
      %v634 = vmul.f32 %v434, %v602
      %v635 = vmul.f32 %v439, %v603
      %v636 = vmul.f32 %v442, %v604
      %v637 = vpack.c.bf16 %v606, %v605
      %v638 = vpack.c.bf16 %v608, %v607
      %v639 = vpack.c.bf16 %v610, %v609
      %v640 = vpack.c.bf16 %v612, %v611
      %v641 = vpack.c.bf16 %v614, %v613
      %v642 = vpack.c.bf16 %v616, %v615
      %v643 = vpack.c.bf16 %v618, %v617
      %v644 = vpack.c.bf16 %v620, %v619
      %v645 = vpack.c.bf16 %v622, %v621
      %v646 = vpack.c.bf16 %v624, %v623
      %v647 = vpack.c.bf16 %v626, %v625
      %v648 = vpack.c.bf16 %v628, %v627
      %v649 = vpack.c.bf16 %v630, %v629
      %v650 = vpack.c.bf16 %v632, %v631
      %v651 = vpack.c.bf16 %v634, %v633
      %v652 = vpack.c.bf16 %v636, %v635
      %v669 = vunpack.c.l.b16 %v637
      %v670 = vunpack.c.h.b16 %v637
      %v671 = vunpack.c.l.b16 %v638
      %v672 = vunpack.c.h.b16 %v638
      %v673 = vunpack.c.l.b16 %v639
      %v674 = vunpack.c.h.b16 %v639
      %v675 = vunpack.c.l.b16 %v640
      %v676 = vunpack.c.h.b16 %v640
      %v677 = vunpack.c.l.b16 %v641
      %v678 = vunpack.c.h.b16 %v641
      %v679 = vunpack.c.l.b16 %v642
      %v680 = vunpack.c.h.b16 %v642
      %v681 = vunpack.c.l.b16 %v643
      %v682 = vunpack.c.h.b16 %v643
      %v683 = vunpack.c.l.b16 %v644
      %v684 = vunpack.c.h.b16 %v644
      %v685 = vunpack.c.l.b16 %v645
      %v686 = vunpack.c.h.b16 %v645
      %v687 = vunpack.c.l.b16 %v646
      %v688 = vunpack.c.h.b16 %v646
      %v689 = vunpack.c.l.b16 %v647
      %v690 = vunpack.c.h.b16 %v647
      %v691 = vunpack.c.l.b16 %v648
      %v692 = vunpack.c.h.b16 %v648
      %v693 = vunpack.c.l.b16 %v649
      %v694 = vunpack.c.h.b16 %v649
      %v695 = vunpack.c.l.b16 %v650
      %v696 = vunpack.c.h.b16 %v650
      %v697 = vunpack.c.l.b16 %v651
      %v698 = vunpack.c.h.b16 %v651
      %v699 = vunpack.c.l.b16 %v652
      %v700 = vunpack.c.h.b16 %v652
      %v701 = vpack.c.b16 %v669, %v669
      %v702 = vpack.c.b16 %v670, %v670
      %v703 = vpack.c.b16 %v671, %v671
      %v704 = vpack.c.b16 %v672, %v672
      %v705 = vpack.c.b16 %v673, %v673
      %v706 = vpack.c.b16 %v674, %v674
      %v707 = vpack.c.b16 %v675, %v675
      %v708 = vpack.c.b16 %v676, %v676
      %v709 = vpack.c.b16 %v677, %v677
      %v710 = vpack.c.b16 %v678, %v678
      %v711 = vpack.c.b16 %v679, %v679
      %v712 = vpack.c.b16 %v680, %v680
      %v713 = vpack.c.b16 %v681, %v681
      %v714 = vpack.c.b16 %v682, %v682
      %v715 = vpack.c.b16 %v683, %v683
      %v716 = vpack.c.b16 %v684, %v684
      %v717 = vpack.c.b16 %v685, %v685
      %v718 = vpack.c.b16 %v686, %v686
      %v719 = vpack.c.b16 %v687, %v687
      %v720 = vpack.c.b16 %v688, %v688
      %v721 = vpack.c.b16 %v689, %v689
      %v722 = vpack.c.b16 %v690, %v690
      %v723 = vpack.c.b16 %v691, %v691
      %v724 = vpack.c.b16 %v692, %v692
      %v725 = vpack.c.b16 %v693, %v693
      %v726 = vpack.c.b16 %v694, %v694
      %v727 = vpack.c.b16 %v695, %v695
      %v728 = vpack.c.b16 %v696, %v696
      %v729 = vpack.c.b16 %v697, %v697
      %v730 = vpack.c.b16 %v698, %v698
      %v731 = vpack.c.b16 %v699, %v699
      %v732 = vpack.c.b16 %v700, %v700
      %vm765 = vcmask 27648
      %766 = vst.msk [vmem:[%s172] sm:$0xf] %vm765, %v701
      %767 = vst.msk [vmem:[%s172 + $0x4] sm:$0xf] %vm765, %v702
      %768 = vst.msk [vmem:[%s172 + $0x8] sm:$0xf] %vm765, %v703
      %769 = vst.msk [vmem:[%s172 + $0xc] sm:$0xf] %vm765, %v704
      %770 = vst.msk [vmem:[%s172 + $0x10] sm:$0xf] %vm765, %v705
      %771 = vst.msk [vmem:[%s172 + $0x14] sm:$0xf] %vm765, %v706
      %772 = vst.msk [vmem:[%s172 + $0x18] sm:$0xf] %vm765, %v707
      %773 = vst.msk [vmem:[%s172 + $0x1c] sm:$0xf] %vm765, %v708
      %774 = vst.msk [vmem:[%s172 + $0x20] sm:$0xf] %vm765, %v709
      %775 = vst.msk [vmem:[%s172 + $0x24] sm:$0xf] %vm765, %v710
      %776 = vst.msk [vmem:[%s172 + $0x28] sm:$0xf] %vm765, %v711
      %777 = vst.msk [vmem:[%s172 + $0x2c] sm:$0xf] %vm765, %v712
      %778 = vst.msk [vmem:[%s172 + $0x30] sm:$0xf] %vm765, %v713
      %779 = vst.msk [vmem:[%s172 + $0x34] sm:$0xf] %vm765, %v714
      %780 = vst.msk [vmem:[%s172 + $0x38] sm:$0xf] %vm765, %v715
      %781 = vst.msk [vmem:[%s172 + $0x3c] sm:$0xf] %vm765, %v716
      %782 = vst.msk [vmem:[%s172 + $0x40] sm:$0xf] %vm765, %v717
      %783 = vst.msk [vmem:[%s172 + $0x44] sm:$0xf] %vm765, %v718
      %784 = vst.msk [vmem:[%s172 + $0x48] sm:$0xf] %vm765, %v719
      %785 = vst.msk [vmem:[%s172 + $0x4c] sm:$0xf] %vm765, %v720
      %786 = vst.msk [vmem:[%s172 + $0x50] sm:$0xf] %vm765, %v721
      %787 = vst.msk [vmem:[%s172 + $0x54] sm:$0xf] %vm765, %v722
      %788 = vst.msk [vmem:[%s172 + $0x58] sm:$0xf] %vm765, %v723
      %789 = vst.msk [vmem:[%s172 + $0x5c] sm:$0xf] %vm765, %v724
      %790 = vst.msk [vmem:[%s172 + $0x60] sm:$0xf] %vm765, %v725
      %791 = vst.msk [vmem:[%s172 + $0x64] sm:$0xf] %vm765, %v726
      %792 = vst.msk [vmem:[%s172 + $0x68] sm:$0xf] %vm765, %v727
      %793 = vst.msk [vmem:[%s172 + $0x6c] sm:$0xf] %vm765, %v728
      %794 = vst.msk [vmem:[%s172 + $0x70] sm:$0xf] %vm765, %v729
      %795 = vst.msk [vmem:[%s172 + $0x74] sm:$0xf] %vm765, %v730
      %796 = vst.msk [vmem:[%s172 + $0x78] sm:$0xf] %vm765, %v731
      %797 = vst.msk [vmem:[%s172 + $0x7c] sm:$0xf] %vm765, %v732
      %s798 = smul.u32 32, %s14
      %p799 = scmp.lt.s32.totalorder %s798, 63
      %s800 = scalar_select %p799, %s798, 63
      %s801 = smul.addr %s800, 4
      %s802 = scalar_lea.vmem %s3, %s801
      // Predicated region
      $region33: #{c3_forward.3} parent=31 // pred_check
        %p803 = pneg %p100
      $region34: #{c3_forward.3} parent=31 // pred_check_branch
        %805 = sbr.rel (%p803) target = $region36
      $region35: #{c3_forward.3} parent=31 // pred_region
        %s806 = smul.u32 32, %s14
      $region36: #{c3_forward.3} parent=31 // pred_fallthru
        _
    $region32: #{c3_forward.3} parent=5 // pred_fallthru
      _
    %p807 = scmp.le.s32.totalorder 2, %s9
    // Predicated region
    $region37: #{c3_forward.3} parent=5 // pred_check
      %p808 = pneg %p807
    $region38: #{c3_forward.3} parent=5 // pred_check_branch
      %810 = sbr.rel (%p808) target = $region40
    $region39: #{c3_forward.3} parent=5 // pred_region
      %s811 = ssub.s32 %s9, 2
      // Predicated region
      $region41: #{c3_forward.3} parent=39 // pred_check
        %p812 = pneg %p106
      $region42: #{c3_forward.3} parent=39 // pred_check_branch
        %814 = sbr.rel (%p812) target = $region44
      $region43: #{c3_forward.3} parent=39 // pred_region
        %s815 = smul.u32 32, %s15
        %p816 = scmp.lt.s32.totalorder %s815, 63
        %s817 = scalar_select %p816, %s815, 63
        %s818 = smul.addr %s817, 4
        %s819 = scalar_lea.vmem %s3, %s818
      $region44: #{c3_forward.3} parent=39 // pred_fallthru
        _
    $region40: #{c3_forward.3} parent=5 // pred_fallthru
      _
  $region6: #{c3_forward.3} parent=0 // loop_footer
    %s13 = sadd.s32 1, %s9
  $region7: #{c3_forward.3} parent=0 // loop_footer_branch
    %8 = sbr.rel target = $region3
  $region8: #{c3_forward.3} parent=0 // loop_exit
    _

// kernel: c3_forward.4
$region0: #{c3_forward.4}
  #allocation0 [shape = 'u32[]', space=smem, size = 0x4, offset = 0x4, fixed_abs, tag = 'smem constant byte address 0x4 - core index']
  #allocation1 [shape = 'u32[144,128]{1,0:T(1,128)}', space=vmem, size = 0x12000, scoped, tag = 'internal scratch']
  #allocation2 [shape = 'bf16[18,18,2]{2,1,0:T(8,128)(2,1)}', space=vmem, size = 0x1b000, scoped, tag = 'scratch operand']
  #allocation3 [shape = 'bf16[256,18]{1,0:T(16,128)(2,1)}', space=vmem, size = 0x10000, scoped, tag = 'scratch operand']
  %s0 = inlined_call_operand.vmem [shape: bf16[512,4], index: 0, kind: input, shape index: {}]
  %s1 = inlined_call_operand.vmem [shape: bf16[4,2], index: 1, kind: input, shape index: {}]
  %s2 = inlined_call_operand.vmem [shape: f32[1,2], index: 2, kind: input, shape index: {}]
  %s3 = inlined_call_operand.vmem [shape: bf16[18,2], index: 3, kind: input, shape index: {}]
  %s4 = inlined_call_operand.vmem [shape: f32[1,2], index: 4, kind: input, shape index: {}]
  %s5 = inlined_call_operand.vmem [shape: bf16[512,2], index: 5, kind: output, shape index: {}]
  %s6 = sld [smem:[#allocation0]]
  $region53: #{c3_forward.4} parent=0
    _
  %s8 = ssub.s32 1, %s6
  %s9 = scalar_select 0, %s8, %s6
  loop: start=0, step=1, limit=4
  $region2: #{c3_forward.4} parent=0 // loop_pre_header
    _
  $region3: #{c3_forward.4} parent=0 // loop_header
    %s11 = sphi 0, %s15
    %p12 = scmp.ge.s32.totalorder %s11, 4
    %s21 = sphi 0, %s23
    %s24 = sphi 0, %s21
    %s25 = sphi 0, %s24
    %s41 = sphi 0, %s25
    %s45 = sphi 0, %s45
    %s47 = sphi 0, %s45
    %s48 = sphi 0, %s47
    %s62 = sphi 0, %s48
    %s66 = sphi 0, %s66
    %s68 = sphi 0, %s66
    %s69 = sphi 0, %s68
    %s83 = sphi 0, %s69
    %s87 = sphi 0, %s87
    %s89 = sphi 0, %s87
    %s90 = sphi 0, %s89
    %s104 = sphi 0, %s90
    %s108 = sphi 0, %s108
    %s110 = sphi 0, %s108
    %s111 = sphi 0, %s110
    %s125 = sphi 0, %s111
    %s131 = sphi 0, %s133
    %s134 = sphi 0, %s131
    %s135 = sphi 0, %s134
    %s151 = sphi 0, %s135
  $region4: #{c3_forward.4} parent=0 // loop_header_branch
    %14 = sbr.rel (%p12) target = $region8
  $region5: #{c3_forward.4} parent=0 // loop_body
    %s16 = ssub.s32 %s11, 1
    %s17 = ssub.s32 %s11, 2
    %s18 = sadd.s32 %s11, 1
    %s19 = ssub.s32 %s11, %s18
    %p20 = scmp.eq.s32.totalorder %s19, 0
    %s22 = sadd.s32 %s21, 1
    %s23 = scalar_select %p20, %s21, %s22
    %p26 = pneg %p20
    %p27 = scmp.eq.s32.totalorder %s11, 1
    %p28 = por %p26, %p27
    %p29 = scmp.ne.s32.totalorder %s21, %s24
    %p30 = scmp.eq.s32.totalorder %s11, 0
    %p31 = por %p29, %p30
    %p32 = scmp.ne.s32.totalorder %s21, %s24
    %p33 = scmp.eq.s32.totalorder %s16, 1
    %p34 = por %p32, %p33
    %p35 = scmp.ne.s32.totalorder %s24, %s25
    %p36 = scmp.eq.s32.totalorder %s16, 0
    %p37 = por %p35, %p36
    %p38 = scmp.ne.s32.totalorder %s24, %s25
    %p39 = scmp.eq.s32.totalorder %s17, 1
    %p40 = por %p38, %p39
    %p42 = scmp.ne.s32.totalorder %s25, %s41
    %p43 = scmp.eq.s32.totalorder %s17, 0
    %p44 = por %p42, %p43
    %s46 = sadd.s32 %s45, 1
    %p49 = scmp.eq.s32.totalorder %s11, 1
    %p50 = scmp.ne.s32.totalorder %s45, %s47
    %p51 = scmp.eq.s32.totalorder %s11, 0
    %p52 = por %p50, %p51
    %p53 = scmp.ne.s32.totalorder %s45, %s47
    %p54 = scmp.eq.s32.totalorder %s16, 1
    %p55 = por %p53, %p54
    %p56 = scmp.ne.s32.totalorder %s47, %s48
    %p57 = scmp.eq.s32.totalorder %s16, 0
    %p58 = por %p56, %p57
    %p59 = scmp.ne.s32.totalorder %s47, %s48
    %p60 = scmp.eq.s32.totalorder %s17, 1
    %p61 = por %p59, %p60
    %p63 = scmp.ne.s32.totalorder %s48, %s62
    %p64 = scmp.eq.s32.totalorder %s17, 0
    %p65 = por %p63, %p64
    %s67 = sadd.s32 %s66, 1
    %p70 = scmp.eq.s32.totalorder %s11, 1
    %p71 = scmp.ne.s32.totalorder %s66, %s68
    %p72 = scmp.eq.s32.totalorder %s11, 0
    %p73 = por %p71, %p72
    %p74 = scmp.ne.s32.totalorder %s66, %s68
    %p75 = scmp.eq.s32.totalorder %s16, 1
    %p76 = por %p74, %p75
    %p77 = scmp.ne.s32.totalorder %s68, %s69
    %p78 = scmp.eq.s32.totalorder %s16, 0
    %p79 = por %p77, %p78
    %p80 = scmp.ne.s32.totalorder %s68, %s69
    %p81 = scmp.eq.s32.totalorder %s17, 1
    %p82 = por %p80, %p81
    %p84 = scmp.ne.s32.totalorder %s69, %s83
    %p85 = scmp.eq.s32.totalorder %s17, 0
    %p86 = por %p84, %p85
    %s88 = sadd.s32 %s87, 1
    %p91 = scmp.eq.s32.totalorder %s11, 1
    %p92 = scmp.ne.s32.totalorder %s87, %s89
    %p93 = scmp.eq.s32.totalorder %s11, 0
    %p94 = por %p92, %p93
    %p95 = scmp.ne.s32.totalorder %s87, %s89
    %p96 = scmp.eq.s32.totalorder %s16, 1
    %p97 = por %p95, %p96
    %p98 = scmp.ne.s32.totalorder %s89, %s90
    %p99 = scmp.eq.s32.totalorder %s16, 0
    %p100 = por %p98, %p99
    %p101 = scmp.ne.s32.totalorder %s89, %s90
    %p102 = scmp.eq.s32.totalorder %s17, 1
    %p103 = por %p101, %p102
    %p105 = scmp.ne.s32.totalorder %s90, %s104
    %p106 = scmp.eq.s32.totalorder %s17, 0
    %p107 = por %p105, %p106
    %s109 = sadd.s32 %s108, 1
    %p112 = scmp.eq.s32.totalorder %s11, 1
    %p113 = scmp.ne.s32.totalorder %s108, %s110
    %p114 = scmp.eq.s32.totalorder %s11, 0
    %p115 = por %p113, %p114
    %p116 = scmp.ne.s32.totalorder %s108, %s110
    %p117 = scmp.eq.s32.totalorder %s16, 1
    %p118 = por %p116, %p117
    %p119 = scmp.ne.s32.totalorder %s110, %s111
    %p120 = scmp.eq.s32.totalorder %s16, 0
    %p121 = por %p119, %p120
    %p122 = scmp.ne.s32.totalorder %s110, %s111
    %p123 = scmp.eq.s32.totalorder %s17, 1
    %p124 = por %p122, %p123
    %p126 = scmp.ne.s32.totalorder %s111, %s125
    %p127 = scmp.eq.s32.totalorder %s17, 0
    %p128 = por %p126, %p127
    %s129 = ssub.s32 %s11, %s18
    %p130 = scmp.eq.s32.totalorder %s129, 0
    %s132 = sadd.s32 %s131, 1
    %s133 = scalar_select %p130, %s131, %s132
    %p136 = pneg %p130
    %p137 = scmp.eq.s32.totalorder %s11, 1
    %p138 = por %p136, %p137
    %p139 = scmp.ne.s32.totalorder %s131, %s134
    %p140 = scmp.eq.s32.totalorder %s11, 0
    %p141 = por %p139, %p140
    %p142 = scmp.ne.s32.totalorder %s131, %s134
    %p143 = scmp.eq.s32.totalorder %s16, 1
    %p144 = por %p142, %p143
    %p145 = scmp.ne.s32.totalorder %s134, %s135
    %p146 = scmp.eq.s32.totalorder %s16, 0
    %p147 = por %p145, %p146
    %p148 = scmp.ne.s32.totalorder %s134, %s135
    %p149 = scmp.eq.s32.totalorder %s17, 1
    %p150 = por %p148, %p149
    %p152 = scmp.ne.s32.totalorder %s135, %s151
    %p153 = scmp.eq.s32.totalorder %s17, 0
    %p154 = por %p152, %p153
    %p155 = scmp.le.s32.totalorder 1, %s11
    %p156 = scmp.lt.s32.totalorder %s11, 3
    %p157 = pnand %p155, %p156
    %p158 = pneg %p157
    // Predicated region
    $region9: #{c3_forward.4} parent=5 // pred_check
      _
    $region10: #{c3_forward.4} parent=5 // pred_check_branch
      %160 = sbr.rel (%p157) target = $region12
    $region11: #{c3_forward.4} parent=5 // pred_region
      %s161 = ssub.s32 %s11, 1
      // Predicated region
      $region13: #{c3_forward.4} parent=11 // pred_check
        %p162 = pneg %p58
      $region14: #{c3_forward.4} parent=11 // pred_check_branch
        %164 = sbr.rel (%p162) target = $region16
      $region15: #{c3_forward.4} parent=11 // pred_region
        _
      $region16: #{c3_forward.4} parent=11 // pred_fallthru
        _
      // Predicated region
      $region17: #{c3_forward.4} parent=11 // pred_check
        %p165 = pneg %p79
      $region18: #{c3_forward.4} parent=11 // pred_check_branch
        %167 = sbr.rel (%p165) target = $region20
      $region19: #{c3_forward.4} parent=11 // pred_region
        _
      $region20: #{c3_forward.4} parent=11 // pred_fallthru
        _
      // Predicated region
      $region21: #{c3_forward.4} parent=11 // pred_check
        %p168 = pneg %p100
      $region22: #{c3_forward.4} parent=11 // pred_check_branch
        %170 = sbr.rel (%p168) target = $region24
      $region23: #{c3_forward.4} parent=11 // pred_region
        _
      $region24: #{c3_forward.4} parent=11 // pred_fallthru
        _
      // Predicated region
      $region25: #{c3_forward.4} parent=11 // pred_check
        %p171 = pneg %p121
      $region26: #{c3_forward.4} parent=11 // pred_check_branch
        %173 = sbr.rel (%p171) target = $region28
      $region27: #{c3_forward.4} parent=11 // pred_region
        _
      $region28: #{c3_forward.4} parent=11 // pred_fallthru
        _
    $region12: #{c3_forward.4} parent=5 // pred_fallthru
      _
    %p174 = scmp.lt.s32.totalorder %s11, 2
    // Predicated region
    $region29: #{c3_forward.4} parent=5 // pred_check
      %p175 = pneg %p174
    $region30: #{c3_forward.4} parent=5 // pred_check_branch
      %177 = sbr.rel (%p175) target = $region32
    $region31: #{c3_forward.4} parent=5 // pred_region
      // Predicated region
      $region33: #{c3_forward.4} parent=31 // pred_check
        %p178 = pneg %p31
      $region34: #{c3_forward.4} parent=31 // pred_check_branch
        %180 = sbr.rel (%p178) target = $region36
      $region35: #{c3_forward.4} parent=31 // pred_region
        %s181 = smul.u32 32, %s11
        %p182 = scmp.lt.s32.totalorder %s181, 63
        %s183 = scalar_select %p182, %s181, 63
        %s184 = smul.addr %s183, 4
        %s185 = scalar_lea.vmem %s0, %s184
        %s186 = smul.u32 32, %s11
      $region36: #{c3_forward.4} parent=31 // pred_fallthru
        _
    $region32: #{c3_forward.4} parent=5 // pred_fallthru
      _
    %p187 = scmp.le.s32.totalorder 1, %s11
    %p188 = scmp.lt.s32.totalorder %s11, 3
    %p189 = pnand %p187, %p188
    %p190 = pneg %p189
    // Predicated region
    $region37: #{c3_forward.4} parent=5 // pred_check
      _
    $region38: #{c3_forward.4} parent=5 // pred_check_branch
      %192 = sbr.rel (%p189) target = $region40
    $region39: #{c3_forward.4} parent=5 // pred_region
      %s193 = ssub.s32 %s11, 1
      %s194 = smul.u32 32, %s16
      %p195 = scmp.lt.s32.totalorder %s194, 63
      %s196 = scalar_select %p195, %s194, 63
      %s197 = smul.addr %s196, 4
      %s198 = scalar_lea.vmem %s0, %s197
      %p199 = pneg %p37
      %p200 = pneg %p34
      %p201 = pneg %p58
      %p202 = pneg %p55
      %p203 = pneg %p79
      %p204 = pneg %p76
      %p205 = pneg %p100
      %p206 = pneg %p97
      %p207 = pneg %p121
      %p208 = pneg %p118
      %p209 = pneg %p147
      %p210 = pneg %p144
      %s211 = smul.u32 32, %s16
      %p212 = scmp.lt.s32.totalorder %s211, 63
      %s213 = scalar_select %p212, %s211, 63
      %s214 = smul.addr %s213, 4
      %s215 = scalar_lea.vmem %s5, %s214
      %s216 = smul.u32 32, %s16
      %p217 = scmp.lt.s32.totalorder %s216, 63
      %s218 = scalar_select %p217, %s216, 63
      %s219 = smul.addr %s218, 4
      %s220 = scalar_lea.vmem %s0, %s219
      %s221 = smul.u32 32, %s16
      %s222 = smul.u32 32, %s16
      %p223 = scmp.lt.s32.totalorder %s222, 63
      %s224 = scalar_select %p223, %s222, 63
      %s225 = smul.addr %s224, 4
      %s226 = scalar_lea.vmem %s5, %s225
      %s227 = smul.u32 32, %s16
      %v229 = vld [vmem:[%s220] sm:$0xf]
      %v230 = vld [vmem:[%s220 + $0x4] sm:$0xf]
      %v231 = vld [vmem:[%s220 + $0x8] sm:$0xf]
      %v232 = vld [vmem:[%s220 + $0xc] sm:$0xf]
      %v233 = vld [vmem:[%s220 + $0x10] sm:$0xf]
      %v234 = vld [vmem:[%s220 + $0x14] sm:$0xf]
      %v235 = vld [vmem:[%s220 + $0x18] sm:$0xf]
      %v236 = vld [vmem:[%s220 + $0x1c] sm:$0xf]
      %v237 = vld [vmem:[%s220 + $0x20] sm:$0xf]
      %v238 = vld [vmem:[%s220 + $0x24] sm:$0xf]
      %v239 = vld [vmem:[%s220 + $0x28] sm:$0xf]
      %v240 = vld [vmem:[%s220 + $0x2c] sm:$0xf]
      %v241 = vld [vmem:[%s220 + $0x30] sm:$0xf]
      %v242 = vld [vmem:[%s220 + $0x34] sm:$0xf]
      %v243 = vld [vmem:[%s220 + $0x38] sm:$0xf]
      %v244 = vld [vmem:[%s220 + $0x3c] sm:$0xf]
      %v245 = vld [vmem:[%s220 + $0x40] sm:$0xf]
      %v246 = vld [vmem:[%s220 + $0x44] sm:$0xf]
      %v247 = vld [vmem:[%s220 + $0x48] sm:$0xf]
      %v248 = vld [vmem:[%s220 + $0x4c] sm:$0xf]
      %v249 = vld [vmem:[%s220 + $0x50] sm:$0xf]
      %v250 = vld [vmem:[%s220 + $0x54] sm:$0xf]
      %v251 = vld [vmem:[%s220 + $0x58] sm:$0xf]
      %v252 = vld [vmem:[%s220 + $0x5c] sm:$0xf]
      %v253 = vld [vmem:[%s220 + $0x60] sm:$0xf]
      %v254 = vld [vmem:[%s220 + $0x64] sm:$0xf]
      %v255 = vld [vmem:[%s220 + $0x68] sm:$0xf]
      %v256 = vld [vmem:[%s220 + $0x6c] sm:$0xf]
      %v257 = vld [vmem:[%s220 + $0x70] sm:$0xf]
      %v258 = vld [vmem:[%s220 + $0x74] sm:$0xf]
      %v259 = vld [vmem:[%s220 + $0x78] sm:$0xf]
      %v260 = vld [vmem:[%s220 + $0x7c] sm:$0xf]
      %v261 = vld [vmem:[%s1] sm:$0x3]
      %v262 = vld [vmem:[%s2] sm:$0x1]
      %v264 = vlaneseq
      %v265 = vshrl.u32 %v264, 7
      %v266 = vsub.s32 0, %v265
      %v267 = vrot.slane %v262, %v266
      %v301 = vunpack.c.l.b16 %v229
      %v302 = vunpack.c.l.b16 %v230
      %v303 = vunpack.c.l.b16 %v231
      %v304 = vunpack.c.l.b16 %v232
      %v305 = vunpack.c.l.b16 %v233
      %v306 = vunpack.c.l.b16 %v234
      %v307 = vunpack.c.l.b16 %v235
      %v308 = vunpack.c.l.b16 %v236
      %v309 = vunpack.c.l.b16 %v237
      %v310 = vunpack.c.l.b16 %v238
      %v311 = vunpack.c.l.b16 %v239
      %v312 = vunpack.c.l.b16 %v240
      %v313 = vunpack.c.l.b16 %v241
      %v314 = vunpack.c.l.b16 %v242
      %v315 = vunpack.c.l.b16 %v243
      %v316 = vunpack.c.l.b16 %v244
      %v317 = vunpack.c.l.b16 %v245
      %v318 = vunpack.c.l.b16 %v246
      %v319 = vunpack.c.l.b16 %v247
      %v320 = vunpack.c.l.b16 %v248
      %v321 = vunpack.c.l.b16 %v249
      %v322 = vunpack.c.l.b16 %v250
      %v323 = vunpack.c.l.b16 %v251
      %v324 = vunpack.c.l.b16 %v252
      %v325 = vunpack.c.l.b16 %v253
      %v326 = vunpack.c.l.b16 %v254
      %v327 = vunpack.c.l.b16 %v255
      %v328 = vunpack.c.l.b16 %v256
      %v329 = vunpack.c.l.b16 %v257
      %v330 = vunpack.c.l.b16 %v258
      %v331 = vunpack.c.l.b16 %v259
      %v332 = vunpack.c.l.b16 %v260
      %v333 = vpack.c.b16 %v302, %v301
      %v334 = vpack.c.b16 %v304, %v303
      %v335 = vpack.c.b16 %v306, %v305
      %v336 = vpack.c.b16 %v308, %v307
      %v337 = vpack.c.b16 %v310, %v309
      %v338 = vpack.c.b16 %v312, %v311
      %v339 = vpack.c.b16 %v314, %v313
      %v340 = vpack.c.b16 %v316, %v315
      %v341 = vpack.c.b16 %v318, %v317
      %v342 = vpack.c.b16 %v320, %v319
      %v343 = vpack.c.b16 %v322, %v321
      %v344 = vpack.c.b16 %v324, %v323
      %v345 = vpack.c.b16 %v326, %v325
      %v346 = vpack.c.b16 %v328, %v327
      %v347 = vpack.c.b16 %v330, %v329
      %v348 = vpack.c.b16 %v332, %v331
      %vm349 = vcmask 31744
      %v351 = vsel %vm349, %v333, 0
      %v354 = vsel %vm349, %v334, 0
      %v357 = vsel %vm349, %v335, 0
      %v360 = vsel %vm349, %v336, 0
      %v363 = vsel %vm349, %v337, 0
      %v366 = vsel %vm349, %v338, 0
      %v369 = vsel %vm349, %v339, 0
      %v372 = vsel %vm349, %v340, 0
      %v375 = vsel %vm349, %v341, 0
      %v378 = vsel %vm349, %v342, 0
      %v381 = vsel %vm349, %v343, 0
      %v384 = vsel %vm349, %v344, 0
      %v387 = vsel %vm349, %v345, 0
      %v390 = vsel %vm349, %v346, 0
      %v393 = vsel %vm349, %v347, 0
      %v396 = vsel %vm349, %v348, 0
      %vm398 = vcmask 1041408
      %v400 = vsel %vm398, %v261, 0
      %402 = vmatprep.subr.bf16.mxu0 0
      %403 = vmatpush1.bf16.msra.mxu0 %v400
      %404 = vmatprep.subr.bf16.mxu0 0
      %405 = vmatpush1.bf16.msra.mxu0 0
      %406 = vmatprep.subr.bf16.mxu0 0
      %407 = vmatpush1.bf16.msra.mxu0 0
      %408 = vmatprep.subr.bf16.mxu0 0
      %409 = vmatpush1.bf16.msra.mxu0 0
      %410 = vmatprep.subr.bf16.mxu0 0
      %411 = vmatpush1.bf16.msra.mxu0 0
      %412 = vmatprep.subr.bf16.mxu0 0
      %413 = vmatpush1.bf16.msra.mxu0 0
      %414 = vmatprep.subr.bf16.mxu0 0
      %415 = vmatpush1.bf16.msra.mxu0 0
      %416 = vmatprep.subr.bf16.mxu0 0
      %417 = vmatpush1.bf16.msra.mxu0 0
      %418 = vmatprep.subr.bf16.mxu0 0
      %419 = vmatpush1.bf16.msra.mxu0 0
      %420 = vmatprep.subr.bf16.mxu0 0
      %421 = vmatpush1.bf16.msra.mxu0 0
      %422 = vmatprep.subr.bf16.mxu0 0
      %423 = vmatpush1.bf16.msra.mxu0 0
      %424 = vmatprep.subr.bf16.mxu0 0
      %425 = vmatpush1.bf16.msra.mxu0 0
      %426 = vmatprep.subr.bf16.mxu0 0
      %427 = vmatpush1.bf16.msra.mxu0 0
      %428 = vmatprep.subr.bf16.mxu0 0
      %429 = vmatpush1.bf16.msra.mxu0 0
      %430 = vmatprep.subr.bf16.mxu0 0
      %431 = vmatpush1.bf16.msra.mxu0 0
      %432 = vmatprep.subr.bf16.mxu0 0
      %433 = vmatpush1.bf16.msra.mxu0 0
      %434 = vmatprep.mubr.bf16.mxu0 0
      %435 = vmatmul.mubr.bf16.gmra.mrb[0].mxu0 %v351
      %v436 = vpop.f32.mrb[0].mxu0
      %v437 = vadd.f32 %v267, %v436
      %v438 = vpop.f32.mrb[0].mxu0
      %v439 = vpop.f32.mrb[0].mxu0
      %v440 = vadd.f32 %v267, %v439
      %v441 = vpop.f32.mrb[0].mxu0
      %442 = vmatprep.mubr.bf16.mxu0 0
      %443 = vmatmul.mubr.bf16.gmra.mrb[0].mxu0 %v354
      %v444 = vpop.f32.mrb[0].mxu0
      %v445 = vadd.f32 %v267, %v444
      %v446 = vpop.f32.mrb[0].mxu0
      %v447 = vpop.f32.mrb[0].mxu0
      %v448 = vadd.f32 %v267, %v447
      %v449 = vpop.f32.mrb[0].mxu0
      %450 = vmatprep.mubr.bf16.mxu0 0
      %451 = vmatmul.mubr.bf16.gmra.mrb[0].mxu0 %v357
      %v452 = vpop.f32.mrb[0].mxu0
      %v453 = vadd.f32 %v267, %v452
      %v454 = vpop.f32.mrb[0].mxu0
      %v455 = vpop.f32.mrb[0].mxu0
      %v456 = vadd.f32 %v267, %v455
      %v457 = vpop.f32.mrb[0].mxu0
      %458 = vmatprep.mubr.bf16.mxu0 0
      %459 = vmatmul.mubr.bf16.gmra.mrb[0].mxu0 %v360
      %v460 = vpop.f32.mrb[0].mxu0
      %v461 = vadd.f32 %v267, %v460
      %v462 = vpop.f32.mrb[0].mxu0
      %v463 = vpop.f32.mrb[0].mxu0
      %v464 = vadd.f32 %v267, %v463
      %v465 = vpop.f32.mrb[0].mxu0
      %466 = vmatprep.mubr.bf16.mxu0 0
      %467 = vmatmul.mubr.bf16.gmra.mrb[0].mxu0 %v363
      %v468 = vpop.f32.mrb[0].mxu0
      %v469 = vadd.f32 %v267, %v468
      %v470 = vpop.f32.mrb[0].mxu0
      %v471 = vpop.f32.mrb[0].mxu0
      %v472 = vadd.f32 %v267, %v471
      %v473 = vpop.f32.mrb[0].mxu0
      %474 = vmatprep.mubr.bf16.mxu0 0
      %475 = vmatmul.mubr.bf16.gmra.mrb[0].mxu0 %v366
      %v476 = vpop.f32.mrb[0].mxu0
      %v477 = vadd.f32 %v267, %v476
      %v478 = vpop.f32.mrb[0].mxu0
      %v479 = vpop.f32.mrb[0].mxu0
      %v480 = vadd.f32 %v267, %v479
      %v481 = vpop.f32.mrb[0].mxu0
      %482 = vmatprep.mubr.bf16.mxu0 0
      %483 = vmatmul.mubr.bf16.gmra.mrb[0].mxu0 %v369
      %v484 = vpop.f32.mrb[0].mxu0
      %v485 = vadd.f32 %v267, %v484
      %v486 = vpop.f32.mrb[0].mxu0
      %v487 = vpop.f32.mrb[0].mxu0
      %v488 = vadd.f32 %v267, %v487
      %v489 = vpop.f32.mrb[0].mxu0
      %490 = vmatprep.mubr.bf16.mxu0 0
      %491 = vmatmul.mubr.bf16.gmra.mrb[0].mxu0 %v372
      %v492 = vpop.f32.mrb[0].mxu0
      %v493 = vadd.f32 %v267, %v492
      %v494 = vpop.f32.mrb[0].mxu0
      %v495 = vpop.f32.mrb[0].mxu0
      %v496 = vadd.f32 %v267, %v495
      %v497 = vpop.f32.mrb[0].mxu0
      %498 = vmatprep.mubr.bf16.mxu0 0
      %499 = vmatmul.mubr.bf16.gmra.mrb[0].mxu0 %v375
      %v500 = vpop.f32.mrb[0].mxu0
      %v501 = vadd.f32 %v267, %v500
      %v502 = vpop.f32.mrb[0].mxu0
      %v503 = vpop.f32.mrb[0].mxu0
      %v504 = vadd.f32 %v267, %v503
      %v505 = vpop.f32.mrb[0].mxu0
      %506 = vmatprep.mubr.bf16.mxu0 0
      %507 = vmatmul.mubr.bf16.gmra.mrb[0].mxu0 %v378
      %v508 = vpop.f32.mrb[0].mxu0
      %v509 = vadd.f32 %v267, %v508
      %v510 = vpop.f32.mrb[0].mxu0
      %v511 = vpop.f32.mrb[0].mxu0
      %v512 = vadd.f32 %v267, %v511
      %v513 = vpop.f32.mrb[0].mxu0
      %514 = vmatprep.mubr.bf16.mxu0 0
      %515 = vmatmul.mubr.bf16.gmra.mrb[0].mxu0 %v381
      %v516 = vpop.f32.mrb[0].mxu0
      %v517 = vadd.f32 %v267, %v516
      %v518 = vpop.f32.mrb[0].mxu0
      %v519 = vpop.f32.mrb[0].mxu0
      %v520 = vadd.f32 %v267, %v519
      %v521 = vpop.f32.mrb[0].mxu0
      %522 = vmatprep.mubr.bf16.mxu0 0
      %523 = vmatmul.mubr.bf16.gmra.mrb[0].mxu0 %v384
      %v524 = vpop.f32.mrb[0].mxu0
      %v525 = vadd.f32 %v267, %v524
      %v526 = vpop.f32.mrb[0].mxu0
      %v527 = vpop.f32.mrb[0].mxu0
      %v528 = vadd.f32 %v267, %v527
      %v529 = vpop.f32.mrb[0].mxu0
      %530 = vmatprep.mubr.bf16.mxu0 0
      %531 = vmatmul.mubr.bf16.gmra.mrb[0].mxu0 %v387
      %v532 = vpop.f32.mrb[0].mxu0
      %v533 = vadd.f32 %v267, %v532
      %v534 = vpop.f32.mrb[0].mxu0
      %v535 = vpop.f32.mrb[0].mxu0
      %v536 = vadd.f32 %v267, %v535
      %v537 = vpop.f32.mrb[0].mxu0
      %538 = vmatprep.mubr.bf16.mxu0 0
      %539 = vmatmul.mubr.bf16.gmra.mrb[0].mxu0 %v390
      %v540 = vpop.f32.mrb[0].mxu0
      %v541 = vadd.f32 %v267, %v540
      %v542 = vpop.f32.mrb[0].mxu0
      %v543 = vpop.f32.mrb[0].mxu0
      %v544 = vadd.f32 %v267, %v543
      %v545 = vpop.f32.mrb[0].mxu0
      %546 = vmatprep.mubr.bf16.mxu0 0
      %547 = vmatmul.mubr.bf16.gmra.mrb[0].mxu0 %v393
      %v548 = vpop.f32.mrb[0].mxu0
      %v549 = vadd.f32 %v267, %v548
      %v550 = vpop.f32.mrb[0].mxu0
      %v551 = vpop.f32.mrb[0].mxu0
      %v552 = vadd.f32 %v267, %v551
      %v553 = vpop.f32.mrb[0].mxu0
      %554 = vmatprep.mubr.bf16.mxu0 0
      %555 = vmatmul.mubr.bf16.gmra.mrb[0].mxu0 %v396
      %v556 = vpop.f32.mrb[0].mxu0
      %v557 = vadd.f32 %v267, %v556
      %v558 = vpop.f32.mrb[0].mxu0
      %v559 = vpop.f32.mrb[0].mxu0
      %v560 = vadd.f32 %v267, %v559
      %v561 = vpop.f32.mrb[0].mxu0
      %562 = vdwg.mxu0
      %v563 = vsub.f32 0.0, %v437
      %v564 = vsub.f32 0.0, %v440
      %v565 = vsub.f32 0.0, %v445
      %v566 = vsub.f32 0.0, %v448
      %v567 = vsub.f32 0.0, %v453
      %v568 = vsub.f32 0.0, %v456
      %v569 = vsub.f32 0.0, %v461
      %v570 = vsub.f32 0.0, %v464
      %v571 = vsub.f32 0.0, %v469
      %v572 = vsub.f32 0.0, %v472
      %v573 = vsub.f32 0.0, %v477
      %v574 = vsub.f32 0.0, %v480
      %v575 = vsub.f32 0.0, %v485
      %v576 = vsub.f32 0.0, %v488
      %v577 = vsub.f32 0.0, %v493
      %v578 = vsub.f32 0.0, %v496
      %v579 = vsub.f32 0.0, %v501
      %v580 = vsub.f32 0.0, %v504
      %v581 = vsub.f32 0.0, %v509
      %v582 = vsub.f32 0.0, %v512
      %v583 = vsub.f32 0.0, %v517
      %v584 = vsub.f32 0.0, %v520
      %v585 = vsub.f32 0.0, %v525
      %v586 = vsub.f32 0.0, %v528
      %v587 = vsub.f32 0.0, %v533
      %v588 = vsub.f32 0.0, %v536
      %v589 = vsub.f32 0.0, %v541
      %v590 = vsub.f32 0.0, %v544
      %v591 = vsub.f32 0.0, %v549
      %v592 = vsub.f32 0.0, %v552
      %v593 = vsub.f32 0.0, %v557
      %v594 = vsub.f32 0.0, %v560
      %v595 = vmul.f32 %v563, 1.442695
      %v596 = vpow.pop %v595
      %v597 = vmul.f32 %v564, 1.442695
      %v598 = vpow.pop %v597
      %v599 = vmul.f32 %v565, 1.442695
      %v600 = vpow.pop %v599
      %v601 = vmul.f32 %v566, 1.442695
      %v602 = vpow.pop %v601
      %v603 = vmul.f32 %v567, 1.442695
      %v604 = vpow.pop %v603
      %v605 = vmul.f32 %v568, 1.442695
      %v606 = vpow.pop %v605
      %v607 = vmul.f32 %v569, 1.442695
      %v608 = vpow.pop %v607
      %v609 = vmul.f32 %v570, 1.442695
      %v610 = vpow.pop %v609
      %v611 = vmul.f32 %v571, 1.442695
      %v612 = vpow.pop %v611
      %v613 = vmul.f32 %v572, 1.442695
      %v614 = vpow.pop %v613
      %v615 = vmul.f32 %v573, 1.442695
      %v616 = vpow.pop %v615
      %v617 = vmul.f32 %v574, 1.442695
      %v618 = vpow.pop %v617
      %v619 = vmul.f32 %v575, 1.442695
      %v620 = vpow.pop %v619
      %v621 = vmul.f32 %v576, 1.442695
      %v622 = vpow.pop %v621
      %v623 = vmul.f32 %v577, 1.442695
      %v624 = vpow.pop %v623
      %v625 = vmul.f32 %v578, 1.442695
      %v626 = vpow.pop %v625
      %v627 = vmul.f32 %v579, 1.442695
      %v628 = vpow.pop %v627
      %v629 = vmul.f32 %v580, 1.442695
      %v630 = vpow.pop %v629
      %v631 = vmul.f32 %v581, 1.442695
      %v632 = vpow.pop %v631
      %v633 = vmul.f32 %v582, 1.442695
      %v634 = vpow.pop %v633
      %v635 = vmul.f32 %v583, 1.442695
      %v636 = vpow.pop %v635
      %v637 = vmul.f32 %v584, 1.442695
      %v638 = vpow.pop %v637
      %v639 = vmul.f32 %v585, 1.442695
      %v640 = vpow.pop %v639
      %v641 = vmul.f32 %v586, 1.442695
      %v642 = vpow.pop %v641
      %v643 = vmul.f32 %v587, 1.442695
      %v644 = vpow.pop %v643
      %v645 = vmul.f32 %v588, 1.442695
      %v646 = vpow.pop %v645
      %v647 = vmul.f32 %v589, 1.442695
      %v648 = vpow.pop %v647
      %v649 = vmul.f32 %v590, 1.442695
      %v650 = vpow.pop %v649
      %v651 = vmul.f32 %v591, 1.442695
      %v652 = vpow.pop %v651
      %v653 = vmul.f32 %v592, 1.442695
      %v654 = vpow.pop %v653
      %v655 = vmul.f32 %v593, 1.442695
      %v656 = vpow.pop %v655
      %v657 = vmul.f32 %v594, 1.442695
      %v658 = vpow.pop %v657
      %v659 = vadd.f32 %v596, 1.0
      %v660 = vadd.f32 %v598, 1.0
      %v661 = vadd.f32 %v600, 1.0
      %v662 = vadd.f32 %v602, 1.0
      %v663 = vadd.f32 %v604, 1.0
      %v664 = vadd.f32 %v606, 1.0
      %v665 = vadd.f32 %v608, 1.0
      %v666 = vadd.f32 %v610, 1.0
      %v667 = vadd.f32 %v612, 1.0
      %v668 = vadd.f32 %v614, 1.0
      %v669 = vadd.f32 %v616, 1.0
      %v670 = vadd.f32 %v618, 1.0
      %v671 = vadd.f32 %v620, 1.0
      %v672 = vadd.f32 %v622, 1.0
      %v673 = vadd.f32 %v624, 1.0
      %v674 = vadd.f32 %v626, 1.0
      %v675 = vadd.f32 %v628, 1.0
      %v676 = vadd.f32 %v630, 1.0
      %v677 = vadd.f32 %v632, 1.0
      %v678 = vadd.f32 %v634, 1.0
      %v679 = vadd.f32 %v636, 1.0
      %v680 = vadd.f32 %v638, 1.0
      %v681 = vadd.f32 %v640, 1.0
      %v682 = vadd.f32 %v642, 1.0
      %v683 = vadd.f32 %v644, 1.0
      %v684 = vadd.f32 %v646, 1.0
      %v685 = vadd.f32 %v648, 1.0
      %v686 = vadd.f32 %v650, 1.0
      %v687 = vadd.f32 %v652, 1.0
      %v688 = vadd.f32 %v654, 1.0
      %v689 = vadd.f32 %v656, 1.0
      %v690 = vadd.f32 %v658, 1.0
      %v691 = vrcp.pop %v659
      %v692 = vrcp.pop %v660
      %v693 = vrcp.pop %v661
      %v694 = vrcp.pop %v662
      %v695 = vrcp.pop %v663
      %v696 = vrcp.pop %v664
      %v697 = vrcp.pop %v665
      %v698 = vrcp.pop %v666
      %v699 = vrcp.pop %v667
      %v700 = vrcp.pop %v668
      %v701 = vrcp.pop %v669
      %v702 = vrcp.pop %v670
      %v703 = vrcp.pop %v671
      %v704 = vrcp.pop %v672
      %v705 = vrcp.pop %v673
      %v706 = vrcp.pop %v674
      %v707 = vrcp.pop %v675
      %v708 = vrcp.pop %v676
      %v709 = vrcp.pop %v677
      %v710 = vrcp.pop %v678
      %v711 = vrcp.pop %v679
      %v712 = vrcp.pop %v680
      %v713 = vrcp.pop %v681
      %v714 = vrcp.pop %v682
      %v715 = vrcp.pop %v683
      %v716 = vrcp.pop %v684
      %v717 = vrcp.pop %v685
      %v718 = vrcp.pop %v686
      %v719 = vrcp.pop %v687
      %v720 = vrcp.pop %v688
      %v721 = vrcp.pop %v689
      %v722 = vrcp.pop %v690
      %v723 = vmul.f32 %v437, %v691
      %v724 = vmul.f32 %v440, %v692
      %v725 = vmul.f32 %v445, %v693
      %v726 = vmul.f32 %v448, %v694
      %v727 = vmul.f32 %v453, %v695
      %v728 = vmul.f32 %v456, %v696
      %v729 = vmul.f32 %v461, %v697
      %v730 = vmul.f32 %v464, %v698
      %v731 = vmul.f32 %v469, %v699
      %v732 = vmul.f32 %v472, %v700
      %v733 = vmul.f32 %v477, %v701
      %v734 = vmul.f32 %v480, %v702
      %v735 = vmul.f32 %v485, %v703
      %v736 = vmul.f32 %v488, %v704
      %v737 = vmul.f32 %v493, %v705
      %v738 = vmul.f32 %v496, %v706
      %v739 = vmul.f32 %v501, %v707
      %v740 = vmul.f32 %v504, %v708
      %v741 = vmul.f32 %v509, %v709
      %v742 = vmul.f32 %v512, %v710
      %v743 = vmul.f32 %v517, %v711
      %v744 = vmul.f32 %v520, %v712
      %v745 = vmul.f32 %v525, %v713
      %v746 = vmul.f32 %v528, %v714
      %v747 = vmul.f32 %v533, %v715
      %v748 = vmul.f32 %v536, %v716
      %v749 = vmul.f32 %v541, %v717
      %v750 = vmul.f32 %v544, %v718
      %v751 = vmul.f32 %v549, %v719
      %v752 = vmul.f32 %v552, %v720
      %v753 = vmul.f32 %v557, %v721
      %v754 = vmul.f32 %v560, %v722
      %vm755 = vcmask 11264
      %756 = vst.msk [vmem:[#allocation2] sm:$0xf] %vm755, 0
      %757 = vst.msk [vmem:[#allocation2 + $0x4] sm:$0xf] %vm755, 0
      %vm758 = vcmask 8192
      %759 = vst.msk [vmem:[#allocation2 + $0x8] sm:$0x1] %vm758, 0
      %760 = vst.msk [vmem:[#allocation2 + $0xc] sm:$0xf] %vm755, 0
      %761 = vst.msk [vmem:[#allocation2 + $0x10] sm:$0xf] %vm755, 0
      %762 = vst.msk [vmem:[#allocation2 + $0x14] sm:$0x1] %vm758, 0
      %763 = vst.msk [vmem:[#allocation2 + $0x18] sm:$0xf] %vm755, 0
      %764 = vst.msk [vmem:[#allocation2 + $0x1c] sm:$0xf] %vm755, 0
      %765 = vst.msk [vmem:[#allocation2 + $0x20] sm:$0x1] %vm758, 0
      %766 = vst.msk [vmem:[#allocation2 + $0x24] sm:$0xf] %vm755, 0
      %767 = vst.msk [vmem:[#allocation2 + $0x28] sm:$0xf] %vm755, 0
      %768 = vst.msk [vmem:[#allocation2 + $0x2c] sm:$0x1] %vm758, 0
      %769 = vst.msk [vmem:[#allocation2 + $0x30] sm:$0xf] %vm755, 0
      %770 = vst.msk [vmem:[#allocation2 + $0x34] sm:$0xf] %vm755, 0
      %771 = vst.msk [vmem:[#allocation2 + $0x38] sm:$0x1] %vm758, 0
      %772 = vst.msk [vmem:[#allocation2 + $0x3c] sm:$0xf] %vm755, 0
      %773 = vst.msk [vmem:[#allocation2 + $0x40] sm:$0xf] %vm755, 0
      %774 = vst.msk [vmem:[#allocation2 + $0x44] sm:$0x1] %vm758, 0
      %775 = vst.msk [vmem:[#allocation2 + $0x48] sm:$0xf] %vm755, 0
      %776 = vst.msk [vmem:[#allocation2 + $0x4c] sm:$0xf] %vm755, 0
      %777 = vst.msk [vmem:[#allocation2 + $0x50] sm:$0x1] %vm758, 0
      %778 = vst.msk [vmem:[#allocation2 + $0x54] sm:$0xf] %vm755, 0
      %779 = vst.msk [vmem:[#allocation2 + $0x58] sm:$0xf] %vm755, 0
      %780 = vst.msk [vmem:[#allocation2 + $0x5c] sm:$0x1] %vm758, 0
      %781 = vst.msk [vmem:[#allocation2 + $0x60] sm:$0xf] %vm755, 0
      %782 = vst.msk [vmem:[#allocation2 + $0x64] sm:$0xf] %vm755, 0
      %783 = vst.msk [vmem:[#allocation2 + $0x68] sm:$0x1] %vm758, 0
      %784 = vst.msk [vmem:[#allocation2 + $0x6c] sm:$0xf] %vm755, 0
      %785 = vst.msk [vmem:[#allocation2 + $0x70] sm:$0xf] %vm755, 0
      %786 = vst.msk [vmem:[#allocation2 + $0x74] sm:$0x1] %vm758, 0
      %787 = vst.msk [vmem:[#allocation2 + $0x78] sm:$0xf] %vm755, 0
      %788 = vst.msk [vmem:[#allocation2 + $0x7c] sm:$0xf] %vm755, 0
      %789 = vst.msk [vmem:[#allocation2 + $0x80] sm:$0x1] %vm758, 0
      %790 = vst.msk [vmem:[#allocation2 + $0x84] sm:$0xf] %vm755, 0
      %791 = vst.msk [vmem:[#allocation2 + $0x88] sm:$0xf] %vm755, 0
      %792 = vst.msk [vmem:[#allocation2 + $0x8c] sm:$0x1] %vm758, 0
      %793 = vst.msk [vmem:[#allocation2 + $0x90] sm:$0xf] %vm755, 0
      %794 = vst.msk [vmem:[#allocation2 + $0x94] sm:$0xf] %vm755, 0
      %795 = vst.msk [vmem:[#allocation2 + $0x98] sm:$0x1] %vm758, 0
      %796 = vst.msk [vmem:[#allocation2 + $0x9c] sm:$0xf] %vm755, 0
      %797 = vst.msk [vmem:[#allocation2 + $0xa0] sm:$0xf] %vm755, 0
      %798 = vst.msk [vmem:[#allocation2 + $0xa4] sm:$0x1] %vm758, 0
      %799 = vst.msk [vmem:[#allocation2 + $0xa8] sm:$0xf] %vm755, 0
      %800 = vst.msk [vmem:[#allocation2 + $0xac] sm:$0xf] %vm755, 0
      %801 = vst.msk [vmem:[#allocation2 + $0xb0] sm:$0x1] %vm758, 0
      %802 = vst.msk [vmem:[#allocation2 + $0xb4] sm:$0xf] %vm755, 0
      %803 = vst.msk [vmem:[#allocation2 + $0xb8] sm:$0xf] %vm755, 0
      %804 = vst.msk [vmem:[#allocation2 + $0xbc] sm:$0x1] %vm758, 0
      %805 = vst.msk [vmem:[#allocation2 + $0xc0] sm:$0xf] %vm755, 0
      %806 = vst.msk [vmem:[#allocation2 + $0xc4] sm:$0xf] %vm755, 0
      %807 = vst.msk [vmem:[#allocation2 + $0xc8] sm:$0x1] %vm758, 0
      %808 = vst.msk [vmem:[#allocation2 + $0xcc] sm:$0xf] %vm755, 0
      %809 = vst.msk [vmem:[#allocation2 + $0xd0] sm:$0xf] %vm755, 0
      %810 = vst.msk [vmem:[#allocation2 + $0xd4] sm:$0x1] %vm758, 0
      %v811 = vpack.c.bf16 %v724, %v723
      %v812 = vpack.c.bf16 %v726, %v725
      %v813 = vpack.c.bf16 %v728, %v727
      %v814 = vpack.c.bf16 %v730, %v729
      %v815 = vpack.c.bf16 %v732, %v731
      %v816 = vpack.c.bf16 %v734, %v733
      %v817 = vpack.c.bf16 %v736, %v735
      %v818 = vpack.c.bf16 %v738, %v737
      %v819 = vpack.c.bf16 %v740, %v739
      %v820 = vpack.c.bf16 %v742, %v741
      %v821 = vpack.c.bf16 %v744, %v743
      %v822 = vpack.c.bf16 %v746, %v745
      %v823 = vpack.c.bf16 %v748, %v747
      %v824 = vpack.c.bf16 %v750, %v749
      %v825 = vpack.c.bf16 %v752, %v751
      %v826 = vpack.c.bf16 %v754, %v753
      %v843 = vunpack.c.l.b16 %v811
      %v844 = vunpack.c.h.b16 %v811
      %v845 = vunpack.c.l.b16 %v812
      %v846 = vunpack.c.h.b16 %v812
      %v847 = vunpack.c.l.b16 %v813
      %v848 = vunpack.c.h.b16 %v813
      %v849 = vunpack.c.l.b16 %v814
      %v850 = vunpack.c.h.b16 %v814
      %v851 = vunpack.c.l.b16 %v815
      %v852 = vunpack.c.h.b16 %v815
      %v853 = vunpack.c.l.b16 %v816
      %v854 = vunpack.c.h.b16 %v816
      %v855 = vunpack.c.l.b16 %v817
      %v856 = vunpack.c.h.b16 %v817
      %v857 = vunpack.c.l.b16 %v818
      %v858 = vunpack.c.h.b16 %v818
      %v859 = vunpack.c.l.b16 %v819
      %v860 = vunpack.c.h.b16 %v819
      %v861 = vunpack.c.l.b16 %v820
      %v862 = vunpack.c.h.b16 %v820
      %v863 = vunpack.c.l.b16 %v821
      %v864 = vunpack.c.h.b16 %v821
      %v865 = vunpack.c.l.b16 %v822
      %v866 = vunpack.c.h.b16 %v822
      %v867 = vunpack.c.l.b16 %v823
      %v868 = vunpack.c.h.b16 %v823
      %v869 = vunpack.c.l.b16 %v824
      %v870 = vunpack.c.h.b16 %v824
      %v871 = vunpack.c.l.b16 %v825
      %v872 = vunpack.c.h.b16 %v825
      %v873 = vunpack.c.l.b16 %v826
      %v874 = vunpack.c.h.b16 %v826
      %v875 = vpack.c.b16 %v843, %v843
      %v876 = vpack.c.b16 %v844, %v844
      %v877 = vpack.c.b16 %v845, %v845
      %v878 = vpack.c.b16 %v846, %v846
      %v879 = vpack.c.b16 %v847, %v847
      %v880 = vpack.c.b16 %v848, %v848
      %v881 = vpack.c.b16 %v849, %v849
      %v882 = vpack.c.b16 %v850, %v850
      %v883 = vpack.c.b16 %v851, %v851
      %v884 = vpack.c.b16 %v852, %v852
      %v885 = vpack.c.b16 %v853, %v853
      %v886 = vpack.c.b16 %v854, %v854
      %v887 = vpack.c.b16 %v855, %v855
      %v888 = vpack.c.b16 %v856, %v856
      %v889 = vpack.c.b16 %v857, %v857
      %v890 = vpack.c.b16 %v858, %v858
      %v891 = vpack.c.b16 %v859, %v859
      %v892 = vpack.c.b16 %v860, %v860
      %v893 = vpack.c.b16 %v861, %v861
      %v894 = vpack.c.b16 %v862, %v862
      %v895 = vpack.c.b16 %v863, %v863
      %v896 = vpack.c.b16 %v864, %v864
      %v897 = vpack.c.b16 %v865, %v865
      %v898 = vpack.c.b16 %v866, %v866
      %v899 = vpack.c.b16 %v867, %v867
      %v900 = vpack.c.b16 %v868, %v868
      %v901 = vpack.c.b16 %v869, %v869
      %v902 = vpack.c.b16 %v870, %v870
      %v903 = vpack.c.b16 %v871, %v871
      %v904 = vpack.c.b16 %v872, %v872
      %v905 = vpack.c.b16 %v873, %v873
      %v906 = vpack.c.b16 %v874, %v874
      %vm907 = vsmask.f32 256
      %vm908 = vsmask.f32 4368
      %vm909 = vmor %vm907, %vm908
      %v911 = vshrl.u32 %v875, 16
      %v913 = vrot.slane %v911, 7
      %v914 = vshll.u32 %v875, 16
      %v916 = vor.u32 %v913, %v914
      %v917 = vrot.slane %v913, 4
      %v919 = vshrl.u32 %v876, 16
      %v921 = vrot.slane %v919, 7
      %v922 = vshll.u32 %v876, 16
      %v924 = vor.u32 %v921, %v922
      %v925 = vsel %vm909, %v917, %v924
      %v926 = vrot.slane %v921, 4
      %v928 = vshrl.u32 %v877, 16
      %v930 = vrot.slane %v928, 7
      %v931 = vshll.u32 %v877, 16
      %v933 = vor.u32 %v930, %v931
      %v934 = vrot.slane %v930, 4
      %v936 = vshrl.u32 %v878, 16
      %v938 = vrot.slane %v936, 7
      %v939 = vshll.u32 %v878, 16
      %v941 = vor.u32 %v938, %v939
      %v942 = vsel %vm909, %v934, %v941
      %v943 = vrot.slane %v938, 4
      %v945 = vshrl.u32 %v879, 16
      %v947 = vrot.slane %v945, 7
      %v948 = vshll.u32 %v879, 16
      %v950 = vor.u32 %v947, %v948
      %v951 = vrot.slane %v947, 4
      %v953 = vshrl.u32 %v880, 16
      %v955 = vrot.slane %v953, 7
      %v956 = vshll.u32 %v880, 16
      %v958 = vor.u32 %v955, %v956
      %v959 = vsel %vm909, %v951, %v958
      %v960 = vrot.slane %v955, 4
      %v962 = vshrl.u32 %v881, 16
      %v964 = vrot.slane %v962, 7
      %v965 = vshll.u32 %v881, 16
      %v967 = vor.u32 %v964, %v965
      %v968 = vrot.slane %v964, 4
      %v970 = vshrl.u32 %v882, 16
      %v972 = vrot.slane %v970, 7
      %v973 = vshll.u32 %v882, 16
      %v975 = vor.u32 %v972, %v973
      %v976 = vsel %vm909, %v968, %v975
      %v977 = vrot.slane %v972, 4
      %v979 = vshrl.u32 %v883, 16
      %v981 = vrot.slane %v979, 7
      %v982 = vshll.u32 %v883, 16
      %v984 = vor.u32 %v981, %v982
      %v985 = vrot.slane %v981, 4
      %v987 = vshrl.u32 %v884, 16
      %v989 = vrot.slane %v987, 7
      %v990 = vshll.u32 %v884, 16
      %v992 = vor.u32 %v989, %v990
      %v993 = vsel %vm909, %v985, %v992
      %v994 = vrot.slane %v989, 4
      %v996 = vshrl.u32 %v885, 16
      %v998 = vrot.slane %v996, 7
      %v999 = vshll.u32 %v885, 16
      %v1001 = vor.u32 %v998, %v999
      %v1002 = vrot.slane %v998, 4
      %v1004 = vshrl.u32 %v886, 16
      %v1006 = vrot.slane %v1004, 7
      %v1007 = vshll.u32 %v886, 16
      %v1009 = vor.u32 %v1006, %v1007
      %v1010 = vsel %vm909, %v1002, %v1009
      %v1011 = vrot.slane %v1006, 4
      %v1013 = vshrl.u32 %v887, 16
      %v1015 = vrot.slane %v1013, 7
      %v1016 = vshll.u32 %v887, 16
      %v1018 = vor.u32 %v1015, %v1016
      %v1019 = vrot.slane %v1015, 4
      %v1021 = vshrl.u32 %v888, 16
      %v1023 = vrot.slane %v1021, 7
      %v1024 = vshll.u32 %v888, 16
      %v1026 = vor.u32 %v1023, %v1024
      %v1027 = vsel %vm909, %v1019, %v1026
      %v1028 = vrot.slane %v1023, 4
      %v1030 = vshrl.u32 %v889, 16
      %v1032 = vrot.slane %v1030, 7
      %v1033 = vshll.u32 %v889, 16
      %v1035 = vor.u32 %v1032, %v1033
      %v1036 = vrot.slane %v1032, 4
      %v1038 = vshrl.u32 %v890, 16
      %v1040 = vrot.slane %v1038, 7
      %v1041 = vshll.u32 %v890, 16
      %v1043 = vor.u32 %v1040, %v1041
      %v1044 = vsel %vm909, %v1036, %v1043
      %v1045 = vrot.slane %v1040, 4
      %v1047 = vshrl.u32 %v891, 16
      %v1049 = vrot.slane %v1047, 7
      %v1050 = vshll.u32 %v891, 16
      %v1052 = vor.u32 %v1049, %v1050
      %v1053 = vrot.slane %v1049, 4
      %v1055 = vshrl.u32 %v892, 16
      %v1057 = vrot.slane %v1055, 7
      %v1058 = vshll.u32 %v892, 16
      %v1060 = vor.u32 %v1057, %v1058
      %v1061 = vsel %vm909, %v1053, %v1060
      %v1062 = vrot.slane %v1057, 4
      %v1064 = vshrl.u32 %v893, 16
      %v1066 = vrot.slane %v1064, 7
      %v1067 = vshll.u32 %v893, 16
      %v1069 = vor.u32 %v1066, %v1067
      %v1070 = vrot.slane %v1066, 4
      %v1072 = vshrl.u32 %v894, 16
      %v1074 = vrot.slane %v1072, 7
      %v1075 = vshll.u32 %v894, 16
      %v1077 = vor.u32 %v1074, %v1075
      %v1078 = vsel %vm909, %v1070, %v1077
      %v1079 = vrot.slane %v1074, 4
      %v1081 = vshrl.u32 %v895, 16
      %v1083 = vrot.slane %v1081, 7
      %v1084 = vshll.u32 %v895, 16
      %v1086 = vor.u32 %v1083, %v1084
      %v1087 = vrot.slane %v1083, 4
      %v1089 = vshrl.u32 %v896, 16
      %v1091 = vrot.slane %v1089, 7
      %v1092 = vshll.u32 %v896, 16
      %v1094 = vor.u32 %v1091, %v1092
      %v1095 = vsel %vm909, %v1087, %v1094
      %v1096 = vrot.slane %v1091, 4
      %v1098 = vshrl.u32 %v897, 16
      %v1100 = vrot.slane %v1098, 7
      %v1101 = vshll.u32 %v897, 16
      %v1103 = vor.u32 %v1100, %v1101
      %v1104 = vrot.slane %v1100, 4
      %v1106 = vshrl.u32 %v898, 16
      %v1108 = vrot.slane %v1106, 7
      %v1109 = vshll.u32 %v898, 16
      %v1111 = vor.u32 %v1108, %v1109
      %v1112 = vsel %vm909, %v1104, %v1111
      %v1113 = vrot.slane %v1108, 4
      %v1115 = vshrl.u32 %v899, 16
      %v1117 = vrot.slane %v1115, 7
      %v1118 = vshll.u32 %v899, 16
      %v1120 = vor.u32 %v1117, %v1118
      %v1121 = vrot.slane %v1117, 4
      %v1123 = vshrl.u32 %v900, 16
      %v1125 = vrot.slane %v1123, 7
      %v1126 = vshll.u32 %v900, 16
      %v1128 = vor.u32 %v1125, %v1126
      %v1129 = vsel %vm909, %v1121, %v1128
      %v1130 = vrot.slane %v1125, 4
      %v1132 = vshrl.u32 %v901, 16
      %v1134 = vrot.slane %v1132, 7
      %v1135 = vshll.u32 %v901, 16
      %v1137 = vor.u32 %v1134, %v1135
      %v1138 = vrot.slane %v1134, 4
      %v1140 = vshrl.u32 %v902, 16
      %v1142 = vrot.slane %v1140, 7
      %v1143 = vshll.u32 %v902, 16
      %v1145 = vor.u32 %v1142, %v1143
      %v1146 = vsel %vm909, %v1138, %v1145
      %v1147 = vrot.slane %v1142, 4
      %v1149 = vshrl.u32 %v903, 16
      %v1151 = vrot.slane %v1149, 7
      %v1152 = vshll.u32 %v903, 16
      %v1154 = vor.u32 %v1151, %v1152
      %v1155 = vrot.slane %v1151, 4
      %v1157 = vshrl.u32 %v904, 16
      %v1159 = vrot.slane %v1157, 7
      %v1160 = vshll.u32 %v904, 16
      %v1162 = vor.u32 %v1159, %v1160
      %v1163 = vsel %vm909, %v1155, %v1162
      %v1164 = vrot.slane %v1159, 4
      %v1166 = vshrl.u32 %v905, 16
      %v1168 = vrot.slane %v1166, 7
      %v1169 = vshll.u32 %v905, 16
      %v1171 = vor.u32 %v1168, %v1169
      %v1172 = vrot.slane %v1168, 4
      %v1174 = vshrl.u32 %v906, 16
      %v1176 = vrot.slane %v1174, 7
      %v1177 = vshll.u32 %v906, 16
      %v1179 = vor.u32 %v1176, %v1177
      %v1180 = vsel %vm909, %v1172, %v1179
      %v1181 = vrot.slane %v1176, 4
      %s1230 = scalar_lea.vmem [#allocation2], 12
      %vm1231 = vcmask 11264
      %vm1232 = vsmask.f32 7938
      %vm1233 = vmand %vm1231, %vm1232
      %v1234 = vld [vmem:[%s1230] sm:$0xf]
      %v1235 = vsel %vm1233, %v916, %v1234
      %1236 = vst [vmem:[%s1230] sm:$0xf] %v1235
      %1237 = vst.msk [vmem:[%s1230 + $0x4] sm:$0xf] %vm755, %v925
      %vm1238 = vcmask 8192
      %vm1239 = vmand %vm1238, %vm907
      %v1240 = vld [vmem:[%s1230 + $0x8] sm:$0x1]
      %v1241 = vsel %vm1239, %v926, %v1240
      %1242 = vst [vmem:[%s1230 + $0x8] sm:$0x1] %v1241
      %v1243 = vld [vmem:[%s1230 + $0xc] sm:$0xf]
      %v1244 = vsel %vm1233, %v933, %v1243
      %1245 = vst [vmem:[%s1230 + $0xc] sm:$0xf] %v1244
      %1246 = vst.msk [vmem:[%s1230 + $0x10] sm:$0xf] %vm755, %v942
      %v1247 = vld [vmem:[%s1230 + $0x14] sm:$0x1]
      %v1248 = vsel %vm1239, %v943, %v1247
      %1249 = vst [vmem:[%s1230 + $0x14] sm:$0x1] %v1248
      %v1250 = vld [vmem:[%s1230 + $0x18] sm:$0xf]
      %v1251 = vsel %vm1233, %v950, %v1250
      %1252 = vst [vmem:[%s1230 + $0x18] sm:$0xf] %v1251
      %1253 = vst.msk [vmem:[%s1230 + $0x1c] sm:$0xf] %vm755, %v959
      %v1254 = vld [vmem:[%s1230 + $0x20] sm:$0x1]
      %v1255 = vsel %vm1239, %v960, %v1254
      %1256 = vst [vmem:[%s1230 + $0x20] sm:$0x1] %v1255
      %v1257 = vld [vmem:[%s1230 + $0x24] sm:$0xf]
      %v1258 = vsel %vm1233, %v967, %v1257
      %1259 = vst [vmem:[%s1230 + $0x24] sm:$0xf] %v1258
      %1260 = vst.msk [vmem:[%s1230 + $0x28] sm:$0xf] %vm755, %v976
      %v1261 = vld [vmem:[%s1230 + $0x2c] sm:$0x1]
      %v1262 = vsel %vm1239, %v977, %v1261
      %1263 = vst [vmem:[%s1230 + $0x2c] sm:$0x1] %v1262
      %v1264 = vld [vmem:[%s1230 + $0x30] sm:$0xf]
      %v1265 = vsel %vm1233, %v984, %v1264
      %1266 = vst [vmem:[%s1230 + $0x30] sm:$0xf] %v1265
      %1267 = vst.msk [vmem:[%s1230 + $0x34] sm:$0xf] %vm755, %v993
      %v1268 = vld [vmem:[%s1230 + $0x38] sm:$0x1]
      %v1269 = vsel %vm1239, %v994, %v1268
      %1270 = vst [vmem:[%s1230 + $0x38] sm:$0x1] %v1269
      %v1271 = vld [vmem:[%s1230 + $0x3c] sm:$0xf]
      %v1272 = vsel %vm1233, %v1001, %v1271
      %1273 = vst [vmem:[%s1230 + $0x3c] sm:$0xf] %v1272
      %1274 = vst.msk [vmem:[%s1230 + $0x40] sm:$0xf] %vm755, %v1010
      %v1275 = vld [vmem:[%s1230 + $0x44] sm:$0x1]
      %v1276 = vsel %vm1239, %v1011, %v1275
      %1277 = vst [vmem:[%s1230 + $0x44] sm:$0x1] %v1276
      %v1278 = vld [vmem:[%s1230 + $0x48] sm:$0xf]
      %v1279 = vsel %vm1233, %v1018, %v1278
      %1280 = vst [vmem:[%s1230 + $0x48] sm:$0xf] %v1279
      %1281 = vst.msk [vmem:[%s1230 + $0x4c] sm:$0xf] %vm755, %v1027
      %v1282 = vld [vmem:[%s1230 + $0x50] sm:$0x1]
      %v1283 = vsel %vm1239, %v1028, %v1282
      %1284 = vst [vmem:[%s1230 + $0x50] sm:$0x1] %v1283
      %v1285 = vld [vmem:[%s1230 + $0x54] sm:$0xf]
      %v1286 = vsel %vm1233, %v1035, %v1285
      %1287 = vst [vmem:[%s1230 + $0x54] sm:$0xf] %v1286
      %1288 = vst.msk [vmem:[%s1230 + $0x58] sm:$0xf] %vm755, %v1044
      %v1289 = vld [vmem:[%s1230 + $0x5c] sm:$0x1]
      %v1290 = vsel %vm1239, %v1045, %v1289
      %1291 = vst [vmem:[%s1230 + $0x5c] sm:$0x1] %v1290
      %v1292 = vld [vmem:[%s1230 + $0x60] sm:$0xf]
      %v1293 = vsel %vm1233, %v1052, %v1292
      %1294 = vst [vmem:[%s1230 + $0x60] sm:$0xf] %v1293
      %1295 = vst.msk [vmem:[%s1230 + $0x64] sm:$0xf] %vm755, %v1061
      %v1296 = vld [vmem:[%s1230 + $0x68] sm:$0x1]
      %v1297 = vsel %vm1239, %v1062, %v1296
      %1298 = vst [vmem:[%s1230 + $0x68] sm:$0x1] %v1297
      %v1299 = vld [vmem:[%s1230 + $0x6c] sm:$0xf]
      %v1300 = vsel %vm1233, %v1069, %v1299
      %1301 = vst [vmem:[%s1230 + $0x6c] sm:$0xf] %v1300
      %1302 = vst.msk [vmem:[%s1230 + $0x70] sm:$0xf] %vm755, %v1078
      %v1303 = vld [vmem:[%s1230 + $0x74] sm:$0x1]
      %v1304 = vsel %vm1239, %v1079, %v1303
      %1305 = vst [vmem:[%s1230 + $0x74] sm:$0x1] %v1304
      %v1306 = vld [vmem:[%s1230 + $0x78] sm:$0xf]
      %v1307 = vsel %vm1233, %v1086, %v1306
      %1308 = vst [vmem:[%s1230 + $0x78] sm:$0xf] %v1307
      %1309 = vst.msk [vmem:[%s1230 + $0x7c] sm:$0xf] %vm755, %v1095
      %v1310 = vld [vmem:[%s1230 + $0x80] sm:$0x1]
      %v1311 = vsel %vm1239, %v1096, %v1310
      %1312 = vst [vmem:[%s1230 + $0x80] sm:$0x1] %v1311
      %v1313 = vld [vmem:[%s1230 + $0x84] sm:$0xf]
      %v1314 = vsel %vm1233, %v1103, %v1313
      %1315 = vst [vmem:[%s1230 + $0x84] sm:$0xf] %v1314
      %1316 = vst.msk [vmem:[%s1230 + $0x88] sm:$0xf] %vm755, %v1112
      %v1317 = vld [vmem:[%s1230 + $0x8c] sm:$0x1]
      %v1318 = vsel %vm1239, %v1113, %v1317
      %1319 = vst [vmem:[%s1230 + $0x8c] sm:$0x1] %v1318
      %v1320 = vld [vmem:[%s1230 + $0x90] sm:$0xf]
      %v1321 = vsel %vm1233, %v1120, %v1320
      %1322 = vst [vmem:[%s1230 + $0x90] sm:$0xf] %v1321
      %1323 = vst.msk [vmem:[%s1230 + $0x94] sm:$0xf] %vm755, %v1129
      %v1324 = vld [vmem:[%s1230 + $0x98] sm:$0x1]
      %v1325 = vsel %vm1239, %v1130, %v1324
      %1326 = vst [vmem:[%s1230 + $0x98] sm:$0x1] %v1325
      %v1327 = vld [vmem:[%s1230 + $0x9c] sm:$0xf]
      %v1328 = vsel %vm1233, %v1137, %v1327
      %1329 = vst [vmem:[%s1230 + $0x9c] sm:$0xf] %v1328
      %1330 = vst.msk [vmem:[%s1230 + $0xa0] sm:$0xf] %vm755, %v1146
      %v1331 = vld [vmem:[%s1230 + $0xa4] sm:$0x1]
      %v1332 = vsel %vm1239, %v1147, %v1331
      %1333 = vst [vmem:[%s1230 + $0xa4] sm:$0x1] %v1332
      %v1334 = vld [vmem:[%s1230 + $0xa8] sm:$0xf]
      %v1335 = vsel %vm1233, %v1154, %v1334
      %1336 = vst [vmem:[%s1230 + $0xa8] sm:$0xf] %v1335
      %1337 = vst.msk [vmem:[%s1230 + $0xac] sm:$0xf] %vm755, %v1163
      %v1338 = vld [vmem:[%s1230 + $0xb0] sm:$0x1]
      %v1339 = vsel %vm1239, %v1164, %v1338
      %1340 = vst [vmem:[%s1230 + $0xb0] sm:$0x1] %v1339
      %v1341 = vld [vmem:[%s1230 + $0xb4] sm:$0xf]
      %v1342 = vsel %vm1233, %v1171, %v1341
      %1343 = vst [vmem:[%s1230 + $0xb4] sm:$0xf] %v1342
      %1344 = vst.msk [vmem:[%s1230 + $0xb8] sm:$0xf] %vm755, %v1180
      %v1345 = vld [vmem:[%s1230 + $0xbc] sm:$0x1]
      %v1346 = vsel %vm1239, %v1181, %v1345
      %1347 = vst [vmem:[%s1230 + $0xbc] sm:$0x1] %v1346
      %v1348 = vld [vmem:[#allocation2] sm:$0xf]
      %v1349 = vld [vmem:[#allocation2 + $0x4] sm:$0xf]
      %v1350 = vld [vmem:[#allocation2 + $0xc] sm:$0xf]
      %v1351 = vld [vmem:[#allocation2 + $0x10] sm:$0xf]
      %v1352 = vld [vmem:[#allocation2 + $0x18] sm:$0xf]
      %v1353 = vld [vmem:[#allocation2 + $0x1c] sm:$0xf]
      %v1354 = vld [vmem:[#allocation2 + $0x24] sm:$0xf]
      %v1355 = vld [vmem:[#allocation2 + $0x28] sm:$0xf]
      %v1356 = vld [vmem:[#allocation2 + $0x30] sm:$0xf]
      %v1357 = vld [vmem:[#allocation2 + $0x34] sm:$0xf]
      %v1358 = vld [vmem:[#allocation2 + $0x3c] sm:$0xf]
      %v1359 = vld [vmem:[#allocation2 + $0x40] sm:$0xf]
      %v1360 = vld [vmem:[#allocation2 + $0x48] sm:$0xf]
      %v1361 = vld [vmem:[#allocation2 + $0x4c] sm:$0xf]
      %v1362 = vld [vmem:[#allocation2 + $0x54] sm:$0xf]
      %v1363 = vld [vmem:[#allocation2 + $0x58] sm:$0xf]
      %v1364 = vld [vmem:[#allocation2 + $0x60] sm:$0xf]
      %v1365 = vld [vmem:[#allocation2 + $0x64] sm:$0xf]
      %v1366 = vld [vmem:[#allocation2 + $0x6c] sm:$0xf]
      %v1367 = vld [vmem:[#allocation2 + $0x70] sm:$0xf]
      %v1368 = vld [vmem:[#allocation2 + $0x78] sm:$0xf]
      %v1369 = vld [vmem:[#allocation2 + $0x7c] sm:$0xf]
      %v1370 = vld [vmem:[#allocation2 + $0x84] sm:$0xf]
      %v1371 = vld [vmem:[#allocation2 + $0x88] sm:$0xf]
      %v1372 = vld [vmem:[#allocation2 + $0x90] sm:$0xf]
      %v1373 = vld [vmem:[#allocation2 + $0x94] sm:$0xf]
      %v1374 = vld [vmem:[#allocation2 + $0x9c] sm:$0xf]
      %v1375 = vld [vmem:[#allocation2 + $0xa0] sm:$0xf]
      %v1376 = vld [vmem:[#allocation2 + $0xa8] sm:$0xf]
      %v1377 = vld [vmem:[#allocation2 + $0xac] sm:$0xf]
      %v1378 = vld [vmem:[#allocation2 + $0xb4] sm:$0xf]
      %v1379 = vld [vmem:[#allocation2 + $0xb8] sm:$0xf]
      %v1412 = vunpack.c.l.b16 %v1348
      %v1413 = vunpack.c.l.b16 %v1349
      %v1414 = vunpack.c.l.b16 %v1350
      %v1415 = vunpack.c.l.b16 %v1351
      %v1416 = vunpack.c.l.b16 %v1352
      %v1417 = vunpack.c.l.b16 %v1353
      %v1418 = vunpack.c.l.b16 %v1354
      %v1419 = vunpack.c.l.b16 %v1355
      %v1420 = vunpack.c.l.b16 %v1356
      %v1421 = vunpack.c.l.b16 %v1357
      %v1422 = vunpack.c.l.b16 %v1358
      %v1423 = vunpack.c.l.b16 %v1359
      %v1424 = vunpack.c.l.b16 %v1360
      %v1425 = vunpack.c.l.b16 %v1361
      %v1426 = vunpack.c.l.b16 %v1362
      %v1427 = vunpack.c.l.b16 %v1363
      %v1428 = vunpack.c.l.b16 %v1364
      %v1429 = vunpack.c.l.b16 %v1365
      %v1430 = vunpack.c.l.b16 %v1366
      %v1431 = vunpack.c.l.b16 %v1367
      %v1432 = vunpack.c.l.b16 %v1368
      %v1433 = vunpack.c.l.b16 %v1369
      %v1434 = vunpack.c.l.b16 %v1370
      %v1435 = vunpack.c.l.b16 %v1371
      %v1436 = vunpack.c.l.b16 %v1372
      %v1437 = vunpack.c.l.b16 %v1373
      %v1438 = vunpack.c.l.b16 %v1374
      %v1439 = vunpack.c.l.b16 %v1375
      %v1440 = vunpack.c.l.b16 %v1376
      %v1441 = vunpack.c.l.b16 %v1377
      %v1442 = vunpack.c.l.b16 %v1378
      %v1443 = vunpack.c.l.b16 %v1379
      %v1444 = vpack.c.b16 %v1413, %v1412
      %v1445 = vpack.c.b16 %v1415, %v1414
      %v1446 = vpack.c.b16 %v1417, %v1416
      %v1447 = vpack.c.b16 %v1419, %v1418
      %v1448 = vpack.c.b16 %v1421, %v1420
      %v1449 = vpack.c.b16 %v1423, %v1422
      %v1450 = vpack.c.b16 %v1425, %v1424
      %v1451 = vpack.c.b16 %v1427, %v1426
      %v1452 = vpack.c.b16 %v1429, %v1428
      %v1453 = vpack.c.b16 %v1431, %v1430
      %v1454 = vpack.c.b16 %v1433, %v1432
      %v1455 = vpack.c.b16 %v1435, %v1434
      %v1456 = vpack.c.b16 %v1437, %v1436
      %v1457 = vpack.c.b16 %v1439, %v1438
      %v1458 = vpack.c.b16 %v1441, %v1440
      %v1459 = vpack.c.b16 %v1443, %v1442
      %vm1476 = vcmask 15360
      %1477 = vst.msk [vmem:[#allocation3] sm:$0xff] %vm1476, %v1444
      %1478 = vst.msk [vmem:[#allocation3 + $0x8] sm:$0xff] %vm1476, %v1445
      %1479 = vst.msk [vmem:[#allocation3 + $0x10] sm:$0xff] %vm1476, %v1446
      %1480 = vst.msk [vmem:[#allocation3 + $0x18] sm:$0xff] %vm1476, %v1447
      %1481 = vst.msk [vmem:[#allocation3 + $0x20] sm:$0xff] %vm1476, %v1448
      %1482 = vst.msk [vmem:[#allocation3 + $0x28] sm:$0xff] %vm1476, %v1449
      %1483 = vst.msk [vmem:[#allocation3 + $0x30] sm:$0xff] %vm1476, %v1450
      %1484 = vst.msk [vmem:[#allocation3 + $0x38] sm:$0xff] %vm1476, %v1451
      %1485 = vst.msk [vmem:[#allocation3 + $0x40] sm:$0xff] %vm1476, %v1452
      %1486 = vst.msk [vmem:[#allocation3 + $0x48] sm:$0xff] %vm1476, %v1453
      %1487 = vst.msk [vmem:[#allocation3 + $0x50] sm:$0xff] %vm1476, %v1454
      %1488 = vst.msk [vmem:[#allocation3 + $0x58] sm:$0xff] %vm1476, %v1455
      %1489 = vst.msk [vmem:[#allocation3 + $0x60] sm:$0xff] %vm1476, %v1456
      %1490 = vst.msk [vmem:[#allocation3 + $0x68] sm:$0xff] %vm1476, %v1457
      %1491 = vst.msk [vmem:[#allocation3 + $0x70] sm:$0xff] %vm1476, %v1458
      %1492 = vst.msk [vmem:[#allocation3 + $0x78] sm:$0xff] %vm1476, %v1459
      %v1493 = vld [vmem:[#allocation2] sm:$0xf]
      %v1494 = vld [vmem:[#allocation2 + $0x4] sm:$0xf]
      %v1495 = vld [vmem:[#allocation2 + $0x8] sm:$0x1]
      %v1496 = vld [vmem:[#allocation2 + $0xc] sm:$0xf]
      %v1497 = vld [vmem:[#allocation2 + $0x10] sm:$0xf]
      %v1498 = vld [vmem:[#allocation2 + $0x14] sm:$0x1]
      %v1499 = vld [vmem:[#allocation2 + $0x18] sm:$0xf]
      %v1500 = vld [vmem:[#allocation2 + $0x1c] sm:$0xf]
      %v1501 = vld [vmem:[#allocation2 + $0x20] sm:$0x1]
      %v1502 = vld [vmem:[#allocation2 + $0x24] sm:$0xf]
      %v1503 = vld [vmem:[#allocation2 + $0x28] sm:$0xf]
      %v1504 = vld [vmem:[#allocation2 + $0x2c] sm:$0x1]
      %v1505 = vld [vmem:[#allocation2 + $0x30] sm:$0xf]
      %v1506 = vld [vmem:[#allocation2 + $0x34] sm:$0xf]
      %v1507 = vld [vmem:[#allocation2 + $0x38] sm:$0x1]
      %v1508 = vld [vmem:[#allocation2 + $0x3c] sm:$0xf]
      %v1509 = vld [vmem:[#allocation2 + $0x40] sm:$0xf]
      %v1510 = vld [vmem:[#allocation2 + $0x44] sm:$0x1]
      %v1511 = vld [vmem:[#allocation2 + $0x48] sm:$0xf]
      %v1512 = vld [vmem:[#allocation2 + $0x4c] sm:$0xf]
      %v1513 = vld [vmem:[#allocation2 + $0x50] sm:$0x1]
      %v1514 = vld [vmem:[#allocation2 + $0x54] sm:$0xf]
      %v1515 = vld [vmem:[#allocation2 + $0x58] sm:$0xf]
      %v1516 = vld [vmem:[#allocation2 + $0x5c] sm:$0x1]
      %v1517 = vld [vmem:[#allocation2 + $0x60] sm:$0xf]
      %v1518 = vld [vmem:[#allocation2 + $0x64] sm:$0xf]
      %v1519 = vld [vmem:[#allocation2 + $0x68] sm:$0x1]
      %v1520 = vld [vmem:[#allocation2 + $0x6c] sm:$0xf]
      %v1521 = vld [vmem:[#allocation2 + $0x70] sm:$0xf]
      %v1522 = vld [vmem:[#allocation2 + $0x74] sm:$0x1]
      %v1523 = vld [vmem:[#allocation2 + $0x78] sm:$0xf]
      %v1524 = vld [vmem:[#allocation2 + $0x7c] sm:$0xf]
      %v1525 = vld [vmem:[#allocation2 + $0x80] sm:$0x1]
      %v1526 = vld [vmem:[#allocation2 + $0x84] sm:$0xf]
      %v1527 = vld [vmem:[#allocation2 + $0x88] sm:$0xf]
      %v1528 = vld [vmem:[#allocation2 + $0x8c] sm:$0x1]
      %v1529 = vld [vmem:[#allocation2 + $0x90] sm:$0xf]
      %v1530 = vld [vmem:[#allocation2 + $0x94] sm:$0xf]
      %v1531 = vld [vmem:[#allocation2 + $0x98] sm:$0x1]
      %v1532 = vld [vmem:[#allocation2 + $0x9c] sm:$0xf]
      %v1533 = vld [vmem:[#allocation2 + $0xa0] sm:$0xf]
      %v1534 = vld [vmem:[#allocation2 + $0xa4] sm:$0x1]
      %v1535 = vld [vmem:[#allocation2 + $0xa8] sm:$0xf]
      %v1536 = vld [vmem:[#allocation2 + $0xac] sm:$0xf]
      %v1537 = vld [vmem:[#allocation2 + $0xb0] sm:$0x1]
      %v1538 = vld [vmem:[#allocation2 + $0xb4] sm:$0xf]
      %v1539 = vld [vmem:[#allocation2 + $0xb8] sm:$0xf]
      %v1540 = vld [vmem:[#allocation2 + $0xbc] sm:$0x1]
      %vm1541 = vsmask.f32 3328
      %vm1542 = vsmask.f32 7440
      %vm1543 = vmor %vm1541, %vm1542
      %v1545 = vshrl.u32 %v1493, 16
      %v1547 = vrot.slane %v1545, 4
      %v1548 = vshll.u32 %v1493, 16
      %v1550 = vrot.slane %v1548, 5
      %v1551 = vor.u32 %v1547, %v1550
      %v1552 = vrot.slane %v1551, 4
      %v1554 = vshll.u32 %v1494, 16
      %v1556 = vrot.slane %v1554, 5
      %v1557 = vsel %vm1543, %v1552, %v1556
      %v1558 = vshrl.u32 %v1494, 16
      %v1560 = vrot.slane %v1558, 4
      %v1561 = vor.u32 %v1560, %v1556
      %v1562 = vrot.slane %v1561, 4
      %v1564 = vshll.u32 %v1495, 16
      %v1566 = vrot.slane %v1564, 5
      %v1567 = vsel %vm1543, %v1562, %v1566
      %v1569 = vshrl.u32 %v1496, 16
      %v1571 = vrot.slane %v1569, 4
      %v1572 = vshll.u32 %v1496, 16
      %v1574 = vrot.slane %v1572, 5
      %v1575 = vor.u32 %v1571, %v1574
      %v1576 = vrot.slane %v1575, 4
      %v1578 = vshll.u32 %v1497, 16
      %v1580 = vrot.slane %v1578, 5
      %v1581 = vsel %vm1543, %v1576, %v1580
      %v1582 = vshrl.u32 %v1497, 16
      %v1584 = vrot.slane %v1582, 4
      %v1585 = vor.u32 %v1584, %v1580
      %v1586 = vrot.slane %v1585, 4
      %v1588 = vshll.u32 %v1498, 16
      %v1590 = vrot.slane %v1588, 5
      %v1591 = vsel %vm1543, %v1586, %v1590
      %v1593 = vshrl.u32 %v1499, 16
      %v1595 = vrot.slane %v1593, 4
      %v1596 = vshll.u32 %v1499, 16
      %v1598 = vrot.slane %v1596, 5
      %v1599 = vor.u32 %v1595, %v1598
      %v1600 = vrot.slane %v1599, 4
      %v1602 = vshll.u32 %v1500, 16
      %v1604 = vrot.slane %v1602, 5
      %v1605 = vsel %vm1543, %v1600, %v1604
      %v1606 = vshrl.u32 %v1500, 16
      %v1608 = vrot.slane %v1606, 4
      %v1609 = vor.u32 %v1608, %v1604
      %v1610 = vrot.slane %v1609, 4
      %v1612 = vshll.u32 %v1501, 16
      %v1614 = vrot.slane %v1612, 5
      %v1615 = vsel %vm1543, %v1610, %v1614
      %v1617 = vshrl.u32 %v1502, 16
      %v1619 = vrot.slane %v1617, 4
      %v1620 = vshll.u32 %v1502, 16
      %v1622 = vrot.slane %v1620, 5
      %v1623 = vor.u32 %v1619, %v1622
      %v1624 = vrot.slane %v1623, 4
      %v1626 = vshll.u32 %v1503, 16
      %v1628 = vrot.slane %v1626, 5
      %v1629 = vsel %vm1543, %v1624, %v1628
      %v1630 = vshrl.u32 %v1503, 16
      %v1632 = vrot.slane %v1630, 4
      %v1633 = vor.u32 %v1632, %v1628
      %v1634 = vrot.slane %v1633, 4
      %v1636 = vshll.u32 %v1504, 16
      %v1638 = vrot.slane %v1636, 5
      %v1639 = vsel %vm1543, %v1634, %v1638
      %v1641 = vshrl.u32 %v1505, 16
      %v1643 = vrot.slane %v1641, 4
      %v1644 = vshll.u32 %v1505, 16
      %v1646 = vrot.slane %v1644, 5
      %v1647 = vor.u32 %v1643, %v1646
      %v1648 = vrot.slane %v1647, 4
      %v1650 = vshll.u32 %v1506, 16
      %v1652 = vrot.slane %v1650, 5
      %v1653 = vsel %vm1543, %v1648, %v1652
      %v1654 = vshrl.u32 %v1506, 16
      %v1656 = vrot.slane %v1654, 4
      %v1657 = vor.u32 %v1656, %v1652
      %v1658 = vrot.slane %v1657, 4
      %v1660 = vshll.u32 %v1507, 16
      %v1662 = vrot.slane %v1660, 5
      %v1663 = vsel %vm1543, %v1658, %v1662
      %v1665 = vshrl.u32 %v1508, 16
      %v1667 = vrot.slane %v1665, 4
      %v1668 = vshll.u32 %v1508, 16
      %v1670 = vrot.slane %v1668, 5
      %v1671 = vor.u32 %v1667, %v1670
      %v1672 = vrot.slane %v1671, 4
      %v1674 = vshll.u32 %v1509, 16
      %v1676 = vrot.slane %v1674, 5
      %v1677 = vsel %vm1543, %v1672, %v1676
      %v1678 = vshrl.u32 %v1509, 16
      %v1680 = vrot.slane %v1678, 4
      %v1681 = vor.u32 %v1680, %v1676
      %v1682 = vrot.slane %v1681, 4
      %v1684 = vshll.u32 %v1510, 16
      %v1686 = vrot.slane %v1684, 5
      %v1687 = vsel %vm1543, %v1682, %v1686
      %v1689 = vshrl.u32 %v1511, 16
      %v1691 = vrot.slane %v1689, 4
      %v1692 = vshll.u32 %v1511, 16
      %v1694 = vrot.slane %v1692, 5
      %v1695 = vor.u32 %v1691, %v1694
      %v1696 = vrot.slane %v1695, 4
      %v1698 = vshll.u32 %v1512, 16
      %v1700 = vrot.slane %v1698, 5
      %v1701 = vsel %vm1543, %v1696, %v1700
      %v1702 = vshrl.u32 %v1512, 16
      %v1704 = vrot.slane %v1702, 4
      %v1705 = vor.u32 %v1704, %v1700
      %v1706 = vrot.slane %v1705, 4
      %v1708 = vshll.u32 %v1513, 16
      %v1710 = vrot.slane %v1708, 5
      %v1711 = vsel %vm1543, %v1706, %v1710
      %v1713 = vshrl.u32 %v1514, 16
      %v1715 = vrot.slane %v1713, 4
      %v1716 = vshll.u32 %v1514, 16
      %v1718 = vrot.slane %v1716, 5
      %v1719 = vor.u32 %v1715, %v1718
      %v1720 = vrot.slane %v1719, 4
      %v1722 = vshll.u32 %v1515, 16
      %v1724 = vrot.slane %v1722, 5
      %v1725 = vsel %vm1543, %v1720, %v1724
      %v1726 = vshrl.u32 %v1515, 16
      %v1728 = vrot.slane %v1726, 4
      %v1729 = vor.u32 %v1728, %v1724
      %v1730 = vrot.slane %v1729, 4
      %v1732 = vshll.u32 %v1516, 16
      %v1734 = vrot.slane %v1732, 5
      %v1735 = vsel %vm1543, %v1730, %v1734
      %v1737 = vshrl.u32 %v1517, 16
      %v1739 = vrot.slane %v1737, 4
      %v1740 = vshll.u32 %v1517, 16
      %v1742 = vrot.slane %v1740, 5
      %v1743 = vor.u32 %v1739, %v1742
      %v1744 = vrot.slane %v1743, 4
      %v1746 = vshll.u32 %v1518, 16
      %v1748 = vrot.slane %v1746, 5
      %v1749 = vsel %vm1543, %v1744, %v1748
      %v1750 = vshrl.u32 %v1518, 16
      %v1752 = vrot.slane %v1750, 4
      %v1753 = vor.u32 %v1752, %v1748
      %v1754 = vrot.slane %v1753, 4
      %v1756 = vshll.u32 %v1519, 16
      %v1758 = vrot.slane %v1756, 5
      %v1759 = vsel %vm1543, %v1754, %v1758
      %v1761 = vshrl.u32 %v1520, 16
      %v1763 = vrot.slane %v1761, 4
      %v1764 = vshll.u32 %v1520, 16
      %v1766 = vrot.slane %v1764, 5
      %v1767 = vor.u32 %v1763, %v1766
      %v1768 = vrot.slane %v1767, 4
      %v1770 = vshll.u32 %v1521, 16
      %v1772 = vrot.slane %v1770, 5
      %v1773 = vsel %vm1543, %v1768, %v1772
      %v1774 = vshrl.u32 %v1521, 16
      %v1776 = vrot.slane %v1774, 4
      %v1777 = vor.u32 %v1776, %v1772
      %v1778 = vrot.slane %v1777, 4
      %v1780 = vshll.u32 %v1522, 16
      %v1782 = vrot.slane %v1780, 5
      %v1783 = vsel %vm1543, %v1778, %v1782
      %v1785 = vshrl.u32 %v1523, 16
      %v1787 = vrot.slane %v1785, 4
      %v1788 = vshll.u32 %v1523, 16
      %v1790 = vrot.slane %v1788, 5
      %v1791 = vor.u32 %v1787, %v1790
      %v1792 = vrot.slane %v1791, 4
      %v1794 = vshll.u32 %v1524, 16
      %v1796 = vrot.slane %v1794, 5
      %v1797 = vsel %vm1543, %v1792, %v1796
      %v1798 = vshrl.u32 %v1524, 16
      %v1800 = vrot.slane %v1798, 4
      %v1801 = vor.u32 %v1800, %v1796
      %v1802 = vrot.slane %v1801, 4
      %v1804 = vshll.u32 %v1525, 16
      %v1806 = vrot.slane %v1804, 5
      %v1807 = vsel %vm1543, %v1802, %v1806
      %v1809 = vshrl.u32 %v1526, 16
      %v1811 = vrot.slane %v1809, 4
      %v1812 = vshll.u32 %v1526, 16
      %v1814 = vrot.slane %v1812, 5
      %v1815 = vor.u32 %v1811, %v1814
      %v1816 = vrot.slane %v1815, 4
      %v1818 = vshll.u32 %v1527, 16
      %v1820 = vrot.slane %v1818, 5
      %v1821 = vsel %vm1543, %v1816, %v1820
      %v1822 = vshrl.u32 %v1527, 16
      %v1824 = vrot.slane %v1822, 4
      %v1825 = vor.u32 %v1824, %v1820
      %v1826 = vrot.slane %v1825, 4
      %v1828 = vshll.u32 %v1528, 16
      %v1830 = vrot.slane %v1828, 5
      %v1831 = vsel %vm1543, %v1826, %v1830
      %v1833 = vshrl.u32 %v1529, 16
      %v1835 = vrot.slane %v1833, 4
      %v1836 = vshll.u32 %v1529, 16
      %v1838 = vrot.slane %v1836, 5
      %v1839 = vor.u32 %v1835, %v1838
      %v1840 = vrot.slane %v1839, 4
      %v1842 = vshll.u32 %v1530, 16
      %v1844 = vrot.slane %v1842, 5
      %v1845 = vsel %vm1543, %v1840, %v1844
      %v1846 = vshrl.u32 %v1530, 16
      %v1848 = vrot.slane %v1846, 4
      %v1849 = vor.u32 %v1848, %v1844
      %v1850 = vrot.slane %v1849, 4
      %v1852 = vshll.u32 %v1531, 16
      %v1854 = vrot.slane %v1852, 5
      %v1855 = vsel %vm1543, %v1850, %v1854
      %v1857 = vshrl.u32 %v1532, 16
      %v1859 = vrot.slane %v1857, 4
      %v1860 = vshll.u32 %v1532, 16
      %v1862 = vrot.slane %v1860, 5
      %v1863 = vor.u32 %v1859, %v1862
      %v1864 = vrot.slane %v1863, 4
      %v1866 = vshll.u32 %v1533, 16
      %v1868 = vrot.slane %v1866, 5
      %v1869 = vsel %vm1543, %v1864, %v1868
      %v1870 = vshrl.u32 %v1533, 16
      %v1872 = vrot.slane %v1870, 4
      %v1873 = vor.u32 %v1872, %v1868
      %v1874 = vrot.slane %v1873, 4
      %v1876 = vshll.u32 %v1534, 16
      %v1878 = vrot.slane %v1876, 5
      %v1879 = vsel %vm1543, %v1874, %v1878
      %v1881 = vshrl.u32 %v1535, 16
      %v1883 = vrot.slane %v1881, 4
      %v1884 = vshll.u32 %v1535, 16
      %v1886 = vrot.slane %v1884, 5
      %v1887 = vor.u32 %v1883, %v1886
      %v1888 = vrot.slane %v1887, 4
      %v1890 = vshll.u32 %v1536, 16
      %v1892 = vrot.slane %v1890, 5
      %v1893 = vsel %vm1543, %v1888, %v1892
      %v1894 = vshrl.u32 %v1536, 16
      %v1896 = vrot.slane %v1894, 4
      %v1897 = vor.u32 %v1896, %v1892
      %v1898 = vrot.slane %v1897, 4
      %v1900 = vshll.u32 %v1537, 16
      %v1902 = vrot.slane %v1900, 5
      %v1903 = vsel %vm1543, %v1898, %v1902
      %v1905 = vshrl.u32 %v1538, 16
      %v1907 = vrot.slane %v1905, 4
      %v1908 = vshll.u32 %v1538, 16
      %v1910 = vrot.slane %v1908, 5
      %v1911 = vor.u32 %v1907, %v1910
      %v1912 = vrot.slane %v1911, 4
      %v1914 = vshll.u32 %v1539, 16
      %v1916 = vrot.slane %v1914, 5
      %v1917 = vsel %vm1543, %v1912, %v1916
      %v1918 = vshrl.u32 %v1539, 16
      %v1920 = vrot.slane %v1918, 4
      %v1921 = vor.u32 %v1920, %v1916
      %v1922 = vrot.slane %v1921, 4
      %v1924 = vshll.u32 %v1540, 16
      %v1926 = vrot.slane %v1924, 5
      %v1927 = vsel %vm1543, %v1922, %v1926
      %v1928 = vunpack.c.l.b16 %v1557
      %v1929 = vunpack.c.l.b16 %v1567
      %v1930 = vunpack.c.l.b16 %v1581
      %v1931 = vunpack.c.l.b16 %v1591
      %v1932 = vunpack.c.l.b16 %v1605
      %v1933 = vunpack.c.l.b16 %v1615
      %v1934 = vunpack.c.l.b16 %v1629
      %v1935 = vunpack.c.l.b16 %v1639
      %v1936 = vunpack.c.l.b16 %v1653
      %v1937 = vunpack.c.l.b16 %v1663
      %v1938 = vunpack.c.l.b16 %v1677
      %v1939 = vunpack.c.l.b16 %v1687
      %v1940 = vunpack.c.l.b16 %v1701
      %v1941 = vunpack.c.l.b16 %v1711
      %v1942 = vunpack.c.l.b16 %v1725
      %v1943 = vunpack.c.l.b16 %v1735
      %v1944 = vunpack.c.l.b16 %v1749
      %v1945 = vunpack.c.l.b16 %v1759
      %v1946 = vunpack.c.l.b16 %v1773
      %v1947 = vunpack.c.l.b16 %v1783
      %v1948 = vunpack.c.l.b16 %v1797
      %v1949 = vunpack.c.l.b16 %v1807
      %v1950 = vunpack.c.l.b16 %v1821
      %v1951 = vunpack.c.l.b16 %v1831
      %v1952 = vunpack.c.l.b16 %v1845
      %v1953 = vunpack.c.l.b16 %v1855
      %v1954 = vunpack.c.l.b16 %v1869
      %v1955 = vunpack.c.l.b16 %v1879
      %v1956 = vunpack.c.l.b16 %v1893
      %v1957 = vunpack.c.l.b16 %v1903
      %v1958 = vunpack.c.l.b16 %v1917
      %v1959 = vunpack.c.l.b16 %v1927
      %v1960 = vpack.c.b16 %v1929, %v1928
      %v1961 = vpack.c.b16 %v1931, %v1930
      %v1962 = vpack.c.b16 %v1933, %v1932
      %v1963 = vpack.c.b16 %v1935, %v1934
      %v1964 = vpack.c.b16 %v1937, %v1936
      %v1965 = vpack.c.b16 %v1939, %v1938
      %v1966 = vpack.c.b16 %v1941, %v1940
      %v1967 = vpack.c.b16 %v1943, %v1942
      %v1968 = vpack.c.b16 %v1945, %v1944
      %v1969 = vpack.c.b16 %v1947, %v1946
      %v1970 = vpack.c.b16 %v1949, %v1948
      %v1971 = vpack.c.b16 %v1951, %v1950
      %v1972 = vpack.c.b16 %v1953, %v1952
      %v1973 = vpack.c.b16 %v1955, %v1954
      %v1974 = vpack.c.b16 %v1957, %v1956
      %v1975 = vpack.c.b16 %v1959, %v1958
      %1976 = vrot.lane.b32.xlu0 %v1960, 2
      %v1977 = vpop.permute.xlu0 %1976
      %1978 = vrot.lane.b32.xlu0 %v1961, 2
      %v1979 = vpop.permute.xlu0 %1978
      %1980 = vrot.lane.b32.xlu0 %v1962, 2
      %v1981 = vpop.permute.xlu0 %1980
      %1982 = vrot.lane.b32.xlu0 %v1963, 2
      %v1983 = vpop.permute.xlu0 %1982
      %1984 = vrot.lane.b32.xlu0 %v1964, 2
      %v1985 = vpop.permute.xlu0 %1984
      %1986 = vrot.lane.b32.xlu0 %v1965, 2
      %v1987 = vpop.permute.xlu0 %1986
      %1988 = vrot.lane.b32.xlu0 %v1966, 2
      %v1989 = vpop.permute.xlu0 %1988
      %1990 = vrot.lane.b32.xlu0 %v1967, 2
      %v1991 = vpop.permute.xlu0 %1990
      %1992 = vrot.lane.b32.xlu0 %v1968, 2
      %v1993 = vpop.permute.xlu0 %1992
      %1994 = vrot.lane.b32.xlu0 %v1969, 2
      %v1995 = vpop.permute.xlu0 %1994
      %1996 = vrot.lane.b32.xlu0 %v1970, 2
      %v1997 = vpop.permute.xlu0 %1996
      %1998 = vrot.lane.b32.xlu0 %v1971, 2
      %v1999 = vpop.permute.xlu0 %1998
      %2000 = vrot.lane.b32.xlu0 %v1972, 2
      %v2001 = vpop.permute.xlu0 %2000
      %2002 = vrot.lane.b32.xlu0 %v1973, 2
      %v2003 = vpop.permute.xlu0 %2002
      %2004 = vrot.lane.b32.xlu0 %v1974, 2
      %v2005 = vpop.permute.xlu0 %2004
      %2006 = vrot.lane.b32.xlu0 %v1975, 2
      %v2007 = vpop.permute.xlu0 %2006
      %vm2024 = vcmask 31760
      %2025 = vst.msk [vmem:[#allocation3] sm:$0xff] %vm2024, %v1977
      %2026 = vst.msk [vmem:[#allocation3 + $0x8] sm:$0xff] %vm2024, %v1979
      %2027 = vst.msk [vmem:[#allocation3 + $0x10] sm:$0xff] %vm2024, %v1981
      %2028 = vst.msk [vmem:[#allocation3 + $0x18] sm:$0xff] %vm2024, %v1983
      %2029 = vst.msk [vmem:[#allocation3 + $0x20] sm:$0xff] %vm2024, %v1985
      %2030 = vst.msk [vmem:[#allocation3 + $0x28] sm:$0xff] %vm2024, %v1987
      %2031 = vst.msk [vmem:[#allocation3 + $0x30] sm:$0xff] %vm2024, %v1989
      %2032 = vst.msk [vmem:[#allocation3 + $0x38] sm:$0xff] %vm2024, %v1991
      %2033 = vst.msk [vmem:[#allocation3 + $0x40] sm:$0xff] %vm2024, %v1993
      %2034 = vst.msk [vmem:[#allocation3 + $0x48] sm:$0xff] %vm2024, %v1995
      %2035 = vst.msk [vmem:[#allocation3 + $0x50] sm:$0xff] %vm2024, %v1997
      %2036 = vst.msk [vmem:[#allocation3 + $0x58] sm:$0xff] %vm2024, %v1999
      %2037 = vst.msk [vmem:[#allocation3 + $0x60] sm:$0xff] %vm2024, %v2001
      %2038 = vst.msk [vmem:[#allocation3 + $0x68] sm:$0xff] %vm2024, %v2003
      %2039 = vst.msk [vmem:[#allocation3 + $0x70] sm:$0xff] %vm2024, %v2005
      %2040 = vst.msk [vmem:[#allocation3 + $0x78] sm:$0xff] %vm2024, %v2007
      %v2041 = vld [vmem:[#allocation2] sm:$0xe]
      %v2042 = vld [vmem:[#allocation2 + $0x4] sm:$0xf]
      %v2043 = vld [vmem:[#allocation2 + $0x8] sm:$0x1]
      %v2044 = vld [vmem:[#allocation2 + $0xc] sm:$0xe]
      %v2045 = vld [vmem:[#allocation2 + $0x10] sm:$0xf]
      %v2046 = vld [vmem:[#allocation2 + $0x14] sm:$0x1]
      %v2047 = vld [vmem:[#allocation2 + $0x18] sm:$0xe]
      %v2048 = vld [vmem:[#allocation2 + $0x1c] sm:$0xf]
      %v2049 = vld [vmem:[#allocation2 + $0x20] sm:$0x1]
      %v2050 = vld [vmem:[#allocation2 + $0x24] sm:$0xe]
      %v2051 = vld [vmem:[#allocation2 + $0x28] sm:$0xf]
      %v2052 = vld [vmem:[#allocation2 + $0x2c] sm:$0x1]
      %v2053 = vld [vmem:[#allocation2 + $0x30] sm:$0xe]
      %v2054 = vld [vmem:[#allocation2 + $0x34] sm:$0xf]
      %v2055 = vld [vmem:[#allocation2 + $0x38] sm:$0x1]
      %v2056 = vld [vmem:[#allocation2 + $0x3c] sm:$0xe]
      %v2057 = vld [vmem:[#allocation2 + $0x40] sm:$0xf]
      %v2058 = vld [vmem:[#allocation2 + $0x44] sm:$0x1]
      %v2059 = vld [vmem:[#allocation2 + $0x48] sm:$0xe]
      %v2060 = vld [vmem:[#allocation2 + $0x4c] sm:$0xf]
      %v2061 = vld [vmem:[#allocation2 + $0x50] sm:$0x1]
      %v2062 = vld [vmem:[#allocation2 + $0x54] sm:$0xe]
      %v2063 = vld [vmem:[#allocation2 + $0x58] sm:$0xf]
      %v2064 = vld [vmem:[#allocation2 + $0x5c] sm:$0x1]
      %v2065 = vld [vmem:[#allocation2 + $0x60] sm:$0xe]
      %v2066 = vld [vmem:[#allocation2 + $0x64] sm:$0xf]
      %v2067 = vld [vmem:[#allocation2 + $0x68] sm:$0x1]
      %v2068 = vld [vmem:[#allocation2 + $0x6c] sm:$0xe]
      %v2069 = vld [vmem:[#allocation2 + $0x70] sm:$0xf]
      %v2070 = vld [vmem:[#allocation2 + $0x74] sm:$0x1]
      %v2071 = vld [vmem:[#allocation2 + $0x78] sm:$0xe]
      %v2072 = vld [vmem:[#allocation2 + $0x7c] sm:$0xf]
      %v2073 = vld [vmem:[#allocation2 + $0x80] sm:$0x1]
      %v2074 = vld [vmem:[#allocation2 + $0x84] sm:$0xe]
      %v2075 = vld [vmem:[#allocation2 + $0x88] sm:$0xf]
      %v2076 = vld [vmem:[#allocation2 + $0x8c] sm:$0x1]
      %v2077 = vld [vmem:[#allocation2 + $0x90] sm:$0xe]
      %v2078 = vld [vmem:[#allocation2 + $0x94] sm:$0xf]
      %v2079 = vld [vmem:[#allocation2 + $0x98] sm:$0x1]
      %v2080 = vld [vmem:[#allocation2 + $0x9c] sm:$0xe]
      %v2081 = vld [vmem:[#allocation2 + $0xa0] sm:$0xf]
      %v2082 = vld [vmem:[#allocation2 + $0xa4] sm:$0x1]
      %v2083 = vld [vmem:[#allocation2 + $0xa8] sm:$0xe]
      %v2084 = vld [vmem:[#allocation2 + $0xac] sm:$0xf]
      %v2085 = vld [vmem:[#allocation2 + $0xb0] sm:$0x1]
      %v2086 = vld [vmem:[#allocation2 + $0xb4] sm:$0xe]
      %v2087 = vld [vmem:[#allocation2 + $0xb8] sm:$0xf]
      %v2088 = vld [vmem:[#allocation2 + $0xbc] sm:$0x1]
      %vm2137 = vcmask 1042432
      %vm2138 = vcmask 1046532
      %vm2139 = vmor %vm2137, %vm2138
      %v2140 = vrot.slane %v2041, 5
      %v2141 = vrot.slane %v2140, 4
      %v2142 = vrot.slane %v2042, 5
      %v2143 = vsel %vm2139, %v2141, %v2142
      %v2144 = vrot.slane %v2142, 4
      %v2145 = vrot.slane %v2043, 5
      %v2146 = vsel %vm2139, %v2144, %v2145
      %v2147 = vrot.slane %v2044, 5
      %v2148 = vrot.slane %v2147, 4
      %v2149 = vrot.slane %v2045, 5
      %v2150 = vsel %vm2139, %v2148, %v2149
      %v2151 = vrot.slane %v2149, 4
      %v2152 = vrot.slane %v2046, 5
      %v2153 = vsel %vm2139, %v2151, %v2152
      %v2154 = vrot.slane %v2047, 5
      %v2155 = vrot.slane %v2154, 4
      %v2156 = vrot.slane %v2048, 5
      %v2157 = vsel %vm2139, %v2155, %v2156
      %v2158 = vrot.slane %v2156, 4
      %v2159 = vrot.slane %v2049, 5
      %v2160 = vsel %vm2139, %v2158, %v2159
      %v2161 = vrot.slane %v2050, 5
      %v2162 = vrot.slane %v2161, 4
      %v2163 = vrot.slane %v2051, 5
      %v2164 = vsel %vm2139, %v2162, %v2163
      %v2165 = vrot.slane %v2163, 4
      %v2166 = vrot.slane %v2052, 5
      %v2167 = vsel %vm2139, %v2165, %v2166
      %v2168 = vrot.slane %v2053, 5
      %v2169 = vrot.slane %v2168, 4
      %v2170 = vrot.slane %v2054, 5
      %v2171 = vsel %vm2139, %v2169, %v2170
      %v2172 = vrot.slane %v2170, 4
      %v2173 = vrot.slane %v2055, 5
      %v2174 = vsel %vm2139, %v2172, %v2173
      %v2175 = vrot.slane %v2056, 5
      %v2176 = vrot.slane %v2175, 4
      %v2177 = vrot.slane %v2057, 5
      %v2178 = vsel %vm2139, %v2176, %v2177
      %v2179 = vrot.slane %v2177, 4
      %v2180 = vrot.slane %v2058, 5
      %v2181 = vsel %vm2139, %v2179, %v2180
      %v2182 = vrot.slane %v2059, 5
      %v2183 = vrot.slane %v2182, 4
      %v2184 = vrot.slane %v2060, 5
      %v2185 = vsel %vm2139, %v2183, %v2184
      %v2186 = vrot.slane %v2184, 4
      %v2187 = vrot.slane %v2061, 5
      %v2188 = vsel %vm2139, %v2186, %v2187
      %v2189 = vrot.slane %v2062, 5
      %v2190 = vrot.slane %v2189, 4
      %v2191 = vrot.slane %v2063, 5
      %v2192 = vsel %vm2139, %v2190, %v2191
      %v2193 = vrot.slane %v2191, 4
      %v2194 = vrot.slane %v2064, 5
      %v2195 = vsel %vm2139, %v2193, %v2194
      %v2196 = vrot.slane %v2065, 5
      %v2197 = vrot.slane %v2196, 4
      %v2198 = vrot.slane %v2066, 5
      %v2199 = vsel %vm2139, %v2197, %v2198
      %v2200 = vrot.slane %v2198, 4
      %v2201 = vrot.slane %v2067, 5
      %v2202 = vsel %vm2139, %v2200, %v2201
      %v2203 = vrot.slane %v2068, 5
      %v2204 = vrot.slane %v2203, 4
      %v2205 = vrot.slane %v2069, 5
      %v2206 = vsel %vm2139, %v2204, %v2205
      %v2207 = vrot.slane %v2205, 4
      %v2208 = vrot.slane %v2070, 5
      %v2209 = vsel %vm2139, %v2207, %v2208
      %v2210 = vrot.slane %v2071, 5
      %v2211 = vrot.slane %v2210, 4
      %v2212 = vrot.slane %v2072, 5
      %v2213 = vsel %vm2139, %v2211, %v2212
      %v2214 = vrot.slane %v2212, 4
      %v2215 = vrot.slane %v2073, 5
      %v2216 = vsel %vm2139, %v2214, %v2215
      %v2217 = vrot.slane %v2074, 5
      %v2218 = vrot.slane %v2217, 4
      %v2219 = vrot.slane %v2075, 5
      %v2220 = vsel %vm2139, %v2218, %v2219
      %v2221 = vrot.slane %v2219, 4
      %v2222 = vrot.slane %v2076, 5
      %v2223 = vsel %vm2139, %v2221, %v2222
      %v2224 = vrot.slane %v2077, 5
      %v2225 = vrot.slane %v2224, 4
      %v2226 = vrot.slane %v2078, 5
      %v2227 = vsel %vm2139, %v2225, %v2226
      %v2228 = vrot.slane %v2226, 4
      %v2229 = vrot.slane %v2079, 5
      %v2230 = vsel %vm2139, %v2228, %v2229
      %v2231 = vrot.slane %v2080, 5
      %v2232 = vrot.slane %v2231, 4
      %v2233 = vrot.slane %v2081, 5
      %v2234 = vsel %vm2139, %v2232, %v2233
      %v2235 = vrot.slane %v2233, 4
      %v2236 = vrot.slane %v2082, 5
      %v2237 = vsel %vm2139, %v2235, %v2236
      %v2238 = vrot.slane %v2083, 5
      %v2239 = vrot.slane %v2238, 4
      %v2240 = vrot.slane %v2084, 5
      %v2241 = vsel %vm2139, %v2239, %v2240
      %v2242 = vrot.slane %v2240, 4
      %v2243 = vrot.slane %v2085, 5
      %v2244 = vsel %vm2139, %v2242, %v2243
      %v2245 = vrot.slane %v2086, 5
      %v2246 = vrot.slane %v2245, 4
      %v2247 = vrot.slane %v2087, 5
      %v2248 = vsel %vm2139, %v2246, %v2247
      %v2249 = vrot.slane %v2247, 4
      %v2250 = vrot.slane %v2088, 5
      %v2251 = vsel %vm2139, %v2249, %v2250
      %v2252 = vunpack.c.l.b16 %v2143
      %v2253 = vunpack.c.l.b16 %v2146
      %v2254 = vunpack.c.l.b16 %v2150
      %v2255 = vunpack.c.l.b16 %v2153
      %v2256 = vunpack.c.l.b16 %v2157
      %v2257 = vunpack.c.l.b16 %v2160
      %v2258 = vunpack.c.l.b16 %v2164
      %v2259 = vunpack.c.l.b16 %v2167
      %v2260 = vunpack.c.l.b16 %v2171
      %v2261 = vunpack.c.l.b16 %v2174
      %v2262 = vunpack.c.l.b16 %v2178
      %v2263 = vunpack.c.l.b16 %v2181
      %v2264 = vunpack.c.l.b16 %v2185
      %v2265 = vunpack.c.l.b16 %v2188
      %v2266 = vunpack.c.l.b16 %v2192
      %v2267 = vunpack.c.l.b16 %v2195
      %v2268 = vunpack.c.l.b16 %v2199
      %v2269 = vunpack.c.l.b16 %v2202
      %v2270 = vunpack.c.l.b16 %v2206
      %v2271 = vunpack.c.l.b16 %v2209
      %v2272 = vunpack.c.l.b16 %v2213
      %v2273 = vunpack.c.l.b16 %v2216
      %v2274 = vunpack.c.l.b16 %v2220
      %v2275 = vunpack.c.l.b16 %v2223
      %v2276 = vunpack.c.l.b16 %v2227
      %v2277 = vunpack.c.l.b16 %v2230
      %v2278 = vunpack.c.l.b16 %v2234
      %v2279 = vunpack.c.l.b16 %v2237
      %v2280 = vunpack.c.l.b16 %v2241
      %v2281 = vunpack.c.l.b16 %v2244
      %v2282 = vunpack.c.l.b16 %v2248
      %v2283 = vunpack.c.l.b16 %v2251
      %v2284 = vpack.c.b16 %v2253, %v2252
      %v2285 = vpack.c.b16 %v2255, %v2254
      %v2286 = vpack.c.b16 %v2257, %v2256
      %v2287 = vpack.c.b16 %v2259, %v2258
      %v2288 = vpack.c.b16 %v2261, %v2260
      %v2289 = vpack.c.b16 %v2263, %v2262
      %v2290 = vpack.c.b16 %v2265, %v2264
      %v2291 = vpack.c.b16 %v2267, %v2266
      %v2292 = vpack.c.b16 %v2269, %v2268
      %v2293 = vpack.c.b16 %v2271, %v2270
      %v2294 = vpack.c.b16 %v2273, %v2272
      %v2295 = vpack.c.b16 %v2275, %v2274
      %v2296 = vpack.c.b16 %v2277, %v2276
      %v2297 = vpack.c.b16 %v2279, %v2278
      %v2298 = vpack.c.b16 %v2281, %v2280
      %v2299 = vpack.c.b16 %v2283, %v2282
      %2300 = vrot.lane.b32.xlu0 %v2284, 4
      %v2301 = vpop.permute.xlu0 %2300
      %2302 = vrot.lane.b32.xlu0 %v2285, 4
      %v2303 = vpop.permute.xlu0 %2302
      %2304 = vrot.lane.b32.xlu0 %v2286, 4
      %v2305 = vpop.permute.xlu0 %2304
      %2306 = vrot.lane.b32.xlu0 %v2287, 4
      %v2307 = vpop.permute.xlu0 %2306
      %2308 = vrot.lane.b32.xlu0 %v2288, 4
      %v2309 = vpop.permute.xlu0 %2308
      %2310 = vrot.lane.b32.xlu0 %v2289, 4
      %v2311 = vpop.permute.xlu0 %2310
      %2312 = vrot.lane.b32.xlu0 %v2290, 4
      %v2313 = vpop.permute.xlu0 %2312
      %2314 = vrot.lane.b32.xlu0 %v2291, 4
      %v2315 = vpop.permute.xlu0 %2314
      %2316 = vrot.lane.b32.xlu0 %v2292, 4
      %v2317 = vpop.permute.xlu0 %2316
      %2318 = vrot.lane.b32.xlu0 %v2293, 4
      %v2319 = vpop.permute.xlu0 %2318
      %2320 = vrot.lane.b32.xlu0 %v2294, 4
      %v2321 = vpop.permute.xlu0 %2320
      %2322 = vrot.lane.b32.xlu0 %v2295, 4
      %v2323 = vpop.permute.xlu0 %2322
      %2324 = vrot.lane.b32.xlu0 %v2296, 4
      %v2325 = vpop.permute.xlu0 %2324
      %2326 = vrot.lane.b32.xlu0 %v2297, 4
      %v2327 = vpop.permute.xlu0 %2326
      %2328 = vrot.lane.b32.xlu0 %v2298, 4
      %v2329 = vpop.permute.xlu0 %2328
      %2330 = vrot.lane.b32.xlu0 %v2299, 4
      %v2331 = vpop.permute.xlu0 %2330
      %vm2348 = vcmask 48160
      %2349 = vst.msk [vmem:[#allocation3] sm:$0xff] %vm2348, %v2301
      %2350 = vst.msk [vmem:[#allocation3 + $0x8] sm:$0xff] %vm2348, %v2303
      %2351 = vst.msk [vmem:[#allocation3 + $0x10] sm:$0xff] %vm2348, %v2305
      %2352 = vst.msk [vmem:[#allocation3 + $0x18] sm:$0xff] %vm2348, %v2307
      %2353 = vst.msk [vmem:[#allocation3 + $0x20] sm:$0xff] %vm2348, %v2309
      %2354 = vst.msk [vmem:[#allocation3 + $0x28] sm:$0xff] %vm2348, %v2311
      %2355 = vst.msk [vmem:[#allocation3 + $0x30] sm:$0xff] %vm2348, %v2313
      %2356 = vst.msk [vmem:[#allocation3 + $0x38] sm:$0xff] %vm2348, %v2315
      %2357 = vst.msk [vmem:[#allocation3 + $0x40] sm:$0xff] %vm2348, %v2317
      %2358 = vst.msk [vmem:[#allocation3 + $0x48] sm:$0xff] %vm2348, %v2319
      %2359 = vst.msk [vmem:[#allocation3 + $0x50] sm:$0xff] %vm2348, %v2321
      %2360 = vst.msk [vmem:[#allocation3 + $0x58] sm:$0xff] %vm2348, %v2323
      %2361 = vst.msk [vmem:[#allocation3 + $0x60] sm:$0xff] %vm2348, %v2325
      %2362 = vst.msk [vmem:[#allocation3 + $0x68] sm:$0xff] %vm2348, %v2327
      %2363 = vst.msk [vmem:[#allocation3 + $0x70] sm:$0xff] %vm2348, %v2329
      %2364 = vst.msk [vmem:[#allocation3 + $0x78] sm:$0xff] %vm2348, %v2331
      %v2365 = vld [vmem:[%s1230] sm:$0xf]
      %v2366 = vld [vmem:[%s1230 + $0x4] sm:$0xf]
      %v2367 = vld [vmem:[%s1230 + $0xc] sm:$0xf]
      %v2368 = vld [vmem:[%s1230 + $0x10] sm:$0xf]
      %v2369 = vld [vmem:[%s1230 + $0x18] sm:$0xf]
      %v2370 = vld [vmem:[%s1230 + $0x1c] sm:$0xf]
      %v2371 = vld [vmem:[%s1230 + $0x24] sm:$0xf]
      %v2372 = vld [vmem:[%s1230 + $0x28] sm:$0xf]
      %v2373 = vld [vmem:[%s1230 + $0x30] sm:$0xf]
      %v2374 = vld [vmem:[%s1230 + $0x34] sm:$0xf]
      %v2375 = vld [vmem:[%s1230 + $0x3c] sm:$0xf]
      %v2376 = vld [vmem:[%s1230 + $0x40] sm:$0xf]
      %v2377 = vld [vmem:[%s1230 + $0x48] sm:$0xf]
      %v2378 = vld [vmem:[%s1230 + $0x4c] sm:$0xf]
      %v2379 = vld [vmem:[%s1230 + $0x54] sm:$0xf]
      %v2380 = vld [vmem:[%s1230 + $0x58] sm:$0xf]
      %v2381 = vld [vmem:[%s1230 + $0x60] sm:$0xf]
      %v2382 = vld [vmem:[%s1230 + $0x64] sm:$0xf]
      %v2383 = vld [vmem:[%s1230 + $0x6c] sm:$0xf]
      %v2384 = vld [vmem:[%s1230 + $0x70] sm:$0xf]
      %v2385 = vld [vmem:[%s1230 + $0x78] sm:$0xf]
      %v2386 = vld [vmem:[%s1230 + $0x7c] sm:$0xf]
      %v2387 = vld [vmem:[%s1230 + $0x84] sm:$0xf]
      %v2388 = vld [vmem:[%s1230 + $0x88] sm:$0xf]
      %v2389 = vld [vmem:[%s1230 + $0x90] sm:$0xf]
      %v2390 = vld [vmem:[%s1230 + $0x94] sm:$0xf]
      %v2391 = vld [vmem:[%s1230 + $0x9c] sm:$0xf]
      %v2392 = vld [vmem:[%s1230 + $0xa0] sm:$0xf]
      %v2393 = vld [vmem:[%s1230 + $0xa8] sm:$0xf]
      %v2394 = vld [vmem:[%s1230 + $0xac] sm:$0xf]
      %v2395 = vld [vmem:[%s1230 + $0xb4] sm:$0xf]
      %v2396 = vld [vmem:[%s1230 + $0xb8] sm:$0xf]
      %v2429 = vunpack.c.l.b16 %v2365
      %v2430 = vunpack.c.l.b16 %v2366
      %v2431 = vunpack.c.l.b16 %v2367
      %v2432 = vunpack.c.l.b16 %v2368
      %v2433 = vunpack.c.l.b16 %v2369
      %v2434 = vunpack.c.l.b16 %v2370
      %v2435 = vunpack.c.l.b16 %v2371
      %v2436 = vunpack.c.l.b16 %v2372
      %v2437 = vunpack.c.l.b16 %v2373
      %v2438 = vunpack.c.l.b16 %v2374
      %v2439 = vunpack.c.l.b16 %v2375
      %v2440 = vunpack.c.l.b16 %v2376
      %v2441 = vunpack.c.l.b16 %v2377
      %v2442 = vunpack.c.l.b16 %v2378
      %v2443 = vunpack.c.l.b16 %v2379
      %v2444 = vunpack.c.l.b16 %v2380
      %v2445 = vunpack.c.l.b16 %v2381
      %v2446 = vunpack.c.l.b16 %v2382
      %v2447 = vunpack.c.l.b16 %v2383
      %v2448 = vunpack.c.l.b16 %v2384
      %v2449 = vunpack.c.l.b16 %v2385
      %v2450 = vunpack.c.l.b16 %v2386
      %v2451 = vunpack.c.l.b16 %v2387
      %v2452 = vunpack.c.l.b16 %v2388
      %v2453 = vunpack.c.l.b16 %v2389
      %v2454 = vunpack.c.l.b16 %v2390
      %v2455 = vunpack.c.l.b16 %v2391
      %v2456 = vunpack.c.l.b16 %v2392
      %v2457 = vunpack.c.l.b16 %v2393
      %v2458 = vunpack.c.l.b16 %v2394
      %v2459 = vunpack.c.l.b16 %v2395
      %v2460 = vunpack.c.l.b16 %v2396
      %v2461 = vpack.c.b16 %v2430, %v2429
      %v2462 = vpack.c.b16 %v2432, %v2431
      %v2463 = vpack.c.b16 %v2434, %v2433
      %v2464 = vpack.c.b16 %v2436, %v2435
      %v2465 = vpack.c.b16 %v2438, %v2437
      %v2466 = vpack.c.b16 %v2440, %v2439
      %v2467 = vpack.c.b16 %v2442, %v2441
      %v2468 = vpack.c.b16 %v2444, %v2443
      %v2469 = vpack.c.b16 %v2446, %v2445
      %v2470 = vpack.c.b16 %v2448, %v2447
      %v2471 = vpack.c.b16 %v2450, %v2449
      %v2472 = vpack.c.b16 %v2452, %v2451
      %v2473 = vpack.c.b16 %v2454, %v2453
      %v2474 = vpack.c.b16 %v2456, %v2455
      %v2475 = vpack.c.b16 %v2458, %v2457
      %v2476 = vpack.c.b16 %v2460, %v2459
      %2477 = vrot.lane.b32.xlu0 %v2461, 6
      %v2478 = vpop.permute.xlu0 %2477
      %2479 = vrot.lane.b32.xlu0 %v2462, 6
      %v2480 = vpop.permute.xlu0 %2479
      %2481 = vrot.lane.b32.xlu0 %v2463, 6
      %v2482 = vpop.permute.xlu0 %2481
      %2483 = vrot.lane.b32.xlu0 %v2464, 6
      %v2484 = vpop.permute.xlu0 %2483
      %2485 = vrot.lane.b32.xlu0 %v2465, 6
      %v2486 = vpop.permute.xlu0 %2485
      %2487 = vrot.lane.b32.xlu0 %v2466, 6
      %v2488 = vpop.permute.xlu0 %2487
      %2489 = vrot.lane.b32.xlu0 %v2467, 6
      %v2490 = vpop.permute.xlu0 %2489
      %2491 = vrot.lane.b32.xlu0 %v2468, 6
      %v2492 = vpop.permute.xlu0 %2491
      %2493 = vrot.lane.b32.xlu0 %v2469, 6
      %v2494 = vpop.permute.xlu0 %2493
      %2495 = vrot.lane.b32.xlu0 %v2470, 6
      %v2496 = vpop.permute.xlu0 %2495
      %2497 = vrot.lane.b32.xlu0 %v2471, 6
      %v2498 = vpop.permute.xlu0 %2497
      %2499 = vrot.lane.b32.xlu0 %v2472, 6
      %v2500 = vpop.permute.xlu0 %2499
      %2501 = vrot.lane.b32.xlu0 %v2473, 6
      %v2502 = vpop.permute.xlu0 %2501
      %2503 = vrot.lane.b32.xlu0 %v2474, 6
      %v2504 = vpop.permute.xlu0 %2503
      %2505 = vrot.lane.b32.xlu0 %v2475, 6
      %v2506 = vpop.permute.xlu0 %2505
      %2507 = vrot.lane.b32.xlu0 %v2476, 6
      %v2508 = vpop.permute.xlu0 %2507
      %vm2525 = vcmask 64560
      %2526 = vst.msk [vmem:[#allocation3] sm:$0xff] %vm2525, %v2478
      %2527 = vst.msk [vmem:[#allocation3 + $0x8] sm:$0xff] %vm2525, %v2480
      %2528 = vst.msk [vmem:[#allocation3 + $0x10] sm:$0xff] %vm2525, %v2482
      %2529 = vst.msk [vmem:[#allocation3 + $0x18] sm:$0xff] %vm2525, %v2484
      %2530 = vst.msk [vmem:[#allocation3 + $0x20] sm:$0xff] %vm2525, %v2486
      %2531 = vst.msk [vmem:[#allocation3 + $0x28] sm:$0xff] %vm2525, %v2488
      %2532 = vst.msk [vmem:[#allocation3 + $0x30] sm:$0xff] %vm2525, %v2490
      %2533 = vst.msk [vmem:[#allocation3 + $0x38] sm:$0xff] %vm2525, %v2492
      %2534 = vst.msk [vmem:[#allocation3 + $0x40] sm:$0xff] %vm2525, %v2494
      %2535 = vst.msk [vmem:[#allocation3 + $0x48] sm:$0xff] %vm2525, %v2496
      %2536 = vst.msk [vmem:[#allocation3 + $0x50] sm:$0xff] %vm2525, %v2498
      %2537 = vst.msk [vmem:[#allocation3 + $0x58] sm:$0xff] %vm2525, %v2500
      %2538 = vst.msk [vmem:[#allocation3 + $0x60] sm:$0xff] %vm2525, %v2502
      %2539 = vst.msk [vmem:[#allocation3 + $0x68] sm:$0xff] %vm2525, %v2504
      %2540 = vst.msk [vmem:[#allocation3 + $0x70] sm:$0xff] %vm2525, %v2506
      %2541 = vst.msk [vmem:[#allocation3 + $0x78] sm:$0xff] %vm2525, %v2508
      %v2542 = vld [vmem:[%s1230] sm:$0xf]
      %v2543 = vld [vmem:[%s1230 + $0x4] sm:$0xf]
      %v2544 = vld [vmem:[%s1230 + $0x8] sm:$0x1]
      %v2545 = vld [vmem:[%s1230 + $0xc] sm:$0xf]
      %v2546 = vld [vmem:[%s1230 + $0x10] sm:$0xf]
      %v2547 = vld [vmem:[%s1230 + $0x14] sm:$0x1]
      %v2548 = vld [vmem:[%s1230 + $0x18] sm:$0xf]
      %v2549 = vld [vmem:[%s1230 + $0x1c] sm:$0xf]
      %v2550 = vld [vmem:[%s1230 + $0x20] sm:$0x1]
      %v2551 = vld [vmem:[%s1230 + $0x24] sm:$0xf]
      %v2552 = vld [vmem:[%s1230 + $0x28] sm:$0xf]
      %v2553 = vld [vmem:[%s1230 + $0x2c] sm:$0x1]
      %v2554 = vld [vmem:[%s1230 + $0x30] sm:$0xf]
      %v2555 = vld [vmem:[%s1230 + $0x34] sm:$0xf]
      %v2556 = vld [vmem:[%s1230 + $0x38] sm:$0x1]
      %v2557 = vld [vmem:[%s1230 + $0x3c] sm:$0xf]
      %v2558 = vld [vmem:[%s1230 + $0x40] sm:$0xf]
      %v2559 = vld [vmem:[%s1230 + $0x44] sm:$0x1]
      %v2560 = vld [vmem:[%s1230 + $0x48] sm:$0xf]
      %v2561 = vld [vmem:[%s1230 + $0x4c] sm:$0xf]
      %v2562 = vld [vmem:[%s1230 + $0x50] sm:$0x1]
      %v2563 = vld [vmem:[%s1230 + $0x54] sm:$0xf]
      %v2564 = vld [vmem:[%s1230 + $0x58] sm:$0xf]
      %v2565 = vld [vmem:[%s1230 + $0x5c] sm:$0x1]
      %v2566 = vld [vmem:[%s1230 + $0x60] sm:$0xf]
      %v2567 = vld [vmem:[%s1230 + $0x64] sm:$0xf]
      %v2568 = vld [vmem:[%s1230 + $0x68] sm:$0x1]
      %v2569 = vld [vmem:[%s1230 + $0x6c] sm:$0xf]
      %v2570 = vld [vmem:[%s1230 + $0x70] sm:$0xf]
      %v2571 = vld [vmem:[%s1230 + $0x74] sm:$0x1]
      %v2572 = vld [vmem:[%s1230 + $0x78] sm:$0xf]
      %v2573 = vld [vmem:[%s1230 + $0x7c] sm:$0xf]
      %v2574 = vld [vmem:[%s1230 + $0x80] sm:$0x1]
      %v2575 = vld [vmem:[%s1230 + $0x84] sm:$0xf]
      %v2576 = vld [vmem:[%s1230 + $0x88] sm:$0xf]
      %v2577 = vld [vmem:[%s1230 + $0x8c] sm:$0x1]
      %v2578 = vld [vmem:[%s1230 + $0x90] sm:$0xf]
      %v2579 = vld [vmem:[%s1230 + $0x94] sm:$0xf]
      %v2580 = vld [vmem:[%s1230 + $0x98] sm:$0x1]
      %v2581 = vld [vmem:[%s1230 + $0x9c] sm:$0xf]
      %v2582 = vld [vmem:[%s1230 + $0xa0] sm:$0xf]
      %v2583 = vld [vmem:[%s1230 + $0xa4] sm:$0x1]
      %v2584 = vld [vmem:[%s1230 + $0xa8] sm:$0xf]
      %v2585 = vld [vmem:[%s1230 + $0xac] sm:$0xf]
      %v2586 = vld [vmem:[%s1230 + $0xb0] sm:$0x1]
      %v2587 = vld [vmem:[%s1230 + $0xb4] sm:$0xf]
      %v2588 = vld [vmem:[%s1230 + $0xb8] sm:$0xf]
      %v2589 = vld [vmem:[%s1230 + $0xbc] sm:$0x1]
      %v2591 = vshrl.u32 %v2542, 16
      %v2593 = vrot.slane %v2591, 4
      %v2594 = vshll.u32 %v2542, 16
      %v2596 = vrot.slane %v2594, 5
      %v2597 = vor.u32 %v2593, %v2596
      %v2598 = vrot.slane %v2597, 4
      %v2600 = vshll.u32 %v2543, 16
      %v2602 = vrot.slane %v2600, 5
      %v2603 = vsel %vm1543, %v2598, %v2602
      %v2604 = vshrl.u32 %v2543, 16
      %v2606 = vrot.slane %v2604, 4
      %v2607 = vor.u32 %v2606, %v2602
      %v2608 = vrot.slane %v2607, 4
      %v2610 = vshll.u32 %v2544, 16
      %v2612 = vrot.slane %v2610, 5
      %v2613 = vsel %vm1543, %v2608, %v2612
      %v2615 = vshrl.u32 %v2545, 16
      %v2617 = vrot.slane %v2615, 4
      %v2618 = vshll.u32 %v2545, 16
      %v2620 = vrot.slane %v2618, 5
      %v2621 = vor.u32 %v2617, %v2620
      %v2622 = vrot.slane %v2621, 4
      %v2624 = vshll.u32 %v2546, 16
      %v2626 = vrot.slane %v2624, 5
      %v2627 = vsel %vm1543, %v2622, %v2626
      %v2628 = vshrl.u32 %v2546, 16
      %v2630 = vrot.slane %v2628, 4
      %v2631 = vor.u32 %v2630, %v2626
      %v2632 = vrot.slane %v2631, 4
      %v2634 = vshll.u32 %v2547, 16
      %v2636 = vrot.slane %v2634, 5
      %v2637 = vsel %vm1543, %v2632, %v2636
      %v2639 = vshrl.u32 %v2548, 16
      %v2641 = vrot.slane %v2639, 4
      %v2642 = vshll.u32 %v2548, 16
      %v2644 = vrot.slane %v2642, 5
      %v2645 = vor.u32 %v2641, %v2644
      %v2646 = vrot.slane %v2645, 4
      %v2648 = vshll.u32 %v2549, 16
      %v2650 = vrot.slane %v2648, 5
      %v2651 = vsel %vm1543, %v2646, %v2650
      %v2652 = vshrl.u32 %v2549, 16
      %v2654 = vrot.slane %v2652, 4
      %v2655 = vor.u32 %v2654, %v2650
      %v2656 = vrot.slane %v2655, 4
      %v2658 = vshll.u32 %v2550, 16
      %v2660 = vrot.slane %v2658, 5
      %v2661 = vsel %vm1543, %v2656, %v2660
      %v2663 = vshrl.u32 %v2551, 16
      %v2665 = vrot.slane %v2663, 4
      %v2666 = vshll.u32 %v2551, 16
      %v2668 = vrot.slane %v2666, 5
      %v2669 = vor.u32 %v2665, %v2668
      %v2670 = vrot.slane %v2669, 4
      %v2672 = vshll.u32 %v2552, 16
      %v2674 = vrot.slane %v2672, 5
      %v2675 = vsel %vm1543, %v2670, %v2674
      %v2676 = vshrl.u32 %v2552, 16
      %v2678 = vrot.slane %v2676, 4
      %v2679 = vor.u32 %v2678, %v2674
      %v2680 = vrot.slane %v2679, 4
      %v2682 = vshll.u32 %v2553, 16
      %v2684 = vrot.slane %v2682, 5
      %v2685 = vsel %vm1543, %v2680, %v2684
      %v2687 = vshrl.u32 %v2554, 16
      %v2689 = vrot.slane %v2687, 4
      %v2690 = vshll.u32 %v2554, 16
      %v2692 = vrot.slane %v2690, 5
      %v2693 = vor.u32 %v2689, %v2692
      %v2694 = vrot.slane %v2693, 4
      %v2696 = vshll.u32 %v2555, 16
      %v2698 = vrot.slane %v2696, 5
      %v2699 = vsel %vm1543, %v2694, %v2698
      %v2700 = vshrl.u32 %v2555, 16
      %v2702 = vrot.slane %v2700, 4
      %v2703 = vor.u32 %v2702, %v2698
      %v2704 = vrot.slane %v2703, 4
      %v2706 = vshll.u32 %v2556, 16
      %v2708 = vrot.slane %v2706, 5
      %v2709 = vsel %vm1543, %v2704, %v2708
      %v2711 = vshrl.u32 %v2557, 16
      %v2713 = vrot.slane %v2711, 4
      %v2714 = vshll.u32 %v2557, 16
      %v2716 = vrot.slane %v2714, 5
      %v2717 = vor.u32 %v2713, %v2716
      %v2718 = vrot.slane %v2717, 4
      %v2720 = vshll.u32 %v2558, 16
      %v2722 = vrot.slane %v2720, 5
      %v2723 = vsel %vm1543, %v2718, %v2722
      %v2724 = vshrl.u32 %v2558, 16
      %v2726 = vrot.slane %v2724, 4
      %v2727 = vor.u32 %v2726, %v2722
      %v2728 = vrot.slane %v2727, 4
      %v2730 = vshll.u32 %v2559, 16
      %v2732 = vrot.slane %v2730, 5
      %v2733 = vsel %vm1543, %v2728, %v2732
      %v2735 = vshrl.u32 %v2560, 16
      %v2737 = vrot.slane %v2735, 4
      %v2738 = vshll.u32 %v2560, 16
      %v2740 = vrot.slane %v2738, 5
      %v2741 = vor.u32 %v2737, %v2740
      %v2742 = vrot.slane %v2741, 4
      %v2744 = vshll.u32 %v2561, 16
      %v2746 = vrot.slane %v2744, 5
      %v2747 = vsel %vm1543, %v2742, %v2746
      %v2748 = vshrl.u32 %v2561, 16
      %v2750 = vrot.slane %v2748, 4
      %v2751 = vor.u32 %v2750, %v2746
      %v2752 = vrot.slane %v2751, 4
      %v2754 = vshll.u32 %v2562, 16
      %v2756 = vrot.slane %v2754, 5
      %v2757 = vsel %vm1543, %v2752, %v2756
      %v2759 = vshrl.u32 %v2563, 16
      %v2761 = vrot.slane %v2759, 4
      %v2762 = vshll.u32 %v2563, 16
      %v2764 = vrot.slane %v2762, 5
      %v2765 = vor.u32 %v2761, %v2764
      %v2766 = vrot.slane %v2765, 4
      %v2768 = vshll.u32 %v2564, 16
      %v2770 = vrot.slane %v2768, 5
      %v2771 = vsel %vm1543, %v2766, %v2770
      %v2772 = vshrl.u32 %v2564, 16
      %v2774 = vrot.slane %v2772, 4
      %v2775 = vor.u32 %v2774, %v2770
      %v2776 = vrot.slane %v2775, 4
      %v2778 = vshll.u32 %v2565, 16
      %v2780 = vrot.slane %v2778, 5
      %v2781 = vsel %vm1543, %v2776, %v2780
      %v2783 = vshrl.u32 %v2566, 16
      %v2785 = vrot.slane %v2783, 4
      %v2786 = vshll.u32 %v2566, 16
      %v2788 = vrot.slane %v2786, 5
      %v2789 = vor.u32 %v2785, %v2788
      %v2790 = vrot.slane %v2789, 4
      %v2792 = vshll.u32 %v2567, 16
      %v2794 = vrot.slane %v2792, 5
      %v2795 = vsel %vm1543, %v2790, %v2794
      %v2796 = vshrl.u32 %v2567, 16
      %v2798 = vrot.slane %v2796, 4
      %v2799 = vor.u32 %v2798, %v2794
      %v2800 = vrot.slane %v2799, 4
      %v2802 = vshll.u32 %v2568, 16
      %v2804 = vrot.slane %v2802, 5
      %v2805 = vsel %vm1543, %v2800, %v2804
      %v2807 = vshrl.u32 %v2569, 16
      %v2809 = vrot.slane %v2807, 4
      %v2810 = vshll.u32 %v2569, 16
      %v2812 = vrot.slane %v2810, 5
      %v2813 = vor.u32 %v2809, %v2812
      %v2814 = vrot.slane %v2813, 4
      %v2816 = vshll.u32 %v2570, 16
      %v2818 = vrot.slane %v2816, 5
      %v2819 = vsel %vm1543, %v2814, %v2818
      %v2820 = vshrl.u32 %v2570, 16
      %v2822 = vrot.slane %v2820, 4
      %v2823 = vor.u32 %v2822, %v2818
      %v2824 = vrot.slane %v2823, 4
      %v2826 = vshll.u32 %v2571, 16
      %v2828 = vrot.slane %v2826, 5
      %v2829 = vsel %vm1543, %v2824, %v2828
      %v2831 = vshrl.u32 %v2572, 16
      %v2833 = vrot.slane %v2831, 4
      %v2834 = vshll.u32 %v2572, 16
      %v2836 = vrot.slane %v2834, 5
      %v2837 = vor.u32 %v2833, %v2836
      %v2838 = vrot.slane %v2837, 4
      %v2840 = vshll.u32 %v2573, 16
      %v2842 = vrot.slane %v2840, 5
      %v2843 = vsel %vm1543, %v2838, %v2842
      %v2844 = vshrl.u32 %v2573, 16
      %v2846 = vrot.slane %v2844, 4
      %v2847 = vor.u32 %v2846, %v2842
      %v2848 = vrot.slane %v2847, 4
      %v2850 = vshll.u32 %v2574, 16
      %v2852 = vrot.slane %v2850, 5
      %v2853 = vsel %vm1543, %v2848, %v2852
      %v2855 = vshrl.u32 %v2575, 16
      %v2857 = vrot.slane %v2855, 4
      %v2858 = vshll.u32 %v2575, 16
      %v2860 = vrot.slane %v2858, 5
      %v2861 = vor.u32 %v2857, %v2860
      %v2862 = vrot.slane %v2861, 4
      %v2864 = vshll.u32 %v2576, 16
      %v2866 = vrot.slane %v2864, 5
      %v2867 = vsel %vm1543, %v2862, %v2866
      %v2868 = vshrl.u32 %v2576, 16
      %v2870 = vrot.slane %v2868, 4
      %v2871 = vor.u32 %v2870, %v2866
      %v2872 = vrot.slane %v2871, 4
      %v2874 = vshll.u32 %v2577, 16
      %v2876 = vrot.slane %v2874, 5
      %v2877 = vsel %vm1543, %v2872, %v2876
      %v2879 = vshrl.u32 %v2578, 16
      %v2881 = vrot.slane %v2879, 4
      %v2882 = vshll.u32 %v2578, 16
      %v2884 = vrot.slane %v2882, 5
      %v2885 = vor.u32 %v2881, %v2884
      %v2886 = vrot.slane %v2885, 4
      %v2888 = vshll.u32 %v2579, 16
      %v2890 = vrot.slane %v2888, 5
      %v2891 = vsel %vm1543, %v2886, %v2890
      %v2892 = vshrl.u32 %v2579, 16
      %v2894 = vrot.slane %v2892, 4
      %v2895 = vor.u32 %v2894, %v2890
      %v2896 = vrot.slane %v2895, 4
      %v2898 = vshll.u32 %v2580, 16
      %v2900 = vrot.slane %v2898, 5
      %v2901 = vsel %vm1543, %v2896, %v2900
      %v2903 = vshrl.u32 %v2581, 16
      %v2905 = vrot.slane %v2903, 4
      %v2906 = vshll.u32 %v2581, 16
      %v2908 = vrot.slane %v2906, 5
      %v2909 = vor.u32 %v2905, %v2908
      %v2910 = vrot.slane %v2909, 4
      %v2912 = vshll.u32 %v2582, 16
      %v2914 = vrot.slane %v2912, 5
      %v2915 = vsel %vm1543, %v2910, %v2914
      %v2916 = vshrl.u32 %v2582, 16
      %v2918 = vrot.slane %v2916, 4
      %v2919 = vor.u32 %v2918, %v2914
      %v2920 = vrot.slane %v2919, 4
      %v2922 = vshll.u32 %v2583, 16
      %v2924 = vrot.slane %v2922, 5
      %v2925 = vsel %vm1543, %v2920, %v2924
      %v2927 = vshrl.u32 %v2584, 16
      %v2929 = vrot.slane %v2927, 4
      %v2930 = vshll.u32 %v2584, 16
      %v2932 = vrot.slane %v2930, 5
      %v2933 = vor.u32 %v2929, %v2932
      %v2934 = vrot.slane %v2933, 4
      %v2936 = vshll.u32 %v2585, 16
      %v2938 = vrot.slane %v2936, 5
      %v2939 = vsel %vm1543, %v2934, %v2938
      %v2940 = vshrl.u32 %v2585, 16
      %v2942 = vrot.slane %v2940, 4
      %v2943 = vor.u32 %v2942, %v2938
      %v2944 = vrot.slane %v2943, 4
      %v2946 = vshll.u32 %v2586, 16
      %v2948 = vrot.slane %v2946, 5
      %v2949 = vsel %vm1543, %v2944, %v2948
      %v2951 = vshrl.u32 %v2587, 16
      %v2953 = vrot.slane %v2951, 4
      %v2954 = vshll.u32 %v2587, 16
      %v2956 = vrot.slane %v2954, 5
      %v2957 = vor.u32 %v2953, %v2956
      %v2958 = vrot.slane %v2957, 4
      %v2960 = vshll.u32 %v2588, 16
      %v2962 = vrot.slane %v2960, 5
      %v2963 = vsel %vm1543, %v2958, %v2962
      %v2964 = vshrl.u32 %v2588, 16
      %v2966 = vrot.slane %v2964, 4
      %v2967 = vor.u32 %v2966, %v2962
      %v2968 = vrot.slane %v2967, 4
      %v2970 = vshll.u32 %v2589, 16
      %v2972 = vrot.slane %v2970, 5
      %v2973 = vsel %vm1543, %v2968, %v2972
      %v2974 = vunpack.c.l.b16 %v2603
      %v2975 = vunpack.c.l.b16 %v2613
      %v2976 = vunpack.c.l.b16 %v2627
      %v2977 = vunpack.c.l.b16 %v2637
      %v2978 = vunpack.c.l.b16 %v2651
      %v2979 = vunpack.c.l.b16 %v2661
      %v2980 = vunpack.c.l.b16 %v2675
      %v2981 = vunpack.c.l.b16 %v2685
      %v2982 = vunpack.c.l.b16 %v2699
      %v2983 = vunpack.c.l.b16 %v2709
      %v2984 = vunpack.c.l.b16 %v2723
      %v2985 = vunpack.c.l.b16 %v2733
      %v2986 = vunpack.c.l.b16 %v2747
      %v2987 = vunpack.c.l.b16 %v2757
      %v2988 = vunpack.c.l.b16 %v2771
      %v2989 = vunpack.c.l.b16 %v2781
      %v2990 = vunpack.c.l.b16 %v2795
      %v2991 = vunpack.c.l.b16 %v2805
      %v2992 = vunpack.c.l.b16 %v2819
      %v2993 = vunpack.c.l.b16 %v2829
      %v2994 = vunpack.c.l.b16 %v2843
      %v2995 = vunpack.c.l.b16 %v2853
      %v2996 = vunpack.c.l.b16 %v2867
      %v2997 = vunpack.c.l.b16 %v2877
      %v2998 = vunpack.c.l.b16 %v2891
      %v2999 = vunpack.c.l.b16 %v2901
      %v3000 = vunpack.c.l.b16 %v2915
      %v3001 = vunpack.c.l.b16 %v2925
      %v3002 = vunpack.c.l.b16 %v2939
      %v3003 = vunpack.c.l.b16 %v2949
      %v3004 = vunpack.c.l.b16 %v2963
      %v3005 = vunpack.c.l.b16 %v2973
      %v3006 = vpack.c.b16 %v2975, %v2974
      %v3007 = vpack.c.b16 %v2977, %v2976
      %v3008 = vpack.c.b16 %v2979, %v2978
      %v3009 = vpack.c.b16 %v2981, %v2980
      %v3010 = vpack.c.b16 %v2983, %v2982
      %v3011 = vpack.c.b16 %v2985, %v2984
      %v3012 = vpack.c.b16 %v2987, %v2986
      %v3013 = vpack.c.b16 %v2989, %v2988
      %v3014 = vpack.c.b16 %v2991, %v2990
      %v3015 = vpack.c.b16 %v2993, %v2992
      %v3016 = vpack.c.b16 %v2995, %v2994
      %v3017 = vpack.c.b16 %v2997, %v2996
      %v3018 = vpack.c.b16 %v2999, %v2998
      %v3019 = vpack.c.b16 %v3001, %v3000
      %v3020 = vpack.c.b16 %v3003, %v3002
      %v3021 = vpack.c.b16 %v3005, %v3004
      %3022 = vrot.lane.b32.xlu0 %v3006, 8
      %v3023 = vpop.permute.xlu0 %3022
      %3024 = vrot.lane.b32.xlu0 %v3007, 8
      %v3025 = vpop.permute.xlu0 %3024
      %3026 = vrot.lane.b32.xlu0 %v3008, 8
      %v3027 = vpop.permute.xlu0 %3026
      %3028 = vrot.lane.b32.xlu0 %v3009, 8
      %v3029 = vpop.permute.xlu0 %3028
      %3030 = vrot.lane.b32.xlu0 %v3010, 8
      %v3031 = vpop.permute.xlu0 %3030
      %3032 = vrot.lane.b32.xlu0 %v3011, 8
      %v3033 = vpop.permute.xlu0 %3032
      %3034 = vrot.lane.b32.xlu0 %v3012, 8
      %v3035 = vpop.permute.xlu0 %3034
      %3036 = vrot.lane.b32.xlu0 %v3013, 8
      %v3037 = vpop.permute.xlu0 %3036
      %3038 = vrot.lane.b32.xlu0 %v3014, 8
      %v3039 = vpop.permute.xlu0 %3038
      %3040 = vrot.lane.b32.xlu0 %v3015, 8
      %v3041 = vpop.permute.xlu0 %3040
      %3042 = vrot.lane.b32.xlu0 %v3016, 8
      %v3043 = vpop.permute.xlu0 %3042
      %3044 = vrot.lane.b32.xlu0 %v3017, 8
      %v3045 = vpop.permute.xlu0 %3044
      %3046 = vrot.lane.b32.xlu0 %v3018, 8
      %v3047 = vpop.permute.xlu0 %3046
      %3048 = vrot.lane.b32.xlu0 %v3019, 8
      %v3049 = vpop.permute.xlu0 %3048
      %3050 = vrot.lane.b32.xlu0 %v3020, 8
      %v3051 = vpop.permute.xlu0 %3050
      %3052 = vrot.lane.b32.xlu0 %v3021, 8
      %v3053 = vpop.permute.xlu0 %3052
      %vm3070 = vcmask 80960
      %3071 = vst.msk [vmem:[#allocation3] sm:$0xff] %vm3070, %v3023
      %3072 = vst.msk [vmem:[#allocation3 + $0x8] sm:$0xff] %vm3070, %v3025
      %3073 = vst.msk [vmem:[#allocation3 + $0x10] sm:$0xff] %vm3070, %v3027
      %3074 = vst.msk [vmem:[#allocation3 + $0x18] sm:$0xff] %vm3070, %v3029
      %3075 = vst.msk [vmem:[#allocation3 + $0x20] sm:$0xff] %vm3070, %v3031
      %3076 = vst.msk [vmem:[#allocation3 + $0x28] sm:$0xff] %vm3070, %v3033
      %3077 = vst.msk [vmem:[#allocation3 + $0x30] sm:$0xff] %vm3070, %v3035
      %3078 = vst.msk [vmem:[#allocation3 + $0x38] sm:$0xff] %vm3070, %v3037
      %3079 = vst.msk [vmem:[#allocation3 + $0x40] sm:$0xff] %vm3070, %v3039
      %3080 = vst.msk [vmem:[#allocation3 + $0x48] sm:$0xff] %vm3070, %v3041
      %3081 = vst.msk [vmem:[#allocation3 + $0x50] sm:$0xff] %vm3070, %v3043
      %3082 = vst.msk [vmem:[#allocation3 + $0x58] sm:$0xff] %vm3070, %v3045
      %3083 = vst.msk [vmem:[#allocation3 + $0x60] sm:$0xff] %vm3070, %v3047
      %3084 = vst.msk [vmem:[#allocation3 + $0x68] sm:$0xff] %vm3070, %v3049
      %3085 = vst.msk [vmem:[#allocation3 + $0x70] sm:$0xff] %vm3070, %v3051
      %3086 = vst.msk [vmem:[#allocation3 + $0x78] sm:$0xff] %vm3070, %v3053
      %v3087 = vld [vmem:[%s1230] sm:$0xe]
      %v3088 = vld [vmem:[%s1230 + $0x4] sm:$0xf]
      %v3089 = vld [vmem:[%s1230 + $0x8] sm:$0x1]
      %v3090 = vld [vmem:[%s1230 + $0xc] sm:$0xe]
      %v3091 = vld [vmem:[%s1230 + $0x10] sm:$0xf]
      %v3092 = vld [vmem:[%s1230 + $0x14] sm:$0x1]
      %v3093 = vld [vmem:[%s1230 + $0x18] sm:$0xe]
      %v3094 = vld [vmem:[%s1230 + $0x1c] sm:$0xf]
      %v3095 = vld [vmem:[%s1230 + $0x20] sm:$0x1]
      %v3096 = vld [vmem:[%s1230 + $0x24] sm:$0xe]
      %v3097 = vld [vmem:[%s1230 + $0x28] sm:$0xf]
      %v3098 = vld [vmem:[%s1230 + $0x2c] sm:$0x1]
      %v3099 = vld [vmem:[%s1230 + $0x30] sm:$0xe]
      %v3100 = vld [vmem:[%s1230 + $0x34] sm:$0xf]
      %v3101 = vld [vmem:[%s1230 + $0x38] sm:$0x1]
      %v3102 = vld [vmem:[%s1230 + $0x3c] sm:$0xe]
      %v3103 = vld [vmem:[%s1230 + $0x40] sm:$0xf]
      %v3104 = vld [vmem:[%s1230 + $0x44] sm:$0x1]
      %v3105 = vld [vmem:[%s1230 + $0x48] sm:$0xe]
      %v3106 = vld [vmem:[%s1230 + $0x4c] sm:$0xf]
      %v3107 = vld [vmem:[%s1230 + $0x50] sm:$0x1]
      %v3108 = vld [vmem:[%s1230 + $0x54] sm:$0xe]
      %v3109 = vld [vmem:[%s1230 + $0x58] sm:$0xf]
      %v3110 = vld [vmem:[%s1230 + $0x5c] sm:$0x1]
      %v3111 = vld [vmem:[%s1230 + $0x60] sm:$0xe]
      %v3112 = vld [vmem:[%s1230 + $0x64] sm:$0xf]
      %v3113 = vld [vmem:[%s1230 + $0x68] sm:$0x1]
      %v3114 = vld [vmem:[%s1230 + $0x6c] sm:$0xe]
      %v3115 = vld [vmem:[%s1230 + $0x70] sm:$0xf]
      %v3116 = vld [vmem:[%s1230 + $0x74] sm:$0x1]
      %v3117 = vld [vmem:[%s1230 + $0x78] sm:$0xe]
      %v3118 = vld [vmem:[%s1230 + $0x7c] sm:$0xf]
      %v3119 = vld [vmem:[%s1230 + $0x80] sm:$0x1]
      %v3120 = vld [vmem:[%s1230 + $0x84] sm:$0xe]
      %v3121 = vld [vmem:[%s1230 + $0x88] sm:$0xf]
      %v3122 = vld [vmem:[%s1230 + $0x8c] sm:$0x1]
      %v3123 = vld [vmem:[%s1230 + $0x90] sm:$0xe]
      %v3124 = vld [vmem:[%s1230 + $0x94] sm:$0xf]
      %v3125 = vld [vmem:[%s1230 + $0x98] sm:$0x1]
      %v3126 = vld [vmem:[%s1230 + $0x9c] sm:$0xe]
      %v3127 = vld [vmem:[%s1230 + $0xa0] sm:$0xf]
      %v3128 = vld [vmem:[%s1230 + $0xa4] sm:$0x1]
      %v3129 = vld [vmem:[%s1230 + $0xa8] sm:$0xe]
      %v3130 = vld [vmem:[%s1230 + $0xac] sm:$0xf]
      %v3131 = vld [vmem:[%s1230 + $0xb0] sm:$0x1]
      %v3132 = vld [vmem:[%s1230 + $0xb4] sm:$0xe]
      %v3133 = vld [vmem:[%s1230 + $0xb8] sm:$0xf]
      %v3134 = vld [vmem:[%s1230 + $0xbc] sm:$0x1]
      %v3183 = vrot.slane %v3087, 5
      %v3184 = vrot.slane %v3183, 4
      %v3185 = vrot.slane %v3088, 5
      %v3186 = vsel %vm2139, %v3184, %v3185
      %v3187 = vrot.slane %v3185, 4
      %v3188 = vrot.slane %v3089, 5
      %v3189 = vsel %vm2139, %v3187, %v3188
      %v3190 = vrot.slane %v3090, 5
      %v3191 = vrot.slane %v3190, 4
      %v3192 = vrot.slane %v3091, 5
      %v3193 = vsel %vm2139, %v3191, %v3192
      %v3194 = vrot.slane %v3192, 4
      %v3195 = vrot.slane %v3092, 5
      %v3196 = vsel %vm2139, %v3194, %v3195
      %v3197 = vrot.slane %v3093, 5
      %v3198 = vrot.slane %v3197, 4
      %v3199 = vrot.slane %v3094, 5
      %v3200 = vsel %vm2139, %v3198, %v3199
      %v3201 = vrot.slane %v3199, 4
      %v3202 = vrot.slane %v3095, 5
      %v3203 = vsel %vm2139, %v3201, %v3202
      %v3204 = vrot.slane %v3096, 5
      %v3205 = vrot.slane %v3204, 4
      %v3206 = vrot.slane %v3097, 5
      %v3207 = vsel %vm2139, %v3205, %v3206
      %v3208 = vrot.slane %v3206, 4
      %v3209 = vrot.slane %v3098, 5
      %v3210 = vsel %vm2139, %v3208, %v3209
      %v3211 = vrot.slane %v3099, 5
      %v3212 = vrot.slane %v3211, 4
      %v3213 = vrot.slane %v3100, 5
      %v3214 = vsel %vm2139, %v3212, %v3213
      %v3215 = vrot.slane %v3213, 4
      %v3216 = vrot.slane %v3101, 5
      %v3217 = vsel %vm2139, %v3215, %v3216
      %v3218 = vrot.slane %v3102, 5
      %v3219 = vrot.slane %v3218, 4
      %v3220 = vrot.slane %v3103, 5
      %v3221 = vsel %vm2139, %v3219, %v3220
      %v3222 = vrot.slane %v3220, 4
      %v3223 = vrot.slane %v3104, 5
      %v3224 = vsel %vm2139, %v3222, %v3223
      %v3225 = vrot.slane %v3105, 5
      %v3226 = vrot.slane %v3225, 4
      %v3227 = vrot.slane %v3106, 5
      %v3228 = vsel %vm2139, %v3226, %v3227
      %v3229 = vrot.slane %v3227, 4
      %v3230 = vrot.slane %v3107, 5
      %v3231 = vsel %vm2139, %v3229, %v3230
      %v3232 = vrot.slane %v3108, 5
      %v3233 = vrot.slane %v3232, 4
      %v3234 = vrot.slane %v3109, 5
      %v3235 = vsel %vm2139, %v3233, %v3234
      %v3236 = vrot.slane %v3234, 4
      %v3237 = vrot.slane %v3110, 5
      %v3238 = vsel %vm2139, %v3236, %v3237
      %v3239 = vrot.slane %v3111, 5
      %v3240 = vrot.slane %v3239, 4
      %v3241 = vrot.slane %v3112, 5
      %v3242 = vsel %vm2139, %v3240, %v3241
      %v3243 = vrot.slane %v3241, 4
      %v3244 = vrot.slane %v3113, 5
      %v3245 = vsel %vm2139, %v3243, %v3244
      %v3246 = vrot.slane %v3114, 5
      %v3247 = vrot.slane %v3246, 4
      %v3248 = vrot.slane %v3115, 5
      %v3249 = vsel %vm2139, %v3247, %v3248
      %v3250 = vrot.slane %v3248, 4
      %v3251 = vrot.slane %v3116, 5
      %v3252 = vsel %vm2139, %v3250, %v3251
      %v3253 = vrot.slane %v3117, 5
      %v3254 = vrot.slane %v3253, 4
      %v3255 = vrot.slane %v3118, 5
      %v3256 = vsel %vm2139, %v3254, %v3255
      %v3257 = vrot.slane %v3255, 4
      %v3258 = vrot.slane %v3119, 5
      %v3259 = vsel %vm2139, %v3257, %v3258
      %v3260 = vrot.slane %v3120, 5
      %v3261 = vrot.slane %v3260, 4
      %v3262 = vrot.slane %v3121, 5
      %v3263 = vsel %vm2139, %v3261, %v3262
      %v3264 = vrot.slane %v3262, 4
      %v3265 = vrot.slane %v3122, 5
      %v3266 = vsel %vm2139, %v3264, %v3265
      %v3267 = vrot.slane %v3123, 5
      %v3268 = vrot.slane %v3267, 4
      %v3269 = vrot.slane %v3124, 5
      %v3270 = vsel %vm2139, %v3268, %v3269
      %v3271 = vrot.slane %v3269, 4
      %v3272 = vrot.slane %v3125, 5
      %v3273 = vsel %vm2139, %v3271, %v3272
      %v3274 = vrot.slane %v3126, 5
      %v3275 = vrot.slane %v3274, 4
      %v3276 = vrot.slane %v3127, 5
      %v3277 = vsel %vm2139, %v3275, %v3276
      %v3278 = vrot.slane %v3276, 4
      %v3279 = vrot.slane %v3128, 5
      %v3280 = vsel %vm2139, %v3278, %v3279
      %v3281 = vrot.slane %v3129, 5
      %v3282 = vrot.slane %v3281, 4
      %v3283 = vrot.slane %v3130, 5
      %v3284 = vsel %vm2139, %v3282, %v3283
      %v3285 = vrot.slane %v3283, 4
      %v3286 = vrot.slane %v3131, 5
      %v3287 = vsel %vm2139, %v3285, %v3286
      %v3288 = vrot.slane %v3132, 5
      %v3289 = vrot.slane %v3288, 4
      %v3290 = vrot.slane %v3133, 5
      %v3291 = vsel %vm2139, %v3289, %v3290
      %v3292 = vrot.slane %v3290, 4
      %v3293 = vrot.slane %v3134, 5
      %v3294 = vsel %vm2139, %v3292, %v3293
      %v3295 = vunpack.c.l.b16 %v3186
      %v3296 = vunpack.c.l.b16 %v3189
      %v3297 = vunpack.c.l.b16 %v3193
      %v3298 = vunpack.c.l.b16 %v3196
      %v3299 = vunpack.c.l.b16 %v3200
      %v3300 = vunpack.c.l.b16 %v3203
      %v3301 = vunpack.c.l.b16 %v3207
      %v3302 = vunpack.c.l.b16 %v3210
      %v3303 = vunpack.c.l.b16 %v3214
      %v3304 = vunpack.c.l.b16 %v3217
      %v3305 = vunpack.c.l.b16 %v3221
      %v3306 = vunpack.c.l.b16 %v3224
      %v3307 = vunpack.c.l.b16 %v3228
      %v3308 = vunpack.c.l.b16 %v3231
      %v3309 = vunpack.c.l.b16 %v3235
      %v3310 = vunpack.c.l.b16 %v3238
      %v3311 = vunpack.c.l.b16 %v3242
      %v3312 = vunpack.c.l.b16 %v3245
      %v3313 = vunpack.c.l.b16 %v3249
      %v3314 = vunpack.c.l.b16 %v3252
      %v3315 = vunpack.c.l.b16 %v3256
      %v3316 = vunpack.c.l.b16 %v3259
      %v3317 = vunpack.c.l.b16 %v3263
      %v3318 = vunpack.c.l.b16 %v3266
      %v3319 = vunpack.c.l.b16 %v3270
      %v3320 = vunpack.c.l.b16 %v3273
      %v3321 = vunpack.c.l.b16 %v3277
      %v3322 = vunpack.c.l.b16 %v3280
      %v3323 = vunpack.c.l.b16 %v3284
      %v3324 = vunpack.c.l.b16 %v3287
      %v3325 = vunpack.c.l.b16 %v3291
      %v3326 = vunpack.c.l.b16 %v3294
      %v3327 = vpack.c.b16 %v3296, %v3295
      %v3328 = vpack.c.b16 %v3298, %v3297
      %v3329 = vpack.c.b16 %v3300, %v3299
      %v3330 = vpack.c.b16 %v3302, %v3301
      %v3331 = vpack.c.b16 %v3304, %v3303
      %v3332 = vpack.c.b16 %v3306, %v3305
      %v3333 = vpack.c.b16 %v3308, %v3307
      %v3334 = vpack.c.b16 %v3310, %v3309
      %v3335 = vpack.c.b16 %v3312, %v3311
      %v3336 = vpack.c.b16 %v3314, %v3313
      %v3337 = vpack.c.b16 %v3316, %v3315
      %v3338 = vpack.c.b16 %v3318, %v3317
      %v3339 = vpack.c.b16 %v3320, %v3319
      %v3340 = vpack.c.b16 %v3322, %v3321
      %v3341 = vpack.c.b16 %v3324, %v3323
      %v3342 = vpack.c.b16 %v3326, %v3325
      %3343 = vrot.lane.b32.xlu0 %v3327, 10
      %v3344 = vpop.permute.xlu0 %3343
      %3345 = vrot.lane.b32.xlu0 %v3328, 10
      %v3346 = vpop.permute.xlu0 %3345
      %3347 = vrot.lane.b32.xlu0 %v3329, 10
      %v3348 = vpop.permute.xlu0 %3347
      %3349 = vrot.lane.b32.xlu0 %v3330, 10
      %v3350 = vpop.permute.xlu0 %3349
      %3351 = vrot.lane.b32.xlu0 %v3331, 10
      %v3352 = vpop.permute.xlu0 %3351
      %3353 = vrot.lane.b32.xlu0 %v3332, 10
      %v3354 = vpop.permute.xlu0 %3353
      %3355 = vrot.lane.b32.xlu0 %v3333, 10
      %v3356 = vpop.permute.xlu0 %3355
      %3357 = vrot.lane.b32.xlu0 %v3334, 10
      %v3358 = vpop.permute.xlu0 %3357
      %3359 = vrot.lane.b32.xlu0 %v3335, 10
      %v3360 = vpop.permute.xlu0 %3359
      %3361 = vrot.lane.b32.xlu0 %v3336, 10
      %v3362 = vpop.permute.xlu0 %3361
      %3363 = vrot.lane.b32.xlu0 %v3337, 10
      %v3364 = vpop.permute.xlu0 %3363
      %3365 = vrot.lane.b32.xlu0 %v3338, 10
      %v3366 = vpop.permute.xlu0 %3365
      %3367 = vrot.lane.b32.xlu0 %v3339, 10
      %v3368 = vpop.permute.xlu0 %3367
      %3369 = vrot.lane.b32.xlu0 %v3340, 10
      %v3370 = vpop.permute.xlu0 %3369
      %3371 = vrot.lane.b32.xlu0 %v3341, 10
      %v3372 = vpop.permute.xlu0 %3371
      %3373 = vrot.lane.b32.xlu0 %v3342, 10
      %v3374 = vpop.permute.xlu0 %3373
      %vm3391 = vcmask 97360
      %3392 = vst.msk [vmem:[#allocation3] sm:$0xff] %vm3391, %v3344
      %3393 = vst.msk [vmem:[#allocation3 + $0x8] sm:$0xff] %vm3391, %v3346
      %3394 = vst.msk [vmem:[#allocation3 + $0x10] sm:$0xff] %vm3391, %v3348
      %3395 = vst.msk [vmem:[#allocation3 + $0x18] sm:$0xff] %vm3391, %v3350
      %3396 = vst.msk [vmem:[#allocation3 + $0x20] sm:$0xff] %vm3391, %v3352
      %3397 = vst.msk [vmem:[#allocation3 + $0x28] sm:$0xff] %vm3391, %v3354
      %3398 = vst.msk [vmem:[#allocation3 + $0x30] sm:$0xff] %vm3391, %v3356
      %3399 = vst.msk [vmem:[#allocation3 + $0x38] sm:$0xff] %vm3391, %v3358
      %3400 = vst.msk [vmem:[#allocation3 + $0x40] sm:$0xff] %vm3391, %v3360
      %3401 = vst.msk [vmem:[#allocation3 + $0x48] sm:$0xff] %vm3391, %v3362
      %3402 = vst.msk [vmem:[#allocation3 + $0x50] sm:$0xff] %vm3391, %v3364
      %3403 = vst.msk [vmem:[#allocation3 + $0x58] sm:$0xff] %vm3391, %v3366
      %3404 = vst.msk [vmem:[#allocation3 + $0x60] sm:$0xff] %vm3391, %v3368
      %3405 = vst.msk [vmem:[#allocation3 + $0x68] sm:$0xff] %vm3391, %v3370
      %3406 = vst.msk [vmem:[#allocation3 + $0x70] sm:$0xff] %vm3391, %v3372
      %3407 = vst.msk [vmem:[#allocation3 + $0x78] sm:$0xff] %vm3391, %v3374
      %s3408 = scalar_lea.vmem [#allocation2], 24
      %v3409 = vld [vmem:[%s3408] sm:$0xf]
      %v3410 = vld [vmem:[%s3408 + $0x4] sm:$0xf]
      %v3411 = vld [vmem:[%s3408 + $0xc] sm:$0xf]
      %v3412 = vld [vmem:[%s3408 + $0x10] sm:$0xf]
      %v3413 = vld [vmem:[%s3408 + $0x18] sm:$0xf]
      %v3414 = vld [vmem:[%s3408 + $0x1c] sm:$0xf]
      %v3415 = vld [vmem:[%s3408 + $0x24] sm:$0xf]
      %v3416 = vld [vmem:[%s3408 + $0x28] sm:$0xf]
      %v3417 = vld [vmem:[%s3408 + $0x30] sm:$0xf]
      %v3418 = vld [vmem:[%s3408 + $0x34] sm:$0xf]
      %v3419 = vld [vmem:[%s3408 + $0x3c] sm:$0xf]
      %v3420 = vld [vmem:[%s3408 + $0x40] sm:$0xf]
      %v3421 = vld [vmem:[%s3408 + $0x48] sm:$0xf]
      %v3422 = vld [vmem:[%s3408 + $0x4c] sm:$0xf]
      %v3423 = vld [vmem:[%s3408 + $0x54] sm:$0xf]
      %v3424 = vld [vmem:[%s3408 + $0x58] sm:$0xf]
      %v3425 = vld [vmem:[%s3408 + $0x60] sm:$0xf]
      %v3426 = vld [vmem:[%s3408 + $0x64] sm:$0xf]
      %v3427 = vld [vmem:[%s3408 + $0x6c] sm:$0xf]
      %v3428 = vld [vmem:[%s3408 + $0x70] sm:$0xf]
      %v3429 = vld [vmem:[%s3408 + $0x78] sm:$0xf]
      %v3430 = vld [vmem:[%s3408 + $0x7c] sm:$0xf]
      %v3431 = vld [vmem:[%s3408 + $0x84] sm:$0xf]
      %v3432 = vld [vmem:[%s3408 + $0x88] sm:$0xf]
      %v3433 = vld [vmem:[%s3408 + $0x90] sm:$0xf]
      %v3434 = vld [vmem:[%s3408 + $0x94] sm:$0xf]
      %v3435 = vld [vmem:[%s3408 + $0x9c] sm:$0xf]
      %v3436 = vld [vmem:[%s3408 + $0xa0] sm:$0xf]
      %v3437 = vld [vmem:[%s3408 + $0xa8] sm:$0xf]
      %v3438 = vld [vmem:[%s3408 + $0xac] sm:$0xf]
      %v3439 = vld [vmem:[%s3408 + $0xb4] sm:$0xf]
      %v3440 = vld [vmem:[%s3408 + $0xb8] sm:$0xf]
      %v3473 = vunpack.c.l.b16 %v3409
      %v3474 = vunpack.c.l.b16 %v3410
      %v3475 = vunpack.c.l.b16 %v3411
      %v3476 = vunpack.c.l.b16 %v3412
      %v3477 = vunpack.c.l.b16 %v3413
      %v3478 = vunpack.c.l.b16 %v3414
      %v3479 = vunpack.c.l.b16 %v3415
      %v3480 = vunpack.c.l.b16 %v3416
      %v3481 = vunpack.c.l.b16 %v3417
      %v3482 = vunpack.c.l.b16 %v3418
      %v3483 = vunpack.c.l.b16 %v3419
      %v3484 = vunpack.c.l.b16 %v3420
      %v3485 = vunpack.c.l.b16 %v3421
      %v3486 = vunpack.c.l.b16 %v3422
      %v3487 = vunpack.c.l.b16 %v3423
      %v3488 = vunpack.c.l.b16 %v3424
      %v3489 = vunpack.c.l.b16 %v3425
      %v3490 = vunpack.c.l.b16 %v3426
      %v3491 = vunpack.c.l.b16 %v3427
      %v3492 = vunpack.c.l.b16 %v3428
      %v3493 = vunpack.c.l.b16 %v3429
      %v3494 = vunpack.c.l.b16 %v3430
      %v3495 = vunpack.c.l.b16 %v3431
      %v3496 = vunpack.c.l.b16 %v3432
      %v3497 = vunpack.c.l.b16 %v3433
      %v3498 = vunpack.c.l.b16 %v3434
      %v3499 = vunpack.c.l.b16 %v3435
      %v3500 = vunpack.c.l.b16 %v3436
      %v3501 = vunpack.c.l.b16 %v3437
      %v3502 = vunpack.c.l.b16 %v3438
      %v3503 = vunpack.c.l.b16 %v3439
      %v3504 = vunpack.c.l.b16 %v3440
      %v3505 = vpack.c.b16 %v3474, %v3473
      %v3506 = vpack.c.b16 %v3476, %v3475
      %v3507 = vpack.c.b16 %v3478, %v3477
      %v3508 = vpack.c.b16 %v3480, %v3479
      %v3509 = vpack.c.b16 %v3482, %v3481
      %v3510 = vpack.c.b16 %v3484, %v3483
      %v3511 = vpack.c.b16 %v3486, %v3485
      %v3512 = vpack.c.b16 %v3488, %v3487
      %v3513 = vpack.c.b16 %v3490, %v3489
      %v3514 = vpack.c.b16 %v3492, %v3491
      %v3515 = vpack.c.b16 %v3494, %v3493
      %v3516 = vpack.c.b16 %v3496, %v3495
      %v3517 = vpack.c.b16 %v3498, %v3497
      %v3518 = vpack.c.b16 %v3500, %v3499
      %v3519 = vpack.c.b16 %v3502, %v3501
      %v3520 = vpack.c.b16 %v3504, %v3503
      %3521 = vrot.lane.b32.xlu0 %v3505, 12
      %v3522 = vpop.permute.xlu0 %3521
      %3523 = vrot.lane.b32.xlu0 %v3506, 12
      %v3524 = vpop.permute.xlu0 %3523
      %3525 = vrot.lane.b32.xlu0 %v3507, 12
      %v3526 = vpop.permute.xlu0 %3525
      %3527 = vrot.lane.b32.xlu0 %v3508, 12
      %v3528 = vpop.permute.xlu0 %3527
      %3529 = vrot.lane.b32.xlu0 %v3509, 12
      %v3530 = vpop.permute.xlu0 %3529
      %3531 = vrot.lane.b32.xlu0 %v3510, 12
      %v3532 = vpop.permute.xlu0 %3531
      %3533 = vrot.lane.b32.xlu0 %v3511, 12
      %v3534 = vpop.permute.xlu0 %3533
      %3535 = vrot.lane.b32.xlu0 %v3512, 12
      %v3536 = vpop.permute.xlu0 %3535
      %3537 = vrot.lane.b32.xlu0 %v3513, 12
      %v3538 = vpop.permute.xlu0 %3537
      %3539 = vrot.lane.b32.xlu0 %v3514, 12
      %v3540 = vpop.permute.xlu0 %3539
      %3541 = vrot.lane.b32.xlu0 %v3515, 12
      %v3542 = vpop.permute.xlu0 %3541
      %3543 = vrot.lane.b32.xlu0 %v3516, 12
      %v3544 = vpop.permute.xlu0 %3543
      %3545 = vrot.lane.b32.xlu0 %v3517, 12
      %v3546 = vpop.permute.xlu0 %3545
      %3547 = vrot.lane.b32.xlu0 %v3518, 12
      %v3548 = vpop.permute.xlu0 %3547
      %3549 = vrot.lane.b32.xlu0 %v3519, 12
      %v3550 = vpop.permute.xlu0 %3549
      %3551 = vrot.lane.b32.xlu0 %v3520, 12
      %v3552 = vpop.permute.xlu0 %3551
      %vm3569 = vcmask 113760
      %3570 = vst.msk [vmem:[#allocation3] sm:$0xff] %vm3569, %v3522
      %3571 = vst.msk [vmem:[#allocation3 + $0x8] sm:$0xff] %vm3569, %v3524
      %3572 = vst.msk [vmem:[#allocation3 + $0x10] sm:$0xff] %vm3569, %v3526
      %3573 = vst.msk [vmem:[#allocation3 + $0x18] sm:$0xff] %vm3569, %v3528
      %3574 = vst.msk [vmem:[#allocation3 + $0x20] sm:$0xff] %vm3569, %v3530
      %3575 = vst.msk [vmem:[#allocation3 + $0x28] sm:$0xff] %vm3569, %v3532
      %3576 = vst.msk [vmem:[#allocation3 + $0x30] sm:$0xff] %vm3569, %v3534
      %3577 = vst.msk [vmem:[#allocation3 + $0x38] sm:$0xff] %vm3569, %v3536
      %3578 = vst.msk [vmem:[#allocation3 + $0x40] sm:$0xff] %vm3569, %v3538
      %3579 = vst.msk [vmem:[#allocation3 + $0x48] sm:$0xff] %vm3569, %v3540
      %3580 = vst.msk [vmem:[#allocation3 + $0x50] sm:$0xff] %vm3569, %v3542
      %3581 = vst.msk [vmem:[#allocation3 + $0x58] sm:$0xff] %vm3569, %v3544
      %3582 = vst.msk [vmem:[#allocation3 + $0x60] sm:$0xff] %vm3569, %v3546
      %3583 = vst.msk [vmem:[#allocation3 + $0x68] sm:$0xff] %vm3569, %v3548
      %3584 = vst.msk [vmem:[#allocation3 + $0x70] sm:$0xff] %vm3569, %v3550
      %3585 = vst.msk [vmem:[#allocation3 + $0x78] sm:$0xff] %vm3569, %v3552
      %v3586 = vld [vmem:[%s3408] sm:$0xf]
      %v3587 = vld [vmem:[%s3408 + $0x4] sm:$0xf]
      %v3588 = vld [vmem:[%s3408 + $0x8] sm:$0x1]
      %v3589 = vld [vmem:[%s3408 + $0xc] sm:$0xf]
      %v3590 = vld [vmem:[%s3408 + $0x10] sm:$0xf]
      %v3591 = vld [vmem:[%s3408 + $0x14] sm:$0x1]
      %v3592 = vld [vmem:[%s3408 + $0x18] sm:$0xf]
      %v3593 = vld [vmem:[%s3408 + $0x1c] sm:$0xf]
      %v3594 = vld [vmem:[%s3408 + $0x20] sm:$0x1]
      %v3595 = vld [vmem:[%s3408 + $0x24] sm:$0xf]
      %v3596 = vld [vmem:[%s3408 + $0x28] sm:$0xf]
      %v3597 = vld [vmem:[%s3408 + $0x2c] sm:$0x1]
      %v3598 = vld [vmem:[%s3408 + $0x30] sm:$0xf]
      %v3599 = vld [vmem:[%s3408 + $0x34] sm:$0xf]
      %v3600 = vld [vmem:[%s3408 + $0x38] sm:$0x1]
      %v3601 = vld [vmem:[%s3408 + $0x3c] sm:$0xf]
      %v3602 = vld [vmem:[%s3408 + $0x40] sm:$0xf]
      %v3603 = vld [vmem:[%s3408 + $0x44] sm:$0x1]
      %v3604 = vld [vmem:[%s3408 + $0x48] sm:$0xf]
      %v3605 = vld [vmem:[%s3408 + $0x4c] sm:$0xf]
      %v3606 = vld [vmem:[%s3408 + $0x50] sm:$0x1]
      %v3607 = vld [vmem:[%s3408 + $0x54] sm:$0xf]
      %v3608 = vld [vmem:[%s3408 + $0x58] sm:$0xf]
      %v3609 = vld [vmem:[%s3408 + $0x5c] sm:$0x1]
      %v3610 = vld [vmem:[%s3408 + $0x60] sm:$0xf]
      %v3611 = vld [vmem:[%s3408 + $0x64] sm:$0xf]
      %v3612 = vld [vmem:[%s3408 + $0x68] sm:$0x1]
      %v3613 = vld [vmem:[%s3408 + $0x6c] sm:$0xf]
      %v3614 = vld [vmem:[%s3408 + $0x70] sm:$0xf]
      %v3615 = vld [vmem:[%s3408 + $0x74] sm:$0x1]
      %v3616 = vld [vmem:[%s3408 + $0x78] sm:$0xf]
      %v3617 = vld [vmem:[%s3408 + $0x7c] sm:$0xf]
      %v3618 = vld [vmem:[%s3408 + $0x80] sm:$0x1]
      %v3619 = vld [vmem:[%s3408 + $0x84] sm:$0xf]
      %v3620 = vld [vmem:[%s3408 + $0x88] sm:$0xf]
      %v3621 = vld [vmem:[%s3408 + $0x8c] sm:$0x1]
      %v3622 = vld [vmem:[%s3408 + $0x90] sm:$0xf]
      %v3623 = vld [vmem:[%s3408 + $0x94] sm:$0xf]
      %v3624 = vld [vmem:[%s3408 + $0x98] sm:$0x1]
      %v3625 = vld [vmem:[%s3408 + $0x9c] sm:$0xf]
      %v3626 = vld [vmem:[%s3408 + $0xa0] sm:$0xf]
      %v3627 = vld [vmem:[%s3408 + $0xa4] sm:$0x1]
      %v3628 = vld [vmem:[%s3408 + $0xa8] sm:$0xf]
      %v3629 = vld [vmem:[%s3408 + $0xac] sm:$0xf]
      %v3630 = vld [vmem:[%s3408 + $0xb0] sm:$0x1]
      %v3631 = vld [vmem:[%s3408 + $0xb4] sm:$0xf]
      %v3632 = vld [vmem:[%s3408 + $0xb8] sm:$0xf]
      %v3633 = vld [vmem:[%s3408 + $0xbc] sm:$0x1]
      %v3635 = vshrl.u32 %v3586, 16
      %v3637 = vrot.slane %v3635, 4
      %v3638 = vshll.u32 %v3586, 16
      %v3640 = vrot.slane %v3638, 5
      %v3641 = vor.u32 %v3637, %v3640
      %v3642 = vrot.slane %v3641, 4
      %v3644 = vshll.u32 %v3587, 16
      %v3646 = vrot.slane %v3644, 5
      %v3647 = vsel %vm1543, %v3642, %v3646
      %v3648 = vshrl.u32 %v3587, 16
      %v3650 = vrot.slane %v3648, 4
      %v3651 = vor.u32 %v3650, %v3646
      %v3652 = vrot.slane %v3651, 4
      %v3654 = vshll.u32 %v3588, 16
      %v3656 = vrot.slane %v3654, 5
      %v3657 = vsel %vm1543, %v3652, %v3656
      %v3659 = vshrl.u32 %v3589, 16
      %v3661 = vrot.slane %v3659, 4
      %v3662 = vshll.u32 %v3589, 16
      %v3664 = vrot.slane %v3662, 5
      %v3665 = vor.u32 %v3661, %v3664
      %v3666 = vrot.slane %v3665, 4
      %v3668 = vshll.u32 %v3590, 16
      %v3670 = vrot.slane %v3668, 5
      %v3671 = vsel %vm1543, %v3666, %v3670
      %v3672 = vshrl.u32 %v3590, 16
      %v3674 = vrot.slane %v3672, 4
      %v3675 = vor.u32 %v3674, %v3670
      %v3676 = vrot.slane %v3675, 4
      %v3678 = vshll.u32 %v3591, 16
      %v3680 = vrot.slane %v3678, 5
      %v3681 = vsel %vm1543, %v3676, %v3680
      %v3683 = vshrl.u32 %v3592, 16
      %v3685 = vrot.slane %v3683, 4
      %v3686 = vshll.u32 %v3592, 16
      %v3688 = vrot.slane %v3686, 5
      %v3689 = vor.u32 %v3685, %v3688
      %v3690 = vrot.slane %v3689, 4
      %v3692 = vshll.u32 %v3593, 16
      %v3694 = vrot.slane %v3692, 5
      %v3695 = vsel %vm1543, %v3690, %v3694
      %v3696 = vshrl.u32 %v3593, 16
      %v3698 = vrot.slane %v3696, 4
      %v3699 = vor.u32 %v3698, %v3694
      %v3700 = vrot.slane %v3699, 4
      %v3702 = vshll.u32 %v3594, 16
      %v3704 = vrot.slane %v3702, 5
      %v3705 = vsel %vm1543, %v3700, %v3704
      %v3707 = vshrl.u32 %v3595, 16
      %v3709 = vrot.slane %v3707, 4
      %v3710 = vshll.u32 %v3595, 16
      %v3712 = vrot.slane %v3710, 5
      %v3713 = vor.u32 %v3709, %v3712
      %v3714 = vrot.slane %v3713, 4
      %v3716 = vshll.u32 %v3596, 16
      %v3718 = vrot.slane %v3716, 5
      %v3719 = vsel %vm1543, %v3714, %v3718
      %v3720 = vshrl.u32 %v3596, 16
      %v3722 = vrot.slane %v3720, 4
      %v3723 = vor.u32 %v3722, %v3718
      %v3724 = vrot.slane %v3723, 4
      %v3726 = vshll.u32 %v3597, 16
      %v3728 = vrot.slane %v3726, 5
      %v3729 = vsel %vm1543, %v3724, %v3728
      %v3731 = vshrl.u32 %v3598, 16
      %v3733 = vrot.slane %v3731, 4
      %v3734 = vshll.u32 %v3598, 16
      %v3736 = vrot.slane %v3734, 5
      %v3737 = vor.u32 %v3733, %v3736
      %v3738 = vrot.slane %v3737, 4
      %v3740 = vshll.u32 %v3599, 16
      %v3742 = vrot.slane %v3740, 5
      %v3743 = vsel %vm1543, %v3738, %v3742
      %v3744 = vshrl.u32 %v3599, 16
      %v3746 = vrot.slane %v3744, 4
      %v3747 = vor.u32 %v3746, %v3742
      %v3748 = vrot.slane %v3747, 4
      %v3750 = vshll.u32 %v3600, 16
      %v3752 = vrot.slane %v3750, 5
      %v3753 = vsel %vm1543, %v3748, %v3752
      %v3755 = vshrl.u32 %v3601, 16
      %v3757 = vrot.slane %v3755, 4
      %v3758 = vshll.u32 %v3601, 16
      %v3760 = vrot.slane %v3758, 5
      %v3761 = vor.u32 %v3757, %v3760
      %v3762 = vrot.slane %v3761, 4
      %v3764 = vshll.u32 %v3602, 16
      %v3766 = vrot.slane %v3764, 5
      %v3767 = vsel %vm1543, %v3762, %v3766
      %v3768 = vshrl.u32 %v3602, 16
      %v3770 = vrot.slane %v3768, 4
      %v3771 = vor.u32 %v3770, %v3766
      %v3772 = vrot.slane %v3771, 4
      %v3774 = vshll.u32 %v3603, 16
      %v3776 = vrot.slane %v3774, 5
      %v3777 = vsel %vm1543, %v3772, %v3776
      %v3779 = vshrl.u32 %v3604, 16
      %v3781 = vrot.slane %v3779, 4
      %v3782 = vshll.u32 %v3604, 16
      %v3784 = vrot.slane %v3782, 5
      %v3785 = vor.u32 %v3781, %v3784
      %v3786 = vrot.slane %v3785, 4
      %v3788 = vshll.u32 %v3605, 16
      %v3790 = vrot.slane %v3788, 5
      %v3791 = vsel %vm1543, %v3786, %v3790
      %v3792 = vshrl.u32 %v3605, 16
      %v3794 = vrot.slane %v3792, 4
      %v3795 = vor.u32 %v3794, %v3790
      %v3796 = vrot.slane %v3795, 4
      %v3798 = vshll.u32 %v3606, 16
      %v3800 = vrot.slane %v3798, 5
      %v3801 = vsel %vm1543, %v3796, %v3800
      %v3803 = vshrl.u32 %v3607, 16
      %v3805 = vrot.slane %v3803, 4
      %v3806 = vshll.u32 %v3607, 16
      %v3808 = vrot.slane %v3806, 5
      %v3809 = vor.u32 %v3805, %v3808
      %v3810 = vrot.slane %v3809, 4
      %v3812 = vshll.u32 %v3608, 16
      %v3814 = vrot.slane %v3812, 5
      %v3815 = vsel %vm1543, %v3810, %v3814
      %v3816 = vshrl.u32 %v3608, 16
      %v3818 = vrot.slane %v3816, 4
      %v3819 = vor.u32 %v3818, %v3814
      %v3820 = vrot.slane %v3819, 4
      %v3822 = vshll.u32 %v3609, 16
      %v3824 = vrot.slane %v3822, 5
      %v3825 = vsel %vm1543, %v3820, %v3824
      %v3827 = vshrl.u32 %v3610, 16
      %v3829 = vrot.slane %v3827, 4
      %v3830 = vshll.u32 %v3610, 16
      %v3832 = vrot.slane %v3830, 5
      %v3833 = vor.u32 %v3829, %v3832
      %v3834 = vrot.slane %v3833, 4
      %v3836 = vshll.u32 %v3611, 16
      %v3838 = vrot.slane %v3836, 5
      %v3839 = vsel %vm1543, %v3834, %v3838
      %v3840 = vshrl.u32 %v3611, 16
      %v3842 = vrot.slane %v3840, 4
      %v3843 = vor.u32 %v3842, %v3838
      %v3844 = vrot.slane %v3843, 4
      %v3846 = vshll.u32 %v3612, 16
      %v3848 = vrot.slane %v3846, 5
      %v3849 = vsel %vm1543, %v3844, %v3848
      %v3851 = vshrl.u32 %v3613, 16
      %v3853 = vrot.slane %v3851, 4
      %v3854 = vshll.u32 %v3613, 16
      %v3856 = vrot.slane %v3854, 5
      %v3857 = vor.u32 %v3853, %v3856
      %v3858 = vrot.slane %v3857, 4
      %v3860 = vshll.u32 %v3614, 16
      %v3862 = vrot.slane %v3860, 5
      %v3863 = vsel %vm1543, %v3858, %v3862
      %v3864 = vshrl.u32 %v3614, 16
      %v3866 = vrot.slane %v3864, 4
      %v3867 = vor.u32 %v3866, %v3862
      %v3868 = vrot.slane %v3867, 4
      %v3870 = vshll.u32 %v3615, 16
      %v3872 = vrot.slane %v3870, 5
      %v3873 = vsel %vm1543, %v3868, %v3872
      %v3875 = vshrl.u32 %v3616, 16
      %v3877 = vrot.slane %v3875, 4
      %v3878 = vshll.u32 %v3616, 16
      %v3880 = vrot.slane %v3878, 5
      %v3881 = vor.u32 %v3877, %v3880
      %v3882 = vrot.slane %v3881, 4
      %v3884 = vshll.u32 %v3617, 16
      %v3886 = vrot.slane %v3884, 5
      %v3887 = vsel %vm1543, %v3882, %v3886
      %v3888 = vshrl.u32 %v3617, 16
      %v3890 = vrot.slane %v3888, 4
      %v3891 = vor.u32 %v3890, %v3886
      %v3892 = vrot.slane %v3891, 4
      %v3894 = vshll.u32 %v3618, 16
      %v3896 = vrot.slane %v3894, 5
      %v3897 = vsel %vm1543, %v3892, %v3896
      %v3899 = vshrl.u32 %v3619, 16
      %v3901 = vrot.slane %v3899, 4
      %v3902 = vshll.u32 %v3619, 16
      %v3904 = vrot.slane %v3902, 5
      %v3905 = vor.u32 %v3901, %v3904
      %v3906 = vrot.slane %v3905, 4
      %v3908 = vshll.u32 %v3620, 16
      %v3910 = vrot.slane %v3908, 5
      %v3911 = vsel %vm1543, %v3906, %v3910
      %v3912 = vshrl.u32 %v3620, 16
      %v3914 = vrot.slane %v3912, 4
      %v3915 = vor.u32 %v3914, %v3910
      %v3916 = vrot.slane %v3915, 4
      %v3918 = vshll.u32 %v3621, 16
      %v3920 = vrot.slane %v3918, 5
      %v3921 = vsel %vm1543, %v3916, %v3920
      %v3923 = vshrl.u32 %v3622, 16
      %v3925 = vrot.slane %v3923, 4
      %v3926 = vshll.u32 %v3622, 16
      %v3928 = vrot.slane %v3926, 5
      %v3929 = vor.u32 %v3925, %v3928
      %v3930 = vrot.slane %v3929, 4
      %v3932 = vshll.u32 %v3623, 16
      %v3934 = vrot.slane %v3932, 5
      %v3935 = vsel %vm1543, %v3930, %v3934
      %v3936 = vshrl.u32 %v3623, 16
      %v3938 = vrot.slane %v3936, 4
      %v3939 = vor.u32 %v3938, %v3934
      %v3940 = vrot.slane %v3939, 4
      %v3942 = vshll.u32 %v3624, 16
      %v3944 = vrot.slane %v3942, 5
      %v3945 = vsel %vm1543, %v3940, %v3944
      %v3947 = vshrl.u32 %v3625, 16
      %v3949 = vrot.slane %v3947, 4
      %v3950 = vshll.u32 %v3625, 16
      %v3952 = vrot.slane %v3950, 5
      %v3953 = vor.u32 %v3949, %v3952
      %v3954 = vrot.slane %v3953, 4
      %v3956 = vshll.u32 %v3626, 16
      %v3958 = vrot.slane %v3956, 5
      %v3959 = vsel %vm1543, %v3954, %v3958
      %v3960 = vshrl.u32 %v3626, 16
      %v3962 = vrot.slane %v3960, 4
      %v3963 = vor.u32 %v3962, %v3958
      %v3964 = vrot.slane %v3963, 4
      %v3966 = vshll.u32 %v3627, 16
      %v3968 = vrot.slane %v3966, 5
      %v3969 = vsel %vm1543, %v3964, %v3968
      %v3971 = vshrl.u32 %v3628, 16
      %v3973 = vrot.slane %v3971, 4
      %v3974 = vshll.u32 %v3628, 16
      %v3976 = vrot.slane %v3974, 5
      %v3977 = vor.u32 %v3973, %v3976
      %v3978 = vrot.slane %v3977, 4
      %v3980 = vshll.u32 %v3629, 16
      %v3982 = vrot.slane %v3980, 5
      %v3983 = vsel %vm1543, %v3978, %v3982
      %v3984 = vshrl.u32 %v3629, 16
      %v3986 = vrot.slane %v3984, 4
      %v3987 = vor.u32 %v3986, %v3982
      %v3988 = vrot.slane %v3987, 4
      %v3990 = vshll.u32 %v3630, 16
      %v3992 = vrot.slane %v3990, 5
      %v3993 = vsel %vm1543, %v3988, %v3992
      %v3995 = vshrl.u32 %v3631, 16
      %v3997 = vrot.slane %v3995, 4
      %v3998 = vshll.u32 %v3631, 16
      %v4000 = vrot.slane %v3998, 5
      %v4001 = vor.u32 %v3997, %v4000
      %v4002 = vrot.slane %v4001, 4
      %v4004 = vshll.u32 %v3632, 16
      %v4006 = vrot.slane %v4004, 5
      %v4007 = vsel %vm1543, %v4002, %v4006
      %v4008 = vshrl.u32 %v3632, 16
      %v4010 = vrot.slane %v4008, 4
      %v4011 = vor.u32 %v4010, %v4006
      %v4012 = vrot.slane %v4011, 4
      %v4014 = vshll.u32 %v3633, 16
      %v4016 = vrot.slane %v4014, 5
      %v4017 = vsel %vm1543, %v4012, %v4016
      %v4018 = vunpack.c.l.b16 %v3647
      %v4019 = vunpack.c.l.b16 %v3657
      %v4020 = vunpack.c.l.b16 %v3671
      %v4021 = vunpack.c.l.b16 %v3681
      %v4022 = vunpack.c.l.b16 %v3695
      %v4023 = vunpack.c.l.b16 %v3705
      %v4024 = vunpack.c.l.b16 %v3719
      %v4025 = vunpack.c.l.b16 %v3729
      %v4026 = vunpack.c.l.b16 %v3743
      %v4027 = vunpack.c.l.b16 %v3753
      %v4028 = vunpack.c.l.b16 %v3767
      %v4029 = vunpack.c.l.b16 %v3777
      %v4030 = vunpack.c.l.b16 %v3791
      %v4031 = vunpack.c.l.b16 %v3801
      %v4032 = vunpack.c.l.b16 %v3815
      %v4033 = vunpack.c.l.b16 %v3825
      %v4034 = vunpack.c.l.b16 %v3839
      %v4035 = vunpack.c.l.b16 %v3849
      %v4036 = vunpack.c.l.b16 %v3863
      %v4037 = vunpack.c.l.b16 %v3873
      %v4038 = vunpack.c.l.b16 %v3887
      %v4039 = vunpack.c.l.b16 %v3897
      %v4040 = vunpack.c.l.b16 %v3911
      %v4041 = vunpack.c.l.b16 %v3921
      %v4042 = vunpack.c.l.b16 %v3935
      %v4043 = vunpack.c.l.b16 %v3945
      %v4044 = vunpack.c.l.b16 %v3959
      %v4045 = vunpack.c.l.b16 %v3969
      %v4046 = vunpack.c.l.b16 %v3983
      %v4047 = vunpack.c.l.b16 %v3993
      %v4048 = vunpack.c.l.b16 %v4007
      %v4049 = vunpack.c.l.b16 %v4017
      %v4050 = vpack.c.b16 %v4019, %v4018
      %v4051 = vpack.c.b16 %v4021, %v4020
      %v4052 = vpack.c.b16 %v4023, %v4022
      %v4053 = vpack.c.b16 %v4025, %v4024
      %v4054 = vpack.c.b16 %v4027, %v4026
      %v4055 = vpack.c.b16 %v4029, %v4028
      %v4056 = vpack.c.b16 %v4031, %v4030
      %v4057 = vpack.c.b16 %v4033, %v4032
      %v4058 = vpack.c.b16 %v4035, %v4034
      %v4059 = vpack.c.b16 %v4037, %v4036
      %v4060 = vpack.c.b16 %v4039, %v4038
      %v4061 = vpack.c.b16 %v4041, %v4040
      %v4062 = vpack.c.b16 %v4043, %v4042
      %v4063 = vpack.c.b16 %v4045, %v4044
      %v4064 = vpack.c.b16 %v4047, %v4046
      %v4065 = vpack.c.b16 %v4049, %v4048
      %4066 = vrot.lane.b32.xlu0 %v4050, 14
      %v4067 = vpop.permute.xlu0 %4066
      %4068 = vrot.lane.b32.xlu0 %v4051, 14
      %v4069 = vpop.permute.xlu0 %4068
      %4070 = vrot.lane.b32.xlu0 %v4052, 14
      %v4071 = vpop.permute.xlu0 %4070
      %4072 = vrot.lane.b32.xlu0 %v4053, 14
      %v4073 = vpop.permute.xlu0 %4072
      %4074 = vrot.lane.b32.xlu0 %v4054, 14
      %v4075 = vpop.permute.xlu0 %4074
      %4076 = vrot.lane.b32.xlu0 %v4055, 14
      %v4077 = vpop.permute.xlu0 %4076
      %4078 = vrot.lane.b32.xlu0 %v4056, 14
      %v4079 = vpop.permute.xlu0 %4078
      %4080 = vrot.lane.b32.xlu0 %v4057, 14
      %v4081 = vpop.permute.xlu0 %4080
      %4082 = vrot.lane.b32.xlu0 %v4058, 14
      %v4083 = vpop.permute.xlu0 %4082
      %4084 = vrot.lane.b32.xlu0 %v4059, 14
      %v4085 = vpop.permute.xlu0 %4084
      %4086 = vrot.lane.b32.xlu0 %v4060, 14
      %v4087 = vpop.permute.xlu0 %4086
      %4088 = vrot.lane.b32.xlu0 %v4061, 14
      %v4089 = vpop.permute.xlu0 %4088
      %4090 = vrot.lane.b32.xlu0 %v4062, 14
      %v4091 = vpop.permute.xlu0 %4090
      %4092 = vrot.lane.b32.xlu0 %v4063, 14
      %v4093 = vpop.permute.xlu0 %4092
      %4094 = vrot.lane.b32.xlu0 %v4064, 14
      %v4095 = vpop.permute.xlu0 %4094
      %4096 = vrot.lane.b32.xlu0 %v4065, 14
      %v4097 = vpop.permute.xlu0 %4096
      %vm4114 = vcmask 130160
      %4115 = vst.msk [vmem:[#allocation3] sm:$0xff] %vm4114, %v4067
      %4116 = vst.msk [vmem:[#allocation3 + $0x8] sm:$0xff] %vm4114, %v4069
      %4117 = vst.msk [vmem:[#allocation3 + $0x10] sm:$0xff] %vm4114, %v4071
      %4118 = vst.msk [vmem:[#allocation3 + $0x18] sm:$0xff] %vm4114, %v4073
      %4119 = vst.msk [vmem:[#allocation3 + $0x20] sm:$0xff] %vm4114, %v4075
      %4120 = vst.msk [vmem:[#allocation3 + $0x28] sm:$0xff] %vm4114, %v4077
      %4121 = vst.msk [vmem:[#allocation3 + $0x30] sm:$0xff] %vm4114, %v4079
      %4122 = vst.msk [vmem:[#allocation3 + $0x38] sm:$0xff] %vm4114, %v4081
      %4123 = vst.msk [vmem:[#allocation3 + $0x40] sm:$0xff] %vm4114, %v4083
      %4124 = vst.msk [vmem:[#allocation3 + $0x48] sm:$0xff] %vm4114, %v4085
      %4125 = vst.msk [vmem:[#allocation3 + $0x50] sm:$0xff] %vm4114, %v4087
      %4126 = vst.msk [vmem:[#allocation3 + $0x58] sm:$0xff] %vm4114, %v4089
      %4127 = vst.msk [vmem:[#allocation3 + $0x60] sm:$0xff] %vm4114, %v4091
      %4128 = vst.msk [vmem:[#allocation3 + $0x68] sm:$0xff] %vm4114, %v4093
      %4129 = vst.msk [vmem:[#allocation3 + $0x70] sm:$0xff] %vm4114, %v4095
      %4130 = vst.msk [vmem:[#allocation3 + $0x78] sm:$0xff] %vm4114, %v4097
      %v4131 = vld [vmem:[%s3408] sm:$0xe]
      %v4132 = vld [vmem:[%s3408 + $0x4] sm:$0xf]
      %v4133 = vld [vmem:[%s3408 + $0x8] sm:$0x1]
      %v4134 = vld [vmem:[%s3408 + $0xc] sm:$0xe]
      %v4135 = vld [vmem:[%s3408 + $0x10] sm:$0xf]
      %v4136 = vld [vmem:[%s3408 + $0x14] sm:$0x1]
      %v4137 = vld [vmem:[%s3408 + $0x18] sm:$0xe]
      %v4138 = vld [vmem:[%s3408 + $0x1c] sm:$0xf]
      %v4139 = vld [vmem:[%s3408 + $0x20] sm:$0x1]
      %v4140 = vld [vmem:[%s3408 + $0x24] sm:$0xe]
      %v4141 = vld [vmem:[%s3408 + $0x28] sm:$0xf]
      %v4142 = vld [vmem:[%s3408 + $0x2c] sm:$0x1]
      %v4143 = vld [vmem:[%s3408 + $0x30] sm:$0xe]
      %v4144 = vld [vmem:[%s3408 + $0x34] sm:$0xf]
      %v4145 = vld [vmem:[%s3408 + $0x38] sm:$0x1]
      %v4146 = vld [vmem:[%s3408 + $0x3c] sm:$0xe]
      %v4147 = vld [vmem:[%s3408 + $0x40] sm:$0xf]
      %v4148 = vld [vmem:[%s3408 + $0x44] sm:$0x1]
      %v4149 = vld [vmem:[%s3408 + $0x48] sm:$0xe]
      %v4150 = vld [vmem:[%s3408 + $0x4c] sm:$0xf]
      %v4151 = vld [vmem:[%s3408 + $0x50] sm:$0x1]
      %v4152 = vld [vmem:[%s3408 + $0x54] sm:$0xe]
      %v4153 = vld [vmem:[%s3408 + $0x58] sm:$0xf]
      %v4154 = vld [vmem:[%s3408 + $0x5c] sm:$0x1]
      %v4155 = vld [vmem:[%s3408 + $0x60] sm:$0xe]
      %v4156 = vld [vmem:[%s3408 + $0x64] sm:$0xf]
      %v4157 = vld [vmem:[%s3408 + $0x68] sm:$0x1]
      %v4158 = vld [vmem:[%s3408 + $0x6c] sm:$0xe]
      %v4159 = vld [vmem:[%s3408 + $0x70] sm:$0xf]
      %v4160 = vld [vmem:[%s3408 + $0x74] sm:$0x1]
      %v4161 = vld [vmem:[%s3408 + $0x78] sm:$0xe]
      %v4162 = vld [vmem:[%s3408 + $0x7c] sm:$0xf]
      %v4163 = vld [vmem:[%s3408 + $0x80] sm:$0x1]
      %v4164 = vld [vmem:[%s3408 + $0x84] sm:$0xe]
      %v4165 = vld [vmem:[%s3408 + $0x88] sm:$0xf]
      %v4166 = vld [vmem:[%s3408 + $0x8c] sm:$0x1]
      %v4167 = vld [vmem:[%s3408 + $0x90] sm:$0xe]
      %v4168 = vld [vmem:[%s3408 + $0x94] sm:$0xf]
      %v4169 = vld [vmem:[%s3408 + $0x98] sm:$0x1]
      %v4170 = vld [vmem:[%s3408 + $0x9c] sm:$0xe]
      %v4171 = vld [vmem:[%s3408 + $0xa0] sm:$0xf]
      %v4172 = vld [vmem:[%s3408 + $0xa4] sm:$0x1]
      %v4173 = vld [vmem:[%s3408 + $0xa8] sm:$0xe]
      %v4174 = vld [vmem:[%s3408 + $0xac] sm:$0xf]
      %v4175 = vld [vmem:[%s3408 + $0xb0] sm:$0x1]
      %v4176 = vld [vmem:[%s3408 + $0xb4] sm:$0xe]
      %v4177 = vld [vmem:[%s3408 + $0xb8] sm:$0xf]
      %v4178 = vld [vmem:[%s3408 + $0xbc] sm:$0x1]
      %v4227 = vrot.slane %v4131, 5
      %v4228 = vrot.slane %v4227, 4
      %v4229 = vrot.slane %v4132, 5
      %v4230 = vsel %vm2139, %v4228, %v4229
      %v4231 = vrot.slane %v4229, 4
      %v4232 = vrot.slane %v4133, 5
      %v4233 = vsel %vm2139, %v4231, %v4232
      %v4234 = vrot.slane %v4134, 5
      %v4235 = vrot.slane %v4234, 4
      %v4236 = vrot.slane %v4135, 5
      %v4237 = vsel %vm2139, %v4235, %v4236
      %v4238 = vrot.slane %v4236, 4
      %v4239 = vrot.slane %v4136, 5
      %v4240 = vsel %vm2139, %v4238, %v4239
      %v4241 = vrot.slane %v4137, 5
      %v4242 = vrot.slane %v4241, 4
      %v4243 = vrot.slane %v4138, 5
      %v4244 = vsel %vm2139, %v4242, %v4243
      %v4245 = vrot.slane %v4243, 4
      %v4246 = vrot.slane %v4139, 5
      %v4247 = vsel %vm2139, %v4245, %v4246
      %v4248 = vrot.slane %v4140, 5
      %v4249 = vrot.slane %v4248, 4
      %v4250 = vrot.slane %v4141, 5
      %v4251 = vsel %vm2139, %v4249, %v4250
      %v4252 = vrot.slane %v4250, 4
      %v4253 = vrot.slane %v4142, 5
      %v4254 = vsel %vm2139, %v4252, %v4253
      %v4255 = vrot.slane %v4143, 5
      %v4256 = vrot.slane %v4255, 4
      %v4257 = vrot.slane %v4144, 5
      %v4258 = vsel %vm2139, %v4256, %v4257
      %v4259 = vrot.slane %v4257, 4
      %v4260 = vrot.slane %v4145, 5
      %v4261 = vsel %vm2139, %v4259, %v4260
      %v4262 = vrot.slane %v4146, 5
      %v4263 = vrot.slane %v4262, 4
      %v4264 = vrot.slane %v4147, 5
      %v4265 = vsel %vm2139, %v4263, %v4264
      %v4266 = vrot.slane %v4264, 4
      %v4267 = vrot.slane %v4148, 5
      %v4268 = vsel %vm2139, %v4266, %v4267
      %v4269 = vrot.slane %v4149, 5
      %v4270 = vrot.slane %v4269, 4
      %v4271 = vrot.slane %v4150, 5
      %v4272 = vsel %vm2139, %v4270, %v4271
      %v4273 = vrot.slane %v4271, 4
      %v4274 = vrot.slane %v4151, 5
      %v4275 = vsel %vm2139, %v4273, %v4274
      %v4276 = vrot.slane %v4152, 5
      %v4277 = vrot.slane %v4276, 4
      %v4278 = vrot.slane %v4153, 5
      %v4279 = vsel %vm2139, %v4277, %v4278
      %v4280 = vrot.slane %v4278, 4
      %v4281 = vrot.slane %v4154, 5
      %v4282 = vsel %vm2139, %v4280, %v4281
      %v4283 = vrot.slane %v4155, 5
      %v4284 = vrot.slane %v4283, 4
      %v4285 = vrot.slane %v4156, 5
      %v4286 = vsel %vm2139, %v4284, %v4285
      %v4287 = vrot.slane %v4285, 4
      %v4288 = vrot.slane %v4157, 5
      %v4289 = vsel %vm2139, %v4287, %v4288
      %v4290 = vrot.slane %v4158, 5
      %v4291 = vrot.slane %v4290, 4
      %v4292 = vrot.slane %v4159, 5
      %v4293 = vsel %vm2139, %v4291, %v4292
      %v4294 = vrot.slane %v4292, 4
      %v4295 = vrot.slane %v4160, 5
      %v4296 = vsel %vm2139, %v4294, %v4295
      %v4297 = vrot.slane %v4161, 5
      %v4298 = vrot.slane %v4297, 4
      %v4299 = vrot.slane %v4162, 5
      %v4300 = vsel %vm2139, %v4298, %v4299
      %v4301 = vrot.slane %v4299, 4
      %v4302 = vrot.slane %v4163, 5
      %v4303 = vsel %vm2139, %v4301, %v4302
      %v4304 = vrot.slane %v4164, 5
      %v4305 = vrot.slane %v4304, 4
      %v4306 = vrot.slane %v4165, 5
      %v4307 = vsel %vm2139, %v4305, %v4306
      %v4308 = vrot.slane %v4306, 4
      %v4309 = vrot.slane %v4166, 5
      %v4310 = vsel %vm2139, %v4308, %v4309
      %v4311 = vrot.slane %v4167, 5
      %v4312 = vrot.slane %v4311, 4
      %v4313 = vrot.slane %v4168, 5
      %v4314 = vsel %vm2139, %v4312, %v4313
      %v4315 = vrot.slane %v4313, 4
      %v4316 = vrot.slane %v4169, 5
      %v4317 = vsel %vm2139, %v4315, %v4316
      %v4318 = vrot.slane %v4170, 5
      %v4319 = vrot.slane %v4318, 4
      %v4320 = vrot.slane %v4171, 5
      %v4321 = vsel %vm2139, %v4319, %v4320
      %v4322 = vrot.slane %v4320, 4
      %v4323 = vrot.slane %v4172, 5
      %v4324 = vsel %vm2139, %v4322, %v4323
      %v4325 = vrot.slane %v4173, 5
      %v4326 = vrot.slane %v4325, 4
      %v4327 = vrot.slane %v4174, 5
      %v4328 = vsel %vm2139, %v4326, %v4327
      %v4329 = vrot.slane %v4327, 4
      %v4330 = vrot.slane %v4175, 5
      %v4331 = vsel %vm2139, %v4329, %v4330
      %v4332 = vrot.slane %v4176, 5
      %v4333 = vrot.slane %v4332, 4
      %v4334 = vrot.slane %v4177, 5
      %v4335 = vsel %vm2139, %v4333, %v4334
      %v4336 = vrot.slane %v4334, 4
      %v4337 = vrot.slane %v4178, 5
      %v4338 = vsel %vm2139, %v4336, %v4337
      %v4339 = vunpack.c.l.b16 %v4230
      %v4340 = vunpack.c.l.b16 %v4233
      %v4341 = vunpack.c.l.b16 %v4237
      %v4342 = vunpack.c.l.b16 %v4240
      %v4343 = vunpack.c.l.b16 %v4244
      %v4344 = vunpack.c.l.b16 %v4247
      %v4345 = vunpack.c.l.b16 %v4251
      %v4346 = vunpack.c.l.b16 %v4254
      %v4347 = vunpack.c.l.b16 %v4258
      %v4348 = vunpack.c.l.b16 %v4261
      %v4349 = vunpack.c.l.b16 %v4265
      %v4350 = vunpack.c.l.b16 %v4268
      %v4351 = vunpack.c.l.b16 %v4272
      %v4352 = vunpack.c.l.b16 %v4275
      %v4353 = vunpack.c.l.b16 %v4279
      %v4354 = vunpack.c.l.b16 %v4282
      %v4355 = vunpack.c.l.b16 %v4286
      %v4356 = vunpack.c.l.b16 %v4289
      %v4357 = vunpack.c.l.b16 %v4293
      %v4358 = vunpack.c.l.b16 %v4296
      %v4359 = vunpack.c.l.b16 %v4300
      %v4360 = vunpack.c.l.b16 %v4303
      %v4361 = vunpack.c.l.b16 %v4307
      %v4362 = vunpack.c.l.b16 %v4310
      %v4363 = vunpack.c.l.b16 %v4314
      %v4364 = vunpack.c.l.b16 %v4317
      %v4365 = vunpack.c.l.b16 %v4321
      %v4366 = vunpack.c.l.b16 %v4324
      %v4367 = vunpack.c.l.b16 %v4328
      %v4368 = vunpack.c.l.b16 %v4331
      %v4369 = vunpack.c.l.b16 %v4335
      %v4370 = vunpack.c.l.b16 %v4338
      %v4371 = vpack.c.b16 %v4340, %v4339
      %v4372 = vpack.c.b16 %v4342, %v4341
      %v4373 = vpack.c.b16 %v4344, %v4343
      %v4374 = vpack.c.b16 %v4346, %v4345
      %v4375 = vpack.c.b16 %v4348, %v4347
      %v4376 = vpack.c.b16 %v4350, %v4349
      %v4377 = vpack.c.b16 %v4352, %v4351
      %v4378 = vpack.c.b16 %v4354, %v4353
      %v4379 = vpack.c.b16 %v4356, %v4355
      %v4380 = vpack.c.b16 %v4358, %v4357
      %v4381 = vpack.c.b16 %v4360, %v4359
      %v4382 = vpack.c.b16 %v4362, %v4361
      %v4383 = vpack.c.b16 %v4364, %v4363
      %v4384 = vpack.c.b16 %v4366, %v4365
      %v4385 = vpack.c.b16 %v4368, %v4367
      %v4386 = vpack.c.b16 %v4370, %v4369
      %4387 = vrot.lane.b32.xlu0 %v4371, 16
      %v4388 = vpop.permute.xlu0 %4387
      %4389 = vrot.lane.b32.xlu0 %v4372, 16
      %v4390 = vpop.permute.xlu0 %4389
      %4391 = vrot.lane.b32.xlu0 %v4373, 16
      %v4392 = vpop.permute.xlu0 %4391
      %4393 = vrot.lane.b32.xlu0 %v4374, 16
      %v4394 = vpop.permute.xlu0 %4393
      %4395 = vrot.lane.b32.xlu0 %v4375, 16
      %v4396 = vpop.permute.xlu0 %4395
      %4397 = vrot.lane.b32.xlu0 %v4376, 16
      %v4398 = vpop.permute.xlu0 %4397
      %4399 = vrot.lane.b32.xlu0 %v4377, 16
      %v4400 = vpop.permute.xlu0 %4399
      %4401 = vrot.lane.b32.xlu0 %v4378, 16
      %v4402 = vpop.permute.xlu0 %4401
      %4403 = vrot.lane.b32.xlu0 %v4379, 16
      %v4404 = vpop.permute.xlu0 %4403
      %4405 = vrot.lane.b32.xlu0 %v4380, 16
      %v4406 = vpop.permute.xlu0 %4405
      %4407 = vrot.lane.b32.xlu0 %v4381, 16
      %v4408 = vpop.permute.xlu0 %4407
      %4409 = vrot.lane.b32.xlu0 %v4382, 16
      %v4410 = vpop.permute.xlu0 %4409
      %4411 = vrot.lane.b32.xlu0 %v4383, 16
      %v4412 = vpop.permute.xlu0 %4411
      %4413 = vrot.lane.b32.xlu0 %v4384, 16
      %v4414 = vpop.permute.xlu0 %4413
      %4415 = vrot.lane.b32.xlu0 %v4385, 16
      %v4416 = vpop.permute.xlu0 %4415
      %4417 = vrot.lane.b32.xlu0 %v4386, 16
      %v4418 = vpop.permute.xlu0 %4417
      %vm4435 = vcmask 146560
      %4436 = vst.msk [vmem:[#allocation3] sm:$0xff] %vm4435, %v4388
      %4437 = vst.msk [vmem:[#allocation3 + $0x8] sm:$0xff] %vm4435, %v4390
      %4438 = vst.msk [vmem:[#allocation3 + $0x10] sm:$0xff] %vm4435, %v4392
      %4439 = vst.msk [vmem:[#allocation3 + $0x18] sm:$0xff] %vm4435, %v4394
      %4440 = vst.msk [vmem:[#allocation3 + $0x20] sm:$0xff] %vm4435, %v4396
      %4441 = vst.msk [vmem:[#allocation3 + $0x28] sm:$0xff] %vm4435, %v4398
      %4442 = vst.msk [vmem:[#allocation3 + $0x30] sm:$0xff] %vm4435, %v4400
      %4443 = vst.msk [vmem:[#allocation3 + $0x38] sm:$0xff] %vm4435, %v4402
      %4444 = vst.msk [vmem:[#allocation3 + $0x40] sm:$0xff] %vm4435, %v4404
      %4445 = vst.msk [vmem:[#allocation3 + $0x48] sm:$0xff] %vm4435, %v4406
      %4446 = vst.msk [vmem:[#allocation3 + $0x50] sm:$0xff] %vm4435, %v4408
      %4447 = vst.msk [vmem:[#allocation3 + $0x58] sm:$0xff] %vm4435, %v4410
      %4448 = vst.msk [vmem:[#allocation3 + $0x60] sm:$0xff] %vm4435, %v4412
      %4449 = vst.msk [vmem:[#allocation3 + $0x68] sm:$0xff] %vm4435, %v4414
      %4450 = vst.msk [vmem:[#allocation3 + $0x70] sm:$0xff] %vm4435, %v4416
      %4451 = vst.msk [vmem:[#allocation3 + $0x78] sm:$0xff] %vm4435, %v4418
      %v4452 = vld [vmem:[#allocation3] sm:$0xff]
      %v4453 = vld [vmem:[#allocation3 + $0x8] sm:$0xff]
      %v4454 = vld [vmem:[#allocation3 + $0x10] sm:$0xff]
      %v4455 = vld [vmem:[#allocation3 + $0x18] sm:$0xff]
      %v4456 = vld [vmem:[#allocation3 + $0x20] sm:$0xff]
      %v4457 = vld [vmem:[#allocation3 + $0x28] sm:$0xff]
      %v4458 = vld [vmem:[#allocation3 + $0x30] sm:$0xff]
      %v4459 = vld [vmem:[#allocation3 + $0x38] sm:$0xff]
      %v4460 = vld [vmem:[#allocation3 + $0x40] sm:$0xff]
      %v4461 = vld [vmem:[#allocation3 + $0x48] sm:$0xff]
      %v4462 = vld [vmem:[#allocation3 + $0x50] sm:$0xff]
      %v4463 = vld [vmem:[#allocation3 + $0x58] sm:$0xff]
      %v4464 = vld [vmem:[#allocation3 + $0x60] sm:$0xff]
      %v4465 = vld [vmem:[#allocation3 + $0x68] sm:$0xff]
      %v4466 = vld [vmem:[#allocation3 + $0x70] sm:$0xff]
      %v4467 = vld [vmem:[#allocation3 + $0x78] sm:$0xff]
      %v4468 = vld [vmem:[%s3] sm:$0xf]
      %v4469 = vld [vmem:[%s3 + $0x4] sm:$0xf]
      %v4470 = vld [vmem:[%s3 + $0x8] sm:$0x1]
      %v4471 = vld [vmem:[%s4] sm:$0x1]
      %v4473 = vlaneseq
      %v4474 = vshrl.u32 %v4473, 7
      %v4475 = vsub.s32 0, %v4474
      %v4476 = vrot.slane %v4471, %v4475
      %v4481 = vunpack.c.l.b16 %v4468
      %v4482 = vunpack.c.l.b16 %v4469
      %v4483 = vunpack.c.l.b16 %v4470
      %v4484 = vpack.c.b16 %v4482, %v4481
      %v4485 = vpack.c.b16 %v4483, %v4483
      %vm4487 = vcmask 146432
      %v4489 = vsel %vm4487, %v4452, 0
      %v4492 = vsel %vm4487, %v4453, 0
      %v4495 = vsel %vm4487, %v4454, 0
      %v4498 = vsel %vm4487, %v4455, 0
      %v4501 = vsel %vm4487, %v4456, 0
      %v4504 = vsel %vm4487, %v4457, 0
      %v4507 = vsel %vm4487, %v4458, 0
      %v4510 = vsel %vm4487, %v4459, 0
      %v4513 = vsel %vm4487, %v4460, 0
      %v4516 = vsel %vm4487, %v4461, 0
      %v4519 = vsel %vm4487, %v4462, 0
      %v4522 = vsel %vm4487, %v4463, 0
      %v4525 = vsel %vm4487, %v4464, 0
      %v4528 = vsel %vm4487, %v4465, 0
      %v4531 = vsel %vm4487, %v4466, 0
      %v4534 = vsel %vm4487, %v4467, 0
      %vm4536 = vcmask 1040384
      %v4538 = vsel %vm4536, %v4485, 0
      %4540 = vmatprep.subr.bf16.mxu0 0
      %4541 = vmatpush1.bf16.msra.mxu0 %v4484
      %4542 = vmatprep.subr.bf16.mxu0 0
      %4543 = vmatpush1.bf16.msra.mxu0 %v4538
      %4544 = vmatprep.subr.bf16.mxu0 0
      %4545 = vmatpush1.bf16.msra.mxu0 0
      %4546 = vmatprep.subr.bf16.mxu0 0
      %4547 = vmatpush1.bf16.msra.mxu0 0
      %4548 = vmatprep.subr.bf16.mxu0 0
      %4549 = vmatpush1.bf16.msra.mxu0 0
      %4550 = vmatprep.subr.bf16.mxu0 0
      %4551 = vmatpush1.bf16.msra.mxu0 0
      %4552 = vmatprep.subr.bf16.mxu0 0
      %4553 = vmatpush1.bf16.msra.mxu0 0
      %4554 = vmatprep.subr.bf16.mxu0 0
      %4555 = vmatpush1.bf16.msra.mxu0 0
      %4556 = vmatprep.subr.bf16.mxu0 0
      %4557 = vmatpush1.bf16.msra.mxu0 0
      %4558 = vmatprep.subr.bf16.mxu0 0
      %4559 = vmatpush1.bf16.msra.mxu0 0
      %4560 = vmatprep.subr.bf16.mxu0 0
      %4561 = vmatpush1.bf16.msra.mxu0 0
      %4562 = vmatprep.subr.bf16.mxu0 0
      %4563 = vmatpush1.bf16.msra.mxu0 0
      %4564 = vmatprep.subr.bf16.mxu0 0
      %4565 = vmatpush1.bf16.msra.mxu0 0
      %4566 = vmatprep.subr.bf16.mxu0 0
      %4567 = vmatpush1.bf16.msra.mxu0 0
      %4568 = vmatprep.subr.bf16.mxu0 0
      %4569 = vmatpush1.bf16.msra.mxu0 0
      %4570 = vmatprep.subr.bf16.mxu0 0
      %4571 = vmatpush1.bf16.msra.mxu0 0
      %4572 = vmatprep.mubr.bf16.mxu0 0
      %4573 = vmatmul.mubr.bf16.gmra.mrb[0].mxu0 %v4489
      %v4574 = vpop.f32.mrb[0].mxu0
      %v4575 = vadd.f32 %v4476, %v4574
      %v4576 = vpop.f32.mrb[0].mxu0
      %v4577 = vpop.f32.mrb[0].mxu0
      %v4578 = vadd.f32 %v4476, %v4577
      %v4579 = vpop.f32.mrb[0].mxu0
      %4580 = vmatprep.mubr.bf16.mxu0 0
      %4581 = vmatmul.mubr.bf16.gmra.mrb[0].mxu0 %v4492
      %v4582 = vpop.f32.mrb[0].mxu0
      %v4583 = vadd.f32 %v4476, %v4582
      %v4584 = vpop.f32.mrb[0].mxu0
      %v4585 = vpop.f32.mrb[0].mxu0
      %v4586 = vadd.f32 %v4476, %v4585
      %v4587 = vpop.f32.mrb[0].mxu0
      %4588 = vmatprep.mubr.bf16.mxu0 0
      %4589 = vmatmul.mubr.bf16.gmra.mrb[0].mxu0 %v4495
      %v4590 = vpop.f32.mrb[0].mxu0
      %v4591 = vadd.f32 %v4476, %v4590
      %v4592 = vpop.f32.mrb[0].mxu0
      %v4593 = vpop.f32.mrb[0].mxu0
      %v4594 = vadd.f32 %v4476, %v4593
      %v4595 = vpop.f32.mrb[0].mxu0
      %4596 = vmatprep.mubr.bf16.mxu0 0
      %4597 = vmatmul.mubr.bf16.gmra.mrb[0].mxu0 %v4498
      %v4598 = vpop.f32.mrb[0].mxu0
      %v4599 = vadd.f32 %v4476, %v4598
      %v4600 = vpop.f32.mrb[0].mxu0
      %v4601 = vpop.f32.mrb[0].mxu0
      %v4602 = vadd.f32 %v4476, %v4601
      %v4603 = vpop.f32.mrb[0].mxu0
      %4604 = vmatprep.mubr.bf16.mxu0 0
      %4605 = vmatmul.mubr.bf16.gmra.mrb[0].mxu0 %v4501
      %v4606 = vpop.f32.mrb[0].mxu0
      %v4607 = vadd.f32 %v4476, %v4606
      %v4608 = vpop.f32.mrb[0].mxu0
      %v4609 = vpop.f32.mrb[0].mxu0
      %v4610 = vadd.f32 %v4476, %v4609
      %v4611 = vpop.f32.mrb[0].mxu0
      %4612 = vmatprep.mubr.bf16.mxu0 0
      %4613 = vmatmul.mubr.bf16.gmra.mrb[0].mxu0 %v4504
      %v4614 = vpop.f32.mrb[0].mxu0
      %v4615 = vadd.f32 %v4476, %v4614
      %v4616 = vpop.f32.mrb[0].mxu0
      %v4617 = vpop.f32.mrb[0].mxu0
      %v4618 = vadd.f32 %v4476, %v4617
      %v4619 = vpop.f32.mrb[0].mxu0
      %4620 = vmatprep.mubr.bf16.mxu0 0
      %4621 = vmatmul.mubr.bf16.gmra.mrb[0].mxu0 %v4507
      %v4622 = vpop.f32.mrb[0].mxu0
      %v4623 = vadd.f32 %v4476, %v4622
      %v4624 = vpop.f32.mrb[0].mxu0
      %v4625 = vpop.f32.mrb[0].mxu0
      %v4626 = vadd.f32 %v4476, %v4625
      %v4627 = vpop.f32.mrb[0].mxu0
      %4628 = vmatprep.mubr.bf16.mxu0 0
      %4629 = vmatmul.mubr.bf16.gmra.mrb[0].mxu0 %v4510
      %v4630 = vpop.f32.mrb[0].mxu0
      %v4631 = vadd.f32 %v4476, %v4630
      %v4632 = vpop.f32.mrb[0].mxu0
      %v4633 = vpop.f32.mrb[0].mxu0
      %v4634 = vadd.f32 %v4476, %v4633
      %v4635 = vpop.f32.mrb[0].mxu0
      %4636 = vmatprep.mubr.bf16.mxu0 0
      %4637 = vmatmul.mubr.bf16.gmra.mrb[0].mxu0 %v4513
      %v4638 = vpop.f32.mrb[0].mxu0
      %v4639 = vadd.f32 %v4476, %v4638
      %v4640 = vpop.f32.mrb[0].mxu0
      %v4641 = vpop.f32.mrb[0].mxu0
      %v4642 = vadd.f32 %v4476, %v4641
      %v4643 = vpop.f32.mrb[0].mxu0
      %4644 = vmatprep.mubr.bf16.mxu0 0
      %4645 = vmatmul.mubr.bf16.gmra.mrb[0].mxu0 %v4516
      %v4646 = vpop.f32.mrb[0].mxu0
      %v4647 = vadd.f32 %v4476, %v4646
      %v4648 = vpop.f32.mrb[0].mxu0
      %v4649 = vpop.f32.mrb[0].mxu0
      %v4650 = vadd.f32 %v4476, %v4649
      %v4651 = vpop.f32.mrb[0].mxu0
      %4652 = vmatprep.mubr.bf16.mxu0 0
      %4653 = vmatmul.mubr.bf16.gmra.mrb[0].mxu0 %v4519
      %v4654 = vpop.f32.mrb[0].mxu0
      %v4655 = vadd.f32 %v4476, %v4654
      %v4656 = vpop.f32.mrb[0].mxu0
      %v4657 = vpop.f32.mrb[0].mxu0
      %v4658 = vadd.f32 %v4476, %v4657
      %v4659 = vpop.f32.mrb[0].mxu0
      %4660 = vmatprep.mubr.bf16.mxu0 0
      %4661 = vmatmul.mubr.bf16.gmra.mrb[0].mxu0 %v4522
      %v4662 = vpop.f32.mrb[0].mxu0
      %v4663 = vadd.f32 %v4476, %v4662
      %v4664 = vpop.f32.mrb[0].mxu0
      %v4665 = vpop.f32.mrb[0].mxu0
      %v4666 = vadd.f32 %v4476, %v4665
      %v4667 = vpop.f32.mrb[0].mxu0
      %4668 = vmatprep.mubr.bf16.mxu0 0
      %4669 = vmatmul.mubr.bf16.gmra.mrb[0].mxu0 %v4525
      %v4670 = vpop.f32.mrb[0].mxu0
      %v4671 = vadd.f32 %v4476, %v4670
      %v4672 = vpop.f32.mrb[0].mxu0
      %v4673 = vpop.f32.mrb[0].mxu0
      %v4674 = vadd.f32 %v4476, %v4673
      %v4675 = vpop.f32.mrb[0].mxu0
      %4676 = vmatprep.mubr.bf16.mxu0 0
      %4677 = vmatmul.mubr.bf16.gmra.mrb[0].mxu0 %v4528
      %v4678 = vpop.f32.mrb[0].mxu0
      %v4679 = vadd.f32 %v4476, %v4678
      %v4680 = vpop.f32.mrb[0].mxu0
      %v4681 = vpop.f32.mrb[0].mxu0
      %v4682 = vadd.f32 %v4476, %v4681
      %v4683 = vpop.f32.mrb[0].mxu0
      %4684 = vmatprep.mubr.bf16.mxu0 0
      %4685 = vmatmul.mubr.bf16.gmra.mrb[0].mxu0 %v4531
      %v4686 = vpop.f32.mrb[0].mxu0
      %v4687 = vadd.f32 %v4476, %v4686
      %v4688 = vpop.f32.mrb[0].mxu0
      %v4689 = vpop.f32.mrb[0].mxu0
      %v4690 = vadd.f32 %v4476, %v4689
      %v4691 = vpop.f32.mrb[0].mxu0
      %4692 = vmatprep.mubr.bf16.mxu0 0
      %4693 = vmatmul.mubr.bf16.gmra.mrb[0].mxu0 %v4534
      %v4694 = vpop.f32.mrb[0].mxu0
      %v4695 = vadd.f32 %v4476, %v4694
      %v4696 = vpop.f32.mrb[0].mxu0
      %v4697 = vpop.f32.mrb[0].mxu0
      %v4698 = vadd.f32 %v4476, %v4697
      %v4699 = vpop.f32.mrb[0].mxu0
      %4700 = vdwg.mxu0
      %v4701 = vsub.f32 0.0, %v4575
      %v4702 = vsub.f32 0.0, %v4578
      %v4703 = vsub.f32 0.0, %v4583
      %v4704 = vsub.f32 0.0, %v4586
      %v4705 = vsub.f32 0.0, %v4591
      %v4706 = vsub.f32 0.0, %v4594
      %v4707 = vsub.f32 0.0, %v4599
      %v4708 = vsub.f32 0.0, %v4602
      %v4709 = vsub.f32 0.0, %v4607
      %v4710 = vsub.f32 0.0, %v4610
      %v4711 = vsub.f32 0.0, %v4615
      %v4712 = vsub.f32 0.0, %v4618
      %v4713 = vsub.f32 0.0, %v4623
      %v4714 = vsub.f32 0.0, %v4626
      %v4715 = vsub.f32 0.0, %v4631
      %v4716 = vsub.f32 0.0, %v4634
      %v4717 = vsub.f32 0.0, %v4639
      %v4718 = vsub.f32 0.0, %v4642
      %v4719 = vsub.f32 0.0, %v4647
      %v4720 = vsub.f32 0.0, %v4650
      %v4721 = vsub.f32 0.0, %v4655
      %v4722 = vsub.f32 0.0, %v4658
      %v4723 = vsub.f32 0.0, %v4663
      %v4724 = vsub.f32 0.0, %v4666
      %v4725 = vsub.f32 0.0, %v4671
      %v4726 = vsub.f32 0.0, %v4674
      %v4727 = vsub.f32 0.0, %v4679
      %v4728 = vsub.f32 0.0, %v4682
      %v4729 = vsub.f32 0.0, %v4687
      %v4730 = vsub.f32 0.0, %v4690
      %v4731 = vsub.f32 0.0, %v4695
      %v4732 = vsub.f32 0.0, %v4698
      %v4733 = vmul.f32 %v4701, 1.442695
      %v4734 = vpow.pop %v4733
      %v4735 = vmul.f32 %v4702, 1.442695
      %v4736 = vpow.pop %v4735
      %v4737 = vmul.f32 %v4703, 1.442695
      %v4738 = vpow.pop %v4737
      %v4739 = vmul.f32 %v4704, 1.442695
      %v4740 = vpow.pop %v4739
      %v4741 = vmul.f32 %v4705, 1.442695
      %v4742 = vpow.pop %v4741
      %v4743 = vmul.f32 %v4706, 1.442695
      %v4744 = vpow.pop %v4743
      %v4745 = vmul.f32 %v4707, 1.442695
      %v4746 = vpow.pop %v4745
      %v4747 = vmul.f32 %v4708, 1.442695
      %v4748 = vpow.pop %v4747
      %v4749 = vmul.f32 %v4709, 1.442695
      %v4750 = vpow.pop %v4749
      %v4751 = vmul.f32 %v4710, 1.442695
      %v4752 = vpow.pop %v4751
      %v4753 = vmul.f32 %v4711, 1.442695
      %v4754 = vpow.pop %v4753
      %v4755 = vmul.f32 %v4712, 1.442695
      %v4756 = vpow.pop %v4755
      %v4757 = vmul.f32 %v4713, 1.442695
      %v4758 = vpow.pop %v4757
      %v4759 = vmul.f32 %v4714, 1.442695
      %v4760 = vpow.pop %v4759
      %v4761 = vmul.f32 %v4715, 1.442695
      %v4762 = vpow.pop %v4761
      %v4763 = vmul.f32 %v4716, 1.442695
      %v4764 = vpow.pop %v4763
      %v4765 = vmul.f32 %v4717, 1.442695
      %v4766 = vpow.pop %v4765
      %v4767 = vmul.f32 %v4718, 1.442695
      %v4768 = vpow.pop %v4767
      %v4769 = vmul.f32 %v4719, 1.442695
      %v4770 = vpow.pop %v4769
      %v4771 = vmul.f32 %v4720, 1.442695
      %v4772 = vpow.pop %v4771
      %v4773 = vmul.f32 %v4721, 1.442695
      %v4774 = vpow.pop %v4773
      %v4775 = vmul.f32 %v4722, 1.442695
      %v4776 = vpow.pop %v4775
      %v4777 = vmul.f32 %v4723, 1.442695
      %v4778 = vpow.pop %v4777
      %v4779 = vmul.f32 %v4724, 1.442695
      %v4780 = vpow.pop %v4779
      %v4781 = vmul.f32 %v4725, 1.442695
      %v4782 = vpow.pop %v4781
      %v4783 = vmul.f32 %v4726, 1.442695
      %v4784 = vpow.pop %v4783
      %v4785 = vmul.f32 %v4727, 1.442695
      %v4786 = vpow.pop %v4785
      %v4787 = vmul.f32 %v4728, 1.442695
      %v4788 = vpow.pop %v4787
      %v4789 = vmul.f32 %v4729, 1.442695
      %v4790 = vpow.pop %v4789
      %v4791 = vmul.f32 %v4730, 1.442695
      %v4792 = vpow.pop %v4791
      %v4793 = vmul.f32 %v4731, 1.442695
      %v4794 = vpow.pop %v4793
      %v4795 = vmul.f32 %v4732, 1.442695
      %v4796 = vpow.pop %v4795
      %v4797 = vadd.f32 %v4734, 1.0
      %v4798 = vadd.f32 %v4736, 1.0
      %v4799 = vadd.f32 %v4738, 1.0
      %v4800 = vadd.f32 %v4740, 1.0
      %v4801 = vadd.f32 %v4742, 1.0
      %v4802 = vadd.f32 %v4744, 1.0
      %v4803 = vadd.f32 %v4746, 1.0
      %v4804 = vadd.f32 %v4748, 1.0
      %v4805 = vadd.f32 %v4750, 1.0
      %v4806 = vadd.f32 %v4752, 1.0
      %v4807 = vadd.f32 %v4754, 1.0
      %v4808 = vadd.f32 %v4756, 1.0
      %v4809 = vadd.f32 %v4758, 1.0
      %v4810 = vadd.f32 %v4760, 1.0
      %v4811 = vadd.f32 %v4762, 1.0
      %v4812 = vadd.f32 %v4764, 1.0
      %v4813 = vadd.f32 %v4766, 1.0
      %v4814 = vadd.f32 %v4768, 1.0
      %v4815 = vadd.f32 %v4770, 1.0
      %v4816 = vadd.f32 %v4772, 1.0
      %v4817 = vadd.f32 %v4774, 1.0
      %v4818 = vadd.f32 %v4776, 1.0
      %v4819 = vadd.f32 %v4778, 1.0
      %v4820 = vadd.f32 %v4780, 1.0
      %v4821 = vadd.f32 %v4782, 1.0
      %v4822 = vadd.f32 %v4784, 1.0
      %v4823 = vadd.f32 %v4786, 1.0
      %v4824 = vadd.f32 %v4788, 1.0
      %v4825 = vadd.f32 %v4790, 1.0
      %v4826 = vadd.f32 %v4792, 1.0
      %v4827 = vadd.f32 %v4794, 1.0
      %v4828 = vadd.f32 %v4796, 1.0
      %v4829 = vrcp.pop %v4797
      %v4830 = vrcp.pop %v4798
      %v4831 = vrcp.pop %v4799
      %v4832 = vrcp.pop %v4800
      %v4833 = vrcp.pop %v4801
      %v4834 = vrcp.pop %v4802
      %v4835 = vrcp.pop %v4803
      %v4836 = vrcp.pop %v4804
      %v4837 = vrcp.pop %v4805
      %v4838 = vrcp.pop %v4806
      %v4839 = vrcp.pop %v4807
      %v4840 = vrcp.pop %v4808
      %v4841 = vrcp.pop %v4809
      %v4842 = vrcp.pop %v4810
      %v4843 = vrcp.pop %v4811
      %v4844 = vrcp.pop %v4812
      %v4845 = vrcp.pop %v4813
      %v4846 = vrcp.pop %v4814
      %v4847 = vrcp.pop %v4815
      %v4848 = vrcp.pop %v4816
      %v4849 = vrcp.pop %v4817
      %v4850 = vrcp.pop %v4818
      %v4851 = vrcp.pop %v4819
      %v4852 = vrcp.pop %v4820
      %v4853 = vrcp.pop %v4821
      %v4854 = vrcp.pop %v4822
      %v4855 = vrcp.pop %v4823
      %v4856 = vrcp.pop %v4824
      %v4857 = vrcp.pop %v4825
      %v4858 = vrcp.pop %v4826
      %v4859 = vrcp.pop %v4827
      %v4860 = vrcp.pop %v4828
      %v4861 = vmul.f32 %v4575, %v4829
      %v4862 = vmul.f32 %v4578, %v4830
      %v4863 = vmul.f32 %v4583, %v4831
      %v4864 = vmul.f32 %v4586, %v4832
      %v4865 = vmul.f32 %v4591, %v4833
      %v4866 = vmul.f32 %v4594, %v4834
      %v4867 = vmul.f32 %v4599, %v4835
      %v4868 = vmul.f32 %v4602, %v4836
      %v4869 = vmul.f32 %v4607, %v4837
      %v4870 = vmul.f32 %v4610, %v4838
      %v4871 = vmul.f32 %v4615, %v4839
      %v4872 = vmul.f32 %v4618, %v4840
      %v4873 = vmul.f32 %v4623, %v4841
      %v4874 = vmul.f32 %v4626, %v4842
      %v4875 = vmul.f32 %v4631, %v4843
      %v4876 = vmul.f32 %v4634, %v4844
      %v4877 = vmul.f32 %v4639, %v4845
      %v4878 = vmul.f32 %v4642, %v4846
      %v4879 = vmul.f32 %v4647, %v4847
      %v4880 = vmul.f32 %v4650, %v4848
      %v4881 = vmul.f32 %v4655, %v4849
      %v4882 = vmul.f32 %v4658, %v4850
      %v4883 = vmul.f32 %v4663, %v4851
      %v4884 = vmul.f32 %v4666, %v4852
      %v4885 = vmul.f32 %v4671, %v4853
      %v4886 = vmul.f32 %v4674, %v4854
      %v4887 = vmul.f32 %v4679, %v4855
      %v4888 = vmul.f32 %v4682, %v4856
      %v4889 = vmul.f32 %v4687, %v4857
      %v4890 = vmul.f32 %v4690, %v4858
      %v4891 = vmul.f32 %v4695, %v4859
      %v4892 = vmul.f32 %v4698, %v4860
      %v4893 = vunpack.c.l.bf16 %v229
      %v4894 = vunpack.c.l.bf16 %v230
      %v4895 = vunpack.c.l.bf16 %v231
      %v4896 = vunpack.c.l.bf16 %v232
      %v4897 = vunpack.c.l.bf16 %v233
      %v4898 = vunpack.c.l.bf16 %v234
      %v4899 = vunpack.c.l.bf16 %v235
      %v4900 = vunpack.c.l.bf16 %v236
      %v4901 = vunpack.c.l.bf16 %v237
      %v4902 = vunpack.c.l.bf16 %v238
      %v4903 = vunpack.c.l.bf16 %v239
      %v4904 = vunpack.c.l.bf16 %v240
      %v4905 = vunpack.c.l.bf16 %v241
      %v4906 = vunpack.c.l.bf16 %v242
      %v4907 = vunpack.c.l.bf16 %v243
      %v4908 = vunpack.c.l.bf16 %v244
      %v4909 = vunpack.c.l.bf16 %v245
      %v4910 = vunpack.c.l.bf16 %v246
      %v4911 = vunpack.c.l.bf16 %v247
      %v4912 = vunpack.c.l.bf16 %v248
      %v4913 = vunpack.c.l.bf16 %v249
      %v4914 = vunpack.c.l.bf16 %v250
      %v4915 = vunpack.c.l.bf16 %v251
      %v4916 = vunpack.c.l.bf16 %v252
      %v4917 = vunpack.c.l.bf16 %v253
      %v4918 = vunpack.c.l.bf16 %v254
      %v4919 = vunpack.c.l.bf16 %v255
      %v4920 = vunpack.c.l.bf16 %v256
      %v4921 = vunpack.c.l.bf16 %v257
      %v4922 = vunpack.c.l.bf16 %v258
      %v4923 = vunpack.c.l.bf16 %v259
      %v4924 = vunpack.c.l.bf16 %v260
      %v4925 = vadd.f32 %v4861, %v4893
      %v4926 = vadd.f32 %v4862, %v4894
      %v4927 = vadd.f32 %v4863, %v4895
      %v4928 = vadd.f32 %v4864, %v4896
      %v4929 = vadd.f32 %v4865, %v4897
      %v4930 = vadd.f32 %v4866, %v4898
      %v4931 = vadd.f32 %v4867, %v4899
      %v4932 = vadd.f32 %v4868, %v4900
      %v4933 = vadd.f32 %v4869, %v4901
      %v4934 = vadd.f32 %v4870, %v4902
      %v4935 = vadd.f32 %v4871, %v4903
      %v4936 = vadd.f32 %v4872, %v4904
      %v4937 = vadd.f32 %v4873, %v4905
      %v4938 = vadd.f32 %v4874, %v4906
      %v4939 = vadd.f32 %v4875, %v4907
      %v4940 = vadd.f32 %v4876, %v4908
      %v4941 = vadd.f32 %v4877, %v4909
      %v4942 = vadd.f32 %v4878, %v4910
      %v4943 = vadd.f32 %v4879, %v4911
      %v4944 = vadd.f32 %v4880, %v4912
      %v4945 = vadd.f32 %v4881, %v4913
      %v4946 = vadd.f32 %v4882, %v4914
      %v4947 = vadd.f32 %v4883, %v4915
      %v4948 = vadd.f32 %v4884, %v4916
      %v4949 = vadd.f32 %v4885, %v4917
      %v4950 = vadd.f32 %v4886, %v4918
      %v4951 = vadd.f32 %v4887, %v4919
      %v4952 = vadd.f32 %v4888, %v4920
      %v4953 = vadd.f32 %v4889, %v4921
      %v4954 = vadd.f32 %v4890, %v4922
      %v4955 = vadd.f32 %v4891, %v4923
      %v4956 = vadd.f32 %v4892, %v4924
      %v4957 = vpack.c.bf16 %v4926, %v4925
      %v4958 = vpack.c.bf16 %v4928, %v4927
      %v4959 = vpack.c.bf16 %v4930, %v4929
      %v4960 = vpack.c.bf16 %v4932, %v4931
      %v4961 = vpack.c.bf16 %v4934, %v4933
      %v4962 = vpack.c.bf16 %v4936, %v4935
      %v4963 = vpack.c.bf16 %v4938, %v4937
      %v4964 = vpack.c.bf16 %v4940, %v4939
      %v4965 = vpack.c.bf16 %v4942, %v4941
      %v4966 = vpack.c.bf16 %v4944, %v4943
      %v4967 = vpack.c.bf16 %v4946, %v4945
      %v4968 = vpack.c.bf16 %v4948, %v4947
      %v4969 = vpack.c.bf16 %v4950, %v4949
      %v4970 = vpack.c.bf16 %v4952, %v4951
      %v4971 = vpack.c.bf16 %v4954, %v4953
      %v4972 = vpack.c.bf16 %v4956, %v4955
      %v4989 = vunpack.c.l.b16 %v4957
      %v4990 = vunpack.c.h.b16 %v4957
      %v4991 = vunpack.c.l.b16 %v4958
      %v4992 = vunpack.c.h.b16 %v4958
      %v4993 = vunpack.c.l.b16 %v4959
      %v4994 = vunpack.c.h.b16 %v4959
      %v4995 = vunpack.c.l.b16 %v4960
      %v4996 = vunpack.c.h.b16 %v4960
      %v4997 = vunpack.c.l.b16 %v4961
      %v4998 = vunpack.c.h.b16 %v4961
      %v4999 = vunpack.c.l.b16 %v4962
      %v5000 = vunpack.c.h.b16 %v4962
      %v5001 = vunpack.c.l.b16 %v4963
      %v5002 = vunpack.c.h.b16 %v4963
      %v5003 = vunpack.c.l.b16 %v4964
      %v5004 = vunpack.c.h.b16 %v4964
      %v5005 = vunpack.c.l.b16 %v4965
      %v5006 = vunpack.c.h.b16 %v4965
      %v5007 = vunpack.c.l.b16 %v4966
      %v5008 = vunpack.c.h.b16 %v4966
      %v5009 = vunpack.c.l.b16 %v4967
      %v5010 = vunpack.c.h.b16 %v4967
      %v5011 = vunpack.c.l.b16 %v4968
      %v5012 = vunpack.c.h.b16 %v4968
      %v5013 = vunpack.c.l.b16 %v4969
      %v5014 = vunpack.c.h.b16 %v4969
      %v5015 = vunpack.c.l.b16 %v4970
      %v5016 = vunpack.c.h.b16 %v4970
      %v5017 = vunpack.c.l.b16 %v4971
      %v5018 = vunpack.c.h.b16 %v4971
      %v5019 = vunpack.c.l.b16 %v4972
      %v5020 = vunpack.c.h.b16 %v4972
      %v5021 = vpack.c.b16 %v4989, %v4989
      %v5022 = vpack.c.b16 %v4990, %v4990
      %v5023 = vpack.c.b16 %v4991, %v4991
      %v5024 = vpack.c.b16 %v4992, %v4992
      %v5025 = vpack.c.b16 %v4993, %v4993
      %v5026 = vpack.c.b16 %v4994, %v4994
      %v5027 = vpack.c.b16 %v4995, %v4995
      %v5028 = vpack.c.b16 %v4996, %v4996
      %v5029 = vpack.c.b16 %v4997, %v4997
      %v5030 = vpack.c.b16 %v4998, %v4998
      %v5031 = vpack.c.b16 %v4999, %v4999
      %v5032 = vpack.c.b16 %v5000, %v5000
      %v5033 = vpack.c.b16 %v5001, %v5001
      %v5034 = vpack.c.b16 %v5002, %v5002
      %v5035 = vpack.c.b16 %v5003, %v5003
      %v5036 = vpack.c.b16 %v5004, %v5004
      %v5037 = vpack.c.b16 %v5005, %v5005
      %v5038 = vpack.c.b16 %v5006, %v5006
      %v5039 = vpack.c.b16 %v5007, %v5007
      %v5040 = vpack.c.b16 %v5008, %v5008
      %v5041 = vpack.c.b16 %v5009, %v5009
      %v5042 = vpack.c.b16 %v5010, %v5010
      %v5043 = vpack.c.b16 %v5011, %v5011
      %v5044 = vpack.c.b16 %v5012, %v5012
      %v5045 = vpack.c.b16 %v5013, %v5013
      %v5046 = vpack.c.b16 %v5014, %v5014
      %v5047 = vpack.c.b16 %v5015, %v5015
      %v5048 = vpack.c.b16 %v5016, %v5016
      %v5049 = vpack.c.b16 %v5017, %v5017
      %v5050 = vpack.c.b16 %v5018, %v5018
      %v5051 = vpack.c.b16 %v5019, %v5019
      %v5052 = vpack.c.b16 %v5020, %v5020
      %5085 = vst.msk [vmem:[%s226] sm:$0xf] %vm755, %v5021
      %5086 = vst.msk [vmem:[%s226 + $0x4] sm:$0xf] %vm755, %v5022
      %5087 = vst.msk [vmem:[%s226 + $0x8] sm:$0xf] %vm755, %v5023
      %5088 = vst.msk [vmem:[%s226 + $0xc] sm:$0xf] %vm755, %v5024
      %5089 = vst.msk [vmem:[%s226 + $0x10] sm:$0xf] %vm755, %v5025
      %5090 = vst.msk [vmem:[%s226 + $0x14] sm:$0xf] %vm755, %v5026
      %5091 = vst.msk [vmem:[%s226 + $0x18] sm:$0xf] %vm755, %v5027
      %5092 = vst.msk [vmem:[%s226 + $0x1c] sm:$0xf] %vm755, %v5028
      %5093 = vst.msk [vmem:[%s226 + $0x20] sm:$0xf] %vm755, %v5029
      %5094 = vst.msk [vmem:[%s226 + $0x24] sm:$0xf] %vm755, %v5030
      %5095 = vst.msk [vmem:[%s226 + $0x28] sm:$0xf] %vm755, %v5031
      %5096 = vst.msk [vmem:[%s226 + $0x2c] sm:$0xf] %vm755, %v5032
      %5097 = vst.msk [vmem:[%s226 + $0x30] sm:$0xf] %vm755, %v5033
      %5098 = vst.msk [vmem:[%s226 + $0x34] sm:$0xf] %vm755, %v5034
      %5099 = vst.msk [vmem:[%s226 + $0x38] sm:$0xf] %vm755, %v5035
      %5100 = vst.msk [vmem:[%s226 + $0x3c] sm:$0xf] %vm755, %v5036
      %5101 = vst.msk [vmem:[%s226 + $0x40] sm:$0xf] %vm755, %v5037
      %5102 = vst.msk [vmem:[%s226 + $0x44] sm:$0xf] %vm755, %v5038
      %5103 = vst.msk [vmem:[%s226 + $0x48] sm:$0xf] %vm755, %v5039
      %5104 = vst.msk [vmem:[%s226 + $0x4c] sm:$0xf] %vm755, %v5040
      %5105 = vst.msk [vmem:[%s226 + $0x50] sm:$0xf] %vm755, %v5041
      %5106 = vst.msk [vmem:[%s226 + $0x54] sm:$0xf] %vm755, %v5042
      %5107 = vst.msk [vmem:[%s226 + $0x58] sm:$0xf] %vm755, %v5043
      %5108 = vst.msk [vmem:[%s226 + $0x5c] sm:$0xf] %vm755, %v5044
      %5109 = vst.msk [vmem:[%s226 + $0x60] sm:$0xf] %vm755, %v5045
      %5110 = vst.msk [vmem:[%s226 + $0x64] sm:$0xf] %vm755, %v5046
      %5111 = vst.msk [vmem:[%s226 + $0x68] sm:$0xf] %vm755, %v5047
      %5112 = vst.msk [vmem:[%s226 + $0x6c] sm:$0xf] %vm755, %v5048
      %5113 = vst.msk [vmem:[%s226 + $0x70] sm:$0xf] %vm755, %v5049
      %5114 = vst.msk [vmem:[%s226 + $0x74] sm:$0xf] %vm755, %v5050
      %5115 = vst.msk [vmem:[%s226 + $0x78] sm:$0xf] %vm755, %v5051
      %5116 = vst.msk [vmem:[%s226 + $0x7c] sm:$0xf] %vm755, %v5052
      %s5117 = smul.u32 32, %s16
      %p5118 = scmp.lt.s32.totalorder %s5117, 63
      %s5119 = scalar_select %p5118, %s5117, 63
      %s5120 = smul.addr %s5119, 4
      %s5121 = scalar_lea.vmem %s5, %s5120
      // Predicated region
      $region41: #{c3_forward.4} parent=39 // pred_check
        %p5122 = pneg %p144
      $region42: #{c3_forward.4} parent=39 // pred_check_branch
        %5124 = sbr.rel (%p5122) target = $region44
      $region43: #{c3_forward.4} parent=39 // pred_region
        %s5125 = smul.u32 32, %s16
      $region44: #{c3_forward.4} parent=39 // pred_fallthru
        _
    $region40: #{c3_forward.4} parent=5 // pred_fallthru
      _
    %p5126 = scmp.le.s32.totalorder 2, %s11
    // Predicated region
    $region45: #{c3_forward.4} parent=5 // pred_check
      %p5127 = pneg %p5126
    $region46: #{c3_forward.4} parent=5 // pred_check_branch
      %5129 = sbr.rel (%p5127) target = $region48
    $region47: #{c3_forward.4} parent=5 // pred_region
      %s5130 = ssub.s32 %s11, 2
      // Predicated region
      $region49: #{c3_forward.4} parent=47 // pred_check
        %p5131 = pneg %p150
      $region50: #{c3_forward.4} parent=47 // pred_check_branch
        %5133 = sbr.rel (%p5131) target = $region52
      $region51: #{c3_forward.4} parent=47 // pred_region
        %s5134 = smul.u32 32, %s17
        %p5135 = scmp.lt.s32.totalorder %s5134, 63
        %s5136 = scalar_select %p5135, %s5134, 63
        %s5137 = smul.addr %s5136, 4
        %s5138 = scalar_lea.vmem %s5, %s5137
      $region52: #{c3_forward.4} parent=47 // pred_fallthru
        _
    $region48: #{c3_forward.4} parent=5 // pred_fallthru
      _
  $region6: #{c3_forward.4} parent=0 // loop_footer
    %s15 = sadd.s32 1, %s11
  $region7: #{c3_forward.4} parent=0 // loop_footer_branch
    %10 = sbr.rel target = $region3
  $region8: #{c3_forward.4} parent=0 // loop_exit
    _

</llo_original>
